<compile_context>
chip_gen: v7x
topology: tpu7x:2x2x1
jax: 0.10.0
libtpu: 0.0.40
codegen_flags: <defaults>
</compile_context>

<pallas_src>
import functools

import jax
import jax.numpy as jnp
from jax.experimental import pallas as pl
from jax.experimental.pallas import tpu as pltpu


_FC_NP = 3200      # dense2 columns padded 3136 -> 3200 (25 * 128) for streaming
_FC_BLOCKS = 5     # stream w2 in 5 blocks of 640 columns
_SPLIT_MIN_M = 2048  # only M-split matmuls at least this tall (the 3528-row one)


def _num_tensorcores():
    """Best-effort TensorCore count (2 on v7x); safe fallback of 1."""
    try:
        info = pltpu.get_tpu_info()
        for attr in ("num_cores", "tensorcore_count", "num_tensorcores",
                     "cores_per_chip"):
            v = getattr(info, attr, None)
            if isinstance(v, int) and v > 0:
                return max(1, min(2, v))
    except Exception:
        pass
    try:
        d = jax.devices()[0]
        for attr in ("num_cores", "core_count"):
            v = getattr(d, attr, None)
            if isinstance(v, int) and v > 0:
                return max(1, min(2, v))
    except Exception:
        pass
    return 1


NUM_TC = _num_tensorcores()


# ----------------------------- Pallas kernels --------------------------------

def _mm_bias_kernel(x_ref, w_ref, b_ref, o_ref, *, relu):
    acc = jnp.dot(x_ref[...], w_ref[...], preferred_element_type=jnp.float32)
    acc = acc + b_ref[...]
    if relu:
        acc = jnp.maximum(acc, 0.0)
    o_ref[...] = acc.astype(o_ref.dtype)


def _mm_nobias_kernel(x_ref, w_ref, o_ref, *, relu):
    acc = jnp.dot(x_ref[...], w_ref[...], preferred_element_type=jnp.float32)
    if relu:
        acc = jnp.maximum(acc, 0.0)
    o_ref[...] = acc.astype(o_ref.dtype)


def matmul_bias_act(x, w, b2d=None, relu=True):
    """y = act(x @ w [+ b]); single block on 1-TC chips, 2-way M split on 2-TC."""
    M, K = x.shape
    N = w.shape[1]
    split = NUM_TC > 1 and M >= _SPLIT_MIN_M
    if split:
        step = 8 * NUM_TC
        Mp = ((M + step - 1) // step) * step
        if Mp != M:
            x = jnp.pad(x, ((0, Mp - M), (0, 0)))
        grid_m = NUM_TC
    else:
        Mp = M
        grid_m = 1
    bm = Mp // grid_m

    if b2d is not None:
        kernel = functools.partial(_mm_bias_kernel, relu=relu)
        in_specs = [
            pl.BlockSpec((bm, K), lambda i: (i, 0)),
            pl.BlockSpec((K, N), lambda i: (0, 0)),
            pl.BlockSpec((1, N), lambda i: (0, 0)),
        ]
        args = (x, w, b2d)
    else:
        kernel = functools.partial(_mm_nobias_kernel, relu=relu)
        in_specs = [
            pl.BlockSpec((bm, K), lambda i: (i, 0)),
            pl.BlockSpec((K, N), lambda i: (0, 0)),
        ]
        args = (x, w)

    y = pl.pallas_call(
        kernel,
        out_shape=jax.ShapeDtypeStruct((Mp, N), jnp.float32),
        grid=(grid_m,),
        in_specs=in_specs,
        out_specs=pl.BlockSpec((bm, N), lambda i: (i, 0)),
        compiler_params=pltpu.CompilerParams(
            dimension_semantics=("parallel",)),
    )(*args)
    if Mp != M:
        y = y[:M]
    return y


def _fc_kernel(z_ref, w1_ref, b1_ref, w2_ref, b2_ref, o_ref, h_ref):
    # h = relu(z @ w1 + b1) computed once into scratch; w2 streamed over N.
    @pl.when(pl.program_id(0) == 0)
    def _():
        h = jnp.dot(z_ref[...], w1_ref[...], preferred_element_type=jnp.float32)
        h_ref[...] = jnp.maximum(h + b1_ref[...], 0.0)

    acc = jnp.dot(h_ref[...], w2_ref[...], preferred_element_type=jnp.float32)
    o_ref[...] = jnp.maximum(acc + b2_ref[...], 0.0)


def fc_streamed(z, w1, b1, w2p, b2p, n_out):
    """relu(relu(z @ w1 + b1) @ w2 + b2) with w2 streamed in N blocks."""
    B, L = z.shape
    N1 = w1.shape[1]
    Np = w2p.shape[1]
    assert Np % _FC_BLOCKS == 0
    bn = Np // _FC_BLOCKS
    y = pl.pallas_call(
        _fc_kernel,
        out_shape=jax.ShapeDtypeStruct((B, Np), jnp.float32),
        grid=(_FC_BLOCKS,),
        in_specs=[
            pl.BlockSpec((B, L), lambda j: (0, 0)),
            pl.BlockSpec((L, N1), lambda j: (0, 0)),
            pl.BlockSpec((1, N1), lambda j: (0, 0)),
            pl.BlockSpec((N1, bn), lambda j: (0, j)),
            pl.BlockSpec((1, bn), lambda j: (0, j)),
        ],
        out_specs=pl.BlockSpec((B, bn), lambda j: (0, j)),
        scratch_shapes=[pltpu.VMEM((B, N1), jnp.float32)],
        compiler_params=pltpu.CompilerParams(
            dimension_semantics=("arbitrary",)),
    )(z, w1, b1, w2p, b2p)
    return y[:, :n_out]


# ------------------------ transposed-conv layers -----------------------------

def upconv_k2_s2_p1(x_pix, w_flat, b_flat, B, H, W):
    """ConvTranspose2d(k=2, s=2, p=1) on pixel rows; lane-dense interleave.

    x_pix: [B*H*W, Cin] (NHWC pixel-row order).  Returns ([B*H'*W', Cout], H', W').

    The matmul emits per-pixel taps in (kh, kw, c) column order.  Assembling
    full image rows of width W*2*Cout per kh, the stride-2 interleave of a
    k=2/s=2/p=1 deconv reduces to "stack the two kh row-planes and drop the
    first/last row and the first/last Cout lanes" - one slice, all lane-dense.
    """
    C = w_flat.shape[1] // 4
    y = matmul_bias_act(x_pix, w_flat, b_flat, relu=True)   # [B*H*W, 4C]
    w2c = W * 2 * C
    r0 = y[:, :2 * C].reshape(B, H, w2c)                    # kh = 0 rows
    r1 = y[:, 2 * C:].reshape(B, H, w2c)                    # kh = 1 rows
    full = jnp.stack([r0, r1], axis=2).reshape(B, 2 * H, w2c)   # row t = 2i+kh
    out = full[:, 1:2 * H - 1, C:w2c - C]                   # crop rows & lanes
    Hn, Wn = 2 * H - 2, 2 * W - 2
    return out.reshape(B * Hn * Wn, C), Hn, Wn


def upconv_k4_s2_p1(x_pix, w_flat, b_pad, B, H, W):
    """ConvTranspose2d(k=4, s=2, p=1), channels padded to a multiple of 8.

    TODO(synk): the overlap-add stays as XLA glue; an in-kernel version needs
    strided sublane stores that do not lower robustly in Mosaic.
    """
    Cp = w_flat.shape[1] // 16
    y = matmul_bias_act(x_pix, w_flat, None, relu=False)     # [B*H*W, 16*Cp]
    y = y.reshape(B, H, W, 4, 4, Cp)
    # o = 2*i - 1 + k, k in {0..3}:
    #   even o=2m   <- (i=m, k=1) + (i=m-1, k=3)
    #   odd  o=2m+1 <- (i=m, k=2) + (i=m+1, k=0)
    yk = [y[:, :, :, k, :, :] for k in range(4)]             # each [B,H,W,4,Cp]
    zrow = jnp.zeros_like(yk[0][:, :1])
    even = yk[1] + jnp.concatenate([zrow, yk[3][:, :-1]], axis=1)
    odd = yk[2] + jnp.concatenate([yk[0][:, 1:], zrow], axis=1)
    z = jnp.stack([even, odd], axis=2).reshape(B, 2 * H, W, 4, Cp)
    zk = [z[:, :, :, k, :] for k in range(4)]                # each [B,2H,W,Cp]
    zcol = jnp.zeros_like(zk[0][:, :, :1])
    even = zk[1] + jnp.concatenate([zcol, zk[3][:, :, :-1]], axis=2)
    odd = zk[2] + jnp.concatenate([zk[0][:, :, 1:], zcol], axis=2)
    out = jnp.stack([even, odd], axis=3).reshape(B, 2 * H, 2 * W, Cp)
    return out + b_pad.reshape(1, 1, 1, Cp)


# ------------------------------ Decoder -------------------------------------

def decoder_forward(z, pp, *, num_channels):
    """z: [B, latent_dim] -> img: [B, num_channels, 84, 84] (NCHW, like PyTorch)."""
    B = z.shape[0]
    # TODO(synk): whole-decoder single pallas_call blocked by the in-kernel
    # sublane<->lane relayout needed for the stride-2 interleave.
    h = fc_streamed(z, pp["w1"], pp["b1"], pp["w2"], pp["b2"], 3136)  # [B,3136] HWC
    x = h.reshape(B * 7 * 7, 64)                                      # pixel rows
    x, H, W = upconv_k2_s2_p1(x, pp["wu1"], pp["bu1"], B, 7, 7)       # 12x12x64
    x, H, W = upconv_k2_s2_p1(x, pp["wu2"], pp["bu2"], B, H, W)       # 22x22x32
    x, H, W = upconv_k2_s2_p1(x, pp["wu3"], pp["bu3"], B, H, W)       # 42x42x32
    img = upconv_k4_s2_p1(x, pp["wu4"], pp["bu4"], B, H, W)           # [B,84,84,Cp]
    img = jnp.transpose(img, (0, 3, 1, 2))      # NCHW on the padded (8) channels
    return img[:, :num_channels]                # slice real channels last


def init_params(key, latent_dim, num_channels):
    """Parameters in PyTorch layout (Linear stored as [in, out])."""
    keys = jax.random.split(key, 12)

    def u(k, shape, fan_in):
        bound = 1.0 / jnp.sqrt(jnp.float32(fan_in))
        return jax.random.uniform(k, shape, jnp.float32, -bound, bound)

    return dict(
        w1=u(keys[0], (latent_dim, 256), latent_dim),
        b1=u(keys[1], (256,), latent_dim),
        w2=u(keys[2], (256, 3136), 256),
        b2=u(keys[3], (3136,), 256),
        # ConvTranspose2d weights in PyTorch layout [Cin, Cout, kH, kW].
        wu1=u(keys[4], (64, 64, 2, 2), 64 * 4),
        bu1=u(keys[5], (64,), 64 * 4),
        wu2=u(keys[6], (64, 32, 2, 2), 64 * 4),
        bu2=u(keys[7], (32,), 64 * 4),
        wu3=u(keys[8], (32, 32, 2, 2), 32 * 4),
        bu3=u(keys[9], (32,), 32 * 4),
        wu4=u(keys[10], (32, num_channels, 4, 4), 32 * 16),
        bu4=u(keys[11], (num_channels,), 32 * 16),
    )


def prepare_params(p, num_channels):
    """One-time packing of PyTorch-layout params into kernel-ready tensors."""
    def flat_k2(w_pt, b):
        cin, cout = w_pt.shape[0], w_pt.shape[1]
        wf = jnp.transpose(w_pt, (0, 2, 3, 1)).reshape(cin, 4 * cout)  # (kh,kw,c)
        bf = jnp.tile(b, 4).reshape(1, 4 * cout)
        return wf, bf

    wu1, bu1 = flat_k2(p["wu1"], p["bu1"])
    wu2, bu2 = flat_k2(p["wu2"], p["bu2"])
    wu3, bu3 = flat_k2(p["wu3"], p["bu3"])

    cpad = ((num_channels + 7) // 8) * 8            # 16*cpad is a multiple of 128
    wu4 = jnp.transpose(p["wu4"], (0, 2, 3, 1))     # [32, 4, 4, C]
    wu4 = jnp.pad(wu4, ((0, 0), (0, 0), (0, 0), (0, cpad - num_channels)))
    wu4 = wu4.reshape(32, 16 * cpad)
    bu4 = jnp.pad(p["bu4"], (0, cpad - num_channels)).reshape(1, cpad)

    # dense2 columns permuted CHW -> HWC so the FC kernel emits NHWC directly,
    # then padded 3136 -> 3200 so w2 can be streamed in 5 x 640 lane-dense blocks.
    w2 = p["w2"].reshape(256, 64, 7, 7).transpose(0, 2, 3, 1).reshape(256, 3136)
    b2 = p["b2"].reshape(64, 7, 7).transpose(1, 2, 0).reshape(1, 3136)
    w2 = jnp.pad(w2, ((0, 0), (0, _FC_NP - 3136)))
    b2 = jnp.pad(b2, ((0, 0), (0, _FC_NP - 3136)))

    return dict(
        w1=p["w1"], b1=p["b1"].reshape(1, 256),
        w2=w2, b2=b2,
        wu1=wu1, bu1=bu1, wu2=wu2, bu2=bu2, wu3=wu3, bu3=bu3,
        wu4=wu4, bu4=bu4,
    )


# --------------------------- pure-JAX reference ------------------------------

def ref_decoder(z, p):
    h = jnp.maximum(z @ p["w1"] + p["b1"], 0.0)
    h = jnp.maximum(h @ p["w2"] + p["b2"], 0.0)
    B = z.shape[0]
    h = h.reshape(B, 64, 7, 7)

    def convT(x, w, b, k, s, pad):
        rhs = jnp.flip(w, (2, 3)).transpose(1, 0, 2, 3)          # [Cout,Cin,k,k]
        q = k - 1 - pad
        y = jax.lax.conv_general_dilated(
            x, rhs, window_strides=(1, 1), padding=((q, q), (q, q)),
            lhs_dilation=(s, s),
            dimension_numbers=("NCHW", "OIHW", "NCHW"))
        return y + b.reshape(1, -1, 1, 1)

    h = jnp.maximum(convT(h, p["wu1"], p["bu1"], 2, 2, 1), 0.0)
    h = jnp.maximum(convT(h, p["wu2"], p["bu2"], 2, 2, 1), 0.0)
    h = jnp.maximum(convT(h, p["wu3"], p["bu3"], 2, 2, 1), 0.0)
    return convT(h, p["wu4"], p["bu4"], 4, 2, 1)


# --------------------------------- main --------------------------------------

if __name__ == "__main__":
    B, latent_dim, num_channels = 2, 32, 3
    key = jax.random.PRNGKey(0)
    kz, kp = jax.random.split(key)
    z = jax.random.normal(kz, (B, latent_dim), jnp.float32)
    params = init_params(kp, latent_dim, num_channels)

    # Weight packing hoisted out of the forward pass (done once, not per call).
    packed = prepare_params(params, num_channels)

    fwd = jax.jit(functools.partial(decoder_forward, num_channels=num_channels))
    out = jax.block_until_ready(fwd(z, packed))
    assert out.shape == (B, num_channels, 84, 84), out.shape

    ref = ref_decoder(z, params)
    max_err = float(jnp.max(jnp.abs(out - ref)))
    assert jnp.allclose(out, ref, atol=1e-3, rtol=1e-3), max_err

    print("KERNEL_OK")
</pallas_src>

<mosaic_0001>
module attributes {stable_mosaic.version = 11 : i64} {
  func.func @_mm_bias_kernel(%arg0: i32, %arg1: memref<98x64xf32, #tpu.memory_space<vmem>>, %arg2: memref<64x256xf32, #tpu.memory_space<vmem>>, %arg3: memref<1x256xf32, #tpu.memory_space<vmem>>, %arg4: memref<98x256xf32, #tpu.memory_space<vmem>>) attributes {dimension_semantics = [#tpu.dimension_semantics<parallel>], iteration_bounds = array<i64: 1>, scalar_prefetch = 0 : i64, scratch_operands = 0 : i64, tpu.core_type = #tpu.core_type<tc>, window_params = [{transform_indices = @transform_0, window_bounds = array<i64: 98, 64>}, {pipeline_mode = #tpu.pipeline_mode<synchronous>, transform_indices = @transform_1, window_bounds = array<i64: 64, 256>}, {pipeline_mode = #tpu.pipeline_mode<synchronous>, transform_indices = @transform_2, window_bounds = array<i64: 1, 256>}, {transform_indices = @transform_3, window_bounds = array<i64: 98, 256>}]} {
    %c0 = arith.constant 0 : index
    %c0_0 = arith.constant 0 : index
    %0 = vector.load %arg1[%c0, %c0_0] : memref<98x64xf32, #tpu.memory_space<vmem>>, vector<98x64xf32>
    %c0_1 = arith.constant 0 : index
    %c0_2 = arith.constant 0 : index
    %1 = vector.load %arg2[%c0_1, %c0_2] : memref<64x256xf32, #tpu.memory_space<vmem>>, vector<64x256xf32>
    %cst = arith.constant dense<0.000000e+00> : vector<98x256xf32>
    %2 = tpu.matmul %0, %1, %cst {dimension_numbers = #tpu.dot_dimension_numbers<[1], [0], [0], [1], [0, 0, 1, 1], [], []>} : vector<98x64xf32>, vector<64x256xf32>, vector<98x256xf32> -> vector<98x256xf32>
    %c0_3 = arith.constant 0 : index
    %c0_4 = arith.constant 0 : index
    %3 = vector.load %arg3[%c0_3, %c0_4] : memref<1x256xf32, #tpu.memory_space<vmem>>, vector<1x256xf32>
    %4 = vector.broadcast %3 : vector<1x256xf32> to vector<98x256xf32>
    %5 = arith.addf %2, %4 : vector<98x256xf32>
    %cst_5 = arith.constant 0.000000e+00 : f32
    %6 = vector.broadcast %cst_5 : f32 to vector<98x256xf32>
    %7 = arith.maximumf %5, %6 : vector<98x256xf32>
    %c0_6 = arith.constant 0 : index
    %c0_7 = arith.constant 0 : index
    %8 = vector.load %arg4[%c0_6, %c0_7] : memref<98x256xf32, #tpu.memory_space<vmem>>, vector<98x256xf32>
    tpu.vector_store %arg4[%c0_6, %c0_7], %7 {strides = array<i32>} : memref<98x256xf32, #tpu.memory_space<vmem>>, vector<98x256xf32>,
    return
  }
  func.func @transform_0(%arg0: i32) -> (i32, i32) {
    %c0_i32 = arith.constant 0 : i32
    %c0_i32_0 = arith.constant 0 : i32
    return %arg0, %c0_i32 : i32, i32
  }
  func.func @transform_1(%arg0: i32) -> (i32, i32) {
    %c0_i32 = arith.constant 0 : i32
    %c0_i32_0 = arith.constant 0 : i32
    %c0_i32_1 = arith.constant 0 : i32
    return %c0_i32, %c0_i32_0 : i32, i32
  }
  func.func @transform_2(%arg0: i32) -> (i32, i32) {
    %c0_i32 = arith.constant 0 : i32
    %c0_i32_0 = arith.constant 0 : i32
    %c0_i32_1 = arith.constant 0 : i32
    return %c0_i32, %c0_i32_0 : i32, i32
  }
  func.func @transform_3(%arg0: i32) -> (i32, i32) {
    %c0_i32 = arith.constant 0 : i32
    %c0_i32_0 = arith.constant 0 : i32
    return %arg0, %c0_i32 : i32, i32
  }
}

module attributes {stable_mosaic.version = 11 : i64} {
  func.func @_fc_kernel(%arg0: i32, %arg1: memref<2x32xf32, #tpu.memory_space<vmem>>, %arg2: memref<32x256xf32, #tpu.memory_space<vmem>>, %arg3: memref<1x256xf32, #tpu.memory_space<vmem>>, %arg4: memref<256x640xf32, #tpu.memory_space<vmem>>, %arg5: memref<1x640xf32, #tpu.memory_space<vmem>>, %arg6: memref<2x640xf32, #tpu.memory_space<vmem>>, %arg7: memref<2x256xf32, #tpu.memory_space<vmem>>) attributes {dimension_semantics = [#tpu.dimension_semantics<arbitrary>], iteration_bounds = array<i64: 5>, scalar_prefetch = 0 : i64, scratch_operands = 1 : i64, tpu.core_type = #tpu.core_type<tc>, window_params = [{pipeline_mode = #tpu.pipeline_mode<synchronous>, transform_indices = @transform_0, window_bounds = array<i64: 2, 32>}, {pipeline_mode = #tpu.pipeline_mode<synchronous>, transform_indices = @transform_1, window_bounds = array<i64: 32, 256>}, {pipeline_mode = #tpu.pipeline_mode<synchronous>, transform_indices = @transform_2, window_bounds = array<i64: 1, 256>}, {transform_indices = @transform_3, window_bounds = array<i64: 256, 640>}, {transform_indices = @transform_4, window_bounds = array<i64: 1, 640>}, {transform_indices = @transform_5, window_bounds = array<i64: 2, 640>}]} {
    %c0_i32 = arith.constant 0 : i32
    %0 = arith.cmpi eq, %arg0, %c0_i32 : i32
    %1 = arith.extui %0 : i1 to i32
    %c0_i32_0 = arith.constant 0 : i32
    %2 = arith.cmpi ne, %1, %c0_i32_0 : i32
    scf.if %2 {
      %c0_9 = arith.constant 0 : index
      %c0_10 = arith.constant 0 : index
      %12 = vector.load %arg1[%c0_9, %c0_10] : memref<2x32xf32, #tpu.memory_space<vmem>>, vector<2x32xf32>
      %c0_11 = arith.constant 0 : index
      %c0_12 = arith.constant 0 : index
      %13 = vector.load %arg2[%c0_11, %c0_12] : memref<32x256xf32, #tpu.memory_space<vmem>>, vector<32x256xf32>
      %cst_13 = arith.constant dense<0.000000e+00> : vector<2x256xf32>
      %14 = tpu.matmul %12, %13, %cst_13 {dimension_numbers = #tpu.dot_dimension_numbers<[1], [0], [0], [1], [0, 0, 1, 1], [], []>} : vector<2x32xf32>, vector<32x256xf32>, vector<2x256xf32> -> vector<2x256xf32>
      %c0_14 = arith.constant 0 : index
      %c0_15 = arith.constant 0 : index
      %15 = vector.load %arg3[%c0_14, %c0_15] : memref<1x256xf32, #tpu.memory_space<vmem>>, vector<1x256xf32>
      %16 = vector.broadcast %15 : vector<1x256xf32> to vector<2x256xf32>
      %17 = arith.addf %14, %16 : vector<2x256xf32>
      %cst_16 = arith.constant 0.000000e+00 : f32
      %18 = vector.broadcast %cst_16 : f32 to vector<2x256xf32>
      %19 = arith.maximumf %17, %18 : vector<2x256xf32>
      %c0_17 = arith.constant 0 : index
      %c0_18 = arith.constant 0 : index
      %20 = vector.load %arg7[%c0_17, %c0_18] : memref<2x256xf32, #tpu.memory_space<vmem>>, vector<2x256xf32>
      tpu.vector_store %arg7[%c0_17, %c0_18], %19 {strides = array<i32>} : memref<2x256xf32, #tpu.memory_space<vmem>>, vector<2x256xf32>,
    } else {
    }
    %c0 = arith.constant 0 : index
    %c0_1 = arith.constant 0 : index
    %3 = vector.load %arg7[%c0, %c0_1] : memref<2x256xf32, #tpu.memory_space<vmem>>, vector<2x256xf32>
    %c0_2 = arith.constant 0 : index
    %c0_3 = arith.constant 0 : index
    %4 = vector.load %arg4[%c0_2, %c0_3] : memref<256x640xf32, #tpu.memory_space<vmem>>, vector<256x640xf32>
    %cst = arith.constant dense<0.000000e+00> : vector<2x640xf32>
    %5 = tpu.matmul %3, %4, %cst {dimension_numbers = #tpu.dot_dimension_numbers<[1], [0], [0], [1], [0, 0, 1, 1], [], []>} : vector<2x256xf32>, vector<256x640xf32>, vector<2x640xf32> -> vector<2x640xf32>
    %c0_4 = arith.constant 0 : index
    %c0_5 = arith.constant 0 : index
    %6 = vector.load %arg5[%c0_4, %c0_5] : memref<1x640xf32, #tpu.memory_space<vmem>>, vector<1x640xf32>
    %7 = vector.broadcast %6 : vector<1x640xf32> to vector<2x640xf32>
    %8 = arith.addf %5, %7 : vector<2x640xf32>
    %cst_6 = arith.constant 0.000000e+00 : f32
    %9 = vector.broadcast %cst_6 : f32 to vector<2x640xf32>
    %10 = arith.maximumf %8, %9 : vector<2x640xf32>
    %c0_7 = arith.constant 0 : index
    %c0_8 = arith.constant 0 : index
    %11 = vector.load %arg6[%c0_7, %c0_8] : memref<2x640xf32, #tpu.memory_space<vmem>>, vector<2x640xf32>
    tpu.vector_store %arg6[%c0_7, %c0_8], %10 {strides = array<i32>} : memref<2x640xf32, #tpu.memory_space<vmem>>, vector<2x640xf32>,
    return
  }
  func.func @transform_0(%arg0: i32) -> (i32, i32) {
    %c0_i32 = arith.constant 0 : i32
    %c0_i32_0 = arith.constant 0 : i32
    %c0_i32_1 = arith.constant 0 : i32
    return %c0_i32, %c0_i32_0 : i32, i32
  }
  func.func @transform_1(%arg0: i32) -> (i32, i32) {
    %c0_i32 = arith.constant 0 : i32
    %c0_i32_0 = arith.constant 0 : i32
    %c0_i32_1 = arith.constant 0 : i32
    return %c0_i32, %c0_i32_0 : i32, i32
  }
  func.func @transform_2(%arg0: i32) -> (i32, i32) {
    %c0_i32 = arith.constant 0 : i32
    %c0_i32_0 = arith.constant 0 : i32
    %c0_i32_1 = arith.constant 0 : i32
    return %c0_i32, %c0_i32_0 : i32, i32
  }
  func.func @transform_3(%arg0: i32) -> (i32, i32) {
    %c0_i32 = arith.constant 0 : i32
    %c0_i32_0 = arith.constant 0 : i32
    return %c0_i32, %arg0 : i32, i32
  }
  func.func @transform_4(%arg0: i32) -> (i32, i32) {
    %c0_i32 = arith.constant 0 : i32
    %c0_i32_0 = arith.constant 0 : i32
    return %c0_i32, %arg0 : i32, i32
  }
  func.func @transform_5(%arg0: i32) -> (i32, i32) {
    %c0_i32 = arith.constant 0 : i32
    %c0_i32_0 = arith.constant 0 : i32
    return %c0_i32, %arg0 : i32, i32
  }
}

module attributes {stable_mosaic.version = 11 : i64} {
  func.func @_mm_bias_kernel(%arg0: i32, %arg1: memref<288x64xf32, #tpu.memory_space<vmem>>, %arg2: memref<64x128xf32, #tpu.memory_space<vmem>>, %arg3: memref<1x128xf32, #tpu.memory_space<vmem>>, %arg4: memref<288x128xf32, #tpu.memory_space<vmem>>) attributes {dimension_semantics = [#tpu.dimension_semantics<parallel>], iteration_bounds = array<i64: 1>, scalar_prefetch = 0 : i64, scratch_operands = 0 : i64, tpu.core_type = #tpu.core_type<tc>, window_params = [{transform_indices = @transform_0, window_bounds = array<i64: 288, 64>}, {pipeline_mode = #tpu.pipeline_mode<synchronous>, transform_indices = @transform_1, window_bounds = array<i64: 64, 128>}, {pipeline_mode = #tpu.pipeline_mode<synchronous>, transform_indices = @transform_2, window_bounds = array<i64: 1, 128>}, {transform_indices = @transform_3, window_bounds = array<i64: 288, 128>}]} {
    %c0 = arith.constant 0 : index
    %c0_0 = arith.constant 0 : index
    %0 = vector.load %arg1[%c0, %c0_0] : memref<288x64xf32, #tpu.memory_space<vmem>>, vector<288x64xf32>
    %c0_1 = arith.constant 0 : index
    %c0_2 = arith.constant 0 : index
    %1 = vector.load %arg2[%c0_1, %c0_2] : memref<64x128xf32, #tpu.memory_space<vmem>>, vector<64x128xf32>
    %cst = arith.constant dense<0.000000e+00> : vector<288x128xf32>
    %2 = tpu.matmul %0, %1, %cst {dimension_numbers = #tpu.dot_dimension_numbers<[1], [0], [0], [1], [0, 0, 1, 1], [], []>} : vector<288x64xf32>, vector<64x128xf32>, vector<288x128xf32> -> vector<288x128xf32>
    %c0_3 = arith.constant 0 : index
    %c0_4 = arith.constant 0 : index
    %3 = vector.load %arg3[%c0_3, %c0_4] : memref<1x128xf32, #tpu.memory_space<vmem>>, vector<1x128xf32>
    %4 = vector.broadcast %3 : vector<1x128xf32> to vector<288x128xf32>
    %5 = arith.addf %2, %4 : vector<288x128xf32>
    %cst_5 = arith.constant 0.000000e+00 : f32
    %6 = vector.broadcast %cst_5 : f32 to vector<288x128xf32>
    %7 = arith.maximumf %5, %6 : vector<288x128xf32>
    %c0_6 = arith.constant 0 : index
    %c0_7 = arith.constant 0 : index
    %8 = vector.load %arg4[%c0_6, %c0_7] : memref<288x128xf32, #tpu.memory_space<vmem>>, vector<288x128xf32>
    tpu.vector_store %arg4[%c0_6, %c0_7], %7 {strides = array<i32>} : memref<288x128xf32, #tpu.memory_space<vmem>>, vector<288x128xf32>,
    return
  }
  func.func @transform_0(%arg0: i32) -> (i32, i32) {
    %c0_i32 = arith.constant 0 : i32
    %c0_i32_0 = arith.constant 0 : i32
    return %arg0, %c0_i32 : i32, i32
  }
  func.func @transform_1(%arg0: i32) -> (i32, i32) {
    %c0_i32 = arith.constant 0 : i32
    %c0_i32_0 = arith.constant 0 : i32
    %c0_i32_1 = arith.constant 0 : i32
    return %c0_i32, %c0_i32_0 : i32, i32
  }
  func.func @transform_2(%arg0: i32) -> (i32, i32) {
    %c0_i32 = arith.constant 0 : i32
    %c0_i32_0 = arith.constant 0 : i32
    %c0_i32_1 = arith.constant 0 : i32
    return %c0_i32, %c0_i32_0 : i32, i32
  }
  func.func @transform_3(%arg0: i32) -> (i32, i32) {
    %c0_i32 = arith.constant 0 : i32
    %c0_i32_0 = arith.constant 0 : i32
    return %arg0, %c0_i32 : i32, i32
  }
}

module attributes {stable_mosaic.version = 11 : i64} {
  func.func @_mm_bias_kernel(%arg0: i32, %arg1: memref<968x32xf32, #tpu.memory_space<vmem>>, %arg2: memref<32x128xf32, #tpu.memory_space<vmem>>, %arg3: memref<1x128xf32, #tpu.memory_space<vmem>>, %arg4: memref<968x128xf32, #tpu.memory_space<vmem>>) attributes {dimension_semantics = [#tpu.dimension_semantics<parallel>], iteration_bounds = array<i64: 1>, scalar_prefetch = 0 : i64, scratch_operands = 0 : i64, tpu.core_type = #tpu.core_type<tc>, window_params = [{transform_indices = @transform_0, window_bounds = array<i64: 968, 32>}, {pipeline_mode = #tpu.pipeline_mode<synchronous>, transform_indices = @transform_1, window_bounds = array<i64: 32, 128>}, {pipeline_mode = #tpu.pipeline_mode<synchronous>, transform_indices = @transform_2, window_bounds = array<i64: 1, 128>}, {transform_indices = @transform_3, window_bounds = array<i64: 968, 128>}]} {
    %c0 = arith.constant 0 : index
    %c0_0 = arith.constant 0 : index
    %0 = vector.load %arg1[%c0, %c0_0] : memref<968x32xf32, #tpu.memory_space<vmem>>, vector<968x32xf32>
    %c0_1 = arith.constant 0 : index
    %c0_2 = arith.constant 0 : index
    %1 = vector.load %arg2[%c0_1, %c0_2] : memref<32x128xf32, #tpu.memory_space<vmem>>, vector<32x128xf32>
    %cst = arith.constant dense<0.000000e+00> : vector<968x128xf32>
    %2 = tpu.matmul %0, %1, %cst {dimension_numbers = #tpu.dot_dimension_numbers<[1], [0], [0], [1], [0, 0, 1, 1], [], []>} : vector<968x32xf32>, vector<32x128xf32>, vector<968x128xf32> -> vector<968x128xf32>
    %c0_3 = arith.constant 0 : index
    %c0_4 = arith.constant 0 : index
    %3 = vector.load %arg3[%c0_3, %c0_4] : memref<1x128xf32, #tpu.memory_space<vmem>>, vector<1x128xf32>
    %4 = vector.broadcast %3 : vector<1x128xf32> to vector<968x128xf32>
    %5 = arith.addf %2, %4 : vector<968x128xf32>
    %cst_5 = arith.constant 0.000000e+00 : f32
    %6 = vector.broadcast %cst_5 : f32 to vector<968x128xf32>
    %7 = arith.maximumf %5, %6 : vector<968x128xf32>
    %c0_6 = arith.constant 0 : index
    %c0_7 = arith.constant 0 : index
    %8 = vector.load %arg4[%c0_6, %c0_7] : memref<968x128xf32, #tpu.memory_space<vmem>>, vector<968x128xf32>
    tpu.vector_store %arg4[%c0_6, %c0_7], %7 {strides = array<i32>} : memref<968x128xf32, #tpu.memory_space<vmem>>, vector<968x128xf32>,
    return
  }
  func.func @transform_0(%arg0: i32) -> (i32, i32) {
    %c0_i32 = arith.constant 0 : i32
    %c0_i32_0 = arith.constant 0 : i32
    return %arg0, %c0_i32 : i32, i32
  }
  func.func @transform_1(%arg0: i32) -> (i32, i32) {
    %c0_i32 = arith.constant 0 : i32
    %c0_i32_0 = arith.constant 0 : i32
    %c0_i32_1 = arith.constant 0 : i32
    return %c0_i32, %c0_i32_0 : i32, i32
  }
  func.func @transform_2(%arg0: i32) -> (i32, i32) {
    %c0_i32 = arith.constant 0 : i32
    %c0_i32_0 = arith.constant 0 : i32
    %c0_i32_1 = arith.constant 0 : i32
    return %c0_i32, %c0_i32_0 : i32, i32
  }
  func.func @transform_3(%arg0: i32) -> (i32, i32) {
    %c0_i32 = arith.constant 0 : i32
    %c0_i32_0 = arith.constant 0 : i32
    return %arg0, %c0_i32 : i32, i32
  }
}

module attributes {stable_mosaic.version = 11 : i64} {
  func.func @_mm_nobias_kernel(%arg0: i32, %arg1: memref<3528x32xf32, #tpu.memory_space<vmem>>, %arg2: memref<32x128xf32, #tpu.memory_space<vmem>>, %arg3: memref<3528x128xf32, #tpu.memory_space<vmem>>) attributes {dimension_semantics = [#tpu.dimension_semantics<parallel>], iteration_bounds = array<i64: 1>, scalar_prefetch = 0 : i64, scratch_operands = 0 : i64, tpu.core_type = #tpu.core_type<tc>, window_params = [{transform_indices = @transform_0, window_bounds = array<i64: 3528, 32>}, {pipeline_mode = #tpu.pipeline_mode<synchronous>, transform_indices = @transform_1, window_bounds = array<i64: 32, 128>}, {transform_indices = @transform_2, window_bounds = array<i64: 3528, 128>}]} {
    %c0 = arith.constant 0 : index
    %c0_0 = arith.constant 0 : index
    %0 = vector.load %arg1[%c0, %c0_0] : memref<3528x32xf32, #tpu.memory_space<vmem>>, vector<3528x32xf32>
    %c0_1 = arith.constant 0 : index
    %c0_2 = arith.constant 0 : index
    %1 = vector.load %arg2[%c0_1, %c0_2] : memref<32x128xf32, #tpu.memory_space<vmem>>, vector<32x128xf32>
    %cst = arith.constant dense<0.000000e+00> : vector<3528x128xf32>
    %2 = tpu.matmul %0, %1, %cst {dimension_numbers = #tpu.dot_dimension_numbers<[1], [0], [0], [1], [0, 0, 1, 1], [], []>} : vector<3528x32xf32>, vector<32x128xf32>, vector<3528x128xf32> -> vector<3528x128xf32>
    %c0_3 = arith.constant 0 : index
    %c0_4 = arith.constant 0 : index
    %3 = vector.load %arg3[%c0_3, %c0_4] : memref<3528x128xf32, #tpu.memory_space<vmem>>, vector<3528x128xf32>
    tpu.vector_store %arg3[%c0_3, %c0_4], %2 {strides = array<i32>} : memref<3528x128xf32, #tpu.memory_space<vmem>>, vector<3528x128xf32>,
    return
  }
  func.func @transform_0(%arg0: i32) -> (i32, i32) {
    %c0_i32 = arith.constant 0 : i32
    %c0_i32_0 = arith.constant 0 : i32
    return %arg0, %c0_i32 : i32, i32
  }
  func.func @transform_1(%arg0: i32) -> (i32, i32) {
    %c0_i32 = arith.constant 0 : i32
    %c0_i32_0 = arith.constant 0 : i32
    %c0_i32_1 = arith.constant 0 : i32
    return %c0_i32, %c0_i32_0 : i32, i32
  }
  func.func @transform_2(%arg0: i32) -> (i32, i32) {
    %c0_i32 = arith.constant 0 : i32
    %c0_i32_0 = arith.constant 0 : i32
    return %arg0, %c0_i32 : i32, i32
  }
}

</mosaic_0001>

<llo_original>
// kernel: decoder_forward.6
$region0: #{decoder_forward.6}
  #allocation0 [shape = 'u32[]', space=smem, size = 0x4, offset = 0x4, fixed_abs, tag = 'smem constant byte address 0x4 - core index']
  #allocation1 [shape = 'u32[144,128]{1,0:T(1,128)}', space=vmem, size = 0x12000, scoped, tag = 'internal scratch']
  %s0 = inlined_call_operand.vmem [shape: f32[98,64], index: 0, kind: input, shape index: {}]
  %s1 = inlined_call_operand.vmem [shape: f32[64,256], index: 1, kind: input, shape index: {}]
  %s2 = inlined_call_operand.vmem [shape: f32[1,256], index: 2, kind: input, shape index: {}]
  %s3 = inlined_call_operand.vmem [shape: f32[98,256], index: 3, kind: output, shape index: {}]
  %s4 = sld [smem:[#allocation0]]
  $region22: #{decoder_forward.6} parent=0
    _
  %s6 = ssub.s32 1, %s4
  %s7 = scalar_select 0, %s6, %s4
  // Predicated region
  $region2: #{decoder_forward.6} parent=0 // pred_check
    _
  $region3: #{decoder_forward.6} parent=0 // pred_check_branch
    %9 = sbr.rel (0) target = $region5
  $region4: #{decoder_forward.6} parent=0 // pred_region
    _
  $region5: #{decoder_forward.6} parent=0 // pred_fallthru
    _
  // Predicated region
  $region6: #{decoder_forward.6} parent=0 // pred_check
    _
  $region7: #{decoder_forward.6} parent=0 // pred_check_branch
    %11 = sbr.rel (0) target = $region9
  $region8: #{decoder_forward.6} parent=0 // pred_region
    _
  $region9: #{decoder_forward.6} parent=0 // pred_fallthru
    _
  // Predicated region
  $region10: #{decoder_forward.6} parent=0 // pred_check
    _
  $region11: #{decoder_forward.6} parent=0 // pred_check_branch
    %13 = sbr.rel (0) target = $region13
  $region12: #{decoder_forward.6} parent=0 // pred_region
    _
  $region13: #{decoder_forward.6} parent=0 // pred_fallthru
    _
  %v14 = vld [vmem:[%s0] sm:$0xff]
  %v15 = vld [vmem:[%s0 + $0x8] sm:$0xff]
  %v16 = vld [vmem:[%s0 + $0x10] sm:$0xff]
  %v17 = vld [vmem:[%s0 + $0x18] sm:$0xff]
  %v18 = vld [vmem:[%s0 + $0x20] sm:$0xff]
  %v19 = vld [vmem:[%s0 + $0x28] sm:$0xff]
  %v20 = vld [vmem:[%s0 + $0x30] sm:$0xff]
  %v21 = vld [vmem:[%s0 + $0x38] sm:$0xff]
  %v22 = vld [vmem:[%s0 + $0x40] sm:$0xff]
  %v23 = vld [vmem:[%s0 + $0x48] sm:$0xff]
  %v24 = vld [vmem:[%s0 + $0x50] sm:$0xff]
  %v25 = vld [vmem:[%s0 + $0x58] sm:$0xff]
  %v26 = vld [vmem:[%s0 + $0x60] sm:$0x3]
  %v27 = vld [vmem:[%s1] sm:$0xff]
  %v28 = vld [vmem:[%s1 + $0x8] sm:$0xff]
  %v29 = vld [vmem:[%s1 + $0x10] sm:$0xff]
  %v30 = vld [vmem:[%s1 + $0x18] sm:$0xff]
  %v31 = vld [vmem:[%s1 + $0x20] sm:$0xff]
  %v32 = vld [vmem:[%s1 + $0x28] sm:$0xff]
  %v33 = vld [vmem:[%s1 + $0x30] sm:$0xff]
  %v34 = vld [vmem:[%s1 + $0x38] sm:$0xff]
  %v35 = vld [vmem:[%s1 + $0x40] sm:$0xff]
  %v36 = vld [vmem:[%s1 + $0x48] sm:$0xff]
  %v37 = vld [vmem:[%s1 + $0x50] sm:$0xff]
  %v38 = vld [vmem:[%s1 + $0x58] sm:$0xff]
  %v39 = vld [vmem:[%s1 + $0x60] sm:$0xff]
  %v40 = vld [vmem:[%s1 + $0x68] sm:$0xff]
  %v41 = vld [vmem:[%s1 + $0x70] sm:$0xff]
  %v42 = vld [vmem:[%s1 + $0x78] sm:$0xff]
  %v43 = vld [vmem:[%s2] sm:$0x3]
  %v45 = vlaneseq
  %v46 = vshrl.u32 %v45, 7
  %v47 = vsub.s32 0, %v46
  %v48 = vrot.slane %v43, %v47
  %v49 = vlaneseq
  %v50 = vshrl.u32 %v49, 7
  %v51 = vsub.s32 1, %v50
  %v52 = vrot.slane %v43, %v51
  %vm55 = vcmask 523264
  %v57 = vsel %vm55, %v14, 0
  %v60 = vsel %vm55, %v15, 0
  %v63 = vsel %vm55, %v16, 0
  %v66 = vsel %vm55, %v17, 0
  %v69 = vsel %vm55, %v18, 0
  %v72 = vsel %vm55, %v19, 0
  %v75 = vsel %vm55, %v20, 0
  %v78 = vsel %vm55, %v21, 0
  %v81 = vsel %vm55, %v22, 0
  %v84 = vsel %vm55, %v23, 0
  %v87 = vsel %vm55, %v24, 0
  %v90 = vsel %vm55, %v25, 0
  %v93 = vsel %vm55, %v26, 0
  %95 = vmatprep.subr.mxu0 %v28
  %96 = vmatpush1.msra.mxu0 %v27
  %97 = vmatprep.subr.mxu0 %v30
  %98 = vmatpush1.msra.mxu0 %v29
  %99 = vmatprep.subr.mxu0 %v32
  %100 = vmatpush1.msra.mxu0 %v31
  %101 = vmatprep.subr.mxu0 %v34
  %102 = vmatpush1.msra.mxu0 %v33
  %103 = vmatprep.subr.mxu0 %v36
  %104 = vmatpush1.msra.mxu0 %v35
  %105 = vmatprep.subr.mxu0 %v38
  %106 = vmatpush1.msra.mxu0 %v37
  %107 = vmatprep.subr.mxu0 %v40
  %108 = vmatpush1.msra.mxu0 %v39
  %109 = vmatprep.subr.mxu0 %v42
  %110 = vmatpush1.msra.mxu0 %v41
  %111 = vmatprep.subr.mxu0 0.0
  %112 = vmatpush1.msra.mxu0 0.0
  %113 = vmatprep.subr.mxu0 0.0
  %114 = vmatpush1.msra.mxu0 0.0
  %115 = vmatprep.subr.mxu0 0.0
  %116 = vmatpush1.msra.mxu0 0.0
  %117 = vmatprep.subr.mxu0 0.0
  %118 = vmatpush1.msra.mxu0 0.0
  %119 = vmatprep.subr.mxu0 0.0
  %120 = vmatpush1.msra.mxu0 0.0
  %121 = vmatprep.subr.mxu0 0.0
  %122 = vmatpush1.msra.mxu0 0.0
  %123 = vmatprep.subr.mxu0 0.0
  %124 = vmatpush1.msra.mxu0 0.0
  %125 = vmatprep.subr.mxu0 0.0
  %126 = vmatpush1.msra.mxu0 0.0
  %127 = vmatprep.subr.mxu0 0.0
  %128 = vmatpush1.msra.mxu0 0.0
  %129 = vmatprep.subr.mxu0 0.0
  %130 = vmatpush1.msra.mxu0 0.0
  %131 = vmatprep.subr.mxu0 0.0
  %132 = vmatpush1.msra.mxu0 0.0
  %133 = vmatprep.subr.mxu0 0.0
  %134 = vmatpush1.msra.mxu0 0.0
  %135 = vmatprep.subr.mxu0 0.0
  %136 = vmatpush1.msra.mxu0 0.0
  %137 = vmatprep.subr.mxu0 0.0
  %138 = vmatpush1.msra.mxu0 0.0
  %139 = vmatprep.subr.mxu0 0.0
  %140 = vmatpush1.msra.mxu0 0.0
  %141 = vmatprep.subr.mxu0 0.0
  %142 = vmatpush1.msra.mxu0 0.0
  %143 = vmatprep.subr.mxu0 0.0
  %144 = vmatpush1.msra.mxu0 0.0
  %145 = vmatprep.subr.mxu0 0.0
  %146 = vmatpush1.msra.mxu0 0.0
  %147 = vmatprep.subr.mxu0 0.0
  %148 = vmatpush1.msra.mxu0 0.0
  %149 = vmatprep.subr.mxu0 0.0
  %150 = vmatpush1.msra.mxu0 0.0
  %151 = vmatprep.subr.mxu0 0.0
  %152 = vmatpush1.msra.mxu0 0.0
  %153 = vmatprep.subr.mxu0 0.0
  %154 = vmatpush1.msra.mxu0 0.0
  %155 = vmatprep.subr.mxu0 0.0
  %156 = vmatpush1.msra.mxu0 0.0
  %157 = vmatprep.subr.mxu0 0.0
  %158 = vmatpush1.msra.mxu0 0.0
  %159 = vmatprep.mubr.f32.mxu0 0.0
  %160 = vmatmul.mubr.f32.gmra.mrb[0].mxu0 %v57
  %v161 = vpop.f32.mrb[0].mxu0
  %v162 = vadd.f32 %v48, %v161
  %v163 = vpop.f32.mrb[0].mxu0
  %v164 = vadd.f32 %v52, %v163
  %165 = vmatprep.mubr.f32.mxu0 0.0
  %166 = vmatmul.mubr.f32.gmra.mrb[0].mxu0 %v60
  %v167 = vpop.f32.mrb[0].mxu0
  %v168 = vadd.f32 %v48, %v167
  %v169 = vpop.f32.mrb[0].mxu0
  %v170 = vadd.f32 %v52, %v169
  %171 = vmatprep.mubr.f32.mxu0 0.0
  %172 = vmatmul.mubr.f32.gmra.mrb[0].mxu0 %v63
  %v173 = vpop.f32.mrb[0].mxu0
  %v174 = vadd.f32 %v48, %v173
  %v175 = vpop.f32.mrb[0].mxu0
  %v176 = vadd.f32 %v52, %v175
  %177 = vmatprep.mubr.f32.mxu0 0.0
  %178 = vmatmul.mubr.f32.gmra.mrb[0].mxu0 %v66
  %v179 = vpop.f32.mrb[0].mxu0
  %v180 = vadd.f32 %v48, %v179
  %v181 = vpop.f32.mrb[0].mxu0
  %v182 = vadd.f32 %v52, %v181
  %183 = vmatprep.mubr.f32.mxu0 0.0
  %184 = vmatmul.mubr.f32.gmra.mrb[0].mxu0 %v69
  %v185 = vpop.f32.mrb[0].mxu0
  %v186 = vadd.f32 %v48, %v185
  %v187 = vpop.f32.mrb[0].mxu0
  %v188 = vadd.f32 %v52, %v187
  %189 = vmatprep.mubr.f32.mxu0 0.0
  %190 = vmatmul.mubr.f32.gmra.mrb[0].mxu0 %v72
  %v191 = vpop.f32.mrb[0].mxu0
  %v192 = vadd.f32 %v48, %v191
  %v193 = vpop.f32.mrb[0].mxu0
  %v194 = vadd.f32 %v52, %v193
  %195 = vmatprep.mubr.f32.mxu0 0.0
  %196 = vmatmul.mubr.f32.gmra.mrb[0].mxu0 %v75
  %v197 = vpop.f32.mrb[0].mxu0
  %v198 = vadd.f32 %v48, %v197
  %v199 = vpop.f32.mrb[0].mxu0
  %v200 = vadd.f32 %v52, %v199
  %201 = vmatprep.mubr.f32.mxu0 0.0
  %202 = vmatmul.mubr.f32.gmra.mrb[0].mxu0 %v78
  %v203 = vpop.f32.mrb[0].mxu0
  %v204 = vadd.f32 %v48, %v203
  %v205 = vpop.f32.mrb[0].mxu0
  %v206 = vadd.f32 %v52, %v205
  %207 = vmatprep.mubr.f32.mxu0 0.0
  %208 = vmatmul.mubr.f32.gmra.mrb[0].mxu0 %v81
  %v209 = vpop.f32.mrb[0].mxu0
  %v210 = vadd.f32 %v48, %v209
  %v211 = vpop.f32.mrb[0].mxu0
  %v212 = vadd.f32 %v52, %v211
  %213 = vmatprep.mubr.f32.mxu0 0.0
  %214 = vmatmul.mubr.f32.gmra.mrb[0].mxu0 %v84
  %v215 = vpop.f32.mrb[0].mxu0
  %v216 = vadd.f32 %v48, %v215
  %v217 = vpop.f32.mrb[0].mxu0
  %v218 = vadd.f32 %v52, %v217
  %219 = vmatprep.mubr.f32.mxu0 0.0
  %220 = vmatmul.mubr.f32.gmra.mrb[0].mxu0 %v87
  %v221 = vpop.f32.mrb[0].mxu0
  %v222 = vadd.f32 %v48, %v221
  %v223 = vpop.f32.mrb[0].mxu0
  %v224 = vadd.f32 %v52, %v223
  %225 = vmatprep.mubr.f32.mxu0 0.0
  %226 = vmatmul.mubr.f32.gmra.mrb[0].mxu0 %v90
  %v227 = vpop.f32.mrb[0].mxu0
  %v228 = vadd.f32 %v48, %v227
  %v229 = vpop.f32.mrb[0].mxu0
  %v230 = vadd.f32 %v52, %v229
  %231 = vmatprep.mubr.f32.mxu0 0.0
  %232 = vmatmul.mubr.f32.gmra.mrb[0].mxu0 %v93
  %v233 = vpop.f32.mrb[0].mxu0
  %v234 = vadd.f32 %v48, %v233
  %v235 = vpop.f32.mrb[0].mxu0
  %v236 = vadd.f32 %v52, %v235
  %237 = vdwg.mxu0
  %v238 = vmax.f32 %v162, 0.0
  %v239 = vmax.f32 %v164, 0.0
  %v240 = vmax.f32 %v168, 0.0
  %v241 = vmax.f32 %v170, 0.0
  %v242 = vmax.f32 %v174, 0.0
  %v243 = vmax.f32 %v176, 0.0
  %v244 = vmax.f32 %v180, 0.0
  %v245 = vmax.f32 %v182, 0.0
  %v246 = vmax.f32 %v186, 0.0
  %v247 = vmax.f32 %v188, 0.0
  %v248 = vmax.f32 %v192, 0.0
  %v249 = vmax.f32 %v194, 0.0
  %v250 = vmax.f32 %v198, 0.0
  %v251 = vmax.f32 %v200, 0.0
  %v252 = vmax.f32 %v204, 0.0
  %v253 = vmax.f32 %v206, 0.0
  %v254 = vmax.f32 %v210, 0.0
  %v255 = vmax.f32 %v212, 0.0
  %v256 = vmax.f32 %v216, 0.0
  %v257 = vmax.f32 %v218, 0.0
  %v258 = vmax.f32 %v222, 0.0
  %v259 = vmax.f32 %v224, 0.0
  %v260 = vmax.f32 %v228, 0.0
  %v261 = vmax.f32 %v230, 0.0
  %v262 = vmax.f32 %v234, 0.0
  %v263 = vmax.f32 %v236, 0.0
  %264 = vst [vmem:[%s3] sm:$0xff] %v238
  %265 = vst [vmem:[%s3 + $0x8] sm:$0xff] %v239
  %266 = vst [vmem:[%s3 + $0x10] sm:$0xff] %v240
  %267 = vst [vmem:[%s3 + $0x18] sm:$0xff] %v241
  %268 = vst [vmem:[%s3 + $0x20] sm:$0xff] %v242
  %269 = vst [vmem:[%s3 + $0x28] sm:$0xff] %v243
  %270 = vst [vmem:[%s3 + $0x30] sm:$0xff] %v244
  %271 = vst [vmem:[%s3 + $0x38] sm:$0xff] %v245
  %272 = vst [vmem:[%s3 + $0x40] sm:$0xff] %v246
  %273 = vst [vmem:[%s3 + $0x48] sm:$0xff] %v247
  %274 = vst [vmem:[%s3 + $0x50] sm:$0xff] %v248
  %275 = vst [vmem:[%s3 + $0x58] sm:$0xff] %v249
  %276 = vst [vmem:[%s3 + $0x60] sm:$0xff] %v250
  %277 = vst [vmem:[%s3 + $0x68] sm:$0xff] %v251
  %278 = vst [vmem:[%s3 + $0x70] sm:$0xff] %v252
  %279 = vst [vmem:[%s3 + $0x78] sm:$0xff] %v253
  %280 = vst [vmem:[%s3 + $0x80] sm:$0xff] %v254
  %281 = vst [vmem:[%s3 + $0x88] sm:$0xff] %v255
  %282 = vst [vmem:[%s3 + $0x90] sm:$0xff] %v256
  %283 = vst [vmem:[%s3 + $0x98] sm:$0xff] %v257
  %284 = vst [vmem:[%s3 + $0xa0] sm:$0xff] %v258
  %285 = vst [vmem:[%s3 + $0xa8] sm:$0xff] %v259
  %286 = vst [vmem:[%s3 + $0xb0] sm:$0xff] %v260
  %287 = vst [vmem:[%s3 + $0xb8] sm:$0xff] %v261
  %288 = vst [vmem:[%s3 + $0xc0] sm:$0x3] %v262
  %289 = vst [vmem:[%s3 + $0xc8] sm:$0x3] %v263
  // Predicated region
  $region14: #{decoder_forward.6} parent=0 // pred_check
    _
  $region15: #{decoder_forward.6} parent=0 // pred_check_branch
    %291 = sbr.rel (0) target = $region17
  $region16: #{decoder_forward.6} parent=0 // pred_region
    _
  $region17: #{decoder_forward.6} parent=0 // pred_fallthru
    _
  // Predicated region
  $region18: #{decoder_forward.6} parent=0 // pred_check
    _
  $region19: #{decoder_forward.6} parent=0 // pred_check_branch
    %293 = sbr.rel (0) target = $region21
  $region20: #{decoder_forward.6} parent=0 // pred_region
    _
  $region21: #{decoder_forward.6} parent=0 // pred_fallthru
    _

// kernel: decoder_forward.5
$region0: #{decoder_forward.5}
  #allocation0 [shape = 'u32[]', space=smem, size = 0x4, offset = 0x4, fixed_abs, tag = 'smem constant byte address 0x4 - core index']
  #allocation1 [shape = 'u32[144,128]{1,0:T(1,128)}', space=vmem, size = 0x12000, scoped, tag = 'internal scratch']
  #allocation2 [shape = 'f32[2,256]{1,0:T(2,128)}', space=vmem, size = 0x800, scoped, tag = 'scratch operand']
  %s0 = inlined_call_operand.hbm [shape: f32[2,32], index: 0, kind: input, shape index: {}]
  %s1 = inlined_call_operand.hbm [shape: f32[32,256], index: 1, kind: input, shape index: {}]
  %s2 = inlined_call_operand.hbm [shape: f32[1,256], index: 2, kind: input, shape index: {}]
  %s3 = inlined_call_operand.hbm [shape: f32[256,3200], index: 3, kind: input, shape index: {}]
  %s4 = inlined_call_operand.hbm [shape: f32[1,3200], index: 4, kind: input, shape index: {}]
  %s5 = inlined_call_operand.vmem [shape: f32[2,3200], index: 5, kind: output, shape index: {}]
  %s6 = sld [smem:[#allocation0]]
  $region77: #{decoder_forward.5} parent=0
    _
  %s8 = ssub.s32 1, %s6
  %s9 = scalar_select 0, %s8, %s6
  $region1: #{decoder_forward.5} parent=0
    #allocation3 [shape = 'u8[1024]{0}', space=vmem, size = 0x400, scoped, tag = 'input window, operand 0, single buffered']
    #allocation4 [shape = 's32[2]{0}', space=sflag, size = 0x8, scoped, tag = 'scoped memory for decoder_forward.5']
    #allocation5 [shape = 'u8[32768]{0}', space=vmem, size = 0x8000, scoped, tag = 'input window, operand 1, single buffered']
    #allocation6 [shape = 's32[1]{0}', space=sflag, size = 0x4, scoped, tag = 'scoped memory for decoder_forward.5']
    #allocation7 [shape = 'u8[1024]{0}', space=vmem, size = 0x400, scoped, tag = 'input window, operand 2, single buffered']
    #allocation8 [shape = 'u8[1310720]{0}', space=vmem, size = 0x140000, scoped, tag = 'input window, operand 3']
    #allocation9 [shape = 's32[2]{0}', space=sflag, size = 0x8, scoped, tag = 'scoped memory for decoder_forward.5']
    #allocation10 [shape = 'u8[5120]{0}', space=vmem, size = 0x1400, scoped, tag = 'input window, operand 4']
    %10 = vsyncpa [#allocation4], 0
    %11 = vsyncpa [#allocation6], 0
    %12 = vsyncpa [#allocation9], 0
    %s13 = scalar_lea.sflag [#allocation9], 1
    %14 = vsyncpa %s13, 0
    loop: start=0, step=1, limit=7
    $region2: #{decoder_forward.5} parent=1 // loop_pre_header
      _
    $region3: #{decoder_forward.5} parent=1 // loop_header
      %s16 = sphi 0, %s20
      %p17 = scmp.ge.s32.totalorder %s16, 7
      %s24 = sphi 0, %s24
      %s26 = sphi 0, %s24
      %s27 = sphi 0, %s26
      %s41 = sphi 0, %s27
      %s45 = sphi 0, %s45
      %s47 = sphi 0, %s45
      %s48 = sphi 0, %s47
      %s62 = sphi 0, %s48
      %s66 = sphi 0, %s66
      %s68 = sphi 0, %s66
      %s69 = sphi 0, %s68
      %s83 = sphi 0, %s69
      %s89 = sphi 0, %s91
      %s92 = sphi 0, %s89
      %s93 = sphi 0, %s92
      %s109 = sphi 0, %s93
      %s115 = sphi 0, %s117
      %s118 = sphi 0, %s115
      %s119 = sphi 0, %s118
      %s135 = sphi 0, %s119
      %s141 = sphi 0, %s143
      %s144 = sphi 0, %s141
      %s145 = sphi 0, %s144
      %s161 = sphi 0, %s145
    $region4: #{decoder_forward.5} parent=1 // loop_header_branch
      %19 = sbr.rel (%p17) target = $region8
    $region5: #{decoder_forward.5} parent=1 // loop_body
      %s21 = ssub.s32 %s16, 1
      %s22 = ssub.s32 %s16, 2
      %s23 = sadd.s32 %s16, 1
      %s25 = sadd.s32 %s24, 1
      %p28 = scmp.eq.s32.totalorder %s16, 4
      %p29 = scmp.ne.s32.totalorder %s24, %s26
      %p30 = scmp.eq.s32.totalorder %s16, 0
      %p31 = por %p29, %p30
      %p32 = scmp.ne.s32.totalorder %s24, %s26
      %p33 = scmp.eq.s32.totalorder %s21, 4
      %p34 = por %p32, %p33
      %p35 = scmp.ne.s32.totalorder %s26, %s27
      %p36 = scmp.eq.s32.totalorder %s21, 0
      %p37 = por %p35, %p36
      %p38 = scmp.ne.s32.totalorder %s26, %s27
      %p39 = scmp.eq.s32.totalorder %s22, 4
      %p40 = por %p38, %p39
      %p42 = scmp.ne.s32.totalorder %s27, %s41
      %p43 = scmp.eq.s32.totalorder %s22, 0
      %p44 = por %p42, %p43
      %s46 = sadd.s32 %s45, 1
      %p49 = scmp.eq.s32.totalorder %s16, 4
      %p50 = scmp.ne.s32.totalorder %s45, %s47
      %p51 = scmp.eq.s32.totalorder %s16, 0
      %p52 = por %p50, %p51
      %p53 = scmp.ne.s32.totalorder %s45, %s47
      %p54 = scmp.eq.s32.totalorder %s21, 4
      %p55 = por %p53, %p54
      %p56 = scmp.ne.s32.totalorder %s47, %s48
      %p57 = scmp.eq.s32.totalorder %s21, 0
      %p58 = por %p56, %p57
      %p59 = scmp.ne.s32.totalorder %s47, %s48
      %p60 = scmp.eq.s32.totalorder %s22, 4
      %p61 = por %p59, %p60
      %p63 = scmp.ne.s32.totalorder %s48, %s62
      %p64 = scmp.eq.s32.totalorder %s22, 0
      %p65 = por %p63, %p64
      %s67 = sadd.s32 %s66, 1
      %p70 = scmp.eq.s32.totalorder %s16, 4
      %p71 = scmp.ne.s32.totalorder %s66, %s68
      %p72 = scmp.eq.s32.totalorder %s16, 0
      %p73 = por %p71, %p72
      %p74 = scmp.ne.s32.totalorder %s66, %s68
      %p75 = scmp.eq.s32.totalorder %s21, 4
      %p76 = por %p74, %p75
      %p77 = scmp.ne.s32.totalorder %s68, %s69
      %p78 = scmp.eq.s32.totalorder %s21, 0
      %p79 = por %p77, %p78
      %p80 = scmp.ne.s32.totalorder %s68, %s69
      %p81 = scmp.eq.s32.totalorder %s22, 4
      %p82 = por %p80, %p81
      %p84 = scmp.ne.s32.totalorder %s69, %s83
      %p85 = scmp.eq.s32.totalorder %s22, 0
      %p86 = por %p84, %p85
      %s87 = ssub.s32 %s16, %s23
      %p88 = scmp.eq.s32.totalorder %s87, 0
      %s90 = sadd.s32 %s89, 1
      %s91 = scalar_select %p88, %s89, %s90
      %p94 = pneg %p88
      %p95 = scmp.eq.s32.totalorder %s16, 4
      %p96 = por %p94, %p95
      %p97 = scmp.ne.s32.totalorder %s89, %s92
      %p98 = scmp.eq.s32.totalorder %s16, 0
      %p99 = por %p97, %p98
      %p100 = scmp.ne.s32.totalorder %s89, %s92
      %p101 = scmp.eq.s32.totalorder %s21, 4
      %p102 = por %p100, %p101
      %p103 = scmp.ne.s32.totalorder %s92, %s93
      %p104 = scmp.eq.s32.totalorder %s21, 0
      %p105 = por %p103, %p104
      %p106 = scmp.ne.s32.totalorder %s92, %s93
      %p107 = scmp.eq.s32.totalorder %s22, 4
      %p108 = por %p106, %p107
      %p110 = scmp.ne.s32.totalorder %s93, %s109
      %p111 = scmp.eq.s32.totalorder %s22, 0
      %p112 = por %p110, %p111
      %s113 = ssub.s32 %s16, %s23
      %p114 = scmp.eq.s32.totalorder %s113, 0
      %s116 = sadd.s32 %s115, 1
      %s117 = scalar_select %p114, %s115, %s116
      %p120 = pneg %p114
      %p121 = scmp.eq.s32.totalorder %s16, 4
      %p122 = por %p120, %p121
      %p123 = scmp.ne.s32.totalorder %s115, %s118
      %p124 = scmp.eq.s32.totalorder %s16, 0
      %p125 = por %p123, %p124
      %p126 = scmp.ne.s32.totalorder %s115, %s118
      %p127 = scmp.eq.s32.totalorder %s21, 4
      %p128 = por %p126, %p127
      %p129 = scmp.ne.s32.totalorder %s118, %s119
      %p130 = scmp.eq.s32.totalorder %s21, 0
      %p131 = por %p129, %p130
      %p132 = scmp.ne.s32.totalorder %s118, %s119
      %p133 = scmp.eq.s32.totalorder %s22, 4
      %p134 = por %p132, %p133
      %p136 = scmp.ne.s32.totalorder %s119, %s135
      %p137 = scmp.eq.s32.totalorder %s22, 0
      %p138 = por %p136, %p137
      %s139 = ssub.s32 %s16, %s23
      %p140 = scmp.eq.s32.totalorder %s139, 0
      %s142 = sadd.s32 %s141, 1
      %s143 = scalar_select %p140, %s141, %s142
      %p146 = pneg %p140
      %p147 = scmp.eq.s32.totalorder %s16, 4
      %p148 = por %p146, %p147
      %p149 = scmp.ne.s32.totalorder %s141, %s144
      %p150 = scmp.eq.s32.totalorder %s16, 0
      %p151 = por %p149, %p150
      %p152 = scmp.ne.s32.totalorder %s141, %s144
      %p153 = scmp.eq.s32.totalorder %s21, 4
      %p154 = por %p152, %p153
      %p155 = scmp.ne.s32.totalorder %s144, %s145
      %p156 = scmp.eq.s32.totalorder %s21, 0
      %p157 = por %p155, %p156
      %p158 = scmp.ne.s32.totalorder %s144, %s145
      %p159 = scmp.eq.s32.totalorder %s22, 4
      %p160 = por %p158, %p159
      %p162 = scmp.ne.s32.totalorder %s145, %s161
      %p163 = scmp.eq.s32.totalorder %s22, 0
      %p164 = por %p162, %p163
      %p165 = scmp.le.s32.totalorder 1, %s16
      %p166 = scmp.lt.s32.totalorder %s16, 6
      %p167 = pnand %p165, %p166
      %p168 = pneg %p167
      // Predicated region
      $region9: #{decoder_forward.5} parent=5 // pred_check
        _
      $region10: #{decoder_forward.5} parent=5 // pred_check_branch
        %170 = sbr.rel (%p167) target = $region12
      $region11: #{decoder_forward.5} parent=5 // pred_region
        %s171 = ssub.s32 %s16, 1
        // Predicated region
        $region13: #{decoder_forward.5} parent=11 // pred_check
          %p172 = pneg %p37
        $region14: #{decoder_forward.5} parent=11 // pred_check_branch
          %174 = sbr.rel (%p172) target = $region16
        $region15: #{decoder_forward.5} parent=11 // pred_region
          %s176 = ssub.s32 32, 32
          %177 = vsyncadd [#allocation4], %s176
          %s179 = sshll.u32 [#allocation3], 4
          %s180 = int_to_ptr.vmem [resolvable:$true] %s179
          %182 = dma.hbm_to_vmem [thread:$0]  %s0, 32, %s180, [#allocation4]
        $region16: #{decoder_forward.5} parent=11 // pred_fallthru
          _
        // Predicated region
        $region17: #{decoder_forward.5} parent=11 // pred_check
          %p183 = pneg %p58
        $region18: #{decoder_forward.5} parent=11 // pred_check_branch
          %185 = sbr.rel (%p183) target = $region20
        $region19: #{decoder_forward.5} parent=11 // pred_region
          %s187 = ssub.s32 1024, 1024
          %188 = vsyncadd [#allocation6], %s187
          %s189 = sshll.u32 [#allocation5], 4
          %s190 = int_to_ptr.vmem [resolvable:$true] %s189
          %195 = dma.hbm_to_vmem [thread:$0]  %s1, 1024, %s190, [#allocation6], 256, 256, 16
        $region20: #{decoder_forward.5} parent=11 // pred_fallthru
          _
        // Predicated region
        $region21: #{decoder_forward.5} parent=11 // pred_check
          %p196 = pneg %p79
        $region22: #{decoder_forward.5} parent=11 // pred_check_branch
          %198 = sbr.rel (%p196) target = $region24
        $region23: #{decoder_forward.5} parent=11 // pred_region
          %s200 = ssub.s32 32, 32
          %201 = vsyncadd [#allocation6], %s200
          %s203 = sshll.u32 [#allocation7], 4
          %s204 = int_to_ptr.vmem [resolvable:$true] %s203
          %206 = dma.hbm_to_vmem [thread:$0]  %s2, 32, %s204, [#allocation6]
        $region24: #{decoder_forward.5} parent=11 // pred_fallthru
          _
      $region12: #{decoder_forward.5} parent=5 // pred_fallthru
        _
      %p207 = scmp.lt.s32.totalorder %s16, 5
      // Predicated region
      $region25: #{decoder_forward.5} parent=5 // pred_check
        %p208 = pneg %p207
      $region26: #{decoder_forward.5} parent=5 // pred_check_branch
        %210 = sbr.rel (%p208) target = $region28
      $region27: #{decoder_forward.5} parent=5 // pred_region
        // Predicated region
        $region29: #{decoder_forward.5} parent=27 // pred_check
          %p211 = pneg %p99
        $region30: #{decoder_forward.5} parent=27 // pred_check_branch
          %213 = sbr.rel (%p211) target = $region32
        $region31: #{decoder_forward.5} parent=27 // pred_region
          %s214 = sand.u32 %s16, 1
          %s215 = scalar_lea.sflag [#allocation9], %s214
          %s216 = sand.u32 %s89, 1
          %s217 = smul.addr %s216, 1280
          %s218 = scalar_lea.vmem [#allocation8], %s217
          %s219 = smul.u32 5, %s16
          %s221 = ssub.s32 20480, 20480
          %222 = vsyncadd %s215, %s221
          %s223 = smul.addr %s219, 128
          %s224 = scalar_lea.hbm %s3, %s223
          %s225 = sshll.u32 %s218, 4
          %s226 = int_to_ptr.vmem [resolvable:$true] %s225
          %231 = dma.hbm_to_vmem [thread:$0]  %s224, 20480, %s226, %s215, 3200, 640, 40
        $region32: #{decoder_forward.5} parent=27 // pred_fallthru
          _
        // Predicated region
        $region33: #{decoder_forward.5} parent=27 // pred_check
          %p232 = pneg %p125
        $region34: #{decoder_forward.5} parent=27 // pred_check_branch
          %234 = sbr.rel (%p232) target = $region36
        $region35: #{decoder_forward.5} parent=27 // pred_region
          %s235 = sand.u32 %s16, 1
          %s236 = scalar_lea.sflag [#allocation9], %s235
          %s237 = sand.u32 %s115, 1
          %s238 = smul.addr %s237, 5
          %s239 = scalar_lea.vmem [#allocation10], %s238
          %s240 = smul.u32 5, %s16
          %s242 = ssub.s32 80, 80
          %243 = vsyncadd %s236, %s242
          %s244 = smul.addr %s240, 16
          %s245 = scalar_lea.hbm %s4, %s244
          %s247 = sshll.u32 %s239, 4
          %s248 = int_to_ptr.vmem [resolvable:$true] %s247
          %250 = dma.hbm_to_vmem [thread:$0]  %s245, 80, %s248, %s236
        $region36: #{decoder_forward.5} parent=27 // pred_fallthru
          _
      $region28: #{decoder_forward.5} parent=5 // pred_fallthru
        _
      %p251 = scmp.le.s32.totalorder 1, %s16
      %p252 = scmp.lt.s32.totalorder %s16, 6
      %p253 = pnand %p251, %p252
      %p254 = pneg %p253
      // Predicated region
      $region37: #{decoder_forward.5} parent=5 // pred_check
        _
      $region38: #{decoder_forward.5} parent=5 // pred_check_branch
        %256 = sbr.rel (%p253) target = $region40
      $region39: #{decoder_forward.5} parent=5 // pred_region
        %s257 = ssub.s32 %s16, 1
        // Predicated region
        $region41: #{decoder_forward.5} parent=39 // pred_check
          %p258 = pneg %p37
        $region42: #{decoder_forward.5} parent=39 // pred_check_branch
          %260 = sbr.rel (%p258) target = $region44
        $region43: #{decoder_forward.5} parent=39 // pred_region
          %261 = dma.done [#allocation4], 32
        $region44: #{decoder_forward.5} parent=39 // pred_fallthru
          _
        // Predicated region
        $region45: #{decoder_forward.5} parent=39 // pred_check
          %p262 = pneg %p58
        $region46: #{decoder_forward.5} parent=39 // pred_check_branch
          %264 = sbr.rel (%p262) target = $region48
        $region47: #{decoder_forward.5} parent=39 // pred_region
          %265 = dma.done [#allocation6], 1024
        $region48: #{decoder_forward.5} parent=39 // pred_fallthru
          _
        // Predicated region
        $region49: #{decoder_forward.5} parent=39 // pred_check
          %p266 = pneg %p79
        $region50: #{decoder_forward.5} parent=39 // pred_check_branch
          %268 = sbr.rel (%p266) target = $region52
        $region51: #{decoder_forward.5} parent=39 // pred_region
          %269 = dma.done [#allocation6], 32
        $region52: #{decoder_forward.5} parent=39 // pred_fallthru
          _
        %s270 = sand.u32 %s21, 1
        %s271 = scalar_lea.sflag [#allocation9], %s270
        %s272 = sand.u32 %s92, 1
        %s273 = smul.addr %s272, 1280
        %s274 = scalar_lea.vmem [#allocation8], %s273
        // Predicated region
        $region53: #{decoder_forward.5} parent=39 // pred_check
          %p275 = pneg %p105
        $region54: #{decoder_forward.5} parent=39 // pred_check_branch
          %277 = sbr.rel (%p275) target = $region56
        $region55: #{decoder_forward.5} parent=39 // pred_region
          %278 = dma.done %s271, 20480
        $region56: #{decoder_forward.5} parent=39 // pred_fallthru
          _
        %s279 = sand.u32 %s21, 1
        %s280 = scalar_lea.sflag [#allocation9], %s279
        %s281 = sand.u32 %s118, 1
        %s282 = smul.addr %s281, 5
        %s283 = scalar_lea.vmem [#allocation10], %s282
        // Predicated region
        $region57: #{decoder_forward.5} parent=39 // pred_check
          %p284 = pneg %p131
        $region58: #{decoder_forward.5} parent=39 // pred_check_branch
          %286 = sbr.rel (%p284) target = $region60
        $region59: #{decoder_forward.5} parent=39 // pred_region
          %287 = dma.done %s280, 80
        $region60: #{decoder_forward.5} parent=39 // pred_fallthru
          _
        %p288 = pneg %p37
        %p289 = pneg %p34
        %p290 = pneg %p58
        %p291 = pneg %p55
        %p292 = pneg %p79
        %p293 = pneg %p76
        %s294 = sand.u32 %s21, 1
        %s295 = scalar_lea.sflag [#allocation9], %s294
        %s296 = sand.u32 %s92, 1
        %s297 = smul.addr %s296, 1280
        %s298 = scalar_lea.vmem [#allocation8], %s297
        %p299 = pneg %p105
        %p300 = pneg %p102
        %s301 = sand.u32 %s21, 1
        %s302 = scalar_lea.sflag [#allocation9], %s301
        %s303 = sand.u32 %s118, 1
        %s304 = smul.addr %s303, 5
        %s305 = scalar_lea.vmem [#allocation10], %s304
        %p306 = pneg %p131
        %p307 = pneg %p128
        %p308 = pneg %p157
        %p309 = pneg %p154
        %s310 = smul.u32 5, %s21
        %p311 = scmp.lt.s32.totalorder %s310, 24
        %s312 = scalar_select %p311, %s310, 24
        %s313 = smul.addr %s312, 2
        %s314 = scalar_lea.vmem %s5, %s313
        %s315 = smul.u32 5, %s21
        %s316 = smul.u32 5, %s21
        %s317 = smul.u32 5, %s21
        %p318 = scmp.lt.s32.totalorder %s317, 24
        %s319 = scalar_select %p318, %s317, 24
        %s320 = smul.addr %s319, 2
        %s321 = scalar_lea.vmem %s5, %s320
        %s322 = smul.u32 5, %s21
        %p323 = scmp.eq.s32.totalorder %s21, 0
        // Predicated region
        $region61: #{decoder_forward.5} parent=39 // pred_check
          %p324 = pneg %p323
        $region62: #{decoder_forward.5} parent=39 // pred_check_branch
          %326 = sbr.rel (%p324) target = $region64
        $region63: #{decoder_forward.5} parent=39 // pred_region
          %v327 = vld [vmem:[#allocation3] sm:$0x3]
          %v328 = vld [vmem:[#allocation5] sm:$0xff]
          %v329 = vld [vmem:[#allocation5 + $0x8] sm:$0xff]
          %v330 = vld [vmem:[#allocation5 + $0x10] sm:$0xff]
          %v331 = vld [vmem:[#allocation5 + $0x18] sm:$0xff]
          %v332 = vld [vmem:[#allocation5 + $0x20] sm:$0xff]
          %v333 = vld [vmem:[#allocation5 + $0x28] sm:$0xff]
          %v334 = vld [vmem:[#allocation5 + $0x30] sm:$0xff]
          %v335 = vld [vmem:[#allocation5 + $0x38] sm:$0xff]
          %v336 = vld [vmem:[#allocation7] sm:$0x3]
          %v338 = vlaneseq
          %v339 = vshrl.u32 %v338, 7
          %v340 = vsub.s32 0, %v339
          %v341 = vrot.slane %v336, %v340
          %v342 = vlaneseq
          %v343 = vshrl.u32 %v342, 7
          %v344 = vsub.s32 1, %v343
          %v345 = vrot.slane %v336, %v344
          %vm348 = vcmask 261120
          %v350 = vsel %vm348, %v327, 0
          %352 = vmatprep.subr.mxu0 %v329
          %353 = vmatpush1.msra.mxu0 %v328
          %354 = vmatprep.subr.mxu0 %v331
          %355 = vmatpush1.msra.mxu0 %v330
          %356 = vmatprep.subr.mxu0 %v333
          %357 = vmatpush1.msra.mxu0 %v332
          %358 = vmatprep.subr.mxu0 %v335
          %359 = vmatpush1.msra.mxu0 %v334
          %360 = vmatprep.subr.mxu0 0.0
          %361 = vmatpush1.msra.mxu0 0.0
          %362 = vmatprep.subr.mxu0 0.0
          %363 = vmatpush1.msra.mxu0 0.0
          %364 = vmatprep.subr.mxu0 0.0
          %365 = vmatpush1.msra.mxu0 0.0
          %366 = vmatprep.subr.mxu0 0.0
          %367 = vmatpush1.msra.mxu0 0.0
          %368 = vmatprep.subr.mxu0 0.0
          %369 = vmatpush1.msra.mxu0 0.0
          %370 = vmatprep.subr.mxu0 0.0
          %371 = vmatpush1.msra.mxu0 0.0
          %372 = vmatprep.subr.mxu0 0.0
          %373 = vmatpush1.msra.mxu0 0.0
          %374 = vmatprep.subr.mxu0 0.0
          %375 = vmatpush1.msra.mxu0 0.0
          %376 = vmatprep.subr.mxu0 0.0
          %377 = vmatpush1.msra.mxu0 0.0
          %378 = vmatprep.subr.mxu0 0.0
          %379 = vmatpush1.msra.mxu0 0.0
          %380 = vmatprep.subr.mxu0 0.0
          %381 = vmatpush1.msra.mxu0 0.0
          %382 = vmatprep.subr.mxu0 0.0
          %383 = vmatpush1.msra.mxu0 0.0
          %384 = vmatprep.subr.mxu0 0.0
          %385 = vmatpush1.msra.mxu0 0.0
          %386 = vmatprep.subr.mxu0 0.0
          %387 = vmatpush1.msra.mxu0 0.0
          %388 = vmatprep.subr.mxu0 0.0
          %389 = vmatpush1.msra.mxu0 0.0
          %390 = vmatprep.subr.mxu0 0.0
          %391 = vmatpush1.msra.mxu0 0.0
          %392 = vmatprep.subr.mxu0 0.0
          %393 = vmatpush1.msra.mxu0 0.0
          %394 = vmatprep.subr.mxu0 0.0
          %395 = vmatpush1.msra.mxu0 0.0
          %396 = vmatprep.subr.mxu0 0.0
          %397 = vmatpush1.msra.mxu0 0.0
          %398 = vmatprep.subr.mxu0 0.0
          %399 = vmatpush1.msra.mxu0 0.0
          %400 = vmatprep.subr.mxu0 0.0
          %401 = vmatpush1.msra.mxu0 0.0
          %402 = vmatprep.subr.mxu0 0.0
          %403 = vmatpush1.msra.mxu0 0.0
          %404 = vmatprep.subr.mxu0 0.0
          %405 = vmatpush1.msra.mxu0 0.0
          %406 = vmatprep.subr.mxu0 0.0
          %407 = vmatpush1.msra.mxu0 0.0
          %408 = vmatprep.subr.mxu0 0.0
          %409 = vmatpush1.msra.mxu0 0.0
          %410 = vmatprep.subr.mxu0 0.0
          %411 = vmatpush1.msra.mxu0 0.0
          %412 = vmatprep.subr.mxu0 0.0
          %413 = vmatpush1.msra.mxu0 0.0
          %414 = vmatprep.subr.mxu0 0.0
          %415 = vmatpush1.msra.mxu0 0.0
          %416 = vmatprep.mubr.f32.mxu0 0.0
          %417 = vmatmul.mubr.f32.gmra.mrb[0].mxu0 %v350
          %v418 = vpop.f32.mrb[0].mxu0
          %v419 = vadd.f32 %v341, %v418
          %v420 = vpop.f32.mrb[0].mxu0
          %v421 = vadd.f32 %v345, %v420
          %422 = vdwg.mxu0
          %v423 = vmax.f32 %v419, 0.0
          %v424 = vmax.f32 %v421, 0.0
          %v427 = vcombine.low %v423, %v424
          %v429 = vunpack.c.l.s4 1983009808
          %v430 = vunpack.c.0.s8 %v429
          %v431 = vlaneseq
          %v432 = vshrl.u32 %v431, 7
          %v433 = vsub.s32 %v430, %v432
          %v434 = vrot.slane %v427, %v433
          %436 = vst [vmem:[#allocation2] sm:$0xf] %v434
        $region64: #{decoder_forward.5} parent=39 // pred_fallthru
          _
        %v437 = vld [vmem:[#allocation2] sm:$0xf]
        %v438 = vld [vmem:[%s274] sm:$0xff]
        %v439 = vld [vmem:[%s274 + $0x8] sm:$0xff]
        %v440 = vld [vmem:[%s274 + $0x10] sm:$0xff]
        %v441 = vld [vmem:[%s274 + $0x18] sm:$0xff]
        %v442 = vld [vmem:[%s274 + $0x20] sm:$0xff]
        %v443 = vld [vmem:[%s274 + $0x28] sm:$0xff]
        %v444 = vld [vmem:[%s274 + $0x30] sm:$0xff]
        %v445 = vld [vmem:[%s274 + $0x38] sm:$0xff]
        %v446 = vld [vmem:[%s274 + $0x40] sm:$0xff]
        %v447 = vld [vmem:[%s274 + $0x48] sm:$0xff]
        %v448 = vld [vmem:[%s274 + $0x50] sm:$0xff]
        %v449 = vld [vmem:[%s274 + $0x58] sm:$0xff]
        %v450 = vld [vmem:[%s274 + $0x60] sm:$0xff]
        %v451 = vld [vmem:[%s274 + $0x68] sm:$0xff]
        %v452 = vld [vmem:[%s274 + $0x70] sm:$0xff]
        %v453 = vld [vmem:[%s274 + $0x78] sm:$0xff]
        %v454 = vld [vmem:[%s274 + $0x80] sm:$0xff]
        %v455 = vld [vmem:[%s274 + $0x88] sm:$0xff]
        %v456 = vld [vmem:[%s274 + $0x90] sm:$0xff]
        %v457 = vld [vmem:[%s274 + $0x98] sm:$0xff]
        %v458 = vld [vmem:[%s274 + $0xa0] sm:$0xff]
        %v459 = vld [vmem:[%s274 + $0xa8] sm:$0xff]
        %v460 = vld [vmem:[%s274 + $0xb0] sm:$0xff]
        %v461 = vld [vmem:[%s274 + $0xb8] sm:$0xff]
        %v462 = vld [vmem:[%s274 + $0xc0] sm:$0xff]
        %v463 = vld [vmem:[%s274 + $0xc8] sm:$0xff]
        %v464 = vld [vmem:[%s274 + $0xd0] sm:$0xff]
        %v465 = vld [vmem:[%s274 + $0xd8] sm:$0xff]
        %v466 = vld [vmem:[%s274 + $0xe0] sm:$0xff]
        %v467 = vld [vmem:[%s274 + $0xe8] sm:$0xff]
        %v468 = vld [vmem:[%s274 + $0xf0] sm:$0xff]
        %v469 = vld [vmem:[%s274 + $0xf8] sm:$0xff]
        %v470 = vld [vmem:[%s274 + $0x100] sm:$0xff]
        %v471 = vld [vmem:[%s274 + $0x108] sm:$0xff]
        %v472 = vld [vmem:[%s274 + $0x110] sm:$0xff]
        %v473 = vld [vmem:[%s274 + $0x118] sm:$0xff]
        %v474 = vld [vmem:[%s274 + $0x120] sm:$0xff]
        %v475 = vld [vmem:[%s274 + $0x128] sm:$0xff]
        %v476 = vld [vmem:[%s274 + $0x130] sm:$0xff]
        %v477 = vld [vmem:[%s274 + $0x138] sm:$0xff]
        %v478 = vld [vmem:[%s274 + $0x140] sm:$0xff]
        %v479 = vld [vmem:[%s274 + $0x148] sm:$0xff]
        %v480 = vld [vmem:[%s274 + $0x150] sm:$0xff]
        %v481 = vld [vmem:[%s274 + $0x158] sm:$0xff]
        %v482 = vld [vmem:[%s274 + $0x160] sm:$0xff]
        %v483 = vld [vmem:[%s274 + $0x168] sm:$0xff]
        %v484 = vld [vmem:[%s274 + $0x170] sm:$0xff]
        %v485 = vld [vmem:[%s274 + $0x178] sm:$0xff]
        %v486 = vld [vmem:[%s274 + $0x180] sm:$0xff]
        %v487 = vld [vmem:[%s274 + $0x188] sm:$0xff]
        %v488 = vld [vmem:[%s274 + $0x190] sm:$0xff]
        %v489 = vld [vmem:[%s274 + $0x198] sm:$0xff]
        %v490 = vld [vmem:[%s274 + $0x1a0] sm:$0xff]
        %v491 = vld [vmem:[%s274 + $0x1a8] sm:$0xff]
        %v492 = vld [vmem:[%s274 + $0x1b0] sm:$0xff]
        %v493 = vld [vmem:[%s274 + $0x1b8] sm:$0xff]
        %v494 = vld [vmem:[%s274 + $0x1c0] sm:$0xff]
        %v495 = vld [vmem:[%s274 + $0x1c8] sm:$0xff]
        %v496 = vld [vmem:[%s274 + $0x1d0] sm:$0xff]
        %v497 = vld [vmem:[%s274 + $0x1d8] sm:$0xff]
        %v498 = vld [vmem:[%s274 + $0x1e0] sm:$0xff]
        %v499 = vld [vmem:[%s274 + $0x1e8] sm:$0xff]
        %v500 = vld [vmem:[%s274 + $0x1f0] sm:$0xff]
        %v501 = vld [vmem:[%s274 + $0x1f8] sm:$0xff]
        %v502 = vld [vmem:[%s274 + $0x200] sm:$0xff]
        %v503 = vld [vmem:[%s274 + $0x208] sm:$0xff]
        %v504 = vld [vmem:[%s274 + $0x210] sm:$0xff]
        %v505 = vld [vmem:[%s274 + $0x218] sm:$0xff]
        %v506 = vld [vmem:[%s274 + $0x220] sm:$0xff]
        %v507 = vld [vmem:[%s274 + $0x228] sm:$0xff]
        %v508 = vld [vmem:[%s274 + $0x230] sm:$0xff]
        %v509 = vld [vmem:[%s274 + $0x238] sm:$0xff]
        %v510 = vld [vmem:[%s274 + $0x240] sm:$0xff]
        %v511 = vld [vmem:[%s274 + $0x248] sm:$0xff]
        %v512 = vld [vmem:[%s274 + $0x250] sm:$0xff]
        %v513 = vld [vmem:[%s274 + $0x258] sm:$0xff]
        %v514 = vld [vmem:[%s274 + $0x260] sm:$0xff]
        %v515 = vld [vmem:[%s274 + $0x268] sm:$0xff]
        %v516 = vld [vmem:[%s274 + $0x270] sm:$0xff]
        %v517 = vld [vmem:[%s274 + $0x278] sm:$0xff]
        %v518 = vld [vmem:[%s274 + $0x280] sm:$0xff]
        %v519 = vld [vmem:[%s274 + $0x288] sm:$0xff]
        %v520 = vld [vmem:[%s274 + $0x290] sm:$0xff]
        %v521 = vld [vmem:[%s274 + $0x298] sm:$0xff]
        %v522 = vld [vmem:[%s274 + $0x2a0] sm:$0xff]
        %v523 = vld [vmem:[%s274 + $0x2a8] sm:$0xff]
        %v524 = vld [vmem:[%s274 + $0x2b0] sm:$0xff]
        %v525 = vld [vmem:[%s274 + $0x2b8] sm:$0xff]
        %v526 = vld [vmem:[%s274 + $0x2c0] sm:$0xff]
        %v527 = vld [vmem:[%s274 + $0x2c8] sm:$0xff]
        %v528 = vld [vmem:[%s274 + $0x2d0] sm:$0xff]
        %v529 = vld [vmem:[%s274 + $0x2d8] sm:$0xff]
        %v530 = vld [vmem:[%s274 + $0x2e0] sm:$0xff]
        %v531 = vld [vmem:[%s274 + $0x2e8] sm:$0xff]
        %v532 = vld [vmem:[%s274 + $0x2f0] sm:$0xff]
        %v533 = vld [vmem:[%s274 + $0x2f8] sm:$0xff]
        %v534 = vld [vmem:[%s274 + $0x300] sm:$0xff]
        %v535 = vld [vmem:[%s274 + $0x308] sm:$0xff]
        %v536 = vld [vmem:[%s274 + $0x310] sm:$0xff]
        %v537 = vld [vmem:[%s274 + $0x318] sm:$0xff]
        %v538 = vld [vmem:[%s274 + $0x320] sm:$0xff]
        %v539 = vld [vmem:[%s274 + $0x328] sm:$0xff]
        %v540 = vld [vmem:[%s274 + $0x330] sm:$0xff]
        %v541 = vld [vmem:[%s274 + $0x338] sm:$0xff]
        %v542 = vld [vmem:[%s274 + $0x340] sm:$0xff]
        %v543 = vld [vmem:[%s274 + $0x348] sm:$0xff]
        %v544 = vld [vmem:[%s274 + $0x350] sm:$0xff]
        %v545 = vld [vmem:[%s274 + $0x358] sm:$0xff]
        %v546 = vld [vmem:[%s274 + $0x360] sm:$0xff]
        %v547 = vld [vmem:[%s274 + $0x368] sm:$0xff]
        %v548 = vld [vmem:[%s274 + $0x370] sm:$0xff]
        %v549 = vld [vmem:[%s274 + $0x378] sm:$0xff]
        %v550 = vld [vmem:[%s274 + $0x380] sm:$0xff]
        %v551 = vld [vmem:[%s274 + $0x388] sm:$0xff]
        %v552 = vld [vmem:[%s274 + $0x390] sm:$0xff]
        %v553 = vld [vmem:[%s274 + $0x398] sm:$0xff]
        %v554 = vld [vmem:[%s274 + $0x3a0] sm:$0xff]
        %v555 = vld [vmem:[%s274 + $0x3a8] sm:$0xff]
        %v556 = vld [vmem:[%s274 + $0x3b0] sm:$0xff]
        %v557 = vld [vmem:[%s274 + $0x3b8] sm:$0xff]
        %v558 = vld [vmem:[%s274 + $0x3c0] sm:$0xff]
        %v559 = vld [vmem:[%s274 + $0x3c8] sm:$0xff]
        %v560 = vld [vmem:[%s274 + $0x3d0] sm:$0xff]
        %v561 = vld [vmem:[%s274 + $0x3d8] sm:$0xff]
        %v562 = vld [vmem:[%s274 + $0x3e0] sm:$0xff]
        %v563 = vld [vmem:[%s274 + $0x3e8] sm:$0xff]
        %v564 = vld [vmem:[%s274 + $0x3f0] sm:$0xff]
        %v565 = vld [vmem:[%s274 + $0x3f8] sm:$0xff]
        %v566 = vld [vmem:[%s274 + $0x400] sm:$0xff]
        %v567 = vld [vmem:[%s274 + $0x408] sm:$0xff]
        %v568 = vld [vmem:[%s274 + $0x410] sm:$0xff]
        %v569 = vld [vmem:[%s274 + $0x418] sm:$0xff]
        %v570 = vld [vmem:[%s274 + $0x420] sm:$0xff]
        %v571 = vld [vmem:[%s274 + $0x428] sm:$0xff]
        %v572 = vld [vmem:[%s274 + $0x430] sm:$0xff]
        %v573 = vld [vmem:[%s274 + $0x438] sm:$0xff]
        %v574 = vld [vmem:[%s274 + $0x440] sm:$0xff]
        %v575 = vld [vmem:[%s274 + $0x448] sm:$0xff]
        %v576 = vld [vmem:[%s274 + $0x450] sm:$0xff]
        %v577 = vld [vmem:[%s274 + $0x458] sm:$0xff]
        %v578 = vld [vmem:[%s274 + $0x460] sm:$0xff]
        %v579 = vld [vmem:[%s274 + $0x468] sm:$0xff]
        %v580 = vld [vmem:[%s274 + $0x470] sm:$0xff]
        %v581 = vld [vmem:[%s274 + $0x478] sm:$0xff]
        %v582 = vld [vmem:[%s274 + $0x480] sm:$0xff]
        %v583 = vld [vmem:[%s274 + $0x488] sm:$0xff]
        %v584 = vld [vmem:[%s274 + $0x490] sm:$0xff]
        %v585 = vld [vmem:[%s274 + $0x498] sm:$0xff]
        %v586 = vld [vmem:[%s274 + $0x4a0] sm:$0xff]
        %v587 = vld [vmem:[%s274 + $0x4a8] sm:$0xff]
        %v588 = vld [vmem:[%s274 + $0x4b0] sm:$0xff]
        %v589 = vld [vmem:[%s274 + $0x4b8] sm:$0xff]
        %v590 = vld [vmem:[%s274 + $0x4c0] sm:$0xff]
        %v591 = vld [vmem:[%s274 + $0x4c8] sm:$0xff]
        %v592 = vld [vmem:[%s274 + $0x4d0] sm:$0xff]
        %v593 = vld [vmem:[%s274 + $0x4d8] sm:$0xff]
        %v594 = vld [vmem:[%s274 + $0x4e0] sm:$0xff]
        %v595 = vld [vmem:[%s274 + $0x4e8] sm:$0xff]
        %v596 = vld [vmem:[%s274 + $0x4f0] sm:$0xff]
        %v597 = vld [vmem:[%s274 + $0x4f8] sm:$0xff]
        %v598 = vld [vmem:[%s283] sm:$0x1f]
        %v600 = vlaneseq
        %v601 = vshrl.u32 %v600, 7
        %v602 = vsub.s32 0, %v601
        %v603 = vrot.slane %v598, %v602
        %v604 = vlaneseq
        %v605 = vshrl.u32 %v604, 7
        %v606 = vsub.s32 1, %v605
        %v607 = vrot.slane %v598, %v606
        %v608 = vlaneseq
        %v609 = vshrl.u32 %v608, 7
        %v610 = vsub.s32 2, %v609
        %v611 = vrot.slane %v598, %v610
        %v612 = vlaneseq
        %v613 = vshrl.u32 %v612, 7
        %v614 = vsub.s32 3, %v613
        %v615 = vrot.slane %v598, %v614
        %v616 = vlaneseq
        %v617 = vshrl.u32 %v616, 7
        %v618 = vsub.s32 4, %v617
        %v619 = vrot.slane %v598, %v618
        %v627 = vunpack.c.l.s4 1983009808
        %v628 = vunpack.c.0.s8 %v627
        %v629 = vlaneseq
        %v630 = vshrl.u32 %v629, 7
        %v631 = vsub.s32 %v628, %v630
        %v632 = vrot.slane %v437, %v631
        %v633 = vcombine.high %v632, %v632
        %636 = vmatprep.subr.mxu0 %v439
        %637 = vmatpush1.msra.mxu0 %v438
        %638 = vmatprep.subr.mxu0 %v444
        %639 = vmatpush1.msra.mxu0 %v443
        %640 = vmatprep.subr.mxu0 %v449
        %641 = vmatpush1.msra.mxu0 %v448
        %642 = vmatprep.subr.mxu0 %v454
        %643 = vmatpush1.msra.mxu0 %v453
        %644 = vmatprep.subr.mxu0 %v459
        %645 = vmatpush1.msra.mxu0 %v458
        %646 = vmatprep.subr.mxu0 %v464
        %647 = vmatpush1.msra.mxu0 %v463
        %648 = vmatprep.subr.mxu0 %v469
        %649 = vmatpush1.msra.mxu0 %v468
        %650 = vmatprep.subr.mxu0 %v474
        %651 = vmatpush1.msra.mxu0 %v473
        %652 = vmatprep.subr.mxu0 %v479
        %653 = vmatpush1.msra.mxu0 %v478
        %654 = vmatprep.subr.mxu0 %v484
        %655 = vmatpush1.msra.mxu0 %v483
        %656 = vmatprep.subr.mxu0 %v489
        %657 = vmatpush1.msra.mxu0 %v488
        %658 = vmatprep.subr.mxu0 %v494
        %659 = vmatpush1.msra.mxu0 %v493
        %660 = vmatprep.subr.mxu0 %v499
        %661 = vmatpush1.msra.mxu0 %v498
        %662 = vmatprep.subr.mxu0 %v504
        %663 = vmatpush1.msra.mxu0 %v503
        %664 = vmatprep.subr.mxu0 %v509
        %665 = vmatpush1.msra.mxu0 %v508
        %666 = vmatprep.subr.mxu0 %v514
        %667 = vmatpush1.msra.mxu0 %v513
        %668 = vmatprep.subr.mxu0 %v519
        %669 = vmatpush1.msra.mxu0 %v518
        %670 = vmatprep.subr.mxu0 %v524
        %671 = vmatpush1.msra.mxu0 %v523
        %672 = vmatprep.subr.mxu0 %v529
        %673 = vmatpush1.msra.mxu0 %v528
        %674 = vmatprep.subr.mxu0 %v534
        %675 = vmatpush1.msra.mxu0 %v533
        %676 = vmatprep.subr.mxu0 %v539
        %677 = vmatpush1.msra.mxu0 %v538
        %678 = vmatprep.subr.mxu0 %v544
        %679 = vmatpush1.msra.mxu0 %v543
        %680 = vmatprep.subr.mxu0 %v549
        %681 = vmatpush1.msra.mxu0 %v548
        %682 = vmatprep.subr.mxu0 %v554
        %683 = vmatpush1.msra.mxu0 %v553
        %684 = vmatprep.subr.mxu0 %v559
        %685 = vmatpush1.msra.mxu0 %v558
        %686 = vmatprep.subr.mxu0 %v564
        %687 = vmatpush1.msra.mxu0 %v563
        %688 = vmatprep.subr.mxu0 %v569
        %689 = vmatpush1.msra.mxu0 %v568
        %690 = vmatprep.subr.mxu0 %v574
        %691 = vmatpush1.msra.mxu0 %v573
        %692 = vmatprep.subr.mxu0 %v579
        %693 = vmatpush1.msra.mxu0 %v578
        %694 = vmatprep.subr.mxu0 %v584
        %695 = vmatpush1.msra.mxu0 %v583
        %696 = vmatprep.subr.mxu0 %v589
        %697 = vmatpush1.msra.mxu0 %v588
        %698 = vmatprep.subr.mxu0 %v594
        %699 = vmatpush1.msra.mxu0 %v593
        %700 = vmatprep.mubr.f32.mxu0 %v633
        %701 = vmatmul.mubr.f32.gmra.mrb[0].mxu0 %v632
        %v702 = vpop.f32.mrb[0].mxu0
        %v703 = vadd.f32 %v603, %v702
        %v704 = vpop.f32.mrb[0].mxu0
        %v705 = vadd.f32 %v607, %v704
        %706 = vdwg.mxu0
        %707 = vmatprep.subr.mxu0 %v441
        %708 = vmatpush1.msra.mxu0 %v440
        %709 = vmatprep.subr.mxu0 %v446
        %710 = vmatpush1.msra.mxu0 %v445
        %711 = vmatprep.subr.mxu0 %v451
        %712 = vmatpush1.msra.mxu0 %v450
        %713 = vmatprep.subr.mxu0 %v456
        %714 = vmatpush1.msra.mxu0 %v455
        %715 = vmatprep.subr.mxu0 %v461
        %716 = vmatpush1.msra.mxu0 %v460
        %717 = vmatprep.subr.mxu0 %v466
        %718 = vmatpush1.msra.mxu0 %v465
        %719 = vmatprep.subr.mxu0 %v471
        %720 = vmatpush1.msra.mxu0 %v470
        %721 = vmatprep.subr.mxu0 %v476
        %722 = vmatpush1.msra.mxu0 %v475
        %723 = vmatprep.subr.mxu0 %v481
        %724 = vmatpush1.msra.mxu0 %v480
        %725 = vmatprep.subr.mxu0 %v486
        %726 = vmatpush1.msra.mxu0 %v485
        %727 = vmatprep.subr.mxu0 %v491
        %728 = vmatpush1.msra.mxu0 %v490
        %729 = vmatprep.subr.mxu0 %v496
        %730 = vmatpush1.msra.mxu0 %v495
        %731 = vmatprep.subr.mxu0 %v501
        %732 = vmatpush1.msra.mxu0 %v500
        %733 = vmatprep.subr.mxu0 %v506
        %734 = vmatpush1.msra.mxu0 %v505
        %735 = vmatprep.subr.mxu0 %v511
        %736 = vmatpush1.msra.mxu0 %v510
        %737 = vmatprep.subr.mxu0 %v516
        %738 = vmatpush1.msra.mxu0 %v515
        %739 = vmatprep.subr.mxu0 %v521
        %740 = vmatpush1.msra.mxu0 %v520
        %741 = vmatprep.subr.mxu0 %v526
        %742 = vmatpush1.msra.mxu0 %v525
        %743 = vmatprep.subr.mxu0 %v531
        %744 = vmatpush1.msra.mxu0 %v530
        %745 = vmatprep.subr.mxu0 %v536
        %746 = vmatpush1.msra.mxu0 %v535
        %747 = vmatprep.subr.mxu0 %v541
        %748 = vmatpush1.msra.mxu0 %v540
        %749 = vmatprep.subr.mxu0 %v546
        %750 = vmatpush1.msra.mxu0 %v545
        %751 = vmatprep.subr.mxu0 %v551
        %752 = vmatpush1.msra.mxu0 %v550
        %753 = vmatprep.subr.mxu0 %v556
        %754 = vmatpush1.msra.mxu0 %v555
        %755 = vmatprep.subr.mxu0 %v561
        %756 = vmatpush1.msra.mxu0 %v560
        %757 = vmatprep.subr.mxu0 %v566
        %758 = vmatpush1.msra.mxu0 %v565
        %759 = vmatprep.subr.mxu0 %v571
        %760 = vmatpush1.msra.mxu0 %v570
        %761 = vmatprep.subr.mxu0 %v576
        %762 = vmatpush1.msra.mxu0 %v575
        %763 = vmatprep.subr.mxu0 %v581
        %764 = vmatpush1.msra.mxu0 %v580
        %765 = vmatprep.subr.mxu0 %v586
        %766 = vmatpush1.msra.mxu0 %v585
        %767 = vmatprep.subr.mxu0 %v591
        %768 = vmatpush1.msra.mxu0 %v590
        %769 = vmatprep.subr.mxu0 %v596
        %770 = vmatpush1.msra.mxu0 %v595
        %771 = vmatprep.mubr.f32.mxu0 %v633
        %772 = vmatmul.mubr.f32.gmra.mrb[0].mxu0 %v632
        %v773 = vpop.f32.mrb[0].mxu0
        %v774 = vadd.f32 %v611, %v773
        %v775 = vpop.f32.mrb[0].mxu0
        %v776 = vadd.f32 %v615, %v775
        %777 = vdwg.mxu0
        %778 = vmatprep.subr.mxu0 0.0
        %779 = vmatpush1.msra.mxu0 %v442
        %780 = vmatprep.subr.mxu0 0.0
        %781 = vmatpush1.msra.mxu0 %v447
        %782 = vmatprep.subr.mxu0 0.0
        %783 = vmatpush1.msra.mxu0 %v452
        %784 = vmatprep.subr.mxu0 0.0
        %785 = vmatpush1.msra.mxu0 %v457
        %786 = vmatprep.subr.mxu0 0.0
        %787 = vmatpush1.msra.mxu0 %v462
        %788 = vmatprep.subr.mxu0 0.0
        %789 = vmatpush1.msra.mxu0 %v467
        %790 = vmatprep.subr.mxu0 0.0
        %791 = vmatpush1.msra.mxu0 %v472
        %792 = vmatprep.subr.mxu0 0.0
        %793 = vmatpush1.msra.mxu0 %v477
        %794 = vmatprep.subr.mxu0 0.0
        %795 = vmatpush1.msra.mxu0 %v482
        %796 = vmatprep.subr.mxu0 0.0
        %797 = vmatpush1.msra.mxu0 %v487
        %798 = vmatprep.subr.mxu0 0.0
        %799 = vmatpush1.msra.mxu0 %v492
        %800 = vmatprep.subr.mxu0 0.0
        %801 = vmatpush1.msra.mxu0 %v497
        %802 = vmatprep.subr.mxu0 0.0
        %803 = vmatpush1.msra.mxu0 %v502
        %804 = vmatprep.subr.mxu0 0.0
        %805 = vmatpush1.msra.mxu0 %v507
        %806 = vmatprep.subr.mxu0 0.0
        %807 = vmatpush1.msra.mxu0 %v512
        %808 = vmatprep.subr.mxu0 0.0
        %809 = vmatpush1.msra.mxu0 %v517
        %810 = vmatprep.subr.mxu0 0.0
        %811 = vmatpush1.msra.mxu0 %v522
        %812 = vmatprep.subr.mxu0 0.0
        %813 = vmatpush1.msra.mxu0 %v527
        %814 = vmatprep.subr.mxu0 0.0
        %815 = vmatpush1.msra.mxu0 %v532
        %816 = vmatprep.subr.mxu0 0.0
        %817 = vmatpush1.msra.mxu0 %v537
        %818 = vmatprep.subr.mxu0 0.0
        %819 = vmatpush1.msra.mxu0 %v542
        %820 = vmatprep.subr.mxu0 0.0
        %821 = vmatpush1.msra.mxu0 %v547
        %822 = vmatprep.subr.mxu0 0.0
        %823 = vmatpush1.msra.mxu0 %v552
        %824 = vmatprep.subr.mxu0 0.0
        %825 = vmatpush1.msra.mxu0 %v557
        %826 = vmatprep.subr.mxu0 0.0
        %827 = vmatpush1.msra.mxu0 %v562
        %828 = vmatprep.subr.mxu0 0.0
        %829 = vmatpush1.msra.mxu0 %v567
        %830 = vmatprep.subr.mxu0 0.0
        %831 = vmatpush1.msra.mxu0 %v572
        %832 = vmatprep.subr.mxu0 0.0
        %833 = vmatpush1.msra.mxu0 %v577
        %834 = vmatprep.subr.mxu0 0.0
        %835 = vmatpush1.msra.mxu0 %v582
        %836 = vmatprep.subr.mxu0 0.0
        %837 = vmatpush1.msra.mxu0 %v587
        %838 = vmatprep.subr.mxu0 0.0
        %839 = vmatpush1.msra.mxu0 %v592
        %840 = vmatprep.subr.mxu0 0.0
        %841 = vmatpush1.msra.mxu0 %v597
        %842 = vmatprep.mubr.f32.mxu0 %v633
        %843 = vmatmul.mubr.f32.gmra.mrb[0].mxu0 %v632
        %v844 = vpop.f32.mrb[0].mxu0
        %v845 = vadd.f32 %v619, %v844
        %v846 = vpop.f32.mrb[0].mxu0
        %847 = vdwg.mxu0
        %v848 = vmax.f32 %v703, 0.0
        %v849 = vmax.f32 %v705, 0.0
        %v850 = vmax.f32 %v774, 0.0
        %v851 = vmax.f32 %v776, 0.0
        %v852 = vmax.f32 %v845, 0.0
        %v858 = vcombine.low %v848, %v849
        %v859 = vcombine.low %v850, %v851
        %v861 = vunpack.c.l.s4 1983009808
        %v862 = vunpack.c.0.s8 %v861
        %v863 = vlaneseq
        %v864 = vshrl.u32 %v863, 7
        %v865 = vsub.s32 %v862, %v864
        %v866 = vrot.slane %v858, %v865
        %v868 = vunpack.c.l.s4 1983009808
        %v869 = vunpack.c.0.s8 %v868
        %v870 = vlaneseq
        %v871 = vshrl.u32 %v870, 7
        %v872 = vsub.s32 %v869, %v871
        %v873 = vrot.slane %v859, %v872
        %v874 = vcombine.low %v866, %v873
        %v876 = vunpack.c.l.s4 1983009808
        %v877 = vunpack.c.0.s8 %v876
        %v878 = vlaneseq
        %v879 = vshrl.u32 %v878, 7
        %v880 = vsub.s32 %v877, %v879
        %v881 = vrot.slane %v852, %v880
        %884 = vst [vmem:[%s321] sm:$0xff] %v874
        %885 = vst [vmem:[%s321 + $0x8] sm:$0x3] %v881
        %s886 = smul.u32 5, %s21
        %p887 = scmp.lt.s32.totalorder %s886, 24
        %s888 = scalar_select %p887, %s886, 24
        %s889 = smul.addr %s888, 2
        %s890 = scalar_lea.vmem %s5, %s889
        // Predicated region
        $region65: #{decoder_forward.5} parent=39 // pred_check
          %p891 = pneg %p154
        $region66: #{decoder_forward.5} parent=39 // pred_check_branch
          %893 = sbr.rel (%p891) target = $region68
        $region67: #{decoder_forward.5} parent=39 // pred_region
          %s894 = smul.u32 5, %s21
        $region68: #{decoder_forward.5} parent=39 // pred_fallthru
          _
      $region40: #{decoder_forward.5} parent=5 // pred_fallthru
        _
      %p895 = scmp.le.s32.totalorder 2, %s16
      // Predicated region
      $region69: #{decoder_forward.5} parent=5 // pred_check
        %p896 = pneg %p895
      $region70: #{decoder_forward.5} parent=5 // pred_check_branch
        %898 = sbr.rel (%p896) target = $region72
      $region71: #{decoder_forward.5} parent=5 // pred_region
        %s899 = ssub.s32 %s16, 2
        // Predicated region
        $region73: #{decoder_forward.5} parent=71 // pred_check
          %p900 = pneg %p160
        $region74: #{decoder_forward.5} parent=71 // pred_check_branch
          %902 = sbr.rel (%p900) target = $region76
        $region75: #{decoder_forward.5} parent=71 // pred_region
          %s903 = smul.u32 5, %s22
          %p904 = scmp.lt.s32.totalorder %s903, 24
          %s905 = scalar_select %p904, %s903, 24
          %s906 = smul.addr %s905, 2
          %s907 = scalar_lea.vmem %s5, %s906
        $region76: #{decoder_forward.5} parent=71 // pred_fallthru
          _
      $region72: #{decoder_forward.5} parent=5 // pred_fallthru
        _
    $region6: #{decoder_forward.5} parent=1 // loop_footer
      %s20 = sadd.s32 1, %s16
    $region7: #{decoder_forward.5} parent=1 // loop_footer_branch
      %15 = sbr.rel target = $region3
    $region8: #{decoder_forward.5} parent=1 // loop_exit
      _
    %908 = vsyncpa [#allocation4], 1
    %s909 = scalar_lea.sflag [#allocation4], 1
    %910 = vsyncpa %s909, 1
    %911 = vsyncpa [#allocation6], 1
    %912 = vsyncpa [#allocation9], 1
    %s913 = scalar_lea.sflag [#allocation9], 1
    %914 = vsyncpa %s913, 1

// kernel: decoder_forward.7
$region0: #{decoder_forward.7}
  #allocation0 [shape = 'u32[]', space=smem, size = 0x4, offset = 0x4, fixed_abs, tag = 'smem constant byte address 0x4 - core index']
  #allocation1 [shape = 'u32[144,128]{1,0:T(1,128)}', space=vmem, size = 0x12000, scoped, tag = 'internal scratch']
  %s0 = inlined_call_operand.vmem [shape: f32[288,64], index: 0, kind: input, shape index: {}]
  %s1 = inlined_call_operand.vmem [shape: f32[64,128], index: 1, kind: input, shape index: {}]
  %s2 = inlined_call_operand.vmem [shape: f32[1,128], index: 2, kind: input, shape index: {}]
  %s3 = inlined_call_operand.vmem [shape: f32[288,128], index: 3, kind: output, shape index: {}]
  %s4 = sld [smem:[#allocation0]]
  $region22: #{decoder_forward.7} parent=0
    _
  %s6 = ssub.s32 1, %s4
  %s7 = scalar_select 0, %s6, %s4
  // Predicated region
  $region2: #{decoder_forward.7} parent=0 // pred_check
    _
  $region3: #{decoder_forward.7} parent=0 // pred_check_branch
    %9 = sbr.rel (0) target = $region5
  $region4: #{decoder_forward.7} parent=0 // pred_region
    _
  $region5: #{decoder_forward.7} parent=0 // pred_fallthru
    _
  // Predicated region
  $region6: #{decoder_forward.7} parent=0 // pred_check
    _
  $region7: #{decoder_forward.7} parent=0 // pred_check_branch
    %11 = sbr.rel (0) target = $region9
  $region8: #{decoder_forward.7} parent=0 // pred_region
    _
  $region9: #{decoder_forward.7} parent=0 // pred_fallthru
    _
  // Predicated region
  $region10: #{decoder_forward.7} parent=0 // pred_check
    _
  $region11: #{decoder_forward.7} parent=0 // pred_check_branch
    %13 = sbr.rel (0) target = $region13
  $region12: #{decoder_forward.7} parent=0 // pred_region
    _
  $region13: #{decoder_forward.7} parent=0 // pred_fallthru
    _
  %v14 = vld [vmem:[%s0] sm:$0xff]
  %v15 = vld [vmem:[%s0 + $0x8] sm:$0xff]
  %v16 = vld [vmem:[%s0 + $0x10] sm:$0xff]
  %v17 = vld [vmem:[%s0 + $0x18] sm:$0xff]
  %v18 = vld [vmem:[%s0 + $0x20] sm:$0xff]
  %v19 = vld [vmem:[%s0 + $0x28] sm:$0xff]
  %v20 = vld [vmem:[%s0 + $0x30] sm:$0xff]
  %v21 = vld [vmem:[%s0 + $0x38] sm:$0xff]
  %v22 = vld [vmem:[%s0 + $0x40] sm:$0xff]
  %v23 = vld [vmem:[%s0 + $0x48] sm:$0xff]
  %v24 = vld [vmem:[%s0 + $0x50] sm:$0xff]
  %v25 = vld [vmem:[%s0 + $0x58] sm:$0xff]
  %v26 = vld [vmem:[%s0 + $0x60] sm:$0xff]
  %v27 = vld [vmem:[%s0 + $0x68] sm:$0xff]
  %v28 = vld [vmem:[%s0 + $0x70] sm:$0xff]
  %v29 = vld [vmem:[%s0 + $0x78] sm:$0xff]
  %v30 = vld [vmem:[%s0 + $0x80] sm:$0xff]
  %v31 = vld [vmem:[%s0 + $0x88] sm:$0xff]
  %v32 = vld [vmem:[%s0 + $0x90] sm:$0xff]
  %v33 = vld [vmem:[%s0 + $0x98] sm:$0xff]
  %v34 = vld [vmem:[%s0 + $0xa0] sm:$0xff]
  %v35 = vld [vmem:[%s0 + $0xa8] sm:$0xff]
  %v36 = vld [vmem:[%s0 + $0xb0] sm:$0xff]
  %v37 = vld [vmem:[%s0 + $0xb8] sm:$0xff]
  %v38 = vld [vmem:[%s0 + $0xc0] sm:$0xff]
  %v39 = vld [vmem:[%s0 + $0xc8] sm:$0xff]
  %v40 = vld [vmem:[%s0 + $0xd0] sm:$0xff]
  %v41 = vld [vmem:[%s0 + $0xd8] sm:$0xff]
  %v42 = vld [vmem:[%s0 + $0xe0] sm:$0xff]
  %v43 = vld [vmem:[%s0 + $0xe8] sm:$0xff]
  %v44 = vld [vmem:[%s0 + $0xf0] sm:$0xff]
  %v45 = vld [vmem:[%s0 + $0xf8] sm:$0xff]
  %v46 = vld [vmem:[%s0 + $0x100] sm:$0xff]
  %v47 = vld [vmem:[%s0 + $0x108] sm:$0xff]
  %v48 = vld [vmem:[%s0 + $0x110] sm:$0xff]
  %v49 = vld [vmem:[%s0 + $0x118] sm:$0xff]
  %v50 = vld [vmem:[%s1] sm:$0xff]
  %v51 = vld [vmem:[%s1 + $0x8] sm:$0xff]
  %v52 = vld [vmem:[%s1 + $0x10] sm:$0xff]
  %v53 = vld [vmem:[%s1 + $0x18] sm:$0xff]
  %v54 = vld [vmem:[%s1 + $0x20] sm:$0xff]
  %v55 = vld [vmem:[%s1 + $0x28] sm:$0xff]
  %v56 = vld [vmem:[%s1 + $0x30] sm:$0xff]
  %v57 = vld [vmem:[%s1 + $0x38] sm:$0xff]
  %v58 = vld [vmem:[%s2] sm:$0x1]
  %v60 = vlaneseq
  %v61 = vshrl.u32 %v60, 7
  %v62 = vsub.s32 0, %v61
  %v63 = vrot.slane %v58, %v62
  %vm65 = vcmask 523264
  %v67 = vsel %vm65, %v14, 0
  %v70 = vsel %vm65, %v15, 0
  %v73 = vsel %vm65, %v16, 0
  %v76 = vsel %vm65, %v17, 0
  %v79 = vsel %vm65, %v18, 0
  %v82 = vsel %vm65, %v19, 0
  %v85 = vsel %vm65, %v20, 0
  %v88 = vsel %vm65, %v21, 0
  %v91 = vsel %vm65, %v22, 0
  %v94 = vsel %vm65, %v23, 0
  %v97 = vsel %vm65, %v24, 0
  %v100 = vsel %vm65, %v25, 0
  %v103 = vsel %vm65, %v26, 0
  %v106 = vsel %vm65, %v27, 0
  %v109 = vsel %vm65, %v28, 0
  %v112 = vsel %vm65, %v29, 0
  %v115 = vsel %vm65, %v30, 0
  %v118 = vsel %vm65, %v31, 0
  %v121 = vsel %vm65, %v32, 0
  %v124 = vsel %vm65, %v33, 0
  %v127 = vsel %vm65, %v34, 0
  %v130 = vsel %vm65, %v35, 0
  %v133 = vsel %vm65, %v36, 0
  %v136 = vsel %vm65, %v37, 0
  %v139 = vsel %vm65, %v38, 0
  %v142 = vsel %vm65, %v39, 0
  %v145 = vsel %vm65, %v40, 0
  %v148 = vsel %vm65, %v41, 0
  %v151 = vsel %vm65, %v42, 0
  %v154 = vsel %vm65, %v43, 0
  %v157 = vsel %vm65, %v44, 0
  %v160 = vsel %vm65, %v45, 0
  %v163 = vsel %vm65, %v46, 0
  %v166 = vsel %vm65, %v47, 0
  %v169 = vsel %vm65, %v48, 0
  %v172 = vsel %vm65, %v49, 0
  %174 = vmatprep.subr.mxu0 0.0
  %175 = vmatpush1.msra.mxu0 %v50
  %176 = vmatprep.subr.mxu0 0.0
  %177 = vmatpush1.msra.mxu0 %v51
  %178 = vmatprep.subr.mxu0 0.0
  %179 = vmatpush1.msra.mxu0 %v52
  %180 = vmatprep.subr.mxu0 0.0
  %181 = vmatpush1.msra.mxu0 %v53
  %182 = vmatprep.subr.mxu0 0.0
  %183 = vmatpush1.msra.mxu0 %v54
  %184 = vmatprep.subr.mxu0 0.0
  %185 = vmatpush1.msra.mxu0 %v55
  %186 = vmatprep.subr.mxu0 0.0
  %187 = vmatpush1.msra.mxu0 %v56
  %188 = vmatprep.subr.mxu0 0.0
  %189 = vmatpush1.msra.mxu0 %v57
  %190 = vmatprep.subr.mxu0 0.0
  %191 = vmatpush1.msra.mxu0 0.0
  %192 = vmatprep.subr.mxu0 0.0
  %193 = vmatpush1.msra.mxu0 0.0
  %194 = vmatprep.subr.mxu0 0.0
  %195 = vmatpush1.msra.mxu0 0.0
  %196 = vmatprep.subr.mxu0 0.0
  %197 = vmatpush1.msra.mxu0 0.0
  %198 = vmatprep.subr.mxu0 0.0
  %199 = vmatpush1.msra.mxu0 0.0
  %200 = vmatprep.subr.mxu0 0.0
  %201 = vmatpush1.msra.mxu0 0.0
  %202 = vmatprep.subr.mxu0 0.0
  %203 = vmatpush1.msra.mxu0 0.0
  %204 = vmatprep.subr.mxu0 0.0
  %205 = vmatpush1.msra.mxu0 0.0
  %206 = vmatprep.subr.mxu0 0.0
  %207 = vmatpush1.msra.mxu0 0.0
  %208 = vmatprep.subr.mxu0 0.0
  %209 = vmatpush1.msra.mxu0 0.0
  %210 = vmatprep.subr.mxu0 0.0
  %211 = vmatpush1.msra.mxu0 0.0
  %212 = vmatprep.subr.mxu0 0.0
  %213 = vmatpush1.msra.mxu0 0.0
  %214 = vmatprep.subr.mxu0 0.0
  %215 = vmatpush1.msra.mxu0 0.0
  %216 = vmatprep.subr.mxu0 0.0
  %217 = vmatpush1.msra.mxu0 0.0
  %218 = vmatprep.subr.mxu0 0.0
  %219 = vmatpush1.msra.mxu0 0.0
  %220 = vmatprep.subr.mxu0 0.0
  %221 = vmatpush1.msra.mxu0 0.0
  %222 = vmatprep.subr.mxu0 0.0
  %223 = vmatpush1.msra.mxu0 0.0
  %224 = vmatprep.subr.mxu0 0.0
  %225 = vmatpush1.msra.mxu0 0.0
  %226 = vmatprep.subr.mxu0 0.0
  %227 = vmatpush1.msra.mxu0 0.0
  %228 = vmatprep.subr.mxu0 0.0
  %229 = vmatpush1.msra.mxu0 0.0
  %230 = vmatprep.subr.mxu0 0.0
  %231 = vmatpush1.msra.mxu0 0.0
  %232 = vmatprep.subr.mxu0 0.0
  %233 = vmatpush1.msra.mxu0 0.0
  %234 = vmatprep.subr.mxu0 0.0
  %235 = vmatpush1.msra.mxu0 0.0
  %236 = vmatprep.subr.mxu0 0.0
  %237 = vmatpush1.msra.mxu0 0.0
  %238 = vmatprep.mubr.f32.mxu0 0.0
  %239 = vmatmul.mubr.f32.gmra.mrb[0].mxu0 %v67
  %v240 = vpop.f32.mrb[0].mxu0
  %v241 = vadd.f32 %v63, %v240
  %v242 = vpop.f32.mrb[0].mxu0
  %243 = vmatprep.mubr.f32.mxu0 0.0
  %244 = vmatmul.mubr.f32.gmra.mrb[0].mxu0 %v70
  %v245 = vpop.f32.mrb[0].mxu0
  %v246 = vadd.f32 %v63, %v245
  %v247 = vpop.f32.mrb[0].mxu0
  %248 = vmatprep.mubr.f32.mxu0 0.0
  %249 = vmatmul.mubr.f32.gmra.mrb[0].mxu0 %v73
  %v250 = vpop.f32.mrb[0].mxu0
  %v251 = vadd.f32 %v63, %v250
  %v252 = vpop.f32.mrb[0].mxu0
  %253 = vmatprep.mubr.f32.mxu0 0.0
  %254 = vmatmul.mubr.f32.gmra.mrb[0].mxu0 %v76
  %v255 = vpop.f32.mrb[0].mxu0
  %v256 = vadd.f32 %v63, %v255
  %v257 = vpop.f32.mrb[0].mxu0
  %258 = vmatprep.mubr.f32.mxu0 0.0
  %259 = vmatmul.mubr.f32.gmra.mrb[0].mxu0 %v79
  %v260 = vpop.f32.mrb[0].mxu0
  %v261 = vadd.f32 %v63, %v260
  %v262 = vpop.f32.mrb[0].mxu0
  %263 = vmatprep.mubr.f32.mxu0 0.0
  %264 = vmatmul.mubr.f32.gmra.mrb[0].mxu0 %v82
  %v265 = vpop.f32.mrb[0].mxu0
  %v266 = vadd.f32 %v63, %v265
  %v267 = vpop.f32.mrb[0].mxu0
  %268 = vmatprep.mubr.f32.mxu0 0.0
  %269 = vmatmul.mubr.f32.gmra.mrb[0].mxu0 %v85
  %v270 = vpop.f32.mrb[0].mxu0
  %v271 = vadd.f32 %v63, %v270
  %v272 = vpop.f32.mrb[0].mxu0
  %273 = vmatprep.mubr.f32.mxu0 0.0
  %274 = vmatmul.mubr.f32.gmra.mrb[0].mxu0 %v88
  %v275 = vpop.f32.mrb[0].mxu0
  %v276 = vadd.f32 %v63, %v275
  %v277 = vpop.f32.mrb[0].mxu0
  %278 = vmatprep.mubr.f32.mxu0 0.0
  %279 = vmatmul.mubr.f32.gmra.mrb[0].mxu0 %v91
  %v280 = vpop.f32.mrb[0].mxu0
  %v281 = vadd.f32 %v63, %v280
  %v282 = vpop.f32.mrb[0].mxu0
  %283 = vmatprep.mubr.f32.mxu0 0.0
  %284 = vmatmul.mubr.f32.gmra.mrb[0].mxu0 %v94
  %v285 = vpop.f32.mrb[0].mxu0
  %v286 = vadd.f32 %v63, %v285
  %v287 = vpop.f32.mrb[0].mxu0
  %288 = vmatprep.mubr.f32.mxu0 0.0
  %289 = vmatmul.mubr.f32.gmra.mrb[0].mxu0 %v97
  %v290 = vpop.f32.mrb[0].mxu0
  %v291 = vadd.f32 %v63, %v290
  %v292 = vpop.f32.mrb[0].mxu0
  %293 = vmatprep.mubr.f32.mxu0 0.0
  %294 = vmatmul.mubr.f32.gmra.mrb[0].mxu0 %v100
  %v295 = vpop.f32.mrb[0].mxu0
  %v296 = vadd.f32 %v63, %v295
  %v297 = vpop.f32.mrb[0].mxu0
  %298 = vmatprep.mubr.f32.mxu0 0.0
  %299 = vmatmul.mubr.f32.gmra.mrb[0].mxu0 %v103
  %v300 = vpop.f32.mrb[0].mxu0
  %v301 = vadd.f32 %v63, %v300
  %v302 = vpop.f32.mrb[0].mxu0
  %303 = vmatprep.mubr.f32.mxu0 0.0
  %304 = vmatmul.mubr.f32.gmra.mrb[0].mxu0 %v106
  %v305 = vpop.f32.mrb[0].mxu0
  %v306 = vadd.f32 %v63, %v305
  %v307 = vpop.f32.mrb[0].mxu0
  %308 = vmatprep.mubr.f32.mxu0 0.0
  %309 = vmatmul.mubr.f32.gmra.mrb[0].mxu0 %v109
  %v310 = vpop.f32.mrb[0].mxu0
  %v311 = vadd.f32 %v63, %v310
  %v312 = vpop.f32.mrb[0].mxu0
  %313 = vmatprep.mubr.f32.mxu0 0.0
  %314 = vmatmul.mubr.f32.gmra.mrb[0].mxu0 %v112
  %v315 = vpop.f32.mrb[0].mxu0
  %v316 = vadd.f32 %v63, %v315
  %v317 = vpop.f32.mrb[0].mxu0
  %318 = vmatprep.mubr.f32.mxu0 0.0
  %319 = vmatmul.mubr.f32.gmra.mrb[0].mxu0 %v115
  %v320 = vpop.f32.mrb[0].mxu0
  %v321 = vadd.f32 %v63, %v320
  %v322 = vpop.f32.mrb[0].mxu0
  %323 = vmatprep.mubr.f32.mxu0 0.0
  %324 = vmatmul.mubr.f32.gmra.mrb[0].mxu0 %v118
  %v325 = vpop.f32.mrb[0].mxu0
  %v326 = vadd.f32 %v63, %v325
  %v327 = vpop.f32.mrb[0].mxu0
  %328 = vmatprep.mubr.f32.mxu0 0.0
  %329 = vmatmul.mubr.f32.gmra.mrb[0].mxu0 %v121
  %v330 = vpop.f32.mrb[0].mxu0
  %v331 = vadd.f32 %v63, %v330
  %v332 = vpop.f32.mrb[0].mxu0
  %333 = vmatprep.mubr.f32.mxu0 0.0
  %334 = vmatmul.mubr.f32.gmra.mrb[0].mxu0 %v124
  %v335 = vpop.f32.mrb[0].mxu0
  %v336 = vadd.f32 %v63, %v335
  %v337 = vpop.f32.mrb[0].mxu0
  %338 = vmatprep.mubr.f32.mxu0 0.0
  %339 = vmatmul.mubr.f32.gmra.mrb[0].mxu0 %v127
  %v340 = vpop.f32.mrb[0].mxu0
  %v341 = vadd.f32 %v63, %v340
  %v342 = vpop.f32.mrb[0].mxu0
  %343 = vmatprep.mubr.f32.mxu0 0.0
  %344 = vmatmul.mubr.f32.gmra.mrb[0].mxu0 %v130
  %v345 = vpop.f32.mrb[0].mxu0
  %v346 = vadd.f32 %v63, %v345
  %v347 = vpop.f32.mrb[0].mxu0
  %348 = vmatprep.mubr.f32.mxu0 0.0
  %349 = vmatmul.mubr.f32.gmra.mrb[0].mxu0 %v133
  %v350 = vpop.f32.mrb[0].mxu0
  %v351 = vadd.f32 %v63, %v350
  %v352 = vpop.f32.mrb[0].mxu0
  %353 = vmatprep.mubr.f32.mxu0 0.0
  %354 = vmatmul.mubr.f32.gmra.mrb[0].mxu0 %v136
  %v355 = vpop.f32.mrb[0].mxu0
  %v356 = vadd.f32 %v63, %v355
  %v357 = vpop.f32.mrb[0].mxu0
  %358 = vmatprep.mubr.f32.mxu0 0.0
  %359 = vmatmul.mubr.f32.gmra.mrb[0].mxu0 %v139
  %v360 = vpop.f32.mrb[0].mxu0
  %v361 = vadd.f32 %v63, %v360
  %v362 = vpop.f32.mrb[0].mxu0
  %363 = vmatprep.mubr.f32.mxu0 0.0
  %364 = vmatmul.mubr.f32.gmra.mrb[0].mxu0 %v142
  %v365 = vpop.f32.mrb[0].mxu0
  %v366 = vadd.f32 %v63, %v365
  %v367 = vpop.f32.mrb[0].mxu0
  %368 = vmatprep.mubr.f32.mxu0 0.0
  %369 = vmatmul.mubr.f32.gmra.mrb[0].mxu0 %v145
  %v370 = vpop.f32.mrb[0].mxu0
  %v371 = vadd.f32 %v63, %v370
  %v372 = vpop.f32.mrb[0].mxu0
  %373 = vmatprep.mubr.f32.mxu0 0.0
  %374 = vmatmul.mubr.f32.gmra.mrb[0].mxu0 %v148
  %v375 = vpop.f32.mrb[0].mxu0
  %v376 = vadd.f32 %v63, %v375
  %v377 = vpop.f32.mrb[0].mxu0
  %378 = vmatprep.mubr.f32.mxu0 0.0
  %379 = vmatmul.mubr.f32.gmra.mrb[0].mxu0 %v151
  %v380 = vpop.f32.mrb[0].mxu0
  %v381 = vadd.f32 %v63, %v380
  %v382 = vpop.f32.mrb[0].mxu0
  %383 = vmatprep.mubr.f32.mxu0 0.0
  %384 = vmatmul.mubr.f32.gmra.mrb[0].mxu0 %v154
  %v385 = vpop.f32.mrb[0].mxu0
  %v386 = vadd.f32 %v63, %v385
  %v387 = vpop.f32.mrb[0].mxu0
  %388 = vmatprep.mubr.f32.mxu0 0.0
  %389 = vmatmul.mubr.f32.gmra.mrb[0].mxu0 %v157
  %v390 = vpop.f32.mrb[0].mxu0
  %v391 = vadd.f32 %v63, %v390
  %v392 = vpop.f32.mrb[0].mxu0
  %393 = vmatprep.mubr.f32.mxu0 0.0
  %394 = vmatmul.mubr.f32.gmra.mrb[0].mxu0 %v160
  %v395 = vpop.f32.mrb[0].mxu0
  %v396 = vadd.f32 %v63, %v395
  %v397 = vpop.f32.mrb[0].mxu0
  %398 = vmatprep.mubr.f32.mxu0 0.0
  %399 = vmatmul.mubr.f32.gmra.mrb[0].mxu0 %v163
  %v400 = vpop.f32.mrb[0].mxu0
  %v401 = vadd.f32 %v63, %v400
  %v402 = vpop.f32.mrb[0].mxu0
  %403 = vmatprep.mubr.f32.mxu0 0.0
  %404 = vmatmul.mubr.f32.gmra.mrb[0].mxu0 %v166
  %v405 = vpop.f32.mrb[0].mxu0
  %v406 = vadd.f32 %v63, %v405
  %v407 = vpop.f32.mrb[0].mxu0
  %408 = vmatprep.mubr.f32.mxu0 0.0
  %409 = vmatmul.mubr.f32.gmra.mrb[0].mxu0 %v169
  %v410 = vpop.f32.mrb[0].mxu0
  %v411 = vadd.f32 %v63, %v410
  %v412 = vpop.f32.mrb[0].mxu0
  %413 = vmatprep.mubr.f32.mxu0 0.0
  %414 = vmatmul.mubr.f32.gmra.mrb[0].mxu0 %v172
  %v415 = vpop.f32.mrb[0].mxu0
  %v416 = vadd.f32 %v63, %v415
  %v417 = vpop.f32.mrb[0].mxu0
  %418 = vdwg.mxu0
  %v419 = vmax.f32 %v241, 0.0
  %v420 = vmax.f32 %v246, 0.0
  %v421 = vmax.f32 %v251, 0.0
  %v422 = vmax.f32 %v256, 0.0
  %v423 = vmax.f32 %v261, 0.0
  %v424 = vmax.f32 %v266, 0.0
  %v425 = vmax.f32 %v271, 0.0
  %v426 = vmax.f32 %v276, 0.0
  %v427 = vmax.f32 %v281, 0.0
  %v428 = vmax.f32 %v286, 0.0
  %v429 = vmax.f32 %v291, 0.0
  %v430 = vmax.f32 %v296, 0.0
  %v431 = vmax.f32 %v301, 0.0
  %v432 = vmax.f32 %v306, 0.0
  %v433 = vmax.f32 %v311, 0.0
  %v434 = vmax.f32 %v316, 0.0
  %v435 = vmax.f32 %v321, 0.0
  %v436 = vmax.f32 %v326, 0.0
  %v437 = vmax.f32 %v331, 0.0
  %v438 = vmax.f32 %v336, 0.0
  %v439 = vmax.f32 %v341, 0.0
  %v440 = vmax.f32 %v346, 0.0
  %v441 = vmax.f32 %v351, 0.0
  %v442 = vmax.f32 %v356, 0.0
  %v443 = vmax.f32 %v361, 0.0
  %v444 = vmax.f32 %v366, 0.0
  %v445 = vmax.f32 %v371, 0.0
  %v446 = vmax.f32 %v376, 0.0
  %v447 = vmax.f32 %v381, 0.0
  %v448 = vmax.f32 %v386, 0.0
  %v449 = vmax.f32 %v391, 0.0
  %v450 = vmax.f32 %v396, 0.0
  %v451 = vmax.f32 %v401, 0.0
  %v452 = vmax.f32 %v406, 0.0
  %v453 = vmax.f32 %v411, 0.0
  %v454 = vmax.f32 %v416, 0.0
  %455 = vst [vmem:[%s3] sm:$0xff] %v419
  %456 = vst [vmem:[%s3 + $0x8] sm:$0xff] %v420
  %457 = vst [vmem:[%s3 + $0x10] sm:$0xff] %v421
  %458 = vst [vmem:[%s3 + $0x18] sm:$0xff] %v422
  %459 = vst [vmem:[%s3 + $0x20] sm:$0xff] %v423
  %460 = vst [vmem:[%s3 + $0x28] sm:$0xff] %v424
  %461 = vst [vmem:[%s3 + $0x30] sm:$0xff] %v425
  %462 = vst [vmem:[%s3 + $0x38] sm:$0xff] %v426
  %463 = vst [vmem:[%s3 + $0x40] sm:$0xff] %v427
  %464 = vst [vmem:[%s3 + $0x48] sm:$0xff] %v428
  %465 = vst [vmem:[%s3 + $0x50] sm:$0xff] %v429
  %466 = vst [vmem:[%s3 + $0x58] sm:$0xff] %v430
  %467 = vst [vmem:[%s3 + $0x60] sm:$0xff] %v431
  %468 = vst [vmem:[%s3 + $0x68] sm:$0xff] %v432
  %469 = vst [vmem:[%s3 + $0x70] sm:$0xff] %v433
  %470 = vst [vmem:[%s3 + $0x78] sm:$0xff] %v434
  %471 = vst [vmem:[%s3 + $0x80] sm:$0xff] %v435
  %472 = vst [vmem:[%s3 + $0x88] sm:$0xff] %v436
  %473 = vst [vmem:[%s3 + $0x90] sm:$0xff] %v437
  %474 = vst [vmem:[%s3 + $0x98] sm:$0xff] %v438
  %475 = vst [vmem:[%s3 + $0xa0] sm:$0xff] %v439
  %476 = vst [vmem:[%s3 + $0xa8] sm:$0xff] %v440
  %477 = vst [vmem:[%s3 + $0xb0] sm:$0xff] %v441
  %478 = vst [vmem:[%s3 + $0xb8] sm:$0xff] %v442
  %479 = vst [vmem:[%s3 + $0xc0] sm:$0xff] %v443
  %480 = vst [vmem:[%s3 + $0xc8] sm:$0xff] %v444
  %481 = vst [vmem:[%s3 + $0xd0] sm:$0xff] %v445
  %482 = vst [vmem:[%s3 + $0xd8] sm:$0xff] %v446
  %483 = vst [vmem:[%s3 + $0xe0] sm:$0xff] %v447
  %484 = vst [vmem:[%s3 + $0xe8] sm:$0xff] %v448
  %485 = vst [vmem:[%s3 + $0xf0] sm:$0xff] %v449
  %486 = vst [vmem:[%s3 + $0xf8] sm:$0xff] %v450
  %487 = vst [vmem:[%s3 + $0x100] sm:$0xff] %v451
  %488 = vst [vmem:[%s3 + $0x108] sm:$0xff] %v452
  %489 = vst [vmem:[%s3 + $0x110] sm:$0xff] %v453
  %490 = vst [vmem:[%s3 + $0x118] sm:$0xff] %v454
  // Predicated region
  $region14: #{decoder_forward.7} parent=0 // pred_check
    _
  $region15: #{decoder_forward.7} parent=0 // pred_check_branch
    %492 = sbr.rel (0) target = $region17
  $region16: #{decoder_forward.7} parent=0 // pred_region
    _
  $region17: #{decoder_forward.7} parent=0 // pred_fallthru
    _
  // Predicated region
  $region18: #{decoder_forward.7} parent=0 // pred_check
    _
  $region19: #{decoder_forward.7} parent=0 // pred_check_branch
    %494 = sbr.rel (0) target = $region21
  $region20: #{decoder_forward.7} parent=0 // pred_region
    _
  $region21: #{decoder_forward.7} parent=0 // pred_fallthru
    _

// kernel: decoder_forward.8
$region0: #{decoder_forward.8}
  #allocation0 [shape = 'u32[]', space=smem, size = 0x4, offset = 0x4, fixed_abs, tag = 'smem constant byte address 0x4 - core index']
  #allocation1 [shape = 'u32[144,128]{1,0:T(1,128)}', space=vmem, size = 0x12000, scoped, tag = 'internal scratch']
  %s0 = inlined_call_operand.vmem [shape: f32[968,32], index: 0, kind: input, shape index: {}]
  %s1 = inlined_call_operand.vmem [shape: f32[32,128], index: 1, kind: input, shape index: {}]
  %s2 = inlined_call_operand.vmem [shape: f32[1,128], index: 2, kind: input, shape index: {}]
  %s3 = inlined_call_operand.vmem [shape: f32[968,128], index: 3, kind: output, shape index: {}]
  %s4 = sld [smem:[#allocation0]]
  $region22: #{decoder_forward.8} parent=0
    _
  %s6 = ssub.s32 1, %s4
  %s7 = scalar_select 0, %s6, %s4
  // Predicated region
  $region2: #{decoder_forward.8} parent=0 // pred_check
    _
  $region3: #{decoder_forward.8} parent=0 // pred_check_branch
    %9 = sbr.rel (0) target = $region5
  $region4: #{decoder_forward.8} parent=0 // pred_region
    _
  $region5: #{decoder_forward.8} parent=0 // pred_fallthru
    _
  // Predicated region
  $region6: #{decoder_forward.8} parent=0 // pred_check
    _
  $region7: #{decoder_forward.8} parent=0 // pred_check_branch
    %11 = sbr.rel (0) target = $region9
  $region8: #{decoder_forward.8} parent=0 // pred_region
    _
  $region9: #{decoder_forward.8} parent=0 // pred_fallthru
    _
  // Predicated region
  $region10: #{decoder_forward.8} parent=0 // pred_check
    _
  $region11: #{decoder_forward.8} parent=0 // pred_check_branch
    %13 = sbr.rel (0) target = $region13
  $region12: #{decoder_forward.8} parent=0 // pred_region
    _
  $region13: #{decoder_forward.8} parent=0 // pred_fallthru
    _
  %v14 = vld [vmem:[%s0] sm:$0xff]
  %v15 = vld [vmem:[%s0 + $0x8] sm:$0xff]
  %v16 = vld [vmem:[%s0 + $0x10] sm:$0xff]
  %v17 = vld [vmem:[%s0 + $0x18] sm:$0xff]
  %v18 = vld [vmem:[%s0 + $0x20] sm:$0xff]
  %v19 = vld [vmem:[%s0 + $0x28] sm:$0xff]
  %v20 = vld [vmem:[%s0 + $0x30] sm:$0xff]
  %v21 = vld [vmem:[%s0 + $0x38] sm:$0xff]
  %v22 = vld [vmem:[%s0 + $0x40] sm:$0xff]
  %v23 = vld [vmem:[%s0 + $0x48] sm:$0xff]
  %v24 = vld [vmem:[%s0 + $0x50] sm:$0xff]
  %v25 = vld [vmem:[%s0 + $0x58] sm:$0xff]
  %v26 = vld [vmem:[%s0 + $0x60] sm:$0xff]
  %v27 = vld [vmem:[%s0 + $0x68] sm:$0xff]
  %v28 = vld [vmem:[%s0 + $0x70] sm:$0xff]
  %v29 = vld [vmem:[%s0 + $0x78] sm:$0xff]
  %v30 = vld [vmem:[%s0 + $0x80] sm:$0xff]
  %v31 = vld [vmem:[%s0 + $0x88] sm:$0xff]
  %v32 = vld [vmem:[%s0 + $0x90] sm:$0xff]
  %v33 = vld [vmem:[%s0 + $0x98] sm:$0xff]
  %v34 = vld [vmem:[%s0 + $0xa0] sm:$0xff]
  %v35 = vld [vmem:[%s0 + $0xa8] sm:$0xff]
  %v36 = vld [vmem:[%s0 + $0xb0] sm:$0xff]
  %v37 = vld [vmem:[%s0 + $0xb8] sm:$0xff]
  %v38 = vld [vmem:[%s0 + $0xc0] sm:$0xff]
  %v39 = vld [vmem:[%s0 + $0xc8] sm:$0xff]
  %v40 = vld [vmem:[%s0 + $0xd0] sm:$0xff]
  %v41 = vld [vmem:[%s0 + $0xd8] sm:$0xff]
  %v42 = vld [vmem:[%s0 + $0xe0] sm:$0xff]
  %v43 = vld [vmem:[%s0 + $0xe8] sm:$0xff]
  %v44 = vld [vmem:[%s0 + $0xf0] sm:$0xff]
  %v45 = vld [vmem:[%s0 + $0xf8] sm:$0xff]
  %v46 = vld [vmem:[%s0 + $0x100] sm:$0xff]
  %v47 = vld [vmem:[%s0 + $0x108] sm:$0xff]
  %v48 = vld [vmem:[%s0 + $0x110] sm:$0xff]
  %v49 = vld [vmem:[%s0 + $0x118] sm:$0xff]
  %v50 = vld [vmem:[%s0 + $0x120] sm:$0xff]
  %v51 = vld [vmem:[%s0 + $0x128] sm:$0xff]
  %v52 = vld [vmem:[%s0 + $0x130] sm:$0xff]
  %v53 = vld [vmem:[%s0 + $0x138] sm:$0xff]
  %v54 = vld [vmem:[%s0 + $0x140] sm:$0xff]
  %v55 = vld [vmem:[%s0 + $0x148] sm:$0xff]
  %v56 = vld [vmem:[%s0 + $0x150] sm:$0xff]
  %v57 = vld [vmem:[%s0 + $0x158] sm:$0xff]
  %v58 = vld [vmem:[%s0 + $0x160] sm:$0xff]
  %v59 = vld [vmem:[%s0 + $0x168] sm:$0xff]
  %v60 = vld [vmem:[%s0 + $0x170] sm:$0xff]
  %v61 = vld [vmem:[%s0 + $0x178] sm:$0xff]
  %v62 = vld [vmem:[%s0 + $0x180] sm:$0xff]
  %v63 = vld [vmem:[%s0 + $0x188] sm:$0xff]
  %v64 = vld [vmem:[%s0 + $0x190] sm:$0xff]
  %v65 = vld [vmem:[%s0 + $0x198] sm:$0xff]
  %v66 = vld [vmem:[%s0 + $0x1a0] sm:$0xff]
  %v67 = vld [vmem:[%s0 + $0x1a8] sm:$0xff]
  %v68 = vld [vmem:[%s0 + $0x1b0] sm:$0xff]
  %v69 = vld [vmem:[%s0 + $0x1b8] sm:$0xff]
  %v70 = vld [vmem:[%s0 + $0x1c0] sm:$0xff]
  %v71 = vld [vmem:[%s0 + $0x1c8] sm:$0xff]
  %v72 = vld [vmem:[%s0 + $0x1d0] sm:$0xff]
  %v73 = vld [vmem:[%s0 + $0x1d8] sm:$0xff]
  %v74 = vld [vmem:[%s0 + $0x1e0] sm:$0xff]
  %v75 = vld [vmem:[%s0 + $0x1e8] sm:$0xff]
  %v76 = vld [vmem:[%s0 + $0x1f0] sm:$0xff]
  %v77 = vld [vmem:[%s0 + $0x1f8] sm:$0xff]
  %v78 = vld [vmem:[%s0 + $0x200] sm:$0xff]
  %v79 = vld [vmem:[%s0 + $0x208] sm:$0xff]
  %v80 = vld [vmem:[%s0 + $0x210] sm:$0xff]
  %v81 = vld [vmem:[%s0 + $0x218] sm:$0xff]
  %v82 = vld [vmem:[%s0 + $0x220] sm:$0xff]
  %v83 = vld [vmem:[%s0 + $0x228] sm:$0xff]
  %v84 = vld [vmem:[%s0 + $0x230] sm:$0xff]
  %v85 = vld [vmem:[%s0 + $0x238] sm:$0xff]
  %v86 = vld [vmem:[%s0 + $0x240] sm:$0xff]
  %v87 = vld [vmem:[%s0 + $0x248] sm:$0xff]
  %v88 = vld [vmem:[%s0 + $0x250] sm:$0xff]
  %v89 = vld [vmem:[%s0 + $0x258] sm:$0xff]
  %v90 = vld [vmem:[%s0 + $0x260] sm:$0xff]
  %v91 = vld [vmem:[%s0 + $0x268] sm:$0xff]
  %v92 = vld [vmem:[%s0 + $0x270] sm:$0xff]
  %v93 = vld [vmem:[%s0 + $0x278] sm:$0xff]
  %v94 = vld [vmem:[%s0 + $0x280] sm:$0xff]
  %v95 = vld [vmem:[%s0 + $0x288] sm:$0xff]
  %v96 = vld [vmem:[%s0 + $0x290] sm:$0xff]
  %v97 = vld [vmem:[%s0 + $0x298] sm:$0xff]
  %v98 = vld [vmem:[%s0 + $0x2a0] sm:$0xff]
  %v99 = vld [vmem:[%s0 + $0x2a8] sm:$0xff]
  %v100 = vld [vmem:[%s0 + $0x2b0] sm:$0xff]
  %v101 = vld [vmem:[%s0 + $0x2b8] sm:$0xff]
  %v102 = vld [vmem:[%s0 + $0x2c0] sm:$0xff]
  %v103 = vld [vmem:[%s0 + $0x2c8] sm:$0xff]
  %v104 = vld [vmem:[%s0 + $0x2d0] sm:$0xff]
  %v105 = vld [vmem:[%s0 + $0x2d8] sm:$0xff]
  %v106 = vld [vmem:[%s0 + $0x2e0] sm:$0xff]
  %v107 = vld [vmem:[%s0 + $0x2e8] sm:$0xff]
  %v108 = vld [vmem:[%s0 + $0x2f0] sm:$0xff]
  %v109 = vld [vmem:[%s0 + $0x2f8] sm:$0xff]
  %v110 = vld [vmem:[%s0 + $0x300] sm:$0xff]
  %v111 = vld [vmem:[%s0 + $0x308] sm:$0xff]
  %v112 = vld [vmem:[%s0 + $0x310] sm:$0xff]
  %v113 = vld [vmem:[%s0 + $0x318] sm:$0xff]
  %v114 = vld [vmem:[%s0 + $0x320] sm:$0xff]
  %v115 = vld [vmem:[%s0 + $0x328] sm:$0xff]
  %v116 = vld [vmem:[%s0 + $0x330] sm:$0xff]
  %v117 = vld [vmem:[%s0 + $0x338] sm:$0xff]
  %v118 = vld [vmem:[%s0 + $0x340] sm:$0xff]
  %v119 = vld [vmem:[%s0 + $0x348] sm:$0xff]
  %v120 = vld [vmem:[%s0 + $0x350] sm:$0xff]
  %v121 = vld [vmem:[%s0 + $0x358] sm:$0xff]
  %v122 = vld [vmem:[%s0 + $0x360] sm:$0xff]
  %v123 = vld [vmem:[%s0 + $0x368] sm:$0xff]
  %v124 = vld [vmem:[%s0 + $0x370] sm:$0xff]
  %v125 = vld [vmem:[%s0 + $0x378] sm:$0xff]
  %v126 = vld [vmem:[%s0 + $0x380] sm:$0xff]
  %v127 = vld [vmem:[%s0 + $0x388] sm:$0xff]
  %v128 = vld [vmem:[%s0 + $0x390] sm:$0xff]
  %v129 = vld [vmem:[%s0 + $0x398] sm:$0xff]
  %v130 = vld [vmem:[%s0 + $0x3a0] sm:$0xff]
  %v131 = vld [vmem:[%s0 + $0x3a8] sm:$0xff]
  %v132 = vld [vmem:[%s0 + $0x3b0] sm:$0xff]
  %v133 = vld [vmem:[%s0 + $0x3b8] sm:$0xff]
  %v134 = vld [vmem:[%s0 + $0x3c0] sm:$0xff]
  %v135 = vld [vmem:[%s1] sm:$0xff]
  %v136 = vld [vmem:[%s1 + $0x8] sm:$0xff]
  %v137 = vld [vmem:[%s1 + $0x10] sm:$0xff]
  %v138 = vld [vmem:[%s1 + $0x18] sm:$0xff]
  %v139 = vld [vmem:[%s2] sm:$0x1]
  %v141 = vlaneseq
  %v142 = vshrl.u32 %v141, 7
  %v143 = vsub.s32 0, %v142
  %v144 = vrot.slane %v139, %v143
  %vm146 = vcmask 261120
  %v148 = vsel %vm146, %v14, 0
  %v151 = vsel %vm146, %v15, 0
  %v154 = vsel %vm146, %v16, 0
  %v157 = vsel %vm146, %v17, 0
  %v160 = vsel %vm146, %v18, 0
  %v163 = vsel %vm146, %v19, 0
  %v166 = vsel %vm146, %v20, 0
  %v169 = vsel %vm146, %v21, 0
  %v172 = vsel %vm146, %v22, 0
  %v175 = vsel %vm146, %v23, 0
  %v178 = vsel %vm146, %v24, 0
  %v181 = vsel %vm146, %v25, 0
  %v184 = vsel %vm146, %v26, 0
  %v187 = vsel %vm146, %v27, 0
  %v190 = vsel %vm146, %v28, 0
  %v193 = vsel %vm146, %v29, 0
  %v196 = vsel %vm146, %v30, 0
  %v199 = vsel %vm146, %v31, 0
  %v202 = vsel %vm146, %v32, 0
  %v205 = vsel %vm146, %v33, 0
  %v208 = vsel %vm146, %v34, 0
  %v211 = vsel %vm146, %v35, 0
  %v214 = vsel %vm146, %v36, 0
  %v217 = vsel %vm146, %v37, 0
  %v220 = vsel %vm146, %v38, 0
  %v223 = vsel %vm146, %v39, 0
  %v226 = vsel %vm146, %v40, 0
  %v229 = vsel %vm146, %v41, 0
  %v232 = vsel %vm146, %v42, 0
  %v235 = vsel %vm146, %v43, 0
  %v238 = vsel %vm146, %v44, 0
  %v241 = vsel %vm146, %v45, 0
  %v244 = vsel %vm146, %v46, 0
  %v247 = vsel %vm146, %v47, 0
  %v250 = vsel %vm146, %v48, 0
  %v253 = vsel %vm146, %v49, 0
  %v256 = vsel %vm146, %v50, 0
  %v259 = vsel %vm146, %v51, 0
  %v262 = vsel %vm146, %v52, 0
  %v265 = vsel %vm146, %v53, 0
  %v268 = vsel %vm146, %v54, 0
  %v271 = vsel %vm146, %v55, 0
  %v274 = vsel %vm146, %v56, 0
  %v277 = vsel %vm146, %v57, 0
  %v280 = vsel %vm146, %v58, 0
  %v283 = vsel %vm146, %v59, 0
  %v286 = vsel %vm146, %v60, 0
  %v289 = vsel %vm146, %v61, 0
  %v292 = vsel %vm146, %v62, 0
  %v295 = vsel %vm146, %v63, 0
  %v298 = vsel %vm146, %v64, 0
  %v301 = vsel %vm146, %v65, 0
  %v304 = vsel %vm146, %v66, 0
  %v307 = vsel %vm146, %v67, 0
  %v310 = vsel %vm146, %v68, 0
  %v313 = vsel %vm146, %v69, 0
  %v316 = vsel %vm146, %v70, 0
  %v319 = vsel %vm146, %v71, 0
  %v322 = vsel %vm146, %v72, 0
  %v325 = vsel %vm146, %v73, 0
  %v328 = vsel %vm146, %v74, 0
  %v331 = vsel %vm146, %v75, 0
  %v334 = vsel %vm146, %v76, 0
  %v337 = vsel %vm146, %v77, 0
  %v340 = vsel %vm146, %v78, 0
  %v343 = vsel %vm146, %v79, 0
  %v346 = vsel %vm146, %v80, 0
  %v349 = vsel %vm146, %v81, 0
  %v352 = vsel %vm146, %v82, 0
  %v355 = vsel %vm146, %v83, 0
  %v358 = vsel %vm146, %v84, 0
  %v361 = vsel %vm146, %v85, 0
  %v364 = vsel %vm146, %v86, 0
  %v367 = vsel %vm146, %v87, 0
  %v370 = vsel %vm146, %v88, 0
  %v373 = vsel %vm146, %v89, 0
  %v376 = vsel %vm146, %v90, 0
  %v379 = vsel %vm146, %v91, 0
  %v382 = vsel %vm146, %v92, 0
  %v385 = vsel %vm146, %v93, 0
  %v388 = vsel %vm146, %v94, 0
  %v391 = vsel %vm146, %v95, 0
  %v394 = vsel %vm146, %v96, 0
  %v397 = vsel %vm146, %v97, 0
  %v400 = vsel %vm146, %v98, 0
  %v403 = vsel %vm146, %v99, 0
  %v406 = vsel %vm146, %v100, 0
  %v409 = vsel %vm146, %v101, 0
  %v412 = vsel %vm146, %v102, 0
  %v415 = vsel %vm146, %v103, 0
  %v418 = vsel %vm146, %v104, 0
  %v421 = vsel %vm146, %v105, 0
  %v424 = vsel %vm146, %v106, 0
  %v427 = vsel %vm146, %v107, 0
  %v430 = vsel %vm146, %v108, 0
  %v433 = vsel %vm146, %v109, 0
  %v436 = vsel %vm146, %v110, 0
  %v439 = vsel %vm146, %v111, 0
  %v442 = vsel %vm146, %v112, 0
  %v445 = vsel %vm146, %v113, 0
  %v448 = vsel %vm146, %v114, 0
  %v451 = vsel %vm146, %v115, 0
  %v454 = vsel %vm146, %v116, 0
  %v457 = vsel %vm146, %v117, 0
  %v460 = vsel %vm146, %v118, 0
  %v463 = vsel %vm146, %v119, 0
  %v466 = vsel %vm146, %v120, 0
  %v469 = vsel %vm146, %v121, 0
  %v472 = vsel %vm146, %v122, 0
  %v475 = vsel %vm146, %v123, 0
  %v478 = vsel %vm146, %v124, 0
  %v481 = vsel %vm146, %v125, 0
  %v484 = vsel %vm146, %v126, 0
  %v487 = vsel %vm146, %v127, 0
  %v490 = vsel %vm146, %v128, 0
  %v493 = vsel %vm146, %v129, 0
  %v496 = vsel %vm146, %v130, 0
  %v499 = vsel %vm146, %v131, 0
  %v502 = vsel %vm146, %v132, 0
  %v505 = vsel %vm146, %v133, 0
  %v508 = vsel %vm146, %v134, 0
  %510 = vmatprep.subr.mxu0 0.0
  %511 = vmatpush1.msra.mxu0 %v135
  %512 = vmatprep.subr.mxu0 0.0
  %513 = vmatpush1.msra.mxu0 %v136
  %514 = vmatprep.subr.mxu0 0.0
  %515 = vmatpush1.msra.mxu0 %v137
  %516 = vmatprep.subr.mxu0 0.0
  %517 = vmatpush1.msra.mxu0 %v138
  %518 = vmatprep.subr.mxu0 0.0
  %519 = vmatpush1.msra.mxu0 0.0
  %520 = vmatprep.subr.mxu0 0.0
  %521 = vmatpush1.msra.mxu0 0.0
  %522 = vmatprep.subr.mxu0 0.0
  %523 = vmatpush1.msra.mxu0 0.0
  %524 = vmatprep.subr.mxu0 0.0
  %525 = vmatpush1.msra.mxu0 0.0
  %526 = vmatprep.subr.mxu0 0.0
  %527 = vmatpush1.msra.mxu0 0.0
  %528 = vmatprep.subr.mxu0 0.0
  %529 = vmatpush1.msra.mxu0 0.0
  %530 = vmatprep.subr.mxu0 0.0
  %531 = vmatpush1.msra.mxu0 0.0
  %532 = vmatprep.subr.mxu0 0.0
  %533 = vmatpush1.msra.mxu0 0.0
  %534 = vmatprep.subr.mxu0 0.0
  %535 = vmatpush1.msra.mxu0 0.0
  %536 = vmatprep.subr.mxu0 0.0
  %537 = vmatpush1.msra.mxu0 0.0
  %538 = vmatprep.subr.mxu0 0.0
  %539 = vmatpush1.msra.mxu0 0.0
  %540 = vmatprep.subr.mxu0 0.0
  %541 = vmatpush1.msra.mxu0 0.0
  %542 = vmatprep.subr.mxu0 0.0
  %543 = vmatpush1.msra.mxu0 0.0
  %544 = vmatprep.subr.mxu0 0.0
  %545 = vmatpush1.msra.mxu0 0.0
  %546 = vmatprep.subr.mxu0 0.0
  %547 = vmatpush1.msra.mxu0 0.0
  %548 = vmatprep.subr.mxu0 0.0
  %549 = vmatpush1.msra.mxu0 0.0
  %550 = vmatprep.subr.mxu0 0.0
  %551 = vmatpush1.msra.mxu0 0.0
  %552 = vmatprep.subr.mxu0 0.0
  %553 = vmatpush1.msra.mxu0 0.0
  %554 = vmatprep.subr.mxu0 0.0
  %555 = vmatpush1.msra.mxu0 0.0
  %556 = vmatprep.subr.mxu0 0.0
  %557 = vmatpush1.msra.mxu0 0.0
  %558 = vmatprep.subr.mxu0 0.0
  %559 = vmatpush1.msra.mxu0 0.0
  %560 = vmatprep.subr.mxu0 0.0
  %561 = vmatpush1.msra.mxu0 0.0
  %562 = vmatprep.subr.mxu0 0.0
  %563 = vmatpush1.msra.mxu0 0.0
  %564 = vmatprep.subr.mxu0 0.0
  %565 = vmatpush1.msra.mxu0 0.0
  %566 = vmatprep.subr.mxu0 0.0
  %567 = vmatpush1.msra.mxu0 0.0
  %568 = vmatprep.subr.mxu0 0.0
  %569 = vmatpush1.msra.mxu0 0.0
  %570 = vmatprep.subr.mxu0 0.0
  %571 = vmatpush1.msra.mxu0 0.0
  %572 = vmatprep.subr.mxu0 0.0
  %573 = vmatpush1.msra.mxu0 0.0
  %574 = vmatprep.mubr.f32.mxu0 0.0
  %575 = vmatmul.mubr.f32.gmra.mrb[0].mxu0 %v148
  %v576 = vpop.f32.mrb[0].mxu0
  %v577 = vadd.f32 %v144, %v576
  %v578 = vpop.f32.mrb[0].mxu0
  %579 = vmatprep.mubr.f32.mxu0 0.0
  %580 = vmatmul.mubr.f32.gmra.mrb[0].mxu0 %v151
  %v581 = vpop.f32.mrb[0].mxu0
  %v582 = vadd.f32 %v144, %v581
  %v583 = vpop.f32.mrb[0].mxu0
  %584 = vmatprep.mubr.f32.mxu0 0.0
  %585 = vmatmul.mubr.f32.gmra.mrb[0].mxu0 %v154
  %v586 = vpop.f32.mrb[0].mxu0
  %v587 = vadd.f32 %v144, %v586
  %v588 = vpop.f32.mrb[0].mxu0
  %589 = vmatprep.mubr.f32.mxu0 0.0
  %590 = vmatmul.mubr.f32.gmra.mrb[0].mxu0 %v157
  %v591 = vpop.f32.mrb[0].mxu0
  %v592 = vadd.f32 %v144, %v591
  %v593 = vpop.f32.mrb[0].mxu0
  %594 = vmatprep.mubr.f32.mxu0 0.0
  %595 = vmatmul.mubr.f32.gmra.mrb[0].mxu0 %v160
  %v596 = vpop.f32.mrb[0].mxu0
  %v597 = vadd.f32 %v144, %v596
  %v598 = vpop.f32.mrb[0].mxu0
  %599 = vmatprep.mubr.f32.mxu0 0.0
  %600 = vmatmul.mubr.f32.gmra.mrb[0].mxu0 %v163
  %v601 = vpop.f32.mrb[0].mxu0
  %v602 = vadd.f32 %v144, %v601
  %v603 = vpop.f32.mrb[0].mxu0
  %604 = vmatprep.mubr.f32.mxu0 0.0
  %605 = vmatmul.mubr.f32.gmra.mrb[0].mxu0 %v166
  %v606 = vpop.f32.mrb[0].mxu0
  %v607 = vadd.f32 %v144, %v606
  %v608 = vpop.f32.mrb[0].mxu0
  %609 = vmatprep.mubr.f32.mxu0 0.0
  %610 = vmatmul.mubr.f32.gmra.mrb[0].mxu0 %v169
  %v611 = vpop.f32.mrb[0].mxu0
  %v612 = vadd.f32 %v144, %v611
  %v613 = vpop.f32.mrb[0].mxu0
  %614 = vmatprep.mubr.f32.mxu0 0.0
  %615 = vmatmul.mubr.f32.gmra.mrb[0].mxu0 %v172
  %v616 = vpop.f32.mrb[0].mxu0
  %v617 = vadd.f32 %v144, %v616
  %v618 = vpop.f32.mrb[0].mxu0
  %619 = vmatprep.mubr.f32.mxu0 0.0
  %620 = vmatmul.mubr.f32.gmra.mrb[0].mxu0 %v175
  %v621 = vpop.f32.mrb[0].mxu0
  %v622 = vadd.f32 %v144, %v621
  %v623 = vpop.f32.mrb[0].mxu0
  %624 = vmatprep.mubr.f32.mxu0 0.0
  %625 = vmatmul.mubr.f32.gmra.mrb[0].mxu0 %v178
  %v626 = vpop.f32.mrb[0].mxu0
  %v627 = vadd.f32 %v144, %v626
  %v628 = vpop.f32.mrb[0].mxu0
  %629 = vmatprep.mubr.f32.mxu0 0.0
  %630 = vmatmul.mubr.f32.gmra.mrb[0].mxu0 %v181
  %v631 = vpop.f32.mrb[0].mxu0
  %v632 = vadd.f32 %v144, %v631
  %v633 = vpop.f32.mrb[0].mxu0
  %634 = vmatprep.mubr.f32.mxu0 0.0
  %635 = vmatmul.mubr.f32.gmra.mrb[0].mxu0 %v184
  %v636 = vpop.f32.mrb[0].mxu0
  %v637 = vadd.f32 %v144, %v636
  %v638 = vpop.f32.mrb[0].mxu0
  %639 = vmatprep.mubr.f32.mxu0 0.0
  %640 = vmatmul.mubr.f32.gmra.mrb[0].mxu0 %v187
  %v641 = vpop.f32.mrb[0].mxu0
  %v642 = vadd.f32 %v144, %v641
  %v643 = vpop.f32.mrb[0].mxu0
  %644 = vmatprep.mubr.f32.mxu0 0.0
  %645 = vmatmul.mubr.f32.gmra.mrb[0].mxu0 %v190
  %v646 = vpop.f32.mrb[0].mxu0
  %v647 = vadd.f32 %v144, %v646
  %v648 = vpop.f32.mrb[0].mxu0
  %649 = vmatprep.mubr.f32.mxu0 0.0
  %650 = vmatmul.mubr.f32.gmra.mrb[0].mxu0 %v193
  %v651 = vpop.f32.mrb[0].mxu0
  %v652 = vadd.f32 %v144, %v651
  %v653 = vpop.f32.mrb[0].mxu0
  %654 = vmatprep.mubr.f32.mxu0 0.0
  %655 = vmatmul.mubr.f32.gmra.mrb[0].mxu0 %v196
  %v656 = vpop.f32.mrb[0].mxu0
  %v657 = vadd.f32 %v144, %v656
  %v658 = vpop.f32.mrb[0].mxu0
  %659 = vmatprep.mubr.f32.mxu0 0.0
  %660 = vmatmul.mubr.f32.gmra.mrb[0].mxu0 %v199
  %v661 = vpop.f32.mrb[0].mxu0
  %v662 = vadd.f32 %v144, %v661
  %v663 = vpop.f32.mrb[0].mxu0
  %664 = vmatprep.mubr.f32.mxu0 0.0
  %665 = vmatmul.mubr.f32.gmra.mrb[0].mxu0 %v202
  %v666 = vpop.f32.mrb[0].mxu0
  %v667 = vadd.f32 %v144, %v666
  %v668 = vpop.f32.mrb[0].mxu0
  %669 = vmatprep.mubr.f32.mxu0 0.0
  %670 = vmatmul.mubr.f32.gmra.mrb[0].mxu0 %v205
  %v671 = vpop.f32.mrb[0].mxu0
  %v672 = vadd.f32 %v144, %v671
  %v673 = vpop.f32.mrb[0].mxu0
  %674 = vmatprep.mubr.f32.mxu0 0.0
  %675 = vmatmul.mubr.f32.gmra.mrb[0].mxu0 %v208
  %v676 = vpop.f32.mrb[0].mxu0
  %v677 = vadd.f32 %v144, %v676
  %v678 = vpop.f32.mrb[0].mxu0
  %679 = vmatprep.mubr.f32.mxu0 0.0
  %680 = vmatmul.mubr.f32.gmra.mrb[0].mxu0 %v211
  %v681 = vpop.f32.mrb[0].mxu0
  %v682 = vadd.f32 %v144, %v681
  %v683 = vpop.f32.mrb[0].mxu0
  %684 = vmatprep.mubr.f32.mxu0 0.0
  %685 = vmatmul.mubr.f32.gmra.mrb[0].mxu0 %v214
  %v686 = vpop.f32.mrb[0].mxu0
  %v687 = vadd.f32 %v144, %v686
  %v688 = vpop.f32.mrb[0].mxu0
  %689 = vmatprep.mubr.f32.mxu0 0.0
  %690 = vmatmul.mubr.f32.gmra.mrb[0].mxu0 %v217
  %v691 = vpop.f32.mrb[0].mxu0
  %v692 = vadd.f32 %v144, %v691
  %v693 = vpop.f32.mrb[0].mxu0
  %694 = vmatprep.mubr.f32.mxu0 0.0
  %695 = vmatmul.mubr.f32.gmra.mrb[0].mxu0 %v220
  %v696 = vpop.f32.mrb[0].mxu0
  %v697 = vadd.f32 %v144, %v696
  %v698 = vpop.f32.mrb[0].mxu0
  %699 = vmatprep.mubr.f32.mxu0 0.0
  %700 = vmatmul.mubr.f32.gmra.mrb[0].mxu0 %v223
  %v701 = vpop.f32.mrb[0].mxu0
  %v702 = vadd.f32 %v144, %v701
  %v703 = vpop.f32.mrb[0].mxu0
  %704 = vmatprep.mubr.f32.mxu0 0.0
  %705 = vmatmul.mubr.f32.gmra.mrb[0].mxu0 %v226
  %v706 = vpop.f32.mrb[0].mxu0
  %v707 = vadd.f32 %v144, %v706
  %v708 = vpop.f32.mrb[0].mxu0
  %709 = vmatprep.mubr.f32.mxu0 0.0
  %710 = vmatmul.mubr.f32.gmra.mrb[0].mxu0 %v229
  %v711 = vpop.f32.mrb[0].mxu0
  %v712 = vadd.f32 %v144, %v711
  %v713 = vpop.f32.mrb[0].mxu0
  %714 = vmatprep.mubr.f32.mxu0 0.0
  %715 = vmatmul.mubr.f32.gmra.mrb[0].mxu0 %v232
  %v716 = vpop.f32.mrb[0].mxu0
  %v717 = vadd.f32 %v144, %v716
  %v718 = vpop.f32.mrb[0].mxu0
  %719 = vmatprep.mubr.f32.mxu0 0.0
  %720 = vmatmul.mubr.f32.gmra.mrb[0].mxu0 %v235
  %v721 = vpop.f32.mrb[0].mxu0
  %v722 = vadd.f32 %v144, %v721
  %v723 = vpop.f32.mrb[0].mxu0
  %724 = vmatprep.mubr.f32.mxu0 0.0
  %725 = vmatmul.mubr.f32.gmra.mrb[0].mxu0 %v238
  %v726 = vpop.f32.mrb[0].mxu0
  %v727 = vadd.f32 %v144, %v726
  %v728 = vpop.f32.mrb[0].mxu0
  %729 = vmatprep.mubr.f32.mxu0 0.0
  %730 = vmatmul.mubr.f32.gmra.mrb[0].mxu0 %v241
  %v731 = vpop.f32.mrb[0].mxu0
  %v732 = vadd.f32 %v144, %v731
  %v733 = vpop.f32.mrb[0].mxu0
  %734 = vmatprep.mubr.f32.mxu0 0.0
  %735 = vmatmul.mubr.f32.gmra.mrb[0].mxu0 %v244
  %v736 = vpop.f32.mrb[0].mxu0
  %v737 = vadd.f32 %v144, %v736
  %v738 = vpop.f32.mrb[0].mxu0
  %739 = vmatprep.mubr.f32.mxu0 0.0
  %740 = vmatmul.mubr.f32.gmra.mrb[0].mxu0 %v247
  %v741 = vpop.f32.mrb[0].mxu0
  %v742 = vadd.f32 %v144, %v741
  %v743 = vpop.f32.mrb[0].mxu0
  %744 = vmatprep.mubr.f32.mxu0 0.0
  %745 = vmatmul.mubr.f32.gmra.mrb[0].mxu0 %v250
  %v746 = vpop.f32.mrb[0].mxu0
  %v747 = vadd.f32 %v144, %v746
  %v748 = vpop.f32.mrb[0].mxu0
  %749 = vmatprep.mubr.f32.mxu0 0.0
  %750 = vmatmul.mubr.f32.gmra.mrb[0].mxu0 %v253
  %v751 = vpop.f32.mrb[0].mxu0
  %v752 = vadd.f32 %v144, %v751
  %v753 = vpop.f32.mrb[0].mxu0
  %754 = vmatprep.mubr.f32.mxu0 0.0
  %755 = vmatmul.mubr.f32.gmra.mrb[0].mxu0 %v256
  %v756 = vpop.f32.mrb[0].mxu0
  %v757 = vadd.f32 %v144, %v756
  %v758 = vpop.f32.mrb[0].mxu0
  %759 = vmatprep.mubr.f32.mxu0 0.0
  %760 = vmatmul.mubr.f32.gmra.mrb[0].mxu0 %v259
  %v761 = vpop.f32.mrb[0].mxu0
  %v762 = vadd.f32 %v144, %v761
  %v763 = vpop.f32.mrb[0].mxu0
  %764 = vmatprep.mubr.f32.mxu0 0.0
  %765 = vmatmul.mubr.f32.gmra.mrb[0].mxu0 %v262
  %v766 = vpop.f32.mrb[0].mxu0
  %v767 = vadd.f32 %v144, %v766
  %v768 = vpop.f32.mrb[0].mxu0
  %769 = vmatprep.mubr.f32.mxu0 0.0
  %770 = vmatmul.mubr.f32.gmra.mrb[0].mxu0 %v265
  %v771 = vpop.f32.mrb[0].mxu0
  %v772 = vadd.f32 %v144, %v771
  %v773 = vpop.f32.mrb[0].mxu0
  %774 = vmatprep.mubr.f32.mxu0 0.0
  %775 = vmatmul.mubr.f32.gmra.mrb[0].mxu0 %v268
  %v776 = vpop.f32.mrb[0].mxu0
  %v777 = vadd.f32 %v144, %v776
  %v778 = vpop.f32.mrb[0].mxu0
  %779 = vmatprep.mubr.f32.mxu0 0.0
  %780 = vmatmul.mubr.f32.gmra.mrb[0].mxu0 %v271
  %v781 = vpop.f32.mrb[0].mxu0
  %v782 = vadd.f32 %v144, %v781
  %v783 = vpop.f32.mrb[0].mxu0
  %784 = vmatprep.mubr.f32.mxu0 0.0
  %785 = vmatmul.mubr.f32.gmra.mrb[0].mxu0 %v274
  %v786 = vpop.f32.mrb[0].mxu0
  %v787 = vadd.f32 %v144, %v786
  %v788 = vpop.f32.mrb[0].mxu0
  %789 = vmatprep.mubr.f32.mxu0 0.0
  %790 = vmatmul.mubr.f32.gmra.mrb[0].mxu0 %v277
  %v791 = vpop.f32.mrb[0].mxu0
  %v792 = vadd.f32 %v144, %v791
  %v793 = vpop.f32.mrb[0].mxu0
  %794 = vmatprep.mubr.f32.mxu0 0.0
  %795 = vmatmul.mubr.f32.gmra.mrb[0].mxu0 %v280
  %v796 = vpop.f32.mrb[0].mxu0
  %v797 = vadd.f32 %v144, %v796
  %v798 = vpop.f32.mrb[0].mxu0
  %799 = vmatprep.mubr.f32.mxu0 0.0
  %800 = vmatmul.mubr.f32.gmra.mrb[0].mxu0 %v283
  %v801 = vpop.f32.mrb[0].mxu0
  %v802 = vadd.f32 %v144, %v801
  %v803 = vpop.f32.mrb[0].mxu0
  %804 = vmatprep.mubr.f32.mxu0 0.0
  %805 = vmatmul.mubr.f32.gmra.mrb[0].mxu0 %v286
  %v806 = vpop.f32.mrb[0].mxu0
  %v807 = vadd.f32 %v144, %v806
  %v808 = vpop.f32.mrb[0].mxu0
  %809 = vmatprep.mubr.f32.mxu0 0.0
  %810 = vmatmul.mubr.f32.gmra.mrb[0].mxu0 %v289
  %v811 = vpop.f32.mrb[0].mxu0
  %v812 = vadd.f32 %v144, %v811
  %v813 = vpop.f32.mrb[0].mxu0
  %814 = vmatprep.mubr.f32.mxu0 0.0
  %815 = vmatmul.mubr.f32.gmra.mrb[0].mxu0 %v292
  %v816 = vpop.f32.mrb[0].mxu0
  %v817 = vadd.f32 %v144, %v816
  %v818 = vpop.f32.mrb[0].mxu0
  %819 = vmatprep.mubr.f32.mxu0 0.0
  %820 = vmatmul.mubr.f32.gmra.mrb[0].mxu0 %v295
  %v821 = vpop.f32.mrb[0].mxu0
  %v822 = vadd.f32 %v144, %v821
  %v823 = vpop.f32.mrb[0].mxu0
  %824 = vmatprep.mubr.f32.mxu0 0.0
  %825 = vmatmul.mubr.f32.gmra.mrb[0].mxu0 %v298
  %v826 = vpop.f32.mrb[0].mxu0
  %v827 = vadd.f32 %v144, %v826
  %v828 = vpop.f32.mrb[0].mxu0
  %829 = vmatprep.mubr.f32.mxu0 0.0
  %830 = vmatmul.mubr.f32.gmra.mrb[0].mxu0 %v301
  %v831 = vpop.f32.mrb[0].mxu0
  %v832 = vadd.f32 %v144, %v831
  %v833 = vpop.f32.mrb[0].mxu0
  %834 = vmatprep.mubr.f32.mxu0 0.0
  %835 = vmatmul.mubr.f32.gmra.mrb[0].mxu0 %v304
  %v836 = vpop.f32.mrb[0].mxu0
  %v837 = vadd.f32 %v144, %v836
  %v838 = vpop.f32.mrb[0].mxu0
  %839 = vmatprep.mubr.f32.mxu0 0.0
  %840 = vmatmul.mubr.f32.gmra.mrb[0].mxu0 %v307
  %v841 = vpop.f32.mrb[0].mxu0
  %v842 = vadd.f32 %v144, %v841
  %v843 = vpop.f32.mrb[0].mxu0
  %844 = vmatprep.mubr.f32.mxu0 0.0
  %845 = vmatmul.mubr.f32.gmra.mrb[0].mxu0 %v310
  %v846 = vpop.f32.mrb[0].mxu0
  %v847 = vadd.f32 %v144, %v846
  %v848 = vpop.f32.mrb[0].mxu0
  %849 = vmatprep.mubr.f32.mxu0 0.0
  %850 = vmatmul.mubr.f32.gmra.mrb[0].mxu0 %v313
  %v851 = vpop.f32.mrb[0].mxu0
  %v852 = vadd.f32 %v144, %v851
  %v853 = vpop.f32.mrb[0].mxu0
  %854 = vmatprep.mubr.f32.mxu0 0.0
  %855 = vmatmul.mubr.f32.gmra.mrb[0].mxu0 %v316
  %v856 = vpop.f32.mrb[0].mxu0
  %v857 = vadd.f32 %v144, %v856
  %v858 = vpop.f32.mrb[0].mxu0
  %859 = vmatprep.mubr.f32.mxu0 0.0
  %860 = vmatmul.mubr.f32.gmra.mrb[0].mxu0 %v319
  %v861 = vpop.f32.mrb[0].mxu0
  %v862 = vadd.f32 %v144, %v861
  %v863 = vpop.f32.mrb[0].mxu0
  %864 = vmatprep.mubr.f32.mxu0 0.0
  %865 = vmatmul.mubr.f32.gmra.mrb[0].mxu0 %v322
  %v866 = vpop.f32.mrb[0].mxu0
  %v867 = vadd.f32 %v144, %v866
  %v868 = vpop.f32.mrb[0].mxu0
  %869 = vmatprep.mubr.f32.mxu0 0.0
  %870 = vmatmul.mubr.f32.gmra.mrb[0].mxu0 %v325
  %v871 = vpop.f32.mrb[0].mxu0
  %v872 = vadd.f32 %v144, %v871
  %v873 = vpop.f32.mrb[0].mxu0
  %874 = vmatprep.mubr.f32.mxu0 0.0
  %875 = vmatmul.mubr.f32.gmra.mrb[0].mxu0 %v328
  %v876 = vpop.f32.mrb[0].mxu0
  %v877 = vadd.f32 %v144, %v876
  %v878 = vpop.f32.mrb[0].mxu0
  %879 = vmatprep.mubr.f32.mxu0 0.0
  %880 = vmatmul.mubr.f32.gmra.mrb[0].mxu0 %v331
  %v881 = vpop.f32.mrb[0].mxu0
  %v882 = vadd.f32 %v144, %v881
  %v883 = vpop.f32.mrb[0].mxu0
  %884 = vmatprep.mubr.f32.mxu0 0.0
  %885 = vmatmul.mubr.f32.gmra.mrb[0].mxu0 %v334
  %v886 = vpop.f32.mrb[0].mxu0
  %v887 = vadd.f32 %v144, %v886
  %v888 = vpop.f32.mrb[0].mxu0
  %889 = vmatprep.mubr.f32.mxu0 0.0
  %890 = vmatmul.mubr.f32.gmra.mrb[0].mxu0 %v337
  %v891 = vpop.f32.mrb[0].mxu0
  %v892 = vadd.f32 %v144, %v891
  %v893 = vpop.f32.mrb[0].mxu0
  %894 = vmatprep.mubr.f32.mxu0 0.0
  %895 = vmatmul.mubr.f32.gmra.mrb[0].mxu0 %v340
  %v896 = vpop.f32.mrb[0].mxu0
  %v897 = vadd.f32 %v144, %v896
  %v898 = vpop.f32.mrb[0].mxu0
  %899 = vmatprep.mubr.f32.mxu0 0.0
  %900 = vmatmul.mubr.f32.gmra.mrb[0].mxu0 %v343
  %v901 = vpop.f32.mrb[0].mxu0
  %v902 = vadd.f32 %v144, %v901
  %v903 = vpop.f32.mrb[0].mxu0
  %904 = vmatprep.mubr.f32.mxu0 0.0
  %905 = vmatmul.mubr.f32.gmra.mrb[0].mxu0 %v346
  %v906 = vpop.f32.mrb[0].mxu0
  %v907 = vadd.f32 %v144, %v906
  %v908 = vpop.f32.mrb[0].mxu0
  %909 = vmatprep.mubr.f32.mxu0 0.0
  %910 = vmatmul.mubr.f32.gmra.mrb[0].mxu0 %v349
  %v911 = vpop.f32.mrb[0].mxu0
  %v912 = vadd.f32 %v144, %v911
  %v913 = vpop.f32.mrb[0].mxu0
  %914 = vmatprep.mubr.f32.mxu0 0.0
  %915 = vmatmul.mubr.f32.gmra.mrb[0].mxu0 %v352
  %v916 = vpop.f32.mrb[0].mxu0
  %v917 = vadd.f32 %v144, %v916
  %v918 = vpop.f32.mrb[0].mxu0
  %919 = vmatprep.mubr.f32.mxu0 0.0
  %920 = vmatmul.mubr.f32.gmra.mrb[0].mxu0 %v355
  %v921 = vpop.f32.mrb[0].mxu0
  %v922 = vadd.f32 %v144, %v921
  %v923 = vpop.f32.mrb[0].mxu0
  %924 = vmatprep.mubr.f32.mxu0 0.0
  %925 = vmatmul.mubr.f32.gmra.mrb[0].mxu0 %v358
  %v926 = vpop.f32.mrb[0].mxu0
  %v927 = vadd.f32 %v144, %v926
  %v928 = vpop.f32.mrb[0].mxu0
  %929 = vmatprep.mubr.f32.mxu0 0.0
  %930 = vmatmul.mubr.f32.gmra.mrb[0].mxu0 %v361
  %v931 = vpop.f32.mrb[0].mxu0
  %v932 = vadd.f32 %v144, %v931
  %v933 = vpop.f32.mrb[0].mxu0
  %934 = vmatprep.mubr.f32.mxu0 0.0
  %935 = vmatmul.mubr.f32.gmra.mrb[0].mxu0 %v364
  %v936 = vpop.f32.mrb[0].mxu0
  %v937 = vadd.f32 %v144, %v936
  %v938 = vpop.f32.mrb[0].mxu0
  %939 = vmatprep.mubr.f32.mxu0 0.0
  %940 = vmatmul.mubr.f32.gmra.mrb[0].mxu0 %v367
  %v941 = vpop.f32.mrb[0].mxu0
  %v942 = vadd.f32 %v144, %v941
  %v943 = vpop.f32.mrb[0].mxu0
  %944 = vmatprep.mubr.f32.mxu0 0.0
  %945 = vmatmul.mubr.f32.gmra.mrb[0].mxu0 %v370
  %v946 = vpop.f32.mrb[0].mxu0
  %v947 = vadd.f32 %v144, %v946
  %v948 = vpop.f32.mrb[0].mxu0
  %949 = vmatprep.mubr.f32.mxu0 0.0
  %950 = vmatmul.mubr.f32.gmra.mrb[0].mxu0 %v373
  %v951 = vpop.f32.mrb[0].mxu0
  %v952 = vadd.f32 %v144, %v951
  %v953 = vpop.f32.mrb[0].mxu0
  %954 = vmatprep.mubr.f32.mxu0 0.0
  %955 = vmatmul.mubr.f32.gmra.mrb[0].mxu0 %v376
  %v956 = vpop.f32.mrb[0].mxu0
  %v957 = vadd.f32 %v144, %v956
  %v958 = vpop.f32.mrb[0].mxu0
  %959 = vmatprep.mubr.f32.mxu0 0.0
  %960 = vmatmul.mubr.f32.gmra.mrb[0].mxu0 %v379
  %v961 = vpop.f32.mrb[0].mxu0
  %v962 = vadd.f32 %v144, %v961
  %v963 = vpop.f32.mrb[0].mxu0
  %964 = vmatprep.mubr.f32.mxu0 0.0
  %965 = vmatmul.mubr.f32.gmra.mrb[0].mxu0 %v382
  %v966 = vpop.f32.mrb[0].mxu0
  %v967 = vadd.f32 %v144, %v966
  %v968 = vpop.f32.mrb[0].mxu0
  %969 = vmatprep.mubr.f32.mxu0 0.0
  %970 = vmatmul.mubr.f32.gmra.mrb[0].mxu0 %v385
  %v971 = vpop.f32.mrb[0].mxu0
  %v972 = vadd.f32 %v144, %v971
  %v973 = vpop.f32.mrb[0].mxu0
  %974 = vmatprep.mubr.f32.mxu0 0.0
  %975 = vmatmul.mubr.f32.gmra.mrb[0].mxu0 %v388
  %v976 = vpop.f32.mrb[0].mxu0
  %v977 = vadd.f32 %v144, %v976
  %v978 = vpop.f32.mrb[0].mxu0
  %979 = vmatprep.mubr.f32.mxu0 0.0
  %980 = vmatmul.mubr.f32.gmra.mrb[0].mxu0 %v391
  %v981 = vpop.f32.mrb[0].mxu0
  %v982 = vadd.f32 %v144, %v981
  %v983 = vpop.f32.mrb[0].mxu0
  %984 = vmatprep.mubr.f32.mxu0 0.0
  %985 = vmatmul.mubr.f32.gmra.mrb[0].mxu0 %v394
  %v986 = vpop.f32.mrb[0].mxu0
  %v987 = vadd.f32 %v144, %v986
  %v988 = vpop.f32.mrb[0].mxu0
  %989 = vmatprep.mubr.f32.mxu0 0.0
  %990 = vmatmul.mubr.f32.gmra.mrb[0].mxu0 %v397
  %v991 = vpop.f32.mrb[0].mxu0
  %v992 = vadd.f32 %v144, %v991
  %v993 = vpop.f32.mrb[0].mxu0
  %994 = vmatprep.mubr.f32.mxu0 0.0
  %995 = vmatmul.mubr.f32.gmra.mrb[0].mxu0 %v400
  %v996 = vpop.f32.mrb[0].mxu0
  %v997 = vadd.f32 %v144, %v996
  %v998 = vpop.f32.mrb[0].mxu0
  %999 = vmatprep.mubr.f32.mxu0 0.0
  %1000 = vmatmul.mubr.f32.gmra.mrb[0].mxu0 %v403
  %v1001 = vpop.f32.mrb[0].mxu0
  %v1002 = vadd.f32 %v144, %v1001
  %v1003 = vpop.f32.mrb[0].mxu0
  %1004 = vmatprep.mubr.f32.mxu0 0.0
  %1005 = vmatmul.mubr.f32.gmra.mrb[0].mxu0 %v406
  %v1006 = vpop.f32.mrb[0].mxu0
  %v1007 = vadd.f32 %v144, %v1006
  %v1008 = vpop.f32.mrb[0].mxu0
  %1009 = vmatprep.mubr.f32.mxu0 0.0
  %1010 = vmatmul.mubr.f32.gmra.mrb[0].mxu0 %v409
  %v1011 = vpop.f32.mrb[0].mxu0
  %v1012 = vadd.f32 %v144, %v1011
  %v1013 = vpop.f32.mrb[0].mxu0
  %1014 = vmatprep.mubr.f32.mxu0 0.0
  %1015 = vmatmul.mubr.f32.gmra.mrb[0].mxu0 %v412
  %v1016 = vpop.f32.mrb[0].mxu0
  %v1017 = vadd.f32 %v144, %v1016
  %v1018 = vpop.f32.mrb[0].mxu0
  %1019 = vmatprep.mubr.f32.mxu0 0.0
  %1020 = vmatmul.mubr.f32.gmra.mrb[0].mxu0 %v415
  %v1021 = vpop.f32.mrb[0].mxu0
  %v1022 = vadd.f32 %v144, %v1021
  %v1023 = vpop.f32.mrb[0].mxu0
  %1024 = vmatprep.mubr.f32.mxu0 0.0
  %1025 = vmatmul.mubr.f32.gmra.mrb[0].mxu0 %v418
  %v1026 = vpop.f32.mrb[0].mxu0
  %v1027 = vadd.f32 %v144, %v1026
  %v1028 = vpop.f32.mrb[0].mxu0
  %1029 = vmatprep.mubr.f32.mxu0 0.0
  %1030 = vmatmul.mubr.f32.gmra.mrb[0].mxu0 %v421
  %v1031 = vpop.f32.mrb[0].mxu0
  %v1032 = vadd.f32 %v144, %v1031
  %v1033 = vpop.f32.mrb[0].mxu0
  %1034 = vmatprep.mubr.f32.mxu0 0.0
  %1035 = vmatmul.mubr.f32.gmra.mrb[0].mxu0 %v424
  %v1036 = vpop.f32.mrb[0].mxu0
  %v1037 = vadd.f32 %v144, %v1036
  %v1038 = vpop.f32.mrb[0].mxu0
  %1039 = vmatprep.mubr.f32.mxu0 0.0
  %1040 = vmatmul.mubr.f32.gmra.mrb[0].mxu0 %v427
  %v1041 = vpop.f32.mrb[0].mxu0
  %v1042 = vadd.f32 %v144, %v1041
  %v1043 = vpop.f32.mrb[0].mxu0
  %1044 = vmatprep.mubr.f32.mxu0 0.0
  %1045 = vmatmul.mubr.f32.gmra.mrb[0].mxu0 %v430
  %v1046 = vpop.f32.mrb[0].mxu0
  %v1047 = vadd.f32 %v144, %v1046
  %v1048 = vpop.f32.mrb[0].mxu0
  %1049 = vmatprep.mubr.f32.mxu0 0.0
  %1050 = vmatmul.mubr.f32.gmra.mrb[0].mxu0 %v433
  %v1051 = vpop.f32.mrb[0].mxu0
  %v1052 = vadd.f32 %v144, %v1051
  %v1053 = vpop.f32.mrb[0].mxu0
  %1054 = vmatprep.mubr.f32.mxu0 0.0
  %1055 = vmatmul.mubr.f32.gmra.mrb[0].mxu0 %v436
  %v1056 = vpop.f32.mrb[0].mxu0
  %v1057 = vadd.f32 %v144, %v1056
  %v1058 = vpop.f32.mrb[0].mxu0
  %1059 = vmatprep.mubr.f32.mxu0 0.0
  %1060 = vmatmul.mubr.f32.gmra.mrb[0].mxu0 %v439
  %v1061 = vpop.f32.mrb[0].mxu0
  %v1062 = vadd.f32 %v144, %v1061
  %v1063 = vpop.f32.mrb[0].mxu0
  %1064 = vmatprep.mubr.f32.mxu0 0.0
  %1065 = vmatmul.mubr.f32.gmra.mrb[0].mxu0 %v442
  %v1066 = vpop.f32.mrb[0].mxu0
  %v1067 = vadd.f32 %v144, %v1066
  %v1068 = vpop.f32.mrb[0].mxu0
  %1069 = vmatprep.mubr.f32.mxu0 0.0
  %1070 = vmatmul.mubr.f32.gmra.mrb[0].mxu0 %v445
  %v1071 = vpop.f32.mrb[0].mxu0
  %v1072 = vadd.f32 %v144, %v1071
  %v1073 = vpop.f32.mrb[0].mxu0
  %1074 = vmatprep.mubr.f32.mxu0 0.0
  %1075 = vmatmul.mubr.f32.gmra.mrb[0].mxu0 %v448
  %v1076 = vpop.f32.mrb[0].mxu0
  %v1077 = vadd.f32 %v144, %v1076
  %v1078 = vpop.f32.mrb[0].mxu0
  %1079 = vmatprep.mubr.f32.mxu0 0.0
  %1080 = vmatmul.mubr.f32.gmra.mrb[0].mxu0 %v451
  %v1081 = vpop.f32.mrb[0].mxu0
  %v1082 = vadd.f32 %v144, %v1081
  %v1083 = vpop.f32.mrb[0].mxu0
  %1084 = vmatprep.mubr.f32.mxu0 0.0
  %1085 = vmatmul.mubr.f32.gmra.mrb[0].mxu0 %v454
  %v1086 = vpop.f32.mrb[0].mxu0
  %v1087 = vadd.f32 %v144, %v1086
  %v1088 = vpop.f32.mrb[0].mxu0
  %1089 = vmatprep.mubr.f32.mxu0 0.0
  %1090 = vmatmul.mubr.f32.gmra.mrb[0].mxu0 %v457
  %v1091 = vpop.f32.mrb[0].mxu0
  %v1092 = vadd.f32 %v144, %v1091
  %v1093 = vpop.f32.mrb[0].mxu0
  %1094 = vmatprep.mubr.f32.mxu0 0.0
  %1095 = vmatmul.mubr.f32.gmra.mrb[0].mxu0 %v460
  %v1096 = vpop.f32.mrb[0].mxu0
  %v1097 = vadd.f32 %v144, %v1096
  %v1098 = vpop.f32.mrb[0].mxu0
  %1099 = vmatprep.mubr.f32.mxu0 0.0
  %1100 = vmatmul.mubr.f32.gmra.mrb[0].mxu0 %v463
  %v1101 = vpop.f32.mrb[0].mxu0
  %v1102 = vadd.f32 %v144, %v1101
  %v1103 = vpop.f32.mrb[0].mxu0
  %1104 = vmatprep.mubr.f32.mxu0 0.0
  %1105 = vmatmul.mubr.f32.gmra.mrb[0].mxu0 %v466
  %v1106 = vpop.f32.mrb[0].mxu0
  %v1107 = vadd.f32 %v144, %v1106
  %v1108 = vpop.f32.mrb[0].mxu0
  %1109 = vmatprep.mubr.f32.mxu0 0.0
  %1110 = vmatmul.mubr.f32.gmra.mrb[0].mxu0 %v469
  %v1111 = vpop.f32.mrb[0].mxu0
  %v1112 = vadd.f32 %v144, %v1111
  %v1113 = vpop.f32.mrb[0].mxu0
  %1114 = vmatprep.mubr.f32.mxu0 0.0
  %1115 = vmatmul.mubr.f32.gmra.mrb[0].mxu0 %v472
  %v1116 = vpop.f32.mrb[0].mxu0
  %v1117 = vadd.f32 %v144, %v1116
  %v1118 = vpop.f32.mrb[0].mxu0
  %1119 = vmatprep.mubr.f32.mxu0 0.0
  %1120 = vmatmul.mubr.f32.gmra.mrb[0].mxu0 %v475
  %v1121 = vpop.f32.mrb[0].mxu0
  %v1122 = vadd.f32 %v144, %v1121
  %v1123 = vpop.f32.mrb[0].mxu0
  %1124 = vmatprep.mubr.f32.mxu0 0.0
  %1125 = vmatmul.mubr.f32.gmra.mrb[0].mxu0 %v478
  %v1126 = vpop.f32.mrb[0].mxu0
  %v1127 = vadd.f32 %v144, %v1126
  %v1128 = vpop.f32.mrb[0].mxu0
  %1129 = vmatprep.mubr.f32.mxu0 0.0
  %1130 = vmatmul.mubr.f32.gmra.mrb[0].mxu0 %v481
  %v1131 = vpop.f32.mrb[0].mxu0
  %v1132 = vadd.f32 %v144, %v1131
  %v1133 = vpop.f32.mrb[0].mxu0
  %1134 = vmatprep.mubr.f32.mxu0 0.0
  %1135 = vmatmul.mubr.f32.gmra.mrb[0].mxu0 %v484
  %v1136 = vpop.f32.mrb[0].mxu0
  %v1137 = vadd.f32 %v144, %v1136
  %v1138 = vpop.f32.mrb[0].mxu0
  %1139 = vmatprep.mubr.f32.mxu0 0.0
  %1140 = vmatmul.mubr.f32.gmra.mrb[0].mxu0 %v487
  %v1141 = vpop.f32.mrb[0].mxu0
  %v1142 = vadd.f32 %v144, %v1141
  %v1143 = vpop.f32.mrb[0].mxu0
  %1144 = vmatprep.mubr.f32.mxu0 0.0
  %1145 = vmatmul.mubr.f32.gmra.mrb[0].mxu0 %v490
  %v1146 = vpop.f32.mrb[0].mxu0
  %v1147 = vadd.f32 %v144, %v1146
  %v1148 = vpop.f32.mrb[0].mxu0
  %1149 = vmatprep.mubr.f32.mxu0 0.0
  %1150 = vmatmul.mubr.f32.gmra.mrb[0].mxu0 %v493
  %v1151 = vpop.f32.mrb[0].mxu0
  %v1152 = vadd.f32 %v144, %v1151
  %v1153 = vpop.f32.mrb[0].mxu0
  %1154 = vmatprep.mubr.f32.mxu0 0.0
  %1155 = vmatmul.mubr.f32.gmra.mrb[0].mxu0 %v496
  %v1156 = vpop.f32.mrb[0].mxu0
  %v1157 = vadd.f32 %v144, %v1156
  %v1158 = vpop.f32.mrb[0].mxu0
  %1159 = vmatprep.mubr.f32.mxu0 0.0
  %1160 = vmatmul.mubr.f32.gmra.mrb[0].mxu0 %v499
  %v1161 = vpop.f32.mrb[0].mxu0
  %v1162 = vadd.f32 %v144, %v1161
  %v1163 = vpop.f32.mrb[0].mxu0
  %1164 = vmatprep.mubr.f32.mxu0 0.0
  %1165 = vmatmul.mubr.f32.gmra.mrb[0].mxu0 %v502
  %v1166 = vpop.f32.mrb[0].mxu0
  %v1167 = vadd.f32 %v144, %v1166
  %v1168 = vpop.f32.mrb[0].mxu0
  %1169 = vmatprep.mubr.f32.mxu0 0.0
  %1170 = vmatmul.mubr.f32.gmra.mrb[0].mxu0 %v505
  %v1171 = vpop.f32.mrb[0].mxu0
  %v1172 = vadd.f32 %v144, %v1171
  %v1173 = vpop.f32.mrb[0].mxu0
  %1174 = vmatprep.mubr.f32.mxu0 0.0
  %1175 = vmatmul.mubr.f32.gmra.mrb[0].mxu0 %v508
  %v1176 = vpop.f32.mrb[0].mxu0
  %v1177 = vadd.f32 %v144, %v1176
  %v1178 = vpop.f32.mrb[0].mxu0
  %1179 = vdwg.mxu0
  %v1180 = vmax.f32 %v577, 0.0
  %v1181 = vmax.f32 %v582, 0.0
  %v1182 = vmax.f32 %v587, 0.0
  %v1183 = vmax.f32 %v592, 0.0
  %v1184 = vmax.f32 %v597, 0.0
  %v1185 = vmax.f32 %v602, 0.0
  %v1186 = vmax.f32 %v607, 0.0
  %v1187 = vmax.f32 %v612, 0.0
  %v1188 = vmax.f32 %v617, 0.0
  %v1189 = vmax.f32 %v622, 0.0
  %v1190 = vmax.f32 %v627, 0.0
  %v1191 = vmax.f32 %v632, 0.0
  %v1192 = vmax.f32 %v637, 0.0
  %v1193 = vmax.f32 %v642, 0.0
  %v1194 = vmax.f32 %v647, 0.0
  %v1195 = vmax.f32 %v652, 0.0
  %v1196 = vmax.f32 %v657, 0.0
  %v1197 = vmax.f32 %v662, 0.0
  %v1198 = vmax.f32 %v667, 0.0
  %v1199 = vmax.f32 %v672, 0.0
  %v1200 = vmax.f32 %v677, 0.0
  %v1201 = vmax.f32 %v682, 0.0
  %v1202 = vmax.f32 %v687, 0.0
  %v1203 = vmax.f32 %v692, 0.0
  %v1204 = vmax.f32 %v697, 0.0
  %v1205 = vmax.f32 %v702, 0.0
  %v1206 = vmax.f32 %v707, 0.0
  %v1207 = vmax.f32 %v712, 0.0
  %v1208 = vmax.f32 %v717, 0.0
  %v1209 = vmax.f32 %v722, 0.0
  %v1210 = vmax.f32 %v727, 0.0
  %v1211 = vmax.f32 %v732, 0.0
  %v1212 = vmax.f32 %v737, 0.0
  %v1213 = vmax.f32 %v742, 0.0
  %v1214 = vmax.f32 %v747, 0.0
  %v1215 = vmax.f32 %v752, 0.0
  %v1216 = vmax.f32 %v757, 0.0
  %v1217 = vmax.f32 %v762, 0.0
  %v1218 = vmax.f32 %v767, 0.0
  %v1219 = vmax.f32 %v772, 0.0
  %v1220 = vmax.f32 %v777, 0.0
  %v1221 = vmax.f32 %v782, 0.0
  %v1222 = vmax.f32 %v787, 0.0
  %v1223 = vmax.f32 %v792, 0.0
  %v1224 = vmax.f32 %v797, 0.0
  %v1225 = vmax.f32 %v802, 0.0
  %v1226 = vmax.f32 %v807, 0.0
  %v1227 = vmax.f32 %v812, 0.0
  %v1228 = vmax.f32 %v817, 0.0
  %v1229 = vmax.f32 %v822, 0.0
  %v1230 = vmax.f32 %v827, 0.0
  %v1231 = vmax.f32 %v832, 0.0
  %v1232 = vmax.f32 %v837, 0.0
  %v1233 = vmax.f32 %v842, 0.0
  %v1234 = vmax.f32 %v847, 0.0
  %v1235 = vmax.f32 %v852, 0.0
  %v1236 = vmax.f32 %v857, 0.0
  %v1237 = vmax.f32 %v862, 0.0
  %v1238 = vmax.f32 %v867, 0.0
  %v1239 = vmax.f32 %v872, 0.0
  %v1240 = vmax.f32 %v877, 0.0
  %v1241 = vmax.f32 %v882, 0.0
  %v1242 = vmax.f32 %v887, 0.0
  %v1243 = vmax.f32 %v892, 0.0
  %v1244 = vmax.f32 %v897, 0.0
  %v1245 = vmax.f32 %v902, 0.0
  %v1246 = vmax.f32 %v907, 0.0
  %v1247 = vmax.f32 %v912, 0.0
  %v1248 = vmax.f32 %v917, 0.0
  %v1249 = vmax.f32 %v922, 0.0
  %v1250 = vmax.f32 %v927, 0.0
  %v1251 = vmax.f32 %v932, 0.0
  %v1252 = vmax.f32 %v937, 0.0
  %v1253 = vmax.f32 %v942, 0.0
  %v1254 = vmax.f32 %v947, 0.0
  %v1255 = vmax.f32 %v952, 0.0
  %v1256 = vmax.f32 %v957, 0.0
  %v1257 = vmax.f32 %v962, 0.0
  %v1258 = vmax.f32 %v967, 0.0
  %v1259 = vmax.f32 %v972, 0.0
  %v1260 = vmax.f32 %v977, 0.0
  %v1261 = vmax.f32 %v982, 0.0
  %v1262 = vmax.f32 %v987, 0.0
  %v1263 = vmax.f32 %v992, 0.0
  %v1264 = vmax.f32 %v997, 0.0
  %v1265 = vmax.f32 %v1002, 0.0
  %v1266 = vmax.f32 %v1007, 0.0
  %v1267 = vmax.f32 %v1012, 0.0
  %v1268 = vmax.f32 %v1017, 0.0
  %v1269 = vmax.f32 %v1022, 0.0
  %v1270 = vmax.f32 %v1027, 0.0
  %v1271 = vmax.f32 %v1032, 0.0
  %v1272 = vmax.f32 %v1037, 0.0
  %v1273 = vmax.f32 %v1042, 0.0
  %v1274 = vmax.f32 %v1047, 0.0
  %v1275 = vmax.f32 %v1052, 0.0
  %v1276 = vmax.f32 %v1057, 0.0
  %v1277 = vmax.f32 %v1062, 0.0
  %v1278 = vmax.f32 %v1067, 0.0
  %v1279 = vmax.f32 %v1072, 0.0
  %v1280 = vmax.f32 %v1077, 0.0
  %v1281 = vmax.f32 %v1082, 0.0
  %v1282 = vmax.f32 %v1087, 0.0
  %v1283 = vmax.f32 %v1092, 0.0
  %v1284 = vmax.f32 %v1097, 0.0
  %v1285 = vmax.f32 %v1102, 0.0
  %v1286 = vmax.f32 %v1107, 0.0
  %v1287 = vmax.f32 %v1112, 0.0
  %v1288 = vmax.f32 %v1117, 0.0
  %v1289 = vmax.f32 %v1122, 0.0
  %v1290 = vmax.f32 %v1127, 0.0
  %v1291 = vmax.f32 %v1132, 0.0
  %v1292 = vmax.f32 %v1137, 0.0
  %v1293 = vmax.f32 %v1142, 0.0
  %v1294 = vmax.f32 %v1147, 0.0
  %v1295 = vmax.f32 %v1152, 0.0
  %v1296 = vmax.f32 %v1157, 0.0
  %v1297 = vmax.f32 %v1162, 0.0
  %v1298 = vmax.f32 %v1167, 0.0
  %v1299 = vmax.f32 %v1172, 0.0
  %v1300 = vmax.f32 %v1177, 0.0
  %1301 = vst [vmem:[%s3] sm:$0xff] %v1180
  %1302 = vst [vmem:[%s3 + $0x8] sm:$0xff] %v1181
  %1303 = vst [vmem:[%s3 + $0x10] sm:$0xff] %v1182
  %1304 = vst [vmem:[%s3 + $0x18] sm:$0xff] %v1183
  %1305 = vst [vmem:[%s3 + $0x20] sm:$0xff] %v1184
  %1306 = vst [vmem:[%s3 + $0x28] sm:$0xff] %v1185
  %1307 = vst [vmem:[%s3 + $0x30] sm:$0xff] %v1186
  %1308 = vst [vmem:[%s3 + $0x38] sm:$0xff] %v1187
  %1309 = vst [vmem:[%s3 + $0x40] sm:$0xff] %v1188
  %1310 = vst [vmem:[%s3 + $0x48] sm:$0xff] %v1189
  %1311 = vst [vmem:[%s3 + $0x50] sm:$0xff] %v1190
  %1312 = vst [vmem:[%s3 + $0x58] sm:$0xff] %v1191
  %1313 = vst [vmem:[%s3 + $0x60] sm:$0xff] %v1192
  %1314 = vst [vmem:[%s3 + $0x68] sm:$0xff] %v1193
  %1315 = vst [vmem:[%s3 + $0x70] sm:$0xff] %v1194
  %1316 = vst [vmem:[%s3 + $0x78] sm:$0xff] %v1195
  %1317 = vst [vmem:[%s3 + $0x80] sm:$0xff] %v1196
  %1318 = vst [vmem:[%s3 + $0x88] sm:$0xff] %v1197
  %1319 = vst [vmem:[%s3 + $0x90] sm:$0xff] %v1198
  %1320 = vst [vmem:[%s3 + $0x98] sm:$0xff] %v1199
  %1321 = vst [vmem:[%s3 + $0xa0] sm:$0xff] %v1200
  %1322 = vst [vmem:[%s3 + $0xa8] sm:$0xff] %v1201
  %1323 = vst [vmem:[%s3 + $0xb0] sm:$0xff] %v1202
  %1324 = vst [vmem:[%s3 + $0xb8] sm:$0xff] %v1203
  %1325 = vst [vmem:[%s3 + $0xc0] sm:$0xff] %v1204
  %1326 = vst [vmem:[%s3 + $0xc8] sm:$0xff] %v1205
  %1327 = vst [vmem:[%s3 + $0xd0] sm:$0xff] %v1206
  %1328 = vst [vmem:[%s3 + $0xd8] sm:$0xff] %v1207
  %1329 = vst [vmem:[%s3 + $0xe0] sm:$0xff] %v1208
  %1330 = vst [vmem:[%s3 + $0xe8] sm:$0xff] %v1209
  %1331 = vst [vmem:[%s3 + $0xf0] sm:$0xff] %v1210
  %1332 = vst [vmem:[%s3 + $0xf8] sm:$0xff] %v1211
  %1333 = vst [vmem:[%s3 + $0x100] sm:$0xff] %v1212
  %1334 = vst [vmem:[%s3 + $0x108] sm:$0xff] %v1213
  %1335 = vst [vmem:[%s3 + $0x110] sm:$0xff] %v1214
  %1336 = vst [vmem:[%s3 + $0x118] sm:$0xff] %v1215
  %1337 = vst [vmem:[%s3 + $0x120] sm:$0xff] %v1216
  %1338 = vst [vmem:[%s3 + $0x128] sm:$0xff] %v1217
  %1339 = vst [vmem:[%s3 + $0x130] sm:$0xff] %v1218
  %1340 = vst [vmem:[%s3 + $0x138] sm:$0xff] %v1219
  %1341 = vst [vmem:[%s3 + $0x140] sm:$0xff] %v1220
  %1342 = vst [vmem:[%s3 + $0x148] sm:$0xff] %v1221
  %1343 = vst [vmem:[%s3 + $0x150] sm:$0xff] %v1222
  %1344 = vst [vmem:[%s3 + $0x158] sm:$0xff] %v1223
  %1345 = vst [vmem:[%s3 + $0x160] sm:$0xff] %v1224
  %1346 = vst [vmem:[%s3 + $0x168] sm:$0xff] %v1225
  %1347 = vst [vmem:[%s3 + $0x170] sm:$0xff] %v1226
  %1348 = vst [vmem:[%s3 + $0x178] sm:$0xff] %v1227
  %1349 = vst [vmem:[%s3 + $0x180] sm:$0xff] %v1228
  %1350 = vst [vmem:[%s3 + $0x188] sm:$0xff] %v1229
  %1351 = vst [vmem:[%s3 + $0x190] sm:$0xff] %v1230
  %1352 = vst [vmem:[%s3 + $0x198] sm:$0xff] %v1231
  %1353 = vst [vmem:[%s3 + $0x1a0] sm:$0xff] %v1232
  %1354 = vst [vmem:[%s3 + $0x1a8] sm:$0xff] %v1233
  %1355 = vst [vmem:[%s3 + $0x1b0] sm:$0xff] %v1234
  %1356 = vst [vmem:[%s3 + $0x1b8] sm:$0xff] %v1235
  %1357 = vst [vmem:[%s3 + $0x1c0] sm:$0xff] %v1236
  %1358 = vst [vmem:[%s3 + $0x1c8] sm:$0xff] %v1237
  %1359 = vst [vmem:[%s3 + $0x1d0] sm:$0xff] %v1238
  %1360 = vst [vmem:[%s3 + $0x1d8] sm:$0xff] %v1239
  %1361 = vst [vmem:[%s3 + $0x1e0] sm:$0xff] %v1240
  %1362 = vst [vmem:[%s3 + $0x1e8] sm:$0xff] %v1241
  %1363 = vst [vmem:[%s3 + $0x1f0] sm:$0xff] %v1242
  %1364 = vst [vmem:[%s3 + $0x1f8] sm:$0xff] %v1243
  %1365 = vst [vmem:[%s3 + $0x200] sm:$0xff] %v1244
  %1366 = vst [vmem:[%s3 + $0x208] sm:$0xff] %v1245
  %1367 = vst [vmem:[%s3 + $0x210] sm:$0xff] %v1246
  %1368 = vst [vmem:[%s3 + $0x218] sm:$0xff] %v1247
  %1369 = vst [vmem:[%s3 + $0x220] sm:$0xff] %v1248
  %1370 = vst [vmem:[%s3 + $0x228] sm:$0xff] %v1249
  %1371 = vst [vmem:[%s3 + $0x230] sm:$0xff] %v1250
  %1372 = vst [vmem:[%s3 + $0x238] sm:$0xff] %v1251
  %1373 = vst [vmem:[%s3 + $0x240] sm:$0xff] %v1252
  %1374 = vst [vmem:[%s3 + $0x248] sm:$0xff] %v1253
  %1375 = vst [vmem:[%s3 + $0x250] sm:$0xff] %v1254
  %1376 = vst [vmem:[%s3 + $0x258] sm:$0xff] %v1255
  %1377 = vst [vmem:[%s3 + $0x260] sm:$0xff] %v1256
  %1378 = vst [vmem:[%s3 + $0x268] sm:$0xff] %v1257
  %1379 = vst [vmem:[%s3 + $0x270] sm:$0xff] %v1258
  %1380 = vst [vmem:[%s3 + $0x278] sm:$0xff] %v1259
  %1381 = vst [vmem:[%s3 + $0x280] sm:$0xff] %v1260
  %1382 = vst [vmem:[%s3 + $0x288] sm:$0xff] %v1261
  %1383 = vst [vmem:[%s3 + $0x290] sm:$0xff] %v1262
  %1384 = vst [vmem:[%s3 + $0x298] sm:$0xff] %v1263
  %1385 = vst [vmem:[%s3 + $0x2a0] sm:$0xff] %v1264
  %1386 = vst [vmem:[%s3 + $0x2a8] sm:$0xff] %v1265
  %1387 = vst [vmem:[%s3 + $0x2b0] sm:$0xff] %v1266
  %1388 = vst [vmem:[%s3 + $0x2b8] sm:$0xff] %v1267
  %1389 = vst [vmem:[%s3 + $0x2c0] sm:$0xff] %v1268
  %1390 = vst [vmem:[%s3 + $0x2c8] sm:$0xff] %v1269
  %1391 = vst [vmem:[%s3 + $0x2d0] sm:$0xff] %v1270
  %1392 = vst [vmem:[%s3 + $0x2d8] sm:$0xff] %v1271
  %1393 = vst [vmem:[%s3 + $0x2e0] sm:$0xff] %v1272
  %1394 = vst [vmem:[%s3 + $0x2e8] sm:$0xff] %v1273
  %1395 = vst [vmem:[%s3 + $0x2f0] sm:$0xff] %v1274
  %1396 = vst [vmem:[%s3 + $0x2f8] sm:$0xff] %v1275
  %1397 = vst [vmem:[%s3 + $0x300] sm:$0xff] %v1276
  %1398 = vst [vmem:[%s3 + $0x308] sm:$0xff] %v1277
  %1399 = vst [vmem:[%s3 + $0x310] sm:$0xff] %v1278
  %1400 = vst [vmem:[%s3 + $0x318] sm:$0xff] %v1279
  %1401 = vst [vmem:[%s3 + $0x320] sm:$0xff] %v1280
  %1402 = vst [vmem:[%s3 + $0x328] sm:$0xff] %v1281
  %1403 = vst [vmem:[%s3 + $0x330] sm:$0xff] %v1282
  %1404 = vst [vmem:[%s3 + $0x338] sm:$0xff] %v1283
  %1405 = vst [vmem:[%s3 + $0x340] sm:$0xff] %v1284
  %1406 = vst [vmem:[%s3 + $0x348] sm:$0xff] %v1285
  %1407 = vst [vmem:[%s3 + $0x350] sm:$0xff] %v1286
  %1408 = vst [vmem:[%s3 + $0x358] sm:$0xff] %v1287
  %1409 = vst [vmem:[%s3 + $0x360] sm:$0xff] %v1288
  %1410 = vst [vmem:[%s3 + $0x368] sm:$0xff] %v1289
  %1411 = vst [vmem:[%s3 + $0x370] sm:$0xff] %v1290
  %1412 = vst [vmem:[%s3 + $0x378] sm:$0xff] %v1291
  %1413 = vst [vmem:[%s3 + $0x380] sm:$0xff] %v1292
  %1414 = vst [vmem:[%s3 + $0x388] sm:$0xff] %v1293
  %1415 = vst [vmem:[%s3 + $0x390] sm:$0xff] %v1294
  %1416 = vst [vmem:[%s3 + $0x398] sm:$0xff] %v1295
  %1417 = vst [vmem:[%s3 + $0x3a0] sm:$0xff] %v1296
  %1418 = vst [vmem:[%s3 + $0x3a8] sm:$0xff] %v1297
  %1419 = vst [vmem:[%s3 + $0x3b0] sm:$0xff] %v1298
  %1420 = vst [vmem:[%s3 + $0x3b8] sm:$0xff] %v1299
  %1421 = vst [vmem:[%s3 + $0x3c0] sm:$0xff] %v1300
  // Predicated region
  $region14: #{decoder_forward.8} parent=0 // pred_check
    _
  $region15: #{decoder_forward.8} parent=0 // pred_check_branch
    %1423 = sbr.rel (0) target = $region17
  $region16: #{decoder_forward.8} parent=0 // pred_region
    _
  $region17: #{decoder_forward.8} parent=0 // pred_fallthru
    _
  // Predicated region
  $region18: #{decoder_forward.8} parent=0 // pred_check
    _
  $region19: #{decoder_forward.8} parent=0 // pred_check_branch
    %1425 = sbr.rel (0) target = $region21
  $region20: #{decoder_forward.8} parent=0 // pred_region
    _
  $region21: #{decoder_forward.8} parent=0 // pred_fallthru
    _

// kernel: decoder_forward.9
$region0: #{decoder_forward.9}
  #allocation0 [shape = 'u32[]', space=smem, size = 0x4, offset = 0x4, fixed_abs, tag = 'smem constant byte address 0x4 - core index']
  #allocation1 [shape = 'u32[144,128]{1,0:T(1,128)}', space=vmem, size = 0x12000, scoped, tag = 'internal scratch']
  %s0 = inlined_call_operand.vmem [shape: f32[3528,32], index: 0, kind: input, shape index: {}]
  %s1 = inlined_call_operand.vmem [shape: f32[32,128], index: 1, kind: input, shape index: {}]
  %s2 = inlined_call_operand.vmem [shape: f32[3528,128], index: 2, kind: output, shape index: {}]
  %s3 = sld [smem:[#allocation0]]
  $region18: #{decoder_forward.9} parent=0
    _
  %s5 = ssub.s32 1, %s3
  %s6 = scalar_select 0, %s5, %s3
  // Predicated region
  $region2: #{decoder_forward.9} parent=0 // pred_check
    _
  $region3: #{decoder_forward.9} parent=0 // pred_check_branch
    %8 = sbr.rel (0) target = $region5
  $region4: #{decoder_forward.9} parent=0 // pred_region
    _
  $region5: #{decoder_forward.9} parent=0 // pred_fallthru
    _
  // Predicated region
  $region6: #{decoder_forward.9} parent=0 // pred_check
    _
  $region7: #{decoder_forward.9} parent=0 // pred_check_branch
    %10 = sbr.rel (0) target = $region9
  $region8: #{decoder_forward.9} parent=0 // pred_region
    _
  $region9: #{decoder_forward.9} parent=0 // pred_fallthru
    _
  %v11 = vld [vmem:[%s0] sm:$0xff]
  %v12 = vld [vmem:[%s0 + $0x8] sm:$0xff]
  %v13 = vld [vmem:[%s0 + $0x10] sm:$0xff]
  %v14 = vld [vmem:[%s0 + $0x18] sm:$0xff]
  %v15 = vld [vmem:[%s0 + $0x20] sm:$0xff]
  %v16 = vld [vmem:[%s0 + $0x28] sm:$0xff]
  %v17 = vld [vmem:[%s0 + $0x30] sm:$0xff]
  %v18 = vld [vmem:[%s0 + $0x38] sm:$0xff]
  %v19 = vld [vmem:[%s0 + $0x40] sm:$0xff]
  %v20 = vld [vmem:[%s0 + $0x48] sm:$0xff]
  %v21 = vld [vmem:[%s0 + $0x50] sm:$0xff]
  %v22 = vld [vmem:[%s0 + $0x58] sm:$0xff]
  %v23 = vld [vmem:[%s0 + $0x60] sm:$0xff]
  %v24 = vld [vmem:[%s0 + $0x68] sm:$0xff]
  %v25 = vld [vmem:[%s0 + $0x70] sm:$0xff]
  %v26 = vld [vmem:[%s0 + $0x78] sm:$0xff]
  %v27 = vld [vmem:[%s0 + $0x80] sm:$0xff]
  %v28 = vld [vmem:[%s0 + $0x88] sm:$0xff]
  %v29 = vld [vmem:[%s0 + $0x90] sm:$0xff]
  %v30 = vld [vmem:[%s0 + $0x98] sm:$0xff]
  %v31 = vld [vmem:[%s0 + $0xa0] sm:$0xff]
  %v32 = vld [vmem:[%s0 + $0xa8] sm:$0xff]
  %v33 = vld [vmem:[%s0 + $0xb0] sm:$0xff]
  %v34 = vld [vmem:[%s0 + $0xb8] sm:$0xff]
  %v35 = vld [vmem:[%s0 + $0xc0] sm:$0xff]
  %v36 = vld [vmem:[%s0 + $0xc8] sm:$0xff]
  %v37 = vld [vmem:[%s0 + $0xd0] sm:$0xff]
  %v38 = vld [vmem:[%s0 + $0xd8] sm:$0xff]
  %v39 = vld [vmem:[%s0 + $0xe0] sm:$0xff]
  %v40 = vld [vmem:[%s0 + $0xe8] sm:$0xff]
  %v41 = vld [vmem:[%s0 + $0xf0] sm:$0xff]
  %v42 = vld [vmem:[%s0 + $0xf8] sm:$0xff]
  %v43 = vld [vmem:[%s0 + $0x100] sm:$0xff]
  %v44 = vld [vmem:[%s0 + $0x108] sm:$0xff]
  %v45 = vld [vmem:[%s0 + $0x110] sm:$0xff]
  %v46 = vld [vmem:[%s0 + $0x118] sm:$0xff]
  %v47 = vld [vmem:[%s0 + $0x120] sm:$0xff]
  %v48 = vld [vmem:[%s0 + $0x128] sm:$0xff]
  %v49 = vld [vmem:[%s0 + $0x130] sm:$0xff]
  %v50 = vld [vmem:[%s0 + $0x138] sm:$0xff]
  %v51 = vld [vmem:[%s0 + $0x140] sm:$0xff]
  %v52 = vld [vmem:[%s0 + $0x148] sm:$0xff]
  %v53 = vld [vmem:[%s0 + $0x150] sm:$0xff]
  %v54 = vld [vmem:[%s0 + $0x158] sm:$0xff]
  %v55 = vld [vmem:[%s0 + $0x160] sm:$0xff]
  %v56 = vld [vmem:[%s0 + $0x168] sm:$0xff]
  %v57 = vld [vmem:[%s0 + $0x170] sm:$0xff]
  %v58 = vld [vmem:[%s0 + $0x178] sm:$0xff]
  %v59 = vld [vmem:[%s0 + $0x180] sm:$0xff]
  %v60 = vld [vmem:[%s0 + $0x188] sm:$0xff]
  %v61 = vld [vmem:[%s0 + $0x190] sm:$0xff]
  %v62 = vld [vmem:[%s0 + $0x198] sm:$0xff]
  %v63 = vld [vmem:[%s0 + $0x1a0] sm:$0xff]
  %v64 = vld [vmem:[%s0 + $0x1a8] sm:$0xff]
  %v65 = vld [vmem:[%s0 + $0x1b0] sm:$0xff]
  %v66 = vld [vmem:[%s0 + $0x1b8] sm:$0xff]
  %v67 = vld [vmem:[%s0 + $0x1c0] sm:$0xff]
  %v68 = vld [vmem:[%s0 + $0x1c8] sm:$0xff]
  %v69 = vld [vmem:[%s0 + $0x1d0] sm:$0xff]
  %v70 = vld [vmem:[%s0 + $0x1d8] sm:$0xff]
  %v71 = vld [vmem:[%s0 + $0x1e0] sm:$0xff]
  %v72 = vld [vmem:[%s0 + $0x1e8] sm:$0xff]
  %v73 = vld [vmem:[%s0 + $0x1f0] sm:$0xff]
  %v74 = vld [vmem:[%s0 + $0x1f8] sm:$0xff]
  %v75 = vld [vmem:[%s0 + $0x200] sm:$0xff]
  %v76 = vld [vmem:[%s0 + $0x208] sm:$0xff]
  %v77 = vld [vmem:[%s0 + $0x210] sm:$0xff]
  %v78 = vld [vmem:[%s0 + $0x218] sm:$0xff]
  %v79 = vld [vmem:[%s0 + $0x220] sm:$0xff]
  %v80 = vld [vmem:[%s0 + $0x228] sm:$0xff]
  %v81 = vld [vmem:[%s0 + $0x230] sm:$0xff]
  %v82 = vld [vmem:[%s0 + $0x238] sm:$0xff]
  %v83 = vld [vmem:[%s0 + $0x240] sm:$0xff]
  %v84 = vld [vmem:[%s0 + $0x248] sm:$0xff]
  %v85 = vld [vmem:[%s0 + $0x250] sm:$0xff]
  %v86 = vld [vmem:[%s0 + $0x258] sm:$0xff]
  %v87 = vld [vmem:[%s0 + $0x260] sm:$0xff]
  %v88 = vld [vmem:[%s0 + $0x268] sm:$0xff]
  %v89 = vld [vmem:[%s0 + $0x270] sm:$0xff]
  %v90 = vld [vmem:[%s0 + $0x278] sm:$0xff]
  %v91 = vld [vmem:[%s0 + $0x280] sm:$0xff]
  %v92 = vld [vmem:[%s0 + $0x288] sm:$0xff]
  %v93 = vld [vmem:[%s0 + $0x290] sm:$0xff]
  %v94 = vld [vmem:[%s0 + $0x298] sm:$0xff]
  %v95 = vld [vmem:[%s0 + $0x2a0] sm:$0xff]
  %v96 = vld [vmem:[%s0 + $0x2a8] sm:$0xff]
  %v97 = vld [vmem:[%s0 + $0x2b0] sm:$0xff]
  %v98 = vld [vmem:[%s0 + $0x2b8] sm:$0xff]
  %v99 = vld [vmem:[%s0 + $0x2c0] sm:$0xff]
  %v100 = vld [vmem:[%s0 + $0x2c8] sm:$0xff]
  %v101 = vld [vmem:[%s0 + $0x2d0] sm:$0xff]
  %v102 = vld [vmem:[%s0 + $0x2d8] sm:$0xff]
  %v103 = vld [vmem:[%s0 + $0x2e0] sm:$0xff]
  %v104 = vld [vmem:[%s0 + $0x2e8] sm:$0xff]
  %v105 = vld [vmem:[%s0 + $0x2f0] sm:$0xff]
  %v106 = vld [vmem:[%s0 + $0x2f8] sm:$0xff]
  %v107 = vld [vmem:[%s0 + $0x300] sm:$0xff]
  %v108 = vld [vmem:[%s0 + $0x308] sm:$0xff]
  %v109 = vld [vmem:[%s0 + $0x310] sm:$0xff]
  %v110 = vld [vmem:[%s0 + $0x318] sm:$0xff]
  %v111 = vld [vmem:[%s0 + $0x320] sm:$0xff]
  %v112 = vld [vmem:[%s0 + $0x328] sm:$0xff]
  %v113 = vld [vmem:[%s0 + $0x330] sm:$0xff]
  %v114 = vld [vmem:[%s0 + $0x338] sm:$0xff]
  %v115 = vld [vmem:[%s0 + $0x340] sm:$0xff]
  %v116 = vld [vmem:[%s0 + $0x348] sm:$0xff]
  %v117 = vld [vmem:[%s0 + $0x350] sm:$0xff]
  %v118 = vld [vmem:[%s0 + $0x358] sm:$0xff]
  %v119 = vld [vmem:[%s0 + $0x360] sm:$0xff]
  %v120 = vld [vmem:[%s0 + $0x368] sm:$0xff]
  %v121 = vld [vmem:[%s0 + $0x370] sm:$0xff]
  %v122 = vld [vmem:[%s0 + $0x378] sm:$0xff]
  %v123 = vld [vmem:[%s0 + $0x380] sm:$0xff]
  %v124 = vld [vmem:[%s0 + $0x388] sm:$0xff]
  %v125 = vld [vmem:[%s0 + $0x390] sm:$0xff]
  %v126 = vld [vmem:[%s0 + $0x398] sm:$0xff]
  %v127 = vld [vmem:[%s0 + $0x3a0] sm:$0xff]
  %v128 = vld [vmem:[%s0 + $0x3a8] sm:$0xff]
  %v129 = vld [vmem:[%s0 + $0x3b0] sm:$0xff]
  %v130 = vld [vmem:[%s0 + $0x3b8] sm:$0xff]
  %v131 = vld [vmem:[%s0 + $0x3c0] sm:$0xff]
  %v132 = vld [vmem:[%s0 + $0x3c8] sm:$0xff]
  %v133 = vld [vmem:[%s0 + $0x3d0] sm:$0xff]
  %v134 = vld [vmem:[%s0 + $0x3d8] sm:$0xff]
  %v135 = vld [vmem:[%s0 + $0x3e0] sm:$0xff]
  %v136 = vld [vmem:[%s0 + $0x3e8] sm:$0xff]
  %v137 = vld [vmem:[%s0 + $0x3f0] sm:$0xff]
  %v138 = vld [vmem:[%s0 + $0x3f8] sm:$0xff]
  %v139 = vld [vmem:[%s0 + $0x400] sm:$0xff]
  %v140 = vld [vmem:[%s0 + $0x408] sm:$0xff]
  %v141 = vld [vmem:[%s0 + $0x410] sm:$0xff]
  %v142 = vld [vmem:[%s0 + $0x418] sm:$0xff]
  %v143 = vld [vmem:[%s0 + $0x420] sm:$0xff]
  %v144 = vld [vmem:[%s0 + $0x428] sm:$0xff]
  %v145 = vld [vmem:[%s0 + $0x430] sm:$0xff]
  %v146 = vld [vmem:[%s0 + $0x438] sm:$0xff]
  %v147 = vld [vmem:[%s0 + $0x440] sm:$0xff]
  %v148 = vld [vmem:[%s0 + $0x448] sm:$0xff]
  %v149 = vld [vmem:[%s0 + $0x450] sm:$0xff]
  %v150 = vld [vmem:[%s0 + $0x458] sm:$0xff]
  %v151 = vld [vmem:[%s0 + $0x460] sm:$0xff]
  %v152 = vld [vmem:[%s0 + $0x468] sm:$0xff]
  %v153 = vld [vmem:[%s0 + $0x470] sm:$0xff]
  %v154 = vld [vmem:[%s0 + $0x478] sm:$0xff]
  %v155 = vld [vmem:[%s0 + $0x480] sm:$0xff]
  %v156 = vld [vmem:[%s0 + $0x488] sm:$0xff]
  %v157 = vld [vmem:[%s0 + $0x490] sm:$0xff]
  %v158 = vld [vmem:[%s0 + $0x498] sm:$0xff]
  %v159 = vld [vmem:[%s0 + $0x4a0] sm:$0xff]
  %v160 = vld [vmem:[%s0 + $0x4a8] sm:$0xff]
  %v161 = vld [vmem:[%s0 + $0x4b0] sm:$0xff]
  %v162 = vld [vmem:[%s0 + $0x4b8] sm:$0xff]
  %v163 = vld [vmem:[%s0 + $0x4c0] sm:$0xff]
  %v164 = vld [vmem:[%s0 + $0x4c8] sm:$0xff]
  %v165 = vld [vmem:[%s0 + $0x4d0] sm:$0xff]
  %v166 = vld [vmem:[%s0 + $0x4d8] sm:$0xff]
  %v167 = vld [vmem:[%s0 + $0x4e0] sm:$0xff]
  %v168 = vld [vmem:[%s0 + $0x4e8] sm:$0xff]
  %v169 = vld [vmem:[%s0 + $0x4f0] sm:$0xff]
  %v170 = vld [vmem:[%s0 + $0x4f8] sm:$0xff]
  %v171 = vld [vmem:[%s0 + $0x500] sm:$0xff]
  %v172 = vld [vmem:[%s0 + $0x508] sm:$0xff]
  %v173 = vld [vmem:[%s0 + $0x510] sm:$0xff]
  %v174 = vld [vmem:[%s0 + $0x518] sm:$0xff]
  %v175 = vld [vmem:[%s0 + $0x520] sm:$0xff]
  %v176 = vld [vmem:[%s0 + $0x528] sm:$0xff]
  %v177 = vld [vmem:[%s0 + $0x530] sm:$0xff]
  %v178 = vld [vmem:[%s0 + $0x538] sm:$0xff]
  %v179 = vld [vmem:[%s0 + $0x540] sm:$0xff]
  %v180 = vld [vmem:[%s0 + $0x548] sm:$0xff]
  %v181 = vld [vmem:[%s0 + $0x550] sm:$0xff]
  %v182 = vld [vmem:[%s0 + $0x558] sm:$0xff]
  %v183 = vld [vmem:[%s0 + $0x560] sm:$0xff]
  %v184 = vld [vmem:[%s0 + $0x568] sm:$0xff]
  %v185 = vld [vmem:[%s0 + $0x570] sm:$0xff]
  %v186 = vld [vmem:[%s0 + $0x578] sm:$0xff]
  %v187 = vld [vmem:[%s0 + $0x580] sm:$0xff]
  %v188 = vld [vmem:[%s0 + $0x588] sm:$0xff]
  %v189 = vld [vmem:[%s0 + $0x590] sm:$0xff]
  %v190 = vld [vmem:[%s0 + $0x598] sm:$0xff]
  %v191 = vld [vmem:[%s0 + $0x5a0] sm:$0xff]
  %v192 = vld [vmem:[%s0 + $0x5a8] sm:$0xff]
  %v193 = vld [vmem:[%s0 + $0x5b0] sm:$0xff]
  %v194 = vld [vmem:[%s0 + $0x5b8] sm:$0xff]
  %v195 = vld [vmem:[%s0 + $0x5c0] sm:$0xff]
  %v196 = vld [vmem:[%s0 + $0x5c8] sm:$0xff]
  %v197 = vld [vmem:[%s0 + $0x5d0] sm:$0xff]
  %v198 = vld [vmem:[%s0 + $0x5d8] sm:$0xff]
  %v199 = vld [vmem:[%s0 + $0x5e0] sm:$0xff]
  %v200 = vld [vmem:[%s0 + $0x5e8] sm:$0xff]
  %v201 = vld [vmem:[%s0 + $0x5f0] sm:$0xff]
  %v202 = vld [vmem:[%s0 + $0x5f8] sm:$0xff]
  %v203 = vld [vmem:[%s0 + $0x600] sm:$0xff]
  %v204 = vld [vmem:[%s0 + $0x608] sm:$0xff]
  %v205 = vld [vmem:[%s0 + $0x610] sm:$0xff]
  %v206 = vld [vmem:[%s0 + $0x618] sm:$0xff]
  %v207 = vld [vmem:[%s0 + $0x620] sm:$0xff]
  %v208 = vld [vmem:[%s0 + $0x628] sm:$0xff]
  %v209 = vld [vmem:[%s0 + $0x630] sm:$0xff]
  %v210 = vld [vmem:[%s0 + $0x638] sm:$0xff]
  %v211 = vld [vmem:[%s0 + $0x640] sm:$0xff]
  %v212 = vld [vmem:[%s0 + $0x648] sm:$0xff]
  %v213 = vld [vmem:[%s0 + $0x650] sm:$0xff]
  %v214 = vld [vmem:[%s0 + $0x658] sm:$0xff]
  %v215 = vld [vmem:[%s0 + $0x660] sm:$0xff]
  %v216 = vld [vmem:[%s0 + $0x668] sm:$0xff]
  %v217 = vld [vmem:[%s0 + $0x670] sm:$0xff]
  %v218 = vld [vmem:[%s0 + $0x678] sm:$0xff]
  %v219 = vld [vmem:[%s0 + $0x680] sm:$0xff]
  %v220 = vld [vmem:[%s0 + $0x688] sm:$0xff]
  %v221 = vld [vmem:[%s0 + $0x690] sm:$0xff]
  %v222 = vld [vmem:[%s0 + $0x698] sm:$0xff]
  %v223 = vld [vmem:[%s0 + $0x6a0] sm:$0xff]
  %v224 = vld [vmem:[%s0 + $0x6a8] sm:$0xff]
  %v225 = vld [vmem:[%s0 + $0x6b0] sm:$0xff]
  %v226 = vld [vmem:[%s0 + $0x6b8] sm:$0xff]
  %v227 = vld [vmem:[%s0 + $0x6c0] sm:$0xff]
  %v228 = vld [vmem:[%s0 + $0x6c8] sm:$0xff]
  %v229 = vld [vmem:[%s0 + $0x6d0] sm:$0xff]
  %v230 = vld [vmem:[%s0 + $0x6d8] sm:$0xff]
  %v231 = vld [vmem:[%s0 + $0x6e0] sm:$0xff]
  %v232 = vld [vmem:[%s0 + $0x6e8] sm:$0xff]
  %v233 = vld [vmem:[%s0 + $0x6f0] sm:$0xff]
  %v234 = vld [vmem:[%s0 + $0x6f8] sm:$0xff]
  %v235 = vld [vmem:[%s0 + $0x700] sm:$0xff]
  %v236 = vld [vmem:[%s0 + $0x708] sm:$0xff]
  %v237 = vld [vmem:[%s0 + $0x710] sm:$0xff]
  %v238 = vld [vmem:[%s0 + $0x718] sm:$0xff]
  %v239 = vld [vmem:[%s0 + $0x720] sm:$0xff]
  %v240 = vld [vmem:[%s0 + $0x728] sm:$0xff]
  %v241 = vld [vmem:[%s0 + $0x730] sm:$0xff]
  %v242 = vld [vmem:[%s0 + $0x738] sm:$0xff]
  %v243 = vld [vmem:[%s0 + $0x740] sm:$0xff]
  %v244 = vld [vmem:[%s0 + $0x748] sm:$0xff]
  %v245 = vld [vmem:[%s0 + $0x750] sm:$0xff]
  %v246 = vld [vmem:[%s0 + $0x758] sm:$0xff]
  %v247 = vld [vmem:[%s0 + $0x760] sm:$0xff]
  %v248 = vld [vmem:[%s0 + $0x768] sm:$0xff]
  %v249 = vld [vmem:[%s0 + $0x770] sm:$0xff]
  %v250 = vld [vmem:[%s0 + $0x778] sm:$0xff]
  %v251 = vld [vmem:[%s0 + $0x780] sm:$0xff]
  %v252 = vld [vmem:[%s0 + $0x788] sm:$0xff]
  %v253 = vld [vmem:[%s0 + $0x790] sm:$0xff]
  %v254 = vld [vmem:[%s0 + $0x798] sm:$0xff]
  %v255 = vld [vmem:[%s0 + $0x7a0] sm:$0xff]
  %v256 = vld [vmem:[%s0 + $0x7a8] sm:$0xff]
  %v257 = vld [vmem:[%s0 + $0x7b0] sm:$0xff]
  %v258 = vld [vmem:[%s0 + $0x7b8] sm:$0xff]
  %v259 = vld [vmem:[%s0 + $0x7c0] sm:$0xff]
  %v260 = vld [vmem:[%s0 + $0x7c8] sm:$0xff]
  %v261 = vld [vmem:[%s0 + $0x7d0] sm:$0xff]
  %v262 = vld [vmem:[%s0 + $0x7d8] sm:$0xff]
  %v263 = vld [vmem:[%s0 + $0x7e0] sm:$0xff]
  %v264 = vld [vmem:[%s0 + $0x7e8] sm:$0xff]
  %v265 = vld [vmem:[%s0 + $0x7f0] sm:$0xff]
  %v266 = vld [vmem:[%s0 + $0x7f8] sm:$0xff]
  %v267 = vld [vmem:[%s0 + $0x800] sm:$0xff]
  %v268 = vld [vmem:[%s0 + $0x808] sm:$0xff]
  %v269 = vld [vmem:[%s0 + $0x810] sm:$0xff]
  %v270 = vld [vmem:[%s0 + $0x818] sm:$0xff]
  %v271 = vld [vmem:[%s0 + $0x820] sm:$0xff]
  %v272 = vld [vmem:[%s0 + $0x828] sm:$0xff]
  %v273 = vld [vmem:[%s0 + $0x830] sm:$0xff]
  %v274 = vld [vmem:[%s0 + $0x838] sm:$0xff]
  %v275 = vld [vmem:[%s0 + $0x840] sm:$0xff]
  %v276 = vld [vmem:[%s0 + $0x848] sm:$0xff]
  %v277 = vld [vmem:[%s0 + $0x850] sm:$0xff]
  %v278 = vld [vmem:[%s0 + $0x858] sm:$0xff]
  %v279 = vld [vmem:[%s0 + $0x860] sm:$0xff]
  %v280 = vld [vmem:[%s0 + $0x868] sm:$0xff]
  %v281 = vld [vmem:[%s0 + $0x870] sm:$0xff]
  %v282 = vld [vmem:[%s0 + $0x878] sm:$0xff]
  %v283 = vld [vmem:[%s0 + $0x880] sm:$0xff]
  %v284 = vld [vmem:[%s0 + $0x888] sm:$0xff]
  %v285 = vld [vmem:[%s0 + $0x890] sm:$0xff]
  %v286 = vld [vmem:[%s0 + $0x898] sm:$0xff]
  %v287 = vld [vmem:[%s0 + $0x8a0] sm:$0xff]
  %v288 = vld [vmem:[%s0 + $0x8a8] sm:$0xff]
  %v289 = vld [vmem:[%s0 + $0x8b0] sm:$0xff]
  %v290 = vld [vmem:[%s0 + $0x8b8] sm:$0xff]
  %v291 = vld [vmem:[%s0 + $0x8c0] sm:$0xff]
  %v292 = vld [vmem:[%s0 + $0x8c8] sm:$0xff]
  %v293 = vld [vmem:[%s0 + $0x8d0] sm:$0xff]
  %v294 = vld [vmem:[%s0 + $0x8d8] sm:$0xff]
  %v295 = vld [vmem:[%s0 + $0x8e0] sm:$0xff]
  %v296 = vld [vmem:[%s0 + $0x8e8] sm:$0xff]
  %v297 = vld [vmem:[%s0 + $0x8f0] sm:$0xff]
  %v298 = vld [vmem:[%s0 + $0x8f8] sm:$0xff]
  %v299 = vld [vmem:[%s0 + $0x900] sm:$0xff]
  %v300 = vld [vmem:[%s0 + $0x908] sm:$0xff]
  %v301 = vld [vmem:[%s0 + $0x910] sm:$0xff]
  %v302 = vld [vmem:[%s0 + $0x918] sm:$0xff]
  %v303 = vld [vmem:[%s0 + $0x920] sm:$0xff]
  %v304 = vld [vmem:[%s0 + $0x928] sm:$0xff]
  %v305 = vld [vmem:[%s0 + $0x930] sm:$0xff]
  %v306 = vld [vmem:[%s0 + $0x938] sm:$0xff]
  %v307 = vld [vmem:[%s0 + $0x940] sm:$0xff]
  %v308 = vld [vmem:[%s0 + $0x948] sm:$0xff]
  %v309 = vld [vmem:[%s0 + $0x950] sm:$0xff]
  %v310 = vld [vmem:[%s0 + $0x958] sm:$0xff]
  %v311 = vld [vmem:[%s0 + $0x960] sm:$0xff]
  %v312 = vld [vmem:[%s0 + $0x968] sm:$0xff]
  %v313 = vld [vmem:[%s0 + $0x970] sm:$0xff]
  %v314 = vld [vmem:[%s0 + $0x978] sm:$0xff]
  %v315 = vld [vmem:[%s0 + $0x980] sm:$0xff]
  %v316 = vld [vmem:[%s0 + $0x988] sm:$0xff]
  %v317 = vld [vmem:[%s0 + $0x990] sm:$0xff]
  %v318 = vld [vmem:[%s0 + $0x998] sm:$0xff]
  %v319 = vld [vmem:[%s0 + $0x9a0] sm:$0xff]
  %v320 = vld [vmem:[%s0 + $0x9a8] sm:$0xff]
  %v321 = vld [vmem:[%s0 + $0x9b0] sm:$0xff]
  %v322 = vld [vmem:[%s0 + $0x9b8] sm:$0xff]
  %v323 = vld [vmem:[%s0 + $0x9c0] sm:$0xff]
  %v324 = vld [vmem:[%s0 + $0x9c8] sm:$0xff]
  %v325 = vld [vmem:[%s0 + $0x9d0] sm:$0xff]
  %v326 = vld [vmem:[%s0 + $0x9d8] sm:$0xff]
  %v327 = vld [vmem:[%s0 + $0x9e0] sm:$0xff]
  %v328 = vld [vmem:[%s0 + $0x9e8] sm:$0xff]
  %v329 = vld [vmem:[%s0 + $0x9f0] sm:$0xff]
  %v330 = vld [vmem:[%s0 + $0x9f8] sm:$0xff]
  %v331 = vld [vmem:[%s0 + $0xa00] sm:$0xff]
  %v332 = vld [vmem:[%s0 + $0xa08] sm:$0xff]
  %v333 = vld [vmem:[%s0 + $0xa10] sm:$0xff]
  %v334 = vld [vmem:[%s0 + $0xa18] sm:$0xff]
  %v335 = vld [vmem:[%s0 + $0xa20] sm:$0xff]
  %v336 = vld [vmem:[%s0 + $0xa28] sm:$0xff]
  %v337 = vld [vmem:[%s0 + $0xa30] sm:$0xff]
  %v338 = vld [vmem:[%s0 + $0xa38] sm:$0xff]
  %v339 = vld [vmem:[%s0 + $0xa40] sm:$0xff]
  %v340 = vld [vmem:[%s0 + $0xa48] sm:$0xff]
  %v341 = vld [vmem:[%s0 + $0xa50] sm:$0xff]
  %v342 = vld [vmem:[%s0 + $0xa58] sm:$0xff]
  %v343 = vld [vmem:[%s0 + $0xa60] sm:$0xff]
  %v344 = vld [vmem:[%s0 + $0xa68] sm:$0xff]
  %v345 = vld [vmem:[%s0 + $0xa70] sm:$0xff]
  %v346 = vld [vmem:[%s0 + $0xa78] sm:$0xff]
  %v347 = vld [vmem:[%s0 + $0xa80] sm:$0xff]
  %v348 = vld [vmem:[%s0 + $0xa88] sm:$0xff]
  %v349 = vld [vmem:[%s0 + $0xa90] sm:$0xff]
  %v350 = vld [vmem:[%s0 + $0xa98] sm:$0xff]
  %v351 = vld [vmem:[%s0 + $0xaa0] sm:$0xff]
  %v352 = vld [vmem:[%s0 + $0xaa8] sm:$0xff]
  %v353 = vld [vmem:[%s0 + $0xab0] sm:$0xff]
  %v354 = vld [vmem:[%s0 + $0xab8] sm:$0xff]
  %v355 = vld [vmem:[%s0 + $0xac0] sm:$0xff]
  %v356 = vld [vmem:[%s0 + $0xac8] sm:$0xff]
  %v357 = vld [vmem:[%s0 + $0xad0] sm:$0xff]
  %v358 = vld [vmem:[%s0 + $0xad8] sm:$0xff]
  %v359 = vld [vmem:[%s0 + $0xae0] sm:$0xff]
  %v360 = vld [vmem:[%s0 + $0xae8] sm:$0xff]
  %v361 = vld [vmem:[%s0 + $0xaf0] sm:$0xff]
  %v362 = vld [vmem:[%s0 + $0xaf8] sm:$0xff]
  %v363 = vld [vmem:[%s0 + $0xb00] sm:$0xff]
  %v364 = vld [vmem:[%s0 + $0xb08] sm:$0xff]
  %v365 = vld [vmem:[%s0 + $0xb10] sm:$0xff]
  %v366 = vld [vmem:[%s0 + $0xb18] sm:$0xff]
  %v367 = vld [vmem:[%s0 + $0xb20] sm:$0xff]
  %v368 = vld [vmem:[%s0 + $0xb28] sm:$0xff]
  %v369 = vld [vmem:[%s0 + $0xb30] sm:$0xff]
  %v370 = vld [vmem:[%s0 + $0xb38] sm:$0xff]
  %v371 = vld [vmem:[%s0 + $0xb40] sm:$0xff]
  %v372 = vld [vmem:[%s0 + $0xb48] sm:$0xff]
  %v373 = vld [vmem:[%s0 + $0xb50] sm:$0xff]
  %v374 = vld [vmem:[%s0 + $0xb58] sm:$0xff]
  %v375 = vld [vmem:[%s0 + $0xb60] sm:$0xff]
  %v376 = vld [vmem:[%s0 + $0xb68] sm:$0xff]
  %v377 = vld [vmem:[%s0 + $0xb70] sm:$0xff]
  %v378 = vld [vmem:[%s0 + $0xb78] sm:$0xff]
  %v379 = vld [vmem:[%s0 + $0xb80] sm:$0xff]
  %v380 = vld [vmem:[%s0 + $0xb88] sm:$0xff]
  %v381 = vld [vmem:[%s0 + $0xb90] sm:$0xff]
  %v382 = vld [vmem:[%s0 + $0xb98] sm:$0xff]
  %v383 = vld [vmem:[%s0 + $0xba0] sm:$0xff]
  %v384 = vld [vmem:[%s0 + $0xba8] sm:$0xff]
  %v385 = vld [vmem:[%s0 + $0xbb0] sm:$0xff]
  %v386 = vld [vmem:[%s0 + $0xbb8] sm:$0xff]
  %v387 = vld [vmem:[%s0 + $0xbc0] sm:$0xff]
  %v388 = vld [vmem:[%s0 + $0xbc8] sm:$0xff]
  %v389 = vld [vmem:[%s0 + $0xbd0] sm:$0xff]
  %v390 = vld [vmem:[%s0 + $0xbd8] sm:$0xff]
  %v391 = vld [vmem:[%s0 + $0xbe0] sm:$0xff]
  %v392 = vld [vmem:[%s0 + $0xbe8] sm:$0xff]
  %v393 = vld [vmem:[%s0 + $0xbf0] sm:$0xff]
  %v394 = vld [vmem:[%s0 + $0xbf8] sm:$0xff]
  %v395 = vld [vmem:[%s0 + $0xc00] sm:$0xff]
  %v396 = vld [vmem:[%s0 + $0xc08] sm:$0xff]
  %v397 = vld [vmem:[%s0 + $0xc10] sm:$0xff]
  %v398 = vld [vmem:[%s0 + $0xc18] sm:$0xff]
  %v399 = vld [vmem:[%s0 + $0xc20] sm:$0xff]
  %v400 = vld [vmem:[%s0 + $0xc28] sm:$0xff]
  %v401 = vld [vmem:[%s0 + $0xc30] sm:$0xff]
  %v402 = vld [vmem:[%s0 + $0xc38] sm:$0xff]
  %v403 = vld [vmem:[%s0 + $0xc40] sm:$0xff]
  %v404 = vld [vmem:[%s0 + $0xc48] sm:$0xff]
  %v405 = vld [vmem:[%s0 + $0xc50] sm:$0xff]
  %v406 = vld [vmem:[%s0 + $0xc58] sm:$0xff]
  %v407 = vld [vmem:[%s0 + $0xc60] sm:$0xff]
  %v408 = vld [vmem:[%s0 + $0xc68] sm:$0xff]
  %v409 = vld [vmem:[%s0 + $0xc70] sm:$0xff]
  %v410 = vld [vmem:[%s0 + $0xc78] sm:$0xff]
  %v411 = vld [vmem:[%s0 + $0xc80] sm:$0xff]
  %v412 = vld [vmem:[%s0 + $0xc88] sm:$0xff]
  %v413 = vld [vmem:[%s0 + $0xc90] sm:$0xff]
  %v414 = vld [vmem:[%s0 + $0xc98] sm:$0xff]
  %v415 = vld [vmem:[%s0 + $0xca0] sm:$0xff]
  %v416 = vld [vmem:[%s0 + $0xca8] sm:$0xff]
  %v417 = vld [vmem:[%s0 + $0xcb0] sm:$0xff]
  %v418 = vld [vmem:[%s0 + $0xcb8] sm:$0xff]
  %v419 = vld [vmem:[%s0 + $0xcc0] sm:$0xff]
  %v420 = vld [vmem:[%s0 + $0xcc8] sm:$0xff]
  %v421 = vld [vmem:[%s0 + $0xcd0] sm:$0xff]
  %v422 = vld [vmem:[%s0 + $0xcd8] sm:$0xff]
  %v423 = vld [vmem:[%s0 + $0xce0] sm:$0xff]
  %v424 = vld [vmem:[%s0 + $0xce8] sm:$0xff]
  %v425 = vld [vmem:[%s0 + $0xcf0] sm:$0xff]
  %v426 = vld [vmem:[%s0 + $0xcf8] sm:$0xff]
  %v427 = vld [vmem:[%s0 + $0xd00] sm:$0xff]
  %v428 = vld [vmem:[%s0 + $0xd08] sm:$0xff]
  %v429 = vld [vmem:[%s0 + $0xd10] sm:$0xff]
  %v430 = vld [vmem:[%s0 + $0xd18] sm:$0xff]
  %v431 = vld [vmem:[%s0 + $0xd20] sm:$0xff]
  %v432 = vld [vmem:[%s0 + $0xd28] sm:$0xff]
  %v433 = vld [vmem:[%s0 + $0xd30] sm:$0xff]
  %v434 = vld [vmem:[%s0 + $0xd38] sm:$0xff]
  %v435 = vld [vmem:[%s0 + $0xd40] sm:$0xff]
  %v436 = vld [vmem:[%s0 + $0xd48] sm:$0xff]
  %v437 = vld [vmem:[%s0 + $0xd50] sm:$0xff]
  %v438 = vld [vmem:[%s0 + $0xd58] sm:$0xff]
  %v439 = vld [vmem:[%s0 + $0xd60] sm:$0xff]
  %v440 = vld [vmem:[%s0 + $0xd68] sm:$0xff]
  %v441 = vld [vmem:[%s0 + $0xd70] sm:$0xff]
  %v442 = vld [vmem:[%s0 + $0xd78] sm:$0xff]
  %v443 = vld [vmem:[%s0 + $0xd80] sm:$0xff]
  %v444 = vld [vmem:[%s0 + $0xd88] sm:$0xff]
  %v445 = vld [vmem:[%s0 + $0xd90] sm:$0xff]
  %v446 = vld [vmem:[%s0 + $0xd98] sm:$0xff]
  %v447 = vld [vmem:[%s0 + $0xda0] sm:$0xff]
  %v448 = vld [vmem:[%s0 + $0xda8] sm:$0xff]
  %v449 = vld [vmem:[%s0 + $0xdb0] sm:$0xff]
  %v450 = vld [vmem:[%s0 + $0xdb8] sm:$0xff]
  %v451 = vld [vmem:[%s0 + $0xdc0] sm:$0xff]
  %v452 = vld [vmem:[%s1] sm:$0xff]
  %v453 = vld [vmem:[%s1 + $0x8] sm:$0xff]
  %v454 = vld [vmem:[%s1 + $0x10] sm:$0xff]
  %v455 = vld [vmem:[%s1 + $0x18] sm:$0xff]
  %vm456 = vcmask 261120
  %v458 = vsel %vm456, %v11, 0
  %v461 = vsel %vm456, %v12, 0
  %v464 = vsel %vm456, %v13, 0
  %v467 = vsel %vm456, %v14, 0
  %v470 = vsel %vm456, %v15, 0
  %v473 = vsel %vm456, %v16, 0
  %v476 = vsel %vm456, %v17, 0
  %v479 = vsel %vm456, %v18, 0
  %v482 = vsel %vm456, %v19, 0
  %v485 = vsel %vm456, %v20, 0
  %v488 = vsel %vm456, %v21, 0
  %v491 = vsel %vm456, %v22, 0
  %v494 = vsel %vm456, %v23, 0
  %v497 = vsel %vm456, %v24, 0
  %v500 = vsel %vm456, %v25, 0
  %v503 = vsel %vm456, %v26, 0
  %v506 = vsel %vm456, %v27, 0
  %v509 = vsel %vm456, %v28, 0
  %v512 = vsel %vm456, %v29, 0
  %v515 = vsel %vm456, %v30, 0
  %v518 = vsel %vm456, %v31, 0
  %v521 = vsel %vm456, %v32, 0
  %v524 = vsel %vm456, %v33, 0
  %v527 = vsel %vm456, %v34, 0
  %v530 = vsel %vm456, %v35, 0
  %v533 = vsel %vm456, %v36, 0
  %v536 = vsel %vm456, %v37, 0
  %v539 = vsel %vm456, %v38, 0
  %v542 = vsel %vm456, %v39, 0
  %v545 = vsel %vm456, %v40, 0
  %v548 = vsel %vm456, %v41, 0
  %v551 = vsel %vm456, %v42, 0
  %v554 = vsel %vm456, %v43, 0
  %v557 = vsel %vm456, %v44, 0
  %v560 = vsel %vm456, %v45, 0
  %v563 = vsel %vm456, %v46, 0
  %v566 = vsel %vm456, %v47, 0
  %v569 = vsel %vm456, %v48, 0
  %v572 = vsel %vm456, %v49, 0
  %v575 = vsel %vm456, %v50, 0
  %v578 = vsel %vm456, %v51, 0
  %v581 = vsel %vm456, %v52, 0
  %v584 = vsel %vm456, %v53, 0
  %v587 = vsel %vm456, %v54, 0
  %v590 = vsel %vm456, %v55, 0
  %v593 = vsel %vm456, %v56, 0
  %v596 = vsel %vm456, %v57, 0
  %v599 = vsel %vm456, %v58, 0
  %v602 = vsel %vm456, %v59, 0
  %v605 = vsel %vm456, %v60, 0
  %v608 = vsel %vm456, %v61, 0
  %v611 = vsel %vm456, %v62, 0
  %v614 = vsel %vm456, %v63, 0
  %v617 = vsel %vm456, %v64, 0
  %v620 = vsel %vm456, %v65, 0
  %v623 = vsel %vm456, %v66, 0
  %v626 = vsel %vm456, %v67, 0
  %v629 = vsel %vm456, %v68, 0
  %v632 = vsel %vm456, %v69, 0
  %v635 = vsel %vm456, %v70, 0
  %v638 = vsel %vm456, %v71, 0
  %v641 = vsel %vm456, %v72, 0
  %v644 = vsel %vm456, %v73, 0
  %v647 = vsel %vm456, %v74, 0
  %v650 = vsel %vm456, %v75, 0
  %v653 = vsel %vm456, %v76, 0
  %v656 = vsel %vm456, %v77, 0
  %v659 = vsel %vm456, %v78, 0
  %v662 = vsel %vm456, %v79, 0
  %v665 = vsel %vm456, %v80, 0
  %v668 = vsel %vm456, %v81, 0
  %v671 = vsel %vm456, %v82, 0
  %v674 = vsel %vm456, %v83, 0
  %v677 = vsel %vm456, %v84, 0
  %v680 = vsel %vm456, %v85, 0
  %v683 = vsel %vm456, %v86, 0
  %v686 = vsel %vm456, %v87, 0
  %v689 = vsel %vm456, %v88, 0
  %v692 = vsel %vm456, %v89, 0
  %v695 = vsel %vm456, %v90, 0
  %v698 = vsel %vm456, %v91, 0
  %v701 = vsel %vm456, %v92, 0
  %v704 = vsel %vm456, %v93, 0
  %v707 = vsel %vm456, %v94, 0
  %v710 = vsel %vm456, %v95, 0
  %v713 = vsel %vm456, %v96, 0
  %v716 = vsel %vm456, %v97, 0
  %v719 = vsel %vm456, %v98, 0
  %v722 = vsel %vm456, %v99, 0
  %v725 = vsel %vm456, %v100, 0
  %v728 = vsel %vm456, %v101, 0
  %v731 = vsel %vm456, %v102, 0
  %v734 = vsel %vm456, %v103, 0
  %v737 = vsel %vm456, %v104, 0
  %v740 = vsel %vm456, %v105, 0
  %v743 = vsel %vm456, %v106, 0
  %v746 = vsel %vm456, %v107, 0
  %v749 = vsel %vm456, %v108, 0
  %v752 = vsel %vm456, %v109, 0
  %v755 = vsel %vm456, %v110, 0
  %v758 = vsel %vm456, %v111, 0
  %v761 = vsel %vm456, %v112, 0
  %v764 = vsel %vm456, %v113, 0
  %v767 = vsel %vm456, %v114, 0
  %v770 = vsel %vm456, %v115, 0
  %v773 = vsel %vm456, %v116, 0
  %v776 = vsel %vm456, %v117, 0
  %v779 = vsel %vm456, %v118, 0
  %v782 = vsel %vm456, %v119, 0
  %v785 = vsel %vm456, %v120, 0
  %v788 = vsel %vm456, %v121, 0
  %v791 = vsel %vm456, %v122, 0
  %v794 = vsel %vm456, %v123, 0
  %v797 = vsel %vm456, %v124, 0
  %v800 = vsel %vm456, %v125, 0
  %v803 = vsel %vm456, %v126, 0
  %v806 = vsel %vm456, %v127, 0
  %v809 = vsel %vm456, %v128, 0
  %v812 = vsel %vm456, %v129, 0
  %v815 = vsel %vm456, %v130, 0
  %v818 = vsel %vm456, %v131, 0
  %v821 = vsel %vm456, %v132, 0
  %v824 = vsel %vm456, %v133, 0
  %v827 = vsel %vm456, %v134, 0
  %v830 = vsel %vm456, %v135, 0
  %v833 = vsel %vm456, %v136, 0
  %v836 = vsel %vm456, %v137, 0
  %v839 = vsel %vm456, %v138, 0
  %v842 = vsel %vm456, %v139, 0
  %v845 = vsel %vm456, %v140, 0
  %v848 = vsel %vm456, %v141, 0
  %v851 = vsel %vm456, %v142, 0
  %v854 = vsel %vm456, %v143, 0
  %v857 = vsel %vm456, %v144, 0
  %v860 = vsel %vm456, %v145, 0
  %v863 = vsel %vm456, %v146, 0
  %v866 = vsel %vm456, %v147, 0
  %v869 = vsel %vm456, %v148, 0
  %v872 = vsel %vm456, %v149, 0
  %v875 = vsel %vm456, %v150, 0
  %v878 = vsel %vm456, %v151, 0
  %v881 = vsel %vm456, %v152, 0
  %v884 = vsel %vm456, %v153, 0
  %v887 = vsel %vm456, %v154, 0
  %v890 = vsel %vm456, %v155, 0
  %v893 = vsel %vm456, %v156, 0
  %v896 = vsel %vm456, %v157, 0
  %v899 = vsel %vm456, %v158, 0
  %v902 = vsel %vm456, %v159, 0
  %v905 = vsel %vm456, %v160, 0
  %v908 = vsel %vm456, %v161, 0
  %v911 = vsel %vm456, %v162, 0
  %v914 = vsel %vm456, %v163, 0
  %v917 = vsel %vm456, %v164, 0
  %v920 = vsel %vm456, %v165, 0
  %v923 = vsel %vm456, %v166, 0
  %v926 = vsel %vm456, %v167, 0
  %v929 = vsel %vm456, %v168, 0
  %v932 = vsel %vm456, %v169, 0
  %v935 = vsel %vm456, %v170, 0
  %v938 = vsel %vm456, %v171, 0
  %v941 = vsel %vm456, %v172, 0
  %v944 = vsel %vm456, %v173, 0
  %v947 = vsel %vm456, %v174, 0
  %v950 = vsel %vm456, %v175, 0
  %v953 = vsel %vm456, %v176, 0
  %v956 = vsel %vm456, %v177, 0
  %v959 = vsel %vm456, %v178, 0
  %v962 = vsel %vm456, %v179, 0
  %v965 = vsel %vm456, %v180, 0
  %v968 = vsel %vm456, %v181, 0
  %v971 = vsel %vm456, %v182, 0
  %v974 = vsel %vm456, %v183, 0
  %v977 = vsel %vm456, %v184, 0
  %v980 = vsel %vm456, %v185, 0
  %v983 = vsel %vm456, %v186, 0
  %v986 = vsel %vm456, %v187, 0
  %v989 = vsel %vm456, %v188, 0
  %v992 = vsel %vm456, %v189, 0
  %v995 = vsel %vm456, %v190, 0
  %v998 = vsel %vm456, %v191, 0
  %v1001 = vsel %vm456, %v192, 0
  %v1004 = vsel %vm456, %v193, 0
  %v1007 = vsel %vm456, %v194, 0
  %v1010 = vsel %vm456, %v195, 0
  %v1013 = vsel %vm456, %v196, 0
  %v1016 = vsel %vm456, %v197, 0
  %v1019 = vsel %vm456, %v198, 0
  %v1022 = vsel %vm456, %v199, 0
  %v1025 = vsel %vm456, %v200, 0
  %v1028 = vsel %vm456, %v201, 0
  %v1031 = vsel %vm456, %v202, 0
  %v1034 = vsel %vm456, %v203, 0
  %v1037 = vsel %vm456, %v204, 0
  %v1040 = vsel %vm456, %v205, 0
  %v1043 = vsel %vm456, %v206, 0
  %v1046 = vsel %vm456, %v207, 0
  %v1049 = vsel %vm456, %v208, 0
  %v1052 = vsel %vm456, %v209, 0
  %v1055 = vsel %vm456, %v210, 0
  %v1058 = vsel %vm456, %v211, 0
  %v1061 = vsel %vm456, %v212, 0
  %v1064 = vsel %vm456, %v213, 0
  %v1067 = vsel %vm456, %v214, 0
  %v1070 = vsel %vm456, %v215, 0
  %v1073 = vsel %vm456, %v216, 0
  %v1076 = vsel %vm456, %v217, 0
  %v1079 = vsel %vm456, %v218, 0
  %v1082 = vsel %vm456, %v219, 0
  %v1085 = vsel %vm456, %v220, 0
  %v1088 = vsel %vm456, %v221, 0
  %v1091 = vsel %vm456, %v222, 0
  %v1094 = vsel %vm456, %v223, 0
  %v1097 = vsel %vm456, %v224, 0
  %v1100 = vsel %vm456, %v225, 0
  %v1103 = vsel %vm456, %v226, 0
  %v1106 = vsel %vm456, %v227, 0
  %v1109 = vsel %vm456, %v228, 0
  %v1112 = vsel %vm456, %v229, 0
  %v1115 = vsel %vm456, %v230, 0
  %v1118 = vsel %vm456, %v231, 0
  %v1121 = vsel %vm456, %v232, 0
  %v1124 = vsel %vm456, %v233, 0
  %v1127 = vsel %vm456, %v234, 0
  %v1130 = vsel %vm456, %v235, 0
  %v1133 = vsel %vm456, %v236, 0
  %v1136 = vsel %vm456, %v237, 0
  %v1139 = vsel %vm456, %v238, 0
  %v1142 = vsel %vm456, %v239, 0
  %v1145 = vsel %vm456, %v240, 0
  %v1148 = vsel %vm456, %v241, 0
  %v1151 = vsel %vm456, %v242, 0
  %v1154 = vsel %vm456, %v243, 0
  %v1157 = vsel %vm456, %v244, 0
  %v1160 = vsel %vm456, %v245, 0
  %v1163 = vsel %vm456, %v246, 0
  %v1166 = vsel %vm456, %v247, 0
  %v1169 = vsel %vm456, %v248, 0
  %v1172 = vsel %vm456, %v249, 0
  %v1175 = vsel %vm456, %v250, 0
  %v1178 = vsel %vm456, %v251, 0
  %v1181 = vsel %vm456, %v252, 0
  %v1184 = vsel %vm456, %v253, 0
  %v1187 = vsel %vm456, %v254, 0
  %v1190 = vsel %vm456, %v255, 0
  %v1193 = vsel %vm456, %v256, 0
  %v1196 = vsel %vm456, %v257, 0
  %v1199 = vsel %vm456, %v258, 0
  %v1202 = vsel %vm456, %v259, 0
  %v1205 = vsel %vm456, %v260, 0
  %v1208 = vsel %vm456, %v261, 0
  %v1211 = vsel %vm456, %v262, 0
  %v1214 = vsel %vm456, %v263, 0
  %v1217 = vsel %vm456, %v264, 0
  %v1220 = vsel %vm456, %v265, 0
  %v1223 = vsel %vm456, %v266, 0
  %v1226 = vsel %vm456, %v267, 0
  %v1229 = vsel %vm456, %v268, 0
  %v1232 = vsel %vm456, %v269, 0
  %v1235 = vsel %vm456, %v270, 0
  %v1238 = vsel %vm456, %v271, 0
  %v1241 = vsel %vm456, %v272, 0
  %v1244 = vsel %vm456, %v273, 0
  %v1247 = vsel %vm456, %v274, 0
  %v1250 = vsel %vm456, %v275, 0
  %v1253 = vsel %vm456, %v276, 0
  %v1256 = vsel %vm456, %v277, 0
  %v1259 = vsel %vm456, %v278, 0
  %v1262 = vsel %vm456, %v279, 0
  %v1265 = vsel %vm456, %v280, 0
  %v1268 = vsel %vm456, %v281, 0
  %v1271 = vsel %vm456, %v282, 0
  %v1274 = vsel %vm456, %v283, 0
  %v1277 = vsel %vm456, %v284, 0
  %v1280 = vsel %vm456, %v285, 0
  %v1283 = vsel %vm456, %v286, 0
  %v1286 = vsel %vm456, %v287, 0
  %v1289 = vsel %vm456, %v288, 0
  %v1292 = vsel %vm456, %v289, 0
  %v1295 = vsel %vm456, %v290, 0
  %v1298 = vsel %vm456, %v291, 0
  %v1301 = vsel %vm456, %v292, 0
  %v1304 = vsel %vm456, %v293, 0
  %v1307 = vsel %vm456, %v294, 0
  %v1310 = vsel %vm456, %v295, 0
  %v1313 = vsel %vm456, %v296, 0
  %v1316 = vsel %vm456, %v297, 0
  %v1319 = vsel %vm456, %v298, 0
  %v1322 = vsel %vm456, %v299, 0
  %v1325 = vsel %vm456, %v300, 0
  %v1328 = vsel %vm456, %v301, 0
  %v1331 = vsel %vm456, %v302, 0
  %v1334 = vsel %vm456, %v303, 0
  %v1337 = vsel %vm456, %v304, 0
  %v1340 = vsel %vm456, %v305, 0
  %v1343 = vsel %vm456, %v306, 0
  %v1346 = vsel %vm456, %v307, 0
  %v1349 = vsel %vm456, %v308, 0
  %v1352 = vsel %vm456, %v309, 0
  %v1355 = vsel %vm456, %v310, 0
  %v1358 = vsel %vm456, %v311, 0
  %v1361 = vsel %vm456, %v312, 0
  %v1364 = vsel %vm456, %v313, 0
  %v1367 = vsel %vm456, %v314, 0
  %v1370 = vsel %vm456, %v315, 0
  %v1373 = vsel %vm456, %v316, 0
  %v1376 = vsel %vm456, %v317, 0
  %v1379 = vsel %vm456, %v318, 0
  %v1382 = vsel %vm456, %v319, 0
  %v1385 = vsel %vm456, %v320, 0
  %v1388 = vsel %vm456, %v321, 0
  %v1391 = vsel %vm456, %v322, 0
  %v1394 = vsel %vm456, %v323, 0
  %v1397 = vsel %vm456, %v324, 0
  %v1400 = vsel %vm456, %v325, 0
  %v1403 = vsel %vm456, %v326, 0
  %v1406 = vsel %vm456, %v327, 0
  %v1409 = vsel %vm456, %v328, 0
  %v1412 = vsel %vm456, %v329, 0
  %v1415 = vsel %vm456, %v330, 0
  %v1418 = vsel %vm456, %v331, 0
  %v1421 = vsel %vm456, %v332, 0
  %v1424 = vsel %vm456, %v333, 0
  %v1427 = vsel %vm456, %v334, 0
  %v1430 = vsel %vm456, %v335, 0
  %v1433 = vsel %vm456, %v336, 0
  %v1436 = vsel %vm456, %v337, 0
  %v1439 = vsel %vm456, %v338, 0
  %v1442 = vsel %vm456, %v339, 0
  %v1445 = vsel %vm456, %v340, 0
  %v1448 = vsel %vm456, %v341, 0
  %v1451 = vsel %vm456, %v342, 0
  %v1454 = vsel %vm456, %v343, 0
  %v1457 = vsel %vm456, %v344, 0
  %v1460 = vsel %vm456, %v345, 0
  %v1463 = vsel %vm456, %v346, 0
  %v1466 = vsel %vm456, %v347, 0
  %v1469 = vsel %vm456, %v348, 0
  %v1472 = vsel %vm456, %v349, 0
  %v1475 = vsel %vm456, %v350, 0
  %v1478 = vsel %vm456, %v351, 0
  %v1481 = vsel %vm456, %v352, 0
  %v1484 = vsel %vm456, %v353, 0
  %v1487 = vsel %vm456, %v354, 0
  %v1490 = vsel %vm456, %v355, 0
  %v1493 = vsel %vm456, %v356, 0
  %v1496 = vsel %vm456, %v357, 0
  %v1499 = vsel %vm456, %v358, 0
  %v1502 = vsel %vm456, %v359, 0
  %v1505 = vsel %vm456, %v360, 0
  %v1508 = vsel %vm456, %v361, 0
  %v1511 = vsel %vm456, %v362, 0
  %v1514 = vsel %vm456, %v363, 0
  %v1517 = vsel %vm456, %v364, 0
  %v1520 = vsel %vm456, %v365, 0
  %v1523 = vsel %vm456, %v366, 0
  %v1526 = vsel %vm456, %v367, 0
  %v1529 = vsel %vm456, %v368, 0
  %v1532 = vsel %vm456, %v369, 0
  %v1535 = vsel %vm456, %v370, 0
  %v1538 = vsel %vm456, %v371, 0
  %v1541 = vsel %vm456, %v372, 0
  %v1544 = vsel %vm456, %v373, 0
  %v1547 = vsel %vm456, %v374, 0
  %v1550 = vsel %vm456, %v375, 0
  %v1553 = vsel %vm456, %v376, 0
  %v1556 = vsel %vm456, %v377, 0
  %v1559 = vsel %vm456, %v378, 0
  %v1562 = vsel %vm456, %v379, 0
  %v1565 = vsel %vm456, %v380, 0
  %v1568 = vsel %vm456, %v381, 0
  %v1571 = vsel %vm456, %v382, 0
  %v1574 = vsel %vm456, %v383, 0
  %v1577 = vsel %vm456, %v384, 0
  %v1580 = vsel %vm456, %v385, 0
  %v1583 = vsel %vm456, %v386, 0
  %v1586 = vsel %vm456, %v387, 0
  %v1589 = vsel %vm456, %v388, 0
  %v1592 = vsel %vm456, %v389, 0
  %v1595 = vsel %vm456, %v390, 0
  %v1598 = vsel %vm456, %v391, 0
  %v1601 = vsel %vm456, %v392, 0
  %v1604 = vsel %vm456, %v393, 0
  %v1607 = vsel %vm456, %v394, 0
  %v1610 = vsel %vm456, %v395, 0
  %v1613 = vsel %vm456, %v396, 0
  %v1616 = vsel %vm456, %v397, 0
  %v1619 = vsel %vm456, %v398, 0
  %v1622 = vsel %vm456, %v399, 0
  %v1625 = vsel %vm456, %v400, 0
  %v1628 = vsel %vm456, %v401, 0
  %v1631 = vsel %vm456, %v402, 0
  %v1634 = vsel %vm456, %v403, 0
  %v1637 = vsel %vm456, %v404, 0
  %v1640 = vsel %vm456, %v405, 0
  %v1643 = vsel %vm456, %v406, 0
  %v1646 = vsel %vm456, %v407, 0
  %v1649 = vsel %vm456, %v408, 0
  %v1652 = vsel %vm456, %v409, 0
  %v1655 = vsel %vm456, %v410, 0
  %v1658 = vsel %vm456, %v411, 0
  %v1661 = vsel %vm456, %v412, 0
  %v1664 = vsel %vm456, %v413, 0
  %v1667 = vsel %vm456, %v414, 0
  %v1670 = vsel %vm456, %v415, 0
  %v1673 = vsel %vm456, %v416, 0
  %v1676 = vsel %vm456, %v417, 0
  %v1679 = vsel %vm456, %v418, 0
  %v1682 = vsel %vm456, %v419, 0
  %v1685 = vsel %vm456, %v420, 0
  %v1688 = vsel %vm456, %v421, 0
  %v1691 = vsel %vm456, %v422, 0
  %v1694 = vsel %vm456, %v423, 0
  %v1697 = vsel %vm456, %v424, 0
  %v1700 = vsel %vm456, %v425, 0
  %v1703 = vsel %vm456, %v426, 0
  %v1706 = vsel %vm456, %v427, 0
  %v1709 = vsel %vm456, %v428, 0
  %v1712 = vsel %vm456, %v429, 0
  %v1715 = vsel %vm456, %v430, 0
  %v1718 = vsel %vm456, %v431, 0
  %v1721 = vsel %vm456, %v432, 0
  %v1724 = vsel %vm456, %v433, 0
  %v1727 = vsel %vm456, %v434, 0
  %v1730 = vsel %vm456, %v435, 0
  %v1733 = vsel %vm456, %v436, 0
  %v1736 = vsel %vm456, %v437, 0
  %v1739 = vsel %vm456, %v438, 0
  %v1742 = vsel %vm456, %v439, 0
  %v1745 = vsel %vm456, %v440, 0
  %v1748 = vsel %vm456, %v441, 0
  %v1751 = vsel %vm456, %v442, 0
  %v1754 = vsel %vm456, %v443, 0
  %v1757 = vsel %vm456, %v444, 0
  %v1760 = vsel %vm456, %v445, 0
  %v1763 = vsel %vm456, %v446, 0
  %v1766 = vsel %vm456, %v447, 0
  %v1769 = vsel %vm456, %v448, 0
  %v1772 = vsel %vm456, %v449, 0
  %v1775 = vsel %vm456, %v450, 0
  %v1778 = vsel %vm456, %v451, 0
  %1780 = vmatprep.subr.mxu0 0.0
  %1781 = vmatpush1.msra.mxu0 %v452
  %1782 = vmatprep.subr.mxu0 0.0
  %1783 = vmatpush1.msra.mxu0 %v453
  %1784 = vmatprep.subr.mxu0 0.0
  %1785 = vmatpush1.msra.mxu0 %v454
  %1786 = vmatprep.subr.mxu0 0.0
  %1787 = vmatpush1.msra.mxu0 %v455
  %1788 = vmatprep.subr.mxu0 0.0
  %1789 = vmatpush1.msra.mxu0 0.0
  %1790 = vmatprep.subr.mxu0 0.0
  %1791 = vmatpush1.msra.mxu0 0.0
  %1792 = vmatprep.subr.mxu0 0.0
  %1793 = vmatpush1.msra.mxu0 0.0
  %1794 = vmatprep.subr.mxu0 0.0
  %1795 = vmatpush1.msra.mxu0 0.0
  %1796 = vmatprep.subr.mxu0 0.0
  %1797 = vmatpush1.msra.mxu0 0.0
  %1798 = vmatprep.subr.mxu0 0.0
  %1799 = vmatpush1.msra.mxu0 0.0
  %1800 = vmatprep.subr.mxu0 0.0
  %1801 = vmatpush1.msra.mxu0 0.0
  %1802 = vmatprep.subr.mxu0 0.0
  %1803 = vmatpush1.msra.mxu0 0.0
  %1804 = vmatprep.subr.mxu0 0.0
  %1805 = vmatpush1.msra.mxu0 0.0
  %1806 = vmatprep.subr.mxu0 0.0
  %1807 = vmatpush1.msra.mxu0 0.0
  %1808 = vmatprep.subr.mxu0 0.0
  %1809 = vmatpush1.msra.mxu0 0.0
  %1810 = vmatprep.subr.mxu0 0.0
  %1811 = vmatpush1.msra.mxu0 0.0
  %1812 = vmatprep.subr.mxu0 0.0
  %1813 = vmatpush1.msra.mxu0 0.0
  %1814 = vmatprep.subr.mxu0 0.0
  %1815 = vmatpush1.msra.mxu0 0.0
  %1816 = vmatprep.subr.mxu0 0.0
  %1817 = vmatpush1.msra.mxu0 0.0
  %1818 = vmatprep.subr.mxu0 0.0
  %1819 = vmatpush1.msra.mxu0 0.0
  %1820 = vmatprep.subr.mxu0 0.0
  %1821 = vmatpush1.msra.mxu0 0.0
  %1822 = vmatprep.subr.mxu0 0.0
  %1823 = vmatpush1.msra.mxu0 0.0
  %1824 = vmatprep.subr.mxu0 0.0
  %1825 = vmatpush1.msra.mxu0 0.0
  %1826 = vmatprep.subr.mxu0 0.0
  %1827 = vmatpush1.msra.mxu0 0.0
  %1828 = vmatprep.subr.mxu0 0.0
  %1829 = vmatpush1.msra.mxu0 0.0
  %1830 = vmatprep.subr.mxu0 0.0
  %1831 = vmatpush1.msra.mxu0 0.0
  %1832 = vmatprep.subr.mxu0 0.0
  %1833 = vmatpush1.msra.mxu0 0.0
  %1834 = vmatprep.subr.mxu0 0.0
  %1835 = vmatpush1.msra.mxu0 0.0
  %1836 = vmatprep.subr.mxu0 0.0
  %1837 = vmatpush1.msra.mxu0 0.0
  %1838 = vmatprep.subr.mxu0 0.0
  %1839 = vmatpush1.msra.mxu0 0.0
  %1840 = vmatprep.subr.mxu0 0.0
  %1841 = vmatpush1.msra.mxu0 0.0
  %1842 = vmatprep.subr.mxu0 0.0
  %1843 = vmatpush1.msra.mxu0 0.0
  %1844 = vmatprep.mubr.f32.mxu0 0.0
  %1845 = vmatmul.mubr.f32.gmra.mrb[0].mxu0 %v458
  %v1846 = vpop.f32.mrb[0].mxu0
  %v1847 = vadd.f32 0.0, %v1846
  %v1848 = vpop.f32.mrb[0].mxu0
  %1849 = vmatprep.mubr.f32.mxu0 0.0
  %1850 = vmatmul.mubr.f32.gmra.mrb[0].mxu0 %v461
  %v1851 = vpop.f32.mrb[0].mxu0
  %v1852 = vadd.f32 0.0, %v1851
  %v1853 = vpop.f32.mrb[0].mxu0
  %1854 = vmatprep.mubr.f32.mxu0 0.0
  %1855 = vmatmul.mubr.f32.gmra.mrb[0].mxu0 %v464
  %v1856 = vpop.f32.mrb[0].mxu0
  %v1857 = vadd.f32 0.0, %v1856
  %v1858 = vpop.f32.mrb[0].mxu0
  %1859 = vmatprep.mubr.f32.mxu0 0.0
  %1860 = vmatmul.mubr.f32.gmra.mrb[0].mxu0 %v467
  %v1861 = vpop.f32.mrb[0].mxu0
  %v1862 = vadd.f32 0.0, %v1861
  %v1863 = vpop.f32.mrb[0].mxu0
  %1864 = vmatprep.mubr.f32.mxu0 0.0
  %1865 = vmatmul.mubr.f32.gmra.mrb[0].mxu0 %v470
  %v1866 = vpop.f32.mrb[0].mxu0
  %v1867 = vadd.f32 0.0, %v1866
  %v1868 = vpop.f32.mrb[0].mxu0
  %1869 = vmatprep.mubr.f32.mxu0 0.0
  %1870 = vmatmul.mubr.f32.gmra.mrb[0].mxu0 %v473
  %v1871 = vpop.f32.mrb[0].mxu0
  %v1872 = vadd.f32 0.0, %v1871
  %v1873 = vpop.f32.mrb[0].mxu0
  %1874 = vmatprep.mubr.f32.mxu0 0.0
  %1875 = vmatmul.mubr.f32.gmra.mrb[0].mxu0 %v476
  %v1876 = vpop.f32.mrb[0].mxu0
  %v1877 = vadd.f32 0.0, %v1876
  %v1878 = vpop.f32.mrb[0].mxu0
  %1879 = vmatprep.mubr.f32.mxu0 0.0
  %1880 = vmatmul.mubr.f32.gmra.mrb[0].mxu0 %v479
  %v1881 = vpop.f32.mrb[0].mxu0
  %v1882 = vadd.f32 0.0, %v1881
  %v1883 = vpop.f32.mrb[0].mxu0
  %1884 = vmatprep.mubr.f32.mxu0 0.0
  %1885 = vmatmul.mubr.f32.gmra.mrb[0].mxu0 %v482
  %v1886 = vpop.f32.mrb[0].mxu0
  %v1887 = vadd.f32 0.0, %v1886
  %v1888 = vpop.f32.mrb[0].mxu0
  %1889 = vmatprep.mubr.f32.mxu0 0.0
  %1890 = vmatmul.mubr.f32.gmra.mrb[0].mxu0 %v485
  %v1891 = vpop.f32.mrb[0].mxu0
  %v1892 = vadd.f32 0.0, %v1891
  %v1893 = vpop.f32.mrb[0].mxu0
  %1894 = vmatprep.mubr.f32.mxu0 0.0
  %1895 = vmatmul.mubr.f32.gmra.mrb[0].mxu0 %v488
  %v1896 = vpop.f32.mrb[0].mxu0
  %v1897 = vadd.f32 0.0, %v1896
  %v1898 = vpop.f32.mrb[0].mxu0
  %1899 = vmatprep.mubr.f32.mxu0 0.0
  %1900 = vmatmul.mubr.f32.gmra.mrb[0].mxu0 %v491
  %v1901 = vpop.f32.mrb[0].mxu0
  %v1902 = vadd.f32 0.0, %v1901
  %v1903 = vpop.f32.mrb[0].mxu0
  %1904 = vmatprep.mubr.f32.mxu0 0.0
  %1905 = vmatmul.mubr.f32.gmra.mrb[0].mxu0 %v494
  %v1906 = vpop.f32.mrb[0].mxu0
  %v1907 = vadd.f32 0.0, %v1906
  %v1908 = vpop.f32.mrb[0].mxu0
  %1909 = vmatprep.mubr.f32.mxu0 0.0
  %1910 = vmatmul.mubr.f32.gmra.mrb[0].mxu0 %v497
  %v1911 = vpop.f32.mrb[0].mxu0
  %v1912 = vadd.f32 0.0, %v1911
  %v1913 = vpop.f32.mrb[0].mxu0
  %1914 = vmatprep.mubr.f32.mxu0 0.0
  %1915 = vmatmul.mubr.f32.gmra.mrb[0].mxu0 %v500
  %v1916 = vpop.f32.mrb[0].mxu0
  %v1917 = vadd.f32 0.0, %v1916
  %v1918 = vpop.f32.mrb[0].mxu0
  %1919 = vmatprep.mubr.f32.mxu0 0.0
  %1920 = vmatmul.mubr.f32.gmra.mrb[0].mxu0 %v503
  %v1921 = vpop.f32.mrb[0].mxu0
  %v1922 = vadd.f32 0.0, %v1921
  %v1923 = vpop.f32.mrb[0].mxu0
  %1924 = vmatprep.mubr.f32.mxu0 0.0
  %1925 = vmatmul.mubr.f32.gmra.mrb[0].mxu0 %v506
  %v1926 = vpop.f32.mrb[0].mxu0
  %v1927 = vadd.f32 0.0, %v1926
  %v1928 = vpop.f32.mrb[0].mxu0
  %1929 = vmatprep.mubr.f32.mxu0 0.0
  %1930 = vmatmul.mubr.f32.gmra.mrb[0].mxu0 %v509
  %v1931 = vpop.f32.mrb[0].mxu0
  %v1932 = vadd.f32 0.0, %v1931
  %v1933 = vpop.f32.mrb[0].mxu0
  %1934 = vmatprep.mubr.f32.mxu0 0.0
  %1935 = vmatmul.mubr.f32.gmra.mrb[0].mxu0 %v512
  %v1936 = vpop.f32.mrb[0].mxu0
  %v1937 = vadd.f32 0.0, %v1936
  %v1938 = vpop.f32.mrb[0].mxu0
  %1939 = vmatprep.mubr.f32.mxu0 0.0
  %1940 = vmatmul.mubr.f32.gmra.mrb[0].mxu0 %v515
  %v1941 = vpop.f32.mrb[0].mxu0
  %v1942 = vadd.f32 0.0, %v1941
  %v1943 = vpop.f32.mrb[0].mxu0
  %1944 = vmatprep.mubr.f32.mxu0 0.0
  %1945 = vmatmul.mubr.f32.gmra.mrb[0].mxu0 %v518
  %v1946 = vpop.f32.mrb[0].mxu0
  %v1947 = vadd.f32 0.0, %v1946
  %v1948 = vpop.f32.mrb[0].mxu0
  %1949 = vmatprep.mubr.f32.mxu0 0.0
  %1950 = vmatmul.mubr.f32.gmra.mrb[0].mxu0 %v521
  %v1951 = vpop.f32.mrb[0].mxu0
  %v1952 = vadd.f32 0.0, %v1951
  %v1953 = vpop.f32.mrb[0].mxu0
  %1954 = vmatprep.mubr.f32.mxu0 0.0
  %1955 = vmatmul.mubr.f32.gmra.mrb[0].mxu0 %v524
  %v1956 = vpop.f32.mrb[0].mxu0
  %v1957 = vadd.f32 0.0, %v1956
  %v1958 = vpop.f32.mrb[0].mxu0
  %1959 = vmatprep.mubr.f32.mxu0 0.0
  %1960 = vmatmul.mubr.f32.gmra.mrb[0].mxu0 %v527
  %v1961 = vpop.f32.mrb[0].mxu0
  %v1962 = vadd.f32 0.0, %v1961
  %v1963 = vpop.f32.mrb[0].mxu0
  %1964 = vmatprep.mubr.f32.mxu0 0.0
  %1965 = vmatmul.mubr.f32.gmra.mrb[0].mxu0 %v530
  %v1966 = vpop.f32.mrb[0].mxu0
  %v1967 = vadd.f32 0.0, %v1966
  %v1968 = vpop.f32.mrb[0].mxu0
  %1969 = vmatprep.mubr.f32.mxu0 0.0
  %1970 = vmatmul.mubr.f32.gmra.mrb[0].mxu0 %v533
  %v1971 = vpop.f32.mrb[0].mxu0
  %v1972 = vadd.f32 0.0, %v1971
  %v1973 = vpop.f32.mrb[0].mxu0
  %1974 = vmatprep.mubr.f32.mxu0 0.0
  %1975 = vmatmul.mubr.f32.gmra.mrb[0].mxu0 %v536
  %v1976 = vpop.f32.mrb[0].mxu0
  %v1977 = vadd.f32 0.0, %v1976
  %v1978 = vpop.f32.mrb[0].mxu0
  %1979 = vmatprep.mubr.f32.mxu0 0.0
  %1980 = vmatmul.mubr.f32.gmra.mrb[0].mxu0 %v539
  %v1981 = vpop.f32.mrb[0].mxu0
  %v1982 = vadd.f32 0.0, %v1981
  %v1983 = vpop.f32.mrb[0].mxu0
  %1984 = vmatprep.mubr.f32.mxu0 0.0
  %1985 = vmatmul.mubr.f32.gmra.mrb[0].mxu0 %v542
  %v1986 = vpop.f32.mrb[0].mxu0
  %v1987 = vadd.f32 0.0, %v1986
  %v1988 = vpop.f32.mrb[0].mxu0
  %1989 = vmatprep.mubr.f32.mxu0 0.0
  %1990 = vmatmul.mubr.f32.gmra.mrb[0].mxu0 %v545
  %v1991 = vpop.f32.mrb[0].mxu0
  %v1992 = vadd.f32 0.0, %v1991
  %v1993 = vpop.f32.mrb[0].mxu0
  %1994 = vmatprep.mubr.f32.mxu0 0.0
  %1995 = vmatmul.mubr.f32.gmra.mrb[0].mxu0 %v548
  %v1996 = vpop.f32.mrb[0].mxu0
  %v1997 = vadd.f32 0.0, %v1996
  %v1998 = vpop.f32.mrb[0].mxu0
  %1999 = vmatprep.mubr.f32.mxu0 0.0
  %2000 = vmatmul.mubr.f32.gmra.mrb[0].mxu0 %v551
  %v2001 = vpop.f32.mrb[0].mxu0
  %v2002 = vadd.f32 0.0, %v2001
  %v2003 = vpop.f32.mrb[0].mxu0
  %2004 = vmatprep.mubr.f32.mxu0 0.0
  %2005 = vmatmul.mubr.f32.gmra.mrb[0].mxu0 %v554
  %v2006 = vpop.f32.mrb[0].mxu0
  %v2007 = vadd.f32 0.0, %v2006
  %v2008 = vpop.f32.mrb[0].mxu0
  %2009 = vmatprep.mubr.f32.mxu0 0.0
  %2010 = vmatmul.mubr.f32.gmra.mrb[0].mxu0 %v557
  %v2011 = vpop.f32.mrb[0].mxu0
  %v2012 = vadd.f32 0.0, %v2011
  %v2013 = vpop.f32.mrb[0].mxu0
  %2014 = vmatprep.mubr.f32.mxu0 0.0
  %2015 = vmatmul.mubr.f32.gmra.mrb[0].mxu0 %v560
  %v2016 = vpop.f32.mrb[0].mxu0
  %v2017 = vadd.f32 0.0, %v2016
  %v2018 = vpop.f32.mrb[0].mxu0
  %2019 = vmatprep.mubr.f32.mxu0 0.0
  %2020 = vmatmul.mubr.f32.gmra.mrb[0].mxu0 %v563
  %v2021 = vpop.f32.mrb[0].mxu0
  %v2022 = vadd.f32 0.0, %v2021
  %v2023 = vpop.f32.mrb[0].mxu0
  %2024 = vmatprep.mubr.f32.mxu0 0.0
  %2025 = vmatmul.mubr.f32.gmra.mrb[0].mxu0 %v566
  %v2026 = vpop.f32.mrb[0].mxu0
  %v2027 = vadd.f32 0.0, %v2026
  %v2028 = vpop.f32.mrb[0].mxu0
  %2029 = vmatprep.mubr.f32.mxu0 0.0
  %2030 = vmatmul.mubr.f32.gmra.mrb[0].mxu0 %v569
  %v2031 = vpop.f32.mrb[0].mxu0
  %v2032 = vadd.f32 0.0, %v2031
  %v2033 = vpop.f32.mrb[0].mxu0
  %2034 = vmatprep.mubr.f32.mxu0 0.0
  %2035 = vmatmul.mubr.f32.gmra.mrb[0].mxu0 %v572
  %v2036 = vpop.f32.mrb[0].mxu0
  %v2037 = vadd.f32 0.0, %v2036
  %v2038 = vpop.f32.mrb[0].mxu0
  %2039 = vmatprep.mubr.f32.mxu0 0.0
  %2040 = vmatmul.mubr.f32.gmra.mrb[0].mxu0 %v575
  %v2041 = vpop.f32.mrb[0].mxu0
  %v2042 = vadd.f32 0.0, %v2041
  %v2043 = vpop.f32.mrb[0].mxu0
  %2044 = vmatprep.mubr.f32.mxu0 0.0
  %2045 = vmatmul.mubr.f32.gmra.mrb[0].mxu0 %v578
  %v2046 = vpop.f32.mrb[0].mxu0
  %v2047 = vadd.f32 0.0, %v2046
  %v2048 = vpop.f32.mrb[0].mxu0
  %2049 = vmatprep.mubr.f32.mxu0 0.0
  %2050 = vmatmul.mubr.f32.gmra.mrb[0].mxu0 %v581
  %v2051 = vpop.f32.mrb[0].mxu0
  %v2052 = vadd.f32 0.0, %v2051
  %v2053 = vpop.f32.mrb[0].mxu0
  %2054 = vmatprep.mubr.f32.mxu0 0.0
  %2055 = vmatmul.mubr.f32.gmra.mrb[0].mxu0 %v584
  %v2056 = vpop.f32.mrb[0].mxu0
  %v2057 = vadd.f32 0.0, %v2056
  %v2058 = vpop.f32.mrb[0].mxu0
  %2059 = vmatprep.mubr.f32.mxu0 0.0
  %2060 = vmatmul.mubr.f32.gmra.mrb[0].mxu0 %v587
  %v2061 = vpop.f32.mrb[0].mxu0
  %v2062 = vadd.f32 0.0, %v2061
  %v2063 = vpop.f32.mrb[0].mxu0
  %2064 = vmatprep.mubr.f32.mxu0 0.0
  %2065 = vmatmul.mubr.f32.gmra.mrb[0].mxu0 %v590
  %v2066 = vpop.f32.mrb[0].mxu0
  %v2067 = vadd.f32 0.0, %v2066
  %v2068 = vpop.f32.mrb[0].mxu0
  %2069 = vmatprep.mubr.f32.mxu0 0.0
  %2070 = vmatmul.mubr.f32.gmra.mrb[0].mxu0 %v593
  %v2071 = vpop.f32.mrb[0].mxu0
  %v2072 = vadd.f32 0.0, %v2071
  %v2073 = vpop.f32.mrb[0].mxu0
  %2074 = vmatprep.mubr.f32.mxu0 0.0
  %2075 = vmatmul.mubr.f32.gmra.mrb[0].mxu0 %v596
  %v2076 = vpop.f32.mrb[0].mxu0
  %v2077 = vadd.f32 0.0, %v2076
  %v2078 = vpop.f32.mrb[0].mxu0
  %2079 = vmatprep.mubr.f32.mxu0 0.0
  %2080 = vmatmul.mubr.f32.gmra.mrb[0].mxu0 %v599
  %v2081 = vpop.f32.mrb[0].mxu0
  %v2082 = vadd.f32 0.0, %v2081
  %v2083 = vpop.f32.mrb[0].mxu0
  %2084 = vmatprep.mubr.f32.mxu0 0.0
  %2085 = vmatmul.mubr.f32.gmra.mrb[0].mxu0 %v602
  %v2086 = vpop.f32.mrb[0].mxu0
  %v2087 = vadd.f32 0.0, %v2086
  %v2088 = vpop.f32.mrb[0].mxu0
  %2089 = vmatprep.mubr.f32.mxu0 0.0
  %2090 = vmatmul.mubr.f32.gmra.mrb[0].mxu0 %v605
  %v2091 = vpop.f32.mrb[0].mxu0
  %v2092 = vadd.f32 0.0, %v2091
  %v2093 = vpop.f32.mrb[0].mxu0
  %2094 = vmatprep.mubr.f32.mxu0 0.0
  %2095 = vmatmul.mubr.f32.gmra.mrb[0].mxu0 %v608
  %v2096 = vpop.f32.mrb[0].mxu0
  %v2097 = vadd.f32 0.0, %v2096
  %v2098 = vpop.f32.mrb[0].mxu0
  %2099 = vmatprep.mubr.f32.mxu0 0.0
  %2100 = vmatmul.mubr.f32.gmra.mrb[0].mxu0 %v611
  %v2101 = vpop.f32.mrb[0].mxu0
  %v2102 = vadd.f32 0.0, %v2101
  %v2103 = vpop.f32.mrb[0].mxu0
  %2104 = vmatprep.mubr.f32.mxu0 0.0
  %2105 = vmatmul.mubr.f32.gmra.mrb[0].mxu0 %v614
  %v2106 = vpop.f32.mrb[0].mxu0
  %v2107 = vadd.f32 0.0, %v2106
  %v2108 = vpop.f32.mrb[0].mxu0
  %2109 = vmatprep.mubr.f32.mxu0 0.0
  %2110 = vmatmul.mubr.f32.gmra.mrb[0].mxu0 %v617
  %v2111 = vpop.f32.mrb[0].mxu0
  %v2112 = vadd.f32 0.0, %v2111
  %v2113 = vpop.f32.mrb[0].mxu0
  %2114 = vmatprep.mubr.f32.mxu0 0.0
  %2115 = vmatmul.mubr.f32.gmra.mrb[0].mxu0 %v620
  %v2116 = vpop.f32.mrb[0].mxu0
  %v2117 = vadd.f32 0.0, %v2116
  %v2118 = vpop.f32.mrb[0].mxu0
  %2119 = vmatprep.mubr.f32.mxu0 0.0
  %2120 = vmatmul.mubr.f32.gmra.mrb[0].mxu0 %v623
  %v2121 = vpop.f32.mrb[0].mxu0
  %v2122 = vadd.f32 0.0, %v2121
  %v2123 = vpop.f32.mrb[0].mxu0
  %2124 = vmatprep.mubr.f32.mxu0 0.0
  %2125 = vmatmul.mubr.f32.gmra.mrb[0].mxu0 %v626
  %v2126 = vpop.f32.mrb[0].mxu0
  %v2127 = vadd.f32 0.0, %v2126
  %v2128 = vpop.f32.mrb[0].mxu0
  %2129 = vmatprep.mubr.f32.mxu0 0.0
  %2130 = vmatmul.mubr.f32.gmra.mrb[0].mxu0 %v629
  %v2131 = vpop.f32.mrb[0].mxu0
  %v2132 = vadd.f32 0.0, %v2131
  %v2133 = vpop.f32.mrb[0].mxu0
  %2134 = vmatprep.mubr.f32.mxu0 0.0
  %2135 = vmatmul.mubr.f32.gmra.mrb[0].mxu0 %v632
  %v2136 = vpop.f32.mrb[0].mxu0
  %v2137 = vadd.f32 0.0, %v2136
  %v2138 = vpop.f32.mrb[0].mxu0
  %2139 = vmatprep.mubr.f32.mxu0 0.0
  %2140 = vmatmul.mubr.f32.gmra.mrb[0].mxu0 %v635
  %v2141 = vpop.f32.mrb[0].mxu0
  %v2142 = vadd.f32 0.0, %v2141
  %v2143 = vpop.f32.mrb[0].mxu0
  %2144 = vmatprep.mubr.f32.mxu0 0.0
  %2145 = vmatmul.mubr.f32.gmra.mrb[0].mxu0 %v638
  %v2146 = vpop.f32.mrb[0].mxu0
  %v2147 = vadd.f32 0.0, %v2146
  %v2148 = vpop.f32.mrb[0].mxu0
  %2149 = vmatprep.mubr.f32.mxu0 0.0
  %2150 = vmatmul.mubr.f32.gmra.mrb[0].mxu0 %v641
  %v2151 = vpop.f32.mrb[0].mxu0
  %v2152 = vadd.f32 0.0, %v2151
  %v2153 = vpop.f32.mrb[0].mxu0
  %2154 = vmatprep.mubr.f32.mxu0 0.0
  %2155 = vmatmul.mubr.f32.gmra.mrb[0].mxu0 %v644
  %v2156 = vpop.f32.mrb[0].mxu0
  %v2157 = vadd.f32 0.0, %v2156
  %v2158 = vpop.f32.mrb[0].mxu0
  %2159 = vmatprep.mubr.f32.mxu0 0.0
  %2160 = vmatmul.mubr.f32.gmra.mrb[0].mxu0 %v647
  %v2161 = vpop.f32.mrb[0].mxu0
  %v2162 = vadd.f32 0.0, %v2161
  %v2163 = vpop.f32.mrb[0].mxu0
  %2164 = vmatprep.mubr.f32.mxu0 0.0
  %2165 = vmatmul.mubr.f32.gmra.mrb[0].mxu0 %v650
  %v2166 = vpop.f32.mrb[0].mxu0
  %v2167 = vadd.f32 0.0, %v2166
  %v2168 = vpop.f32.mrb[0].mxu0
  %2169 = vmatprep.mubr.f32.mxu0 0.0
  %2170 = vmatmul.mubr.f32.gmra.mrb[0].mxu0 %v653
  %v2171 = vpop.f32.mrb[0].mxu0
  %v2172 = vadd.f32 0.0, %v2171
  %v2173 = vpop.f32.mrb[0].mxu0
  %2174 = vmatprep.mubr.f32.mxu0 0.0
  %2175 = vmatmul.mubr.f32.gmra.mrb[0].mxu0 %v656
  %v2176 = vpop.f32.mrb[0].mxu0
  %v2177 = vadd.f32 0.0, %v2176
  %v2178 = vpop.f32.mrb[0].mxu0
  %2179 = vmatprep.mubr.f32.mxu0 0.0
  %2180 = vmatmul.mubr.f32.gmra.mrb[0].mxu0 %v659
  %v2181 = vpop.f32.mrb[0].mxu0
  %v2182 = vadd.f32 0.0, %v2181
  %v2183 = vpop.f32.mrb[0].mxu0
  %2184 = vmatprep.mubr.f32.mxu0 0.0
  %2185 = vmatmul.mubr.f32.gmra.mrb[0].mxu0 %v662
  %v2186 = vpop.f32.mrb[0].mxu0
  %v2187 = vadd.f32 0.0, %v2186
  %v2188 = vpop.f32.mrb[0].mxu0
  %2189 = vmatprep.mubr.f32.mxu0 0.0
  %2190 = vmatmul.mubr.f32.gmra.mrb[0].mxu0 %v665
  %v2191 = vpop.f32.mrb[0].mxu0
  %v2192 = vadd.f32 0.0, %v2191
  %v2193 = vpop.f32.mrb[0].mxu0
  %2194 = vmatprep.mubr.f32.mxu0 0.0
  %2195 = vmatmul.mubr.f32.gmra.mrb[0].mxu0 %v668
  %v2196 = vpop.f32.mrb[0].mxu0
  %v2197 = vadd.f32 0.0, %v2196
  %v2198 = vpop.f32.mrb[0].mxu0
  %2199 = vmatprep.mubr.f32.mxu0 0.0
  %2200 = vmatmul.mubr.f32.gmra.mrb[0].mxu0 %v671
  %v2201 = vpop.f32.mrb[0].mxu0
  %v2202 = vadd.f32 0.0, %v2201
  %v2203 = vpop.f32.mrb[0].mxu0
  %2204 = vmatprep.mubr.f32.mxu0 0.0
  %2205 = vmatmul.mubr.f32.gmra.mrb[0].mxu0 %v674
  %v2206 = vpop.f32.mrb[0].mxu0
  %v2207 = vadd.f32 0.0, %v2206
  %v2208 = vpop.f32.mrb[0].mxu0
  %2209 = vmatprep.mubr.f32.mxu0 0.0
  %2210 = vmatmul.mubr.f32.gmra.mrb[0].mxu0 %v677
  %v2211 = vpop.f32.mrb[0].mxu0
  %v2212 = vadd.f32 0.0, %v2211
  %v2213 = vpop.f32.mrb[0].mxu0
  %2214 = vmatprep.mubr.f32.mxu0 0.0
  %2215 = vmatmul.mubr.f32.gmra.mrb[0].mxu0 %v680
  %v2216 = vpop.f32.mrb[0].mxu0
  %v2217 = vadd.f32 0.0, %v2216
  %v2218 = vpop.f32.mrb[0].mxu0
  %2219 = vmatprep.mubr.f32.mxu0 0.0
  %2220 = vmatmul.mubr.f32.gmra.mrb[0].mxu0 %v683
  %v2221 = vpop.f32.mrb[0].mxu0
  %v2222 = vadd.f32 0.0, %v2221
  %v2223 = vpop.f32.mrb[0].mxu0
  %2224 = vmatprep.mubr.f32.mxu0 0.0
  %2225 = vmatmul.mubr.f32.gmra.mrb[0].mxu0 %v686
  %v2226 = vpop.f32.mrb[0].mxu0
  %v2227 = vadd.f32 0.0, %v2226
  %v2228 = vpop.f32.mrb[0].mxu0
  %2229 = vmatprep.mubr.f32.mxu0 0.0
  %2230 = vmatmul.mubr.f32.gmra.mrb[0].mxu0 %v689
  %v2231 = vpop.f32.mrb[0].mxu0
  %v2232 = vadd.f32 0.0, %v2231
  %v2233 = vpop.f32.mrb[0].mxu0
  %2234 = vmatprep.mubr.f32.mxu0 0.0
  %2235 = vmatmul.mubr.f32.gmra.mrb[0].mxu0 %v692
  %v2236 = vpop.f32.mrb[0].mxu0
  %v2237 = vadd.f32 0.0, %v2236
  %v2238 = vpop.f32.mrb[0].mxu0
  %2239 = vmatprep.mubr.f32.mxu0 0.0
  %2240 = vmatmul.mubr.f32.gmra.mrb[0].mxu0 %v695
  %v2241 = vpop.f32.mrb[0].mxu0
  %v2242 = vadd.f32 0.0, %v2241
  %v2243 = vpop.f32.mrb[0].mxu0
  %2244 = vmatprep.mubr.f32.mxu0 0.0
  %2245 = vmatmul.mubr.f32.gmra.mrb[0].mxu0 %v698
  %v2246 = vpop.f32.mrb[0].mxu0
  %v2247 = vadd.f32 0.0, %v2246
  %v2248 = vpop.f32.mrb[0].mxu0
  %2249 = vmatprep.mubr.f32.mxu0 0.0
  %2250 = vmatmul.mubr.f32.gmra.mrb[0].mxu0 %v701
  %v2251 = vpop.f32.mrb[0].mxu0
  %v2252 = vadd.f32 0.0, %v2251
  %v2253 = vpop.f32.mrb[0].mxu0
  %2254 = vmatprep.mubr.f32.mxu0 0.0
  %2255 = vmatmul.mubr.f32.gmra.mrb[0].mxu0 %v704
  %v2256 = vpop.f32.mrb[0].mxu0
  %v2257 = vadd.f32 0.0, %v2256
  %v2258 = vpop.f32.mrb[0].mxu0
  %2259 = vmatprep.mubr.f32.mxu0 0.0
  %2260 = vmatmul.mubr.f32.gmra.mrb[0].mxu0 %v707
  %v2261 = vpop.f32.mrb[0].mxu0
  %v2262 = vadd.f32 0.0, %v2261
  %v2263 = vpop.f32.mrb[0].mxu0
  %2264 = vmatprep.mubr.f32.mxu0 0.0
  %2265 = vmatmul.mubr.f32.gmra.mrb[0].mxu0 %v710
  %v2266 = vpop.f32.mrb[0].mxu0
  %v2267 = vadd.f32 0.0, %v2266
  %v2268 = vpop.f32.mrb[0].mxu0
  %2269 = vmatprep.mubr.f32.mxu0 0.0
  %2270 = vmatmul.mubr.f32.gmra.mrb[0].mxu0 %v713
  %v2271 = vpop.f32.mrb[0].mxu0
  %v2272 = vadd.f32 0.0, %v2271
  %v2273 = vpop.f32.mrb[0].mxu0
  %2274 = vmatprep.mubr.f32.mxu0 0.0
  %2275 = vmatmul.mubr.f32.gmra.mrb[0].mxu0 %v716
  %v2276 = vpop.f32.mrb[0].mxu0
  %v2277 = vadd.f32 0.0, %v2276
  %v2278 = vpop.f32.mrb[0].mxu0
  %2279 = vmatprep.mubr.f32.mxu0 0.0
  %2280 = vmatmul.mubr.f32.gmra.mrb[0].mxu0 %v719
  %v2281 = vpop.f32.mrb[0].mxu0
  %v2282 = vadd.f32 0.0, %v2281
  %v2283 = vpop.f32.mrb[0].mxu0
  %2284 = vmatprep.mubr.f32.mxu0 0.0
  %2285 = vmatmul.mubr.f32.gmra.mrb[0].mxu0 %v722
  %v2286 = vpop.f32.mrb[0].mxu0
  %v2287 = vadd.f32 0.0, %v2286
  %v2288 = vpop.f32.mrb[0].mxu0
  %2289 = vmatprep.mubr.f32.mxu0 0.0
  %2290 = vmatmul.mubr.f32.gmra.mrb[0].mxu0 %v725
  %v2291 = vpop.f32.mrb[0].mxu0
  %v2292 = vadd.f32 0.0, %v2291
  %v2293 = vpop.f32.mrb[0].mxu0
  %2294 = vmatprep.mubr.f32.mxu0 0.0
  %2295 = vmatmul.mubr.f32.gmra.mrb[0].mxu0 %v728
  %v2296 = vpop.f32.mrb[0].mxu0
  %v2297 = vadd.f32 0.0, %v2296
  %v2298 = vpop.f32.mrb[0].mxu0
  %2299 = vmatprep.mubr.f32.mxu0 0.0
  %2300 = vmatmul.mubr.f32.gmra.mrb[0].mxu0 %v731
  %v2301 = vpop.f32.mrb[0].mxu0
  %v2302 = vadd.f32 0.0, %v2301
  %v2303 = vpop.f32.mrb[0].mxu0
  %2304 = vmatprep.mubr.f32.mxu0 0.0
  %2305 = vmatmul.mubr.f32.gmra.mrb[0].mxu0 %v734
  %v2306 = vpop.f32.mrb[0].mxu0
  %v2307 = vadd.f32 0.0, %v2306
  %v2308 = vpop.f32.mrb[0].mxu0
  %2309 = vmatprep.mubr.f32.mxu0 0.0
  %2310 = vmatmul.mubr.f32.gmra.mrb[0].mxu0 %v737
  %v2311 = vpop.f32.mrb[0].mxu0
  %v2312 = vadd.f32 0.0, %v2311
  %v2313 = vpop.f32.mrb[0].mxu0
  %2314 = vmatprep.mubr.f32.mxu0 0.0
  %2315 = vmatmul.mubr.f32.gmra.mrb[0].mxu0 %v740
  %v2316 = vpop.f32.mrb[0].mxu0
  %v2317 = vadd.f32 0.0, %v2316
  %v2318 = vpop.f32.mrb[0].mxu0
  %2319 = vmatprep.mubr.f32.mxu0 0.0
  %2320 = vmatmul.mubr.f32.gmra.mrb[0].mxu0 %v743
  %v2321 = vpop.f32.mrb[0].mxu0
  %v2322 = vadd.f32 0.0, %v2321
  %v2323 = vpop.f32.mrb[0].mxu0
  %2324 = vmatprep.mubr.f32.mxu0 0.0
  %2325 = vmatmul.mubr.f32.gmra.mrb[0].mxu0 %v746
  %v2326 = vpop.f32.mrb[0].mxu0
  %v2327 = vadd.f32 0.0, %v2326
  %v2328 = vpop.f32.mrb[0].mxu0
  %2329 = vmatprep.mubr.f32.mxu0 0.0
  %2330 = vmatmul.mubr.f32.gmra.mrb[0].mxu0 %v749
  %v2331 = vpop.f32.mrb[0].mxu0
  %v2332 = vadd.f32 0.0, %v2331
  %v2333 = vpop.f32.mrb[0].mxu0
  %2334 = vmatprep.mubr.f32.mxu0 0.0
  %2335 = vmatmul.mubr.f32.gmra.mrb[0].mxu0 %v752
  %v2336 = vpop.f32.mrb[0].mxu0
  %v2337 = vadd.f32 0.0, %v2336
  %v2338 = vpop.f32.mrb[0].mxu0
  %2339 = vmatprep.mubr.f32.mxu0 0.0
  %2340 = vmatmul.mubr.f32.gmra.mrb[0].mxu0 %v755
  %v2341 = vpop.f32.mrb[0].mxu0
  %v2342 = vadd.f32 0.0, %v2341
  %v2343 = vpop.f32.mrb[0].mxu0
  %2344 = vmatprep.mubr.f32.mxu0 0.0
  %2345 = vmatmul.mubr.f32.gmra.mrb[0].mxu0 %v758
  %v2346 = vpop.f32.mrb[0].mxu0
  %v2347 = vadd.f32 0.0, %v2346
  %v2348 = vpop.f32.mrb[0].mxu0
  %2349 = vmatprep.mubr.f32.mxu0 0.0
  %2350 = vmatmul.mubr.f32.gmra.mrb[0].mxu0 %v761
  %v2351 = vpop.f32.mrb[0].mxu0
  %v2352 = vadd.f32 0.0, %v2351
  %v2353 = vpop.f32.mrb[0].mxu0
  %2354 = vmatprep.mubr.f32.mxu0 0.0
  %2355 = vmatmul.mubr.f32.gmra.mrb[0].mxu0 %v764
  %v2356 = vpop.f32.mrb[0].mxu0
  %v2357 = vadd.f32 0.0, %v2356
  %v2358 = vpop.f32.mrb[0].mxu0
  %2359 = vmatprep.mubr.f32.mxu0 0.0
  %2360 = vmatmul.mubr.f32.gmra.mrb[0].mxu0 %v767
  %v2361 = vpop.f32.mrb[0].mxu0
  %v2362 = vadd.f32 0.0, %v2361
  %v2363 = vpop.f32.mrb[0].mxu0
  %2364 = vmatprep.mubr.f32.mxu0 0.0
  %2365 = vmatmul.mubr.f32.gmra.mrb[0].mxu0 %v770
  %v2366 = vpop.f32.mrb[0].mxu0
  %v2367 = vadd.f32 0.0, %v2366
  %v2368 = vpop.f32.mrb[0].mxu0
  %2369 = vmatprep.mubr.f32.mxu0 0.0
  %2370 = vmatmul.mubr.f32.gmra.mrb[0].mxu0 %v773
  %v2371 = vpop.f32.mrb[0].mxu0
  %v2372 = vadd.f32 0.0, %v2371
  %v2373 = vpop.f32.mrb[0].mxu0
  %2374 = vmatprep.mubr.f32.mxu0 0.0
  %2375 = vmatmul.mubr.f32.gmra.mrb[0].mxu0 %v776
  %v2376 = vpop.f32.mrb[0].mxu0
  %v2377 = vadd.f32 0.0, %v2376
  %v2378 = vpop.f32.mrb[0].mxu0
  %2379 = vmatprep.mubr.f32.mxu0 0.0
  %2380 = vmatmul.mubr.f32.gmra.mrb[0].mxu0 %v779
  %v2381 = vpop.f32.mrb[0].mxu0
  %v2382 = vadd.f32 0.0, %v2381
  %v2383 = vpop.f32.mrb[0].mxu0
  %2384 = vmatprep.mubr.f32.mxu0 0.0
  %2385 = vmatmul.mubr.f32.gmra.mrb[0].mxu0 %v782
  %v2386 = vpop.f32.mrb[0].mxu0
  %v2387 = vadd.f32 0.0, %v2386
  %v2388 = vpop.f32.mrb[0].mxu0
  %2389 = vmatprep.mubr.f32.mxu0 0.0
  %2390 = vmatmul.mubr.f32.gmra.mrb[0].mxu0 %v785
  %v2391 = vpop.f32.mrb[0].mxu0
  %v2392 = vadd.f32 0.0, %v2391
  %v2393 = vpop.f32.mrb[0].mxu0
  %2394 = vmatprep.mubr.f32.mxu0 0.0
  %2395 = vmatmul.mubr.f32.gmra.mrb[0].mxu0 %v788
  %v2396 = vpop.f32.mrb[0].mxu0
  %v2397 = vadd.f32 0.0, %v2396
  %v2398 = vpop.f32.mrb[0].mxu0
  %2399 = vmatprep.mubr.f32.mxu0 0.0
  %2400 = vmatmul.mubr.f32.gmra.mrb[0].mxu0 %v791
  %v2401 = vpop.f32.mrb[0].mxu0
  %v2402 = vadd.f32 0.0, %v2401
  %v2403 = vpop.f32.mrb[0].mxu0
  %2404 = vmatprep.mubr.f32.mxu0 0.0
  %2405 = vmatmul.mubr.f32.gmra.mrb[0].mxu0 %v794
  %v2406 = vpop.f32.mrb[0].mxu0
  %v2407 = vadd.f32 0.0, %v2406
  %v2408 = vpop.f32.mrb[0].mxu0
  %2409 = vmatprep.mubr.f32.mxu0 0.0
  %2410 = vmatmul.mubr.f32.gmra.mrb[0].mxu0 %v797
  %v2411 = vpop.f32.mrb[0].mxu0
  %v2412 = vadd.f32 0.0, %v2411
  %v2413 = vpop.f32.mrb[0].mxu0
  %2414 = vmatprep.mubr.f32.mxu0 0.0
  %2415 = vmatmul.mubr.f32.gmra.mrb[0].mxu0 %v800
  %v2416 = vpop.f32.mrb[0].mxu0
  %v2417 = vadd.f32 0.0, %v2416
  %v2418 = vpop.f32.mrb[0].mxu0
  %2419 = vmatprep.mubr.f32.mxu0 0.0
  %2420 = vmatmul.mubr.f32.gmra.mrb[0].mxu0 %v803
  %v2421 = vpop.f32.mrb[0].mxu0
  %v2422 = vadd.f32 0.0, %v2421
  %v2423 = vpop.f32.mrb[0].mxu0
  %2424 = vmatprep.mubr.f32.mxu0 0.0
  %2425 = vmatmul.mubr.f32.gmra.mrb[0].mxu0 %v806
  %v2426 = vpop.f32.mrb[0].mxu0
  %v2427 = vadd.f32 0.0, %v2426
  %v2428 = vpop.f32.mrb[0].mxu0
  %2429 = vmatprep.mubr.f32.mxu0 0.0
  %2430 = vmatmul.mubr.f32.gmra.mrb[0].mxu0 %v809
  %v2431 = vpop.f32.mrb[0].mxu0
  %v2432 = vadd.f32 0.0, %v2431
  %v2433 = vpop.f32.mrb[0].mxu0
  %2434 = vmatprep.mubr.f32.mxu0 0.0
  %2435 = vmatmul.mubr.f32.gmra.mrb[0].mxu0 %v812
  %v2436 = vpop.f32.mrb[0].mxu0
  %v2437 = vadd.f32 0.0, %v2436
  %v2438 = vpop.f32.mrb[0].mxu0
  %2439 = vmatprep.mubr.f32.mxu0 0.0
  %2440 = vmatmul.mubr.f32.gmra.mrb[0].mxu0 %v815
  %v2441 = vpop.f32.mrb[0].mxu0
  %v2442 = vadd.f32 0.0, %v2441
  %v2443 = vpop.f32.mrb[0].mxu0
  %2444 = vmatprep.mubr.f32.mxu0 0.0
  %2445 = vmatmul.mubr.f32.gmra.mrb[0].mxu0 %v818
  %v2446 = vpop.f32.mrb[0].mxu0
  %v2447 = vadd.f32 0.0, %v2446
  %v2448 = vpop.f32.mrb[0].mxu0
  %2449 = vmatprep.mubr.f32.mxu0 0.0
  %2450 = vmatmul.mubr.f32.gmra.mrb[0].mxu0 %v821
  %v2451 = vpop.f32.mrb[0].mxu0
  %v2452 = vadd.f32 0.0, %v2451
  %v2453 = vpop.f32.mrb[0].mxu0
  %2454 = vmatprep.mubr.f32.mxu0 0.0
  %2455 = vmatmul.mubr.f32.gmra.mrb[0].mxu0 %v824
  %v2456 = vpop.f32.mrb[0].mxu0
  %v2457 = vadd.f32 0.0, %v2456
  %v2458 = vpop.f32.mrb[0].mxu0
  %2459 = vmatprep.mubr.f32.mxu0 0.0
  %2460 = vmatmul.mubr.f32.gmra.mrb[0].mxu0 %v827
  %v2461 = vpop.f32.mrb[0].mxu0
  %v2462 = vadd.f32 0.0, %v2461
  %v2463 = vpop.f32.mrb[0].mxu0
  %2464 = vmatprep.mubr.f32.mxu0 0.0
  %2465 = vmatmul.mubr.f32.gmra.mrb[0].mxu0 %v830
  %v2466 = vpop.f32.mrb[0].mxu0
  %v2467 = vadd.f32 0.0, %v2466
  %v2468 = vpop.f32.mrb[0].mxu0
  %2469 = vmatprep.mubr.f32.mxu0 0.0
  %2470 = vmatmul.mubr.f32.gmra.mrb[0].mxu0 %v833
  %v2471 = vpop.f32.mrb[0].mxu0
  %v2472 = vadd.f32 0.0, %v2471
  %v2473 = vpop.f32.mrb[0].mxu0
  %2474 = vmatprep.mubr.f32.mxu0 0.0
  %2475 = vmatmul.mubr.f32.gmra.mrb[0].mxu0 %v836
  %v2476 = vpop.f32.mrb[0].mxu0
  %v2477 = vadd.f32 0.0, %v2476
  %v2478 = vpop.f32.mrb[0].mxu0
  %2479 = vmatprep.mubr.f32.mxu0 0.0
  %2480 = vmatmul.mubr.f32.gmra.mrb[0].mxu0 %v839
  %v2481 = vpop.f32.mrb[0].mxu0
  %v2482 = vadd.f32 0.0, %v2481
  %v2483 = vpop.f32.mrb[0].mxu0
  %2484 = vmatprep.mubr.f32.mxu0 0.0
  %2485 = vmatmul.mubr.f32.gmra.mrb[0].mxu0 %v842
  %v2486 = vpop.f32.mrb[0].mxu0
  %v2487 = vadd.f32 0.0, %v2486
  %v2488 = vpop.f32.mrb[0].mxu0
  %2489 = vmatprep.mubr.f32.mxu0 0.0
  %2490 = vmatmul.mubr.f32.gmra.mrb[0].mxu0 %v845
  %v2491 = vpop.f32.mrb[0].mxu0
  %v2492 = vadd.f32 0.0, %v2491
  %v2493 = vpop.f32.mrb[0].mxu0
  %2494 = vmatprep.mubr.f32.mxu0 0.0
  %2495 = vmatmul.mubr.f32.gmra.mrb[0].mxu0 %v848
  %v2496 = vpop.f32.mrb[0].mxu0
  %v2497 = vadd.f32 0.0, %v2496
  %v2498 = vpop.f32.mrb[0].mxu0
  %2499 = vmatprep.mubr.f32.mxu0 0.0
  %2500 = vmatmul.mubr.f32.gmra.mrb[0].mxu0 %v851
  %v2501 = vpop.f32.mrb[0].mxu0
  %v2502 = vadd.f32 0.0, %v2501
  %v2503 = vpop.f32.mrb[0].mxu0
  %2504 = vmatprep.mubr.f32.mxu0 0.0
  %2505 = vmatmul.mubr.f32.gmra.mrb[0].mxu0 %v854
  %v2506 = vpop.f32.mrb[0].mxu0
  %v2507 = vadd.f32 0.0, %v2506
  %v2508 = vpop.f32.mrb[0].mxu0
  %2509 = vmatprep.mubr.f32.mxu0 0.0
  %2510 = vmatmul.mubr.f32.gmra.mrb[0].mxu0 %v857
  %v2511 = vpop.f32.mrb[0].mxu0
  %v2512 = vadd.f32 0.0, %v2511
  %v2513 = vpop.f32.mrb[0].mxu0
  %2514 = vmatprep.mubr.f32.mxu0 0.0
  %2515 = vmatmul.mubr.f32.gmra.mrb[0].mxu0 %v860
  %v2516 = vpop.f32.mrb[0].mxu0
  %v2517 = vadd.f32 0.0, %v2516
  %v2518 = vpop.f32.mrb[0].mxu0
  %2519 = vmatprep.mubr.f32.mxu0 0.0
  %2520 = vmatmul.mubr.f32.gmra.mrb[0].mxu0 %v863
  %v2521 = vpop.f32.mrb[0].mxu0
  %v2522 = vadd.f32 0.0, %v2521
  %v2523 = vpop.f32.mrb[0].mxu0
  %2524 = vmatprep.mubr.f32.mxu0 0.0
  %2525 = vmatmul.mubr.f32.gmra.mrb[0].mxu0 %v866
  %v2526 = vpop.f32.mrb[0].mxu0
  %v2527 = vadd.f32 0.0, %v2526
  %v2528 = vpop.f32.mrb[0].mxu0
  %2529 = vmatprep.mubr.f32.mxu0 0.0
  %2530 = vmatmul.mubr.f32.gmra.mrb[0].mxu0 %v869
  %v2531 = vpop.f32.mrb[0].mxu0
  %v2532 = vadd.f32 0.0, %v2531
  %v2533 = vpop.f32.mrb[0].mxu0
  %2534 = vmatprep.mubr.f32.mxu0 0.0
  %2535 = vmatmul.mubr.f32.gmra.mrb[0].mxu0 %v872
  %v2536 = vpop.f32.mrb[0].mxu0
  %v2537 = vadd.f32 0.0, %v2536
  %v2538 = vpop.f32.mrb[0].mxu0
  %2539 = vmatprep.mubr.f32.mxu0 0.0
  %2540 = vmatmul.mubr.f32.gmra.mrb[0].mxu0 %v875
  %v2541 = vpop.f32.mrb[0].mxu0
  %v2542 = vadd.f32 0.0, %v2541
  %v2543 = vpop.f32.mrb[0].mxu0
  %2544 = vmatprep.mubr.f32.mxu0 0.0
  %2545 = vmatmul.mubr.f32.gmra.mrb[0].mxu0 %v878
  %v2546 = vpop.f32.mrb[0].mxu0
  %v2547 = vadd.f32 0.0, %v2546
  %v2548 = vpop.f32.mrb[0].mxu0
  %2549 = vmatprep.mubr.f32.mxu0 0.0
  %2550 = vmatmul.mubr.f32.gmra.mrb[0].mxu0 %v881
  %v2551 = vpop.f32.mrb[0].mxu0
  %v2552 = vadd.f32 0.0, %v2551
  %v2553 = vpop.f32.mrb[0].mxu0
  %2554 = vmatprep.mubr.f32.mxu0 0.0
  %2555 = vmatmul.mubr.f32.gmra.mrb[0].mxu0 %v884
  %v2556 = vpop.f32.mrb[0].mxu0
  %v2557 = vadd.f32 0.0, %v2556
  %v2558 = vpop.f32.mrb[0].mxu0
  %2559 = vmatprep.mubr.f32.mxu0 0.0
  %2560 = vmatmul.mubr.f32.gmra.mrb[0].mxu0 %v887
  %v2561 = vpop.f32.mrb[0].mxu0
  %v2562 = vadd.f32 0.0, %v2561
  %v2563 = vpop.f32.mrb[0].mxu0
  %2564 = vmatprep.mubr.f32.mxu0 0.0
  %2565 = vmatmul.mubr.f32.gmra.mrb[0].mxu0 %v890
  %v2566 = vpop.f32.mrb[0].mxu0
  %v2567 = vadd.f32 0.0, %v2566
  %v2568 = vpop.f32.mrb[0].mxu0
  %2569 = vmatprep.mubr.f32.mxu0 0.0
  %2570 = vmatmul.mubr.f32.gmra.mrb[0].mxu0 %v893
  %v2571 = vpop.f32.mrb[0].mxu0
  %v2572 = vadd.f32 0.0, %v2571
  %v2573 = vpop.f32.mrb[0].mxu0
  %2574 = vmatprep.mubr.f32.mxu0 0.0
  %2575 = vmatmul.mubr.f32.gmra.mrb[0].mxu0 %v896
  %v2576 = vpop.f32.mrb[0].mxu0
  %v2577 = vadd.f32 0.0, %v2576
  %v2578 = vpop.f32.mrb[0].mxu0
  %2579 = vmatprep.mubr.f32.mxu0 0.0
  %2580 = vmatmul.mubr.f32.gmra.mrb[0].mxu0 %v899
  %v2581 = vpop.f32.mrb[0].mxu0
  %v2582 = vadd.f32 0.0, %v2581
  %v2583 = vpop.f32.mrb[0].mxu0
  %2584 = vmatprep.mubr.f32.mxu0 0.0
  %2585 = vmatmul.mubr.f32.gmra.mrb[0].mxu0 %v902
  %v2586 = vpop.f32.mrb[0].mxu0
  %v2587 = vadd.f32 0.0, %v2586
  %v2588 = vpop.f32.mrb[0].mxu0
  %2589 = vmatprep.mubr.f32.mxu0 0.0
  %2590 = vmatmul.mubr.f32.gmra.mrb[0].mxu0 %v905
  %v2591 = vpop.f32.mrb[0].mxu0
  %v2592 = vadd.f32 0.0, %v2591
  %v2593 = vpop.f32.mrb[0].mxu0
  %2594 = vmatprep.mubr.f32.mxu0 0.0
  %2595 = vmatmul.mubr.f32.gmra.mrb[0].mxu0 %v908
  %v2596 = vpop.f32.mrb[0].mxu0
  %v2597 = vadd.f32 0.0, %v2596
  %v2598 = vpop.f32.mrb[0].mxu0
  %2599 = vmatprep.mubr.f32.mxu0 0.0
  %2600 = vmatmul.mubr.f32.gmra.mrb[0].mxu0 %v911
  %v2601 = vpop.f32.mrb[0].mxu0
  %v2602 = vadd.f32 0.0, %v2601
  %v2603 = vpop.f32.mrb[0].mxu0
  %2604 = vmatprep.mubr.f32.mxu0 0.0
  %2605 = vmatmul.mubr.f32.gmra.mrb[0].mxu0 %v914
  %v2606 = vpop.f32.mrb[0].mxu0
  %v2607 = vadd.f32 0.0, %v2606
  %v2608 = vpop.f32.mrb[0].mxu0
  %2609 = vmatprep.mubr.f32.mxu0 0.0
  %2610 = vmatmul.mubr.f32.gmra.mrb[0].mxu0 %v917
  %v2611 = vpop.f32.mrb[0].mxu0
  %v2612 = vadd.f32 0.0, %v2611
  %v2613 = vpop.f32.mrb[0].mxu0
  %2614 = vmatprep.mubr.f32.mxu0 0.0
  %2615 = vmatmul.mubr.f32.gmra.mrb[0].mxu0 %v920
  %v2616 = vpop.f32.mrb[0].mxu0
  %v2617 = vadd.f32 0.0, %v2616
  %v2618 = vpop.f32.mrb[0].mxu0
  %2619 = vmatprep.mubr.f32.mxu0 0.0
  %2620 = vmatmul.mubr.f32.gmra.mrb[0].mxu0 %v923
  %v2621 = vpop.f32.mrb[0].mxu0
  %v2622 = vadd.f32 0.0, %v2621
  %v2623 = vpop.f32.mrb[0].mxu0
  %2624 = vmatprep.mubr.f32.mxu0 0.0
  %2625 = vmatmul.mubr.f32.gmra.mrb[0].mxu0 %v926
  %v2626 = vpop.f32.mrb[0].mxu0
  %v2627 = vadd.f32 0.0, %v2626
  %v2628 = vpop.f32.mrb[0].mxu0
  %2629 = vmatprep.mubr.f32.mxu0 0.0
  %2630 = vmatmul.mubr.f32.gmra.mrb[0].mxu0 %v929
  %v2631 = vpop.f32.mrb[0].mxu0
  %v2632 = vadd.f32 0.0, %v2631
  %v2633 = vpop.f32.mrb[0].mxu0
  %2634 = vmatprep.mubr.f32.mxu0 0.0
  %2635 = vmatmul.mubr.f32.gmra.mrb[0].mxu0 %v932
  %v2636 = vpop.f32.mrb[0].mxu0
  %v2637 = vadd.f32 0.0, %v2636
  %v2638 = vpop.f32.mrb[0].mxu0
  %2639 = vmatprep.mubr.f32.mxu0 0.0
  %2640 = vmatmul.mubr.f32.gmra.mrb[0].mxu0 %v935
  %v2641 = vpop.f32.mrb[0].mxu0
  %v2642 = vadd.f32 0.0, %v2641
  %v2643 = vpop.f32.mrb[0].mxu0
  %2644 = vmatprep.mubr.f32.mxu0 0.0
  %2645 = vmatmul.mubr.f32.gmra.mrb[0].mxu0 %v938
  %v2646 = vpop.f32.mrb[0].mxu0
  %v2647 = vadd.f32 0.0, %v2646
  %v2648 = vpop.f32.mrb[0].mxu0
  %2649 = vmatprep.mubr.f32.mxu0 0.0
  %2650 = vmatmul.mubr.f32.gmra.mrb[0].mxu0 %v941
  %v2651 = vpop.f32.mrb[0].mxu0
  %v2652 = vadd.f32 0.0, %v2651
  %v2653 = vpop.f32.mrb[0].mxu0
  %2654 = vmatprep.mubr.f32.mxu0 0.0
  %2655 = vmatmul.mubr.f32.gmra.mrb[0].mxu0 %v944
  %v2656 = vpop.f32.mrb[0].mxu0
  %v2657 = vadd.f32 0.0, %v2656
  %v2658 = vpop.f32.mrb[0].mxu0
  %2659 = vmatprep.mubr.f32.mxu0 0.0
  %2660 = vmatmul.mubr.f32.gmra.mrb[0].mxu0 %v947
  %v2661 = vpop.f32.mrb[0].mxu0
  %v2662 = vadd.f32 0.0, %v2661
  %v2663 = vpop.f32.mrb[0].mxu0
  %2664 = vmatprep.mubr.f32.mxu0 0.0
  %2665 = vmatmul.mubr.f32.gmra.mrb[0].mxu0 %v950
  %v2666 = vpop.f32.mrb[0].mxu0
  %v2667 = vadd.f32 0.0, %v2666
  %v2668 = vpop.f32.mrb[0].mxu0
  %2669 = vmatprep.mubr.f32.mxu0 0.0
  %2670 = vmatmul.mubr.f32.gmra.mrb[0].mxu0 %v953
  %v2671 = vpop.f32.mrb[0].mxu0
  %v2672 = vadd.f32 0.0, %v2671
  %v2673 = vpop.f32.mrb[0].mxu0
  %2674 = vmatprep.mubr.f32.mxu0 0.0
  %2675 = vmatmul.mubr.f32.gmra.mrb[0].mxu0 %v956
  %v2676 = vpop.f32.mrb[0].mxu0
  %v2677 = vadd.f32 0.0, %v2676
  %v2678 = vpop.f32.mrb[0].mxu0
  %2679 = vmatprep.mubr.f32.mxu0 0.0
  %2680 = vmatmul.mubr.f32.gmra.mrb[0].mxu0 %v959
  %v2681 = vpop.f32.mrb[0].mxu0
  %v2682 = vadd.f32 0.0, %v2681
  %v2683 = vpop.f32.mrb[0].mxu0
  %2684 = vmatprep.mubr.f32.mxu0 0.0
  %2685 = vmatmul.mubr.f32.gmra.mrb[0].mxu0 %v962
  %v2686 = vpop.f32.mrb[0].mxu0
  %v2687 = vadd.f32 0.0, %v2686
  %v2688 = vpop.f32.mrb[0].mxu0
  %2689 = vmatprep.mubr.f32.mxu0 0.0
  %2690 = vmatmul.mubr.f32.gmra.mrb[0].mxu0 %v965
  %v2691 = vpop.f32.mrb[0].mxu0
  %v2692 = vadd.f32 0.0, %v2691
  %v2693 = vpop.f32.mrb[0].mxu0
  %2694 = vmatprep.mubr.f32.mxu0 0.0
  %2695 = vmatmul.mubr.f32.gmra.mrb[0].mxu0 %v968
  %v2696 = vpop.f32.mrb[0].mxu0
  %v2697 = vadd.f32 0.0, %v2696
  %v2698 = vpop.f32.mrb[0].mxu0
  %2699 = vmatprep.mubr.f32.mxu0 0.0
  %2700 = vmatmul.mubr.f32.gmra.mrb[0].mxu0 %v971
  %v2701 = vpop.f32.mrb[0].mxu0
  %v2702 = vadd.f32 0.0, %v2701
  %v2703 = vpop.f32.mrb[0].mxu0
  %2704 = vmatprep.mubr.f32.mxu0 0.0
  %2705 = vmatmul.mubr.f32.gmra.mrb[0].mxu0 %v974
  %v2706 = vpop.f32.mrb[0].mxu0
  %v2707 = vadd.f32 0.0, %v2706
  %v2708 = vpop.f32.mrb[0].mxu0
  %2709 = vmatprep.mubr.f32.mxu0 0.0
  %2710 = vmatmul.mubr.f32.gmra.mrb[0].mxu0 %v977
  %v2711 = vpop.f32.mrb[0].mxu0
  %v2712 = vadd.f32 0.0, %v2711
  %v2713 = vpop.f32.mrb[0].mxu0
  %2714 = vmatprep.mubr.f32.mxu0 0.0
  %2715 = vmatmul.mubr.f32.gmra.mrb[0].mxu0 %v980
  %v2716 = vpop.f32.mrb[0].mxu0
  %v2717 = vadd.f32 0.0, %v2716
  %v2718 = vpop.f32.mrb[0].mxu0
  %2719 = vmatprep.mubr.f32.mxu0 0.0
  %2720 = vmatmul.mubr.f32.gmra.mrb[0].mxu0 %v983
  %v2721 = vpop.f32.mrb[0].mxu0
  %v2722 = vadd.f32 0.0, %v2721
  %v2723 = vpop.f32.mrb[0].mxu0
  %2724 = vmatprep.mubr.f32.mxu0 0.0
  %2725 = vmatmul.mubr.f32.gmra.mrb[0].mxu0 %v986
  %v2726 = vpop.f32.mrb[0].mxu0
  %v2727 = vadd.f32 0.0, %v2726
  %v2728 = vpop.f32.mrb[0].mxu0
  %2729 = vmatprep.mubr.f32.mxu0 0.0
  %2730 = vmatmul.mubr.f32.gmra.mrb[0].mxu0 %v989
  %v2731 = vpop.f32.mrb[0].mxu0
  %v2732 = vadd.f32 0.0, %v2731
  %v2733 = vpop.f32.mrb[0].mxu0
  %2734 = vmatprep.mubr.f32.mxu0 0.0
  %2735 = vmatmul.mubr.f32.gmra.mrb[0].mxu0 %v992
  %v2736 = vpop.f32.mrb[0].mxu0
  %v2737 = vadd.f32 0.0, %v2736
  %v2738 = vpop.f32.mrb[0].mxu0
  %2739 = vmatprep.mubr.f32.mxu0 0.0
  %2740 = vmatmul.mubr.f32.gmra.mrb[0].mxu0 %v995
  %v2741 = vpop.f32.mrb[0].mxu0
  %v2742 = vadd.f32 0.0, %v2741
  %v2743 = vpop.f32.mrb[0].mxu0
  %2744 = vmatprep.mubr.f32.mxu0 0.0
  %2745 = vmatmul.mubr.f32.gmra.mrb[0].mxu0 %v998
  %v2746 = vpop.f32.mrb[0].mxu0
  %v2747 = vadd.f32 0.0, %v2746
  %v2748 = vpop.f32.mrb[0].mxu0
  %2749 = vmatprep.mubr.f32.mxu0 0.0
  %2750 = vmatmul.mubr.f32.gmra.mrb[0].mxu0 %v1001
  %v2751 = vpop.f32.mrb[0].mxu0
  %v2752 = vadd.f32 0.0, %v2751
  %v2753 = vpop.f32.mrb[0].mxu0
  %2754 = vmatprep.mubr.f32.mxu0 0.0
  %2755 = vmatmul.mubr.f32.gmra.mrb[0].mxu0 %v1004
  %v2756 = vpop.f32.mrb[0].mxu0
  %v2757 = vadd.f32 0.0, %v2756
  %v2758 = vpop.f32.mrb[0].mxu0
  %2759 = vmatprep.mubr.f32.mxu0 0.0
  %2760 = vmatmul.mubr.f32.gmra.mrb[0].mxu0 %v1007
  %v2761 = vpop.f32.mrb[0].mxu0
  %v2762 = vadd.f32 0.0, %v2761
  %v2763 = vpop.f32.mrb[0].mxu0
  %2764 = vmatprep.mubr.f32.mxu0 0.0
  %2765 = vmatmul.mubr.f32.gmra.mrb[0].mxu0 %v1010
  %v2766 = vpop.f32.mrb[0].mxu0
  %v2767 = vadd.f32 0.0, %v2766
  %v2768 = vpop.f32.mrb[0].mxu0
  %2769 = vmatprep.mubr.f32.mxu0 0.0
  %2770 = vmatmul.mubr.f32.gmra.mrb[0].mxu0 %v1013
  %v2771 = vpop.f32.mrb[0].mxu0
  %v2772 = vadd.f32 0.0, %v2771
  %v2773 = vpop.f32.mrb[0].mxu0
  %2774 = vmatprep.mubr.f32.mxu0 0.0
  %2775 = vmatmul.mubr.f32.gmra.mrb[0].mxu0 %v1016
  %v2776 = vpop.f32.mrb[0].mxu0
  %v2777 = vadd.f32 0.0, %v2776
  %v2778 = vpop.f32.mrb[0].mxu0
  %2779 = vmatprep.mubr.f32.mxu0 0.0
  %2780 = vmatmul.mubr.f32.gmra.mrb[0].mxu0 %v1019
  %v2781 = vpop.f32.mrb[0].mxu0
  %v2782 = vadd.f32 0.0, %v2781
  %v2783 = vpop.f32.mrb[0].mxu0
  %2784 = vmatprep.mubr.f32.mxu0 0.0
  %2785 = vmatmul.mubr.f32.gmra.mrb[0].mxu0 %v1022
  %v2786 = vpop.f32.mrb[0].mxu0
  %v2787 = vadd.f32 0.0, %v2786
  %v2788 = vpop.f32.mrb[0].mxu0
  %2789 = vmatprep.mubr.f32.mxu0 0.0
  %2790 = vmatmul.mubr.f32.gmra.mrb[0].mxu0 %v1025
  %v2791 = vpop.f32.mrb[0].mxu0
  %v2792 = vadd.f32 0.0, %v2791
  %v2793 = vpop.f32.mrb[0].mxu0
  %2794 = vmatprep.mubr.f32.mxu0 0.0
  %2795 = vmatmul.mubr.f32.gmra.mrb[0].mxu0 %v1028
  %v2796 = vpop.f32.mrb[0].mxu0
  %v2797 = vadd.f32 0.0, %v2796
  %v2798 = vpop.f32.mrb[0].mxu0
  %2799 = vmatprep.mubr.f32.mxu0 0.0
  %2800 = vmatmul.mubr.f32.gmra.mrb[0].mxu0 %v1031
  %v2801 = vpop.f32.mrb[0].mxu0
  %v2802 = vadd.f32 0.0, %v2801
  %v2803 = vpop.f32.mrb[0].mxu0
  %2804 = vmatprep.mubr.f32.mxu0 0.0
  %2805 = vmatmul.mubr.f32.gmra.mrb[0].mxu0 %v1034
  %v2806 = vpop.f32.mrb[0].mxu0
  %v2807 = vadd.f32 0.0, %v2806
  %v2808 = vpop.f32.mrb[0].mxu0
  %2809 = vmatprep.mubr.f32.mxu0 0.0
  %2810 = vmatmul.mubr.f32.gmra.mrb[0].mxu0 %v1037
  %v2811 = vpop.f32.mrb[0].mxu0
  %v2812 = vadd.f32 0.0, %v2811
  %v2813 = vpop.f32.mrb[0].mxu0
  %2814 = vmatprep.mubr.f32.mxu0 0.0
  %2815 = vmatmul.mubr.f32.gmra.mrb[0].mxu0 %v1040
  %v2816 = vpop.f32.mrb[0].mxu0
  %v2817 = vadd.f32 0.0, %v2816
  %v2818 = vpop.f32.mrb[0].mxu0
  %2819 = vmatprep.mubr.f32.mxu0 0.0
  %2820 = vmatmul.mubr.f32.gmra.mrb[0].mxu0 %v1043
  %v2821 = vpop.f32.mrb[0].mxu0
  %v2822 = vadd.f32 0.0, %v2821
  %v2823 = vpop.f32.mrb[0].mxu0
  %2824 = vmatprep.mubr.f32.mxu0 0.0
  %2825 = vmatmul.mubr.f32.gmra.mrb[0].mxu0 %v1046
  %v2826 = vpop.f32.mrb[0].mxu0
  %v2827 = vadd.f32 0.0, %v2826
  %v2828 = vpop.f32.mrb[0].mxu0
  %2829 = vmatprep.mubr.f32.mxu0 0.0
  %2830 = vmatmul.mubr.f32.gmra.mrb[0].mxu0 %v1049
  %v2831 = vpop.f32.mrb[0].mxu0
  %v2832 = vadd.f32 0.0, %v2831
  %v2833 = vpop.f32.mrb[0].mxu0
  %2834 = vmatprep.mubr.f32.mxu0 0.0
  %2835 = vmatmul.mubr.f32.gmra.mrb[0].mxu0 %v1052
  %v2836 = vpop.f32.mrb[0].mxu0
  %v2837 = vadd.f32 0.0, %v2836
  %v2838 = vpop.f32.mrb[0].mxu0
  %2839 = vmatprep.mubr.f32.mxu0 0.0
  %2840 = vmatmul.mubr.f32.gmra.mrb[0].mxu0 %v1055
  %v2841 = vpop.f32.mrb[0].mxu0
  %v2842 = vadd.f32 0.0, %v2841
  %v2843 = vpop.f32.mrb[0].mxu0
  %2844 = vmatprep.mubr.f32.mxu0 0.0
  %2845 = vmatmul.mubr.f32.gmra.mrb[0].mxu0 %v1058
  %v2846 = vpop.f32.mrb[0].mxu0
  %v2847 = vadd.f32 0.0, %v2846
  %v2848 = vpop.f32.mrb[0].mxu0
  %2849 = vmatprep.mubr.f32.mxu0 0.0
  %2850 = vmatmul.mubr.f32.gmra.mrb[0].mxu0 %v1061
  %v2851 = vpop.f32.mrb[0].mxu0
  %v2852 = vadd.f32 0.0, %v2851
  %v2853 = vpop.f32.mrb[0].mxu0
  %2854 = vmatprep.mubr.f32.mxu0 0.0
  %2855 = vmatmul.mubr.f32.gmra.mrb[0].mxu0 %v1064
  %v2856 = vpop.f32.mrb[0].mxu0
  %v2857 = vadd.f32 0.0, %v2856
  %v2858 = vpop.f32.mrb[0].mxu0
  %2859 = vmatprep.mubr.f32.mxu0 0.0
  %2860 = vmatmul.mubr.f32.gmra.mrb[0].mxu0 %v1067
  %v2861 = vpop.f32.mrb[0].mxu0
  %v2862 = vadd.f32 0.0, %v2861
  %v2863 = vpop.f32.mrb[0].mxu0
  %2864 = vmatprep.mubr.f32.mxu0 0.0
  %2865 = vmatmul.mubr.f32.gmra.mrb[0].mxu0 %v1070
  %v2866 = vpop.f32.mrb[0].mxu0
  %v2867 = vadd.f32 0.0, %v2866
  %v2868 = vpop.f32.mrb[0].mxu0
  %2869 = vmatprep.mubr.f32.mxu0 0.0
  %2870 = vmatmul.mubr.f32.gmra.mrb[0].mxu0 %v1073
  %v2871 = vpop.f32.mrb[0].mxu0
  %v2872 = vadd.f32 0.0, %v2871
  %v2873 = vpop.f32.mrb[0].mxu0
  %2874 = vmatprep.mubr.f32.mxu0 0.0
  %2875 = vmatmul.mubr.f32.gmra.mrb[0].mxu0 %v1076
  %v2876 = vpop.f32.mrb[0].mxu0
  %v2877 = vadd.f32 0.0, %v2876
  %v2878 = vpop.f32.mrb[0].mxu0
  %2879 = vmatprep.mubr.f32.mxu0 0.0
  %2880 = vmatmul.mubr.f32.gmra.mrb[0].mxu0 %v1079
  %v2881 = vpop.f32.mrb[0].mxu0
  %v2882 = vadd.f32 0.0, %v2881
  %v2883 = vpop.f32.mrb[0].mxu0
  %2884 = vmatprep.mubr.f32.mxu0 0.0
  %2885 = vmatmul.mubr.f32.gmra.mrb[0].mxu0 %v1082
  %v2886 = vpop.f32.mrb[0].mxu0
  %v2887 = vadd.f32 0.0, %v2886
  %v2888 = vpop.f32.mrb[0].mxu0
  %2889 = vmatprep.mubr.f32.mxu0 0.0
  %2890 = vmatmul.mubr.f32.gmra.mrb[0].mxu0 %v1085
  %v2891 = vpop.f32.mrb[0].mxu0
  %v2892 = vadd.f32 0.0, %v2891
  %v2893 = vpop.f32.mrb[0].mxu0
  %2894 = vmatprep.mubr.f32.mxu0 0.0
  %2895 = vmatmul.mubr.f32.gmra.mrb[0].mxu0 %v1088
  %v2896 = vpop.f32.mrb[0].mxu0
  %v2897 = vadd.f32 0.0, %v2896
  %v2898 = vpop.f32.mrb[0].mxu0
  %2899 = vmatprep.mubr.f32.mxu0 0.0
  %2900 = vmatmul.mubr.f32.gmra.mrb[0].mxu0 %v1091
  %v2901 = vpop.f32.mrb[0].mxu0
  %v2902 = vadd.f32 0.0, %v2901
  %v2903 = vpop.f32.mrb[0].mxu0
  %2904 = vmatprep.mubr.f32.mxu0 0.0
  %2905 = vmatmul.mubr.f32.gmra.mrb[0].mxu0 %v1094
  %v2906 = vpop.f32.mrb[0].mxu0
  %v2907 = vadd.f32 0.0, %v2906
  %v2908 = vpop.f32.mrb[0].mxu0
  %2909 = vmatprep.mubr.f32.mxu0 0.0
  %2910 = vmatmul.mubr.f32.gmra.mrb[0].mxu0 %v1097
  %v2911 = vpop.f32.mrb[0].mxu0
  %v2912 = vadd.f32 0.0, %v2911
  %v2913 = vpop.f32.mrb[0].mxu0
  %2914 = vmatprep.mubr.f32.mxu0 0.0
  %2915 = vmatmul.mubr.f32.gmra.mrb[0].mxu0 %v1100
  %v2916 = vpop.f32.mrb[0].mxu0
  %v2917 = vadd.f32 0.0, %v2916
  %v2918 = vpop.f32.mrb[0].mxu0
  %2919 = vmatprep.mubr.f32.mxu0 0.0
  %2920 = vmatmul.mubr.f32.gmra.mrb[0].mxu0 %v1103
  %v2921 = vpop.f32.mrb[0].mxu0
  %v2922 = vadd.f32 0.0, %v2921
  %v2923 = vpop.f32.mrb[0].mxu0
  %2924 = vmatprep.mubr.f32.mxu0 0.0
  %2925 = vmatmul.mubr.f32.gmra.mrb[0].mxu0 %v1106
  %v2926 = vpop.f32.mrb[0].mxu0
  %v2927 = vadd.f32 0.0, %v2926
  %v2928 = vpop.f32.mrb[0].mxu0
  %2929 = vmatprep.mubr.f32.mxu0 0.0
  %2930 = vmatmul.mubr.f32.gmra.mrb[0].mxu0 %v1109
  %v2931 = vpop.f32.mrb[0].mxu0
  %v2932 = vadd.f32 0.0, %v2931
  %v2933 = vpop.f32.mrb[0].mxu0
  %2934 = vmatprep.mubr.f32.mxu0 0.0
  %2935 = vmatmul.mubr.f32.gmra.mrb[0].mxu0 %v1112
  %v2936 = vpop.f32.mrb[0].mxu0
  %v2937 = vadd.f32 0.0, %v2936
  %v2938 = vpop.f32.mrb[0].mxu0
  %2939 = vmatprep.mubr.f32.mxu0 0.0
  %2940 = vmatmul.mubr.f32.gmra.mrb[0].mxu0 %v1115
  %v2941 = vpop.f32.mrb[0].mxu0
  %v2942 = vadd.f32 0.0, %v2941
  %v2943 = vpop.f32.mrb[0].mxu0
  %2944 = vmatprep.mubr.f32.mxu0 0.0
  %2945 = vmatmul.mubr.f32.gmra.mrb[0].mxu0 %v1118
  %v2946 = vpop.f32.mrb[0].mxu0
  %v2947 = vadd.f32 0.0, %v2946
  %v2948 = vpop.f32.mrb[0].mxu0
  %2949 = vmatprep.mubr.f32.mxu0 0.0
  %2950 = vmatmul.mubr.f32.gmra.mrb[0].mxu0 %v1121
  %v2951 = vpop.f32.mrb[0].mxu0
  %v2952 = vadd.f32 0.0, %v2951
  %v2953 = vpop.f32.mrb[0].mxu0
  %2954 = vmatprep.mubr.f32.mxu0 0.0
  %2955 = vmatmul.mubr.f32.gmra.mrb[0].mxu0 %v1124
  %v2956 = vpop.f32.mrb[0].mxu0
  %v2957 = vadd.f32 0.0, %v2956
  %v2958 = vpop.f32.mrb[0].mxu0
  %2959 = vmatprep.mubr.f32.mxu0 0.0
  %2960 = vmatmul.mubr.f32.gmra.mrb[0].mxu0 %v1127
  %v2961 = vpop.f32.mrb[0].mxu0
  %v2962 = vadd.f32 0.0, %v2961
  %v2963 = vpop.f32.mrb[0].mxu0
  %2964 = vmatprep.mubr.f32.mxu0 0.0
  %2965 = vmatmul.mubr.f32.gmra.mrb[0].mxu0 %v1130
  %v2966 = vpop.f32.mrb[0].mxu0
  %v2967 = vadd.f32 0.0, %v2966
  %v2968 = vpop.f32.mrb[0].mxu0
  %2969 = vmatprep.mubr.f32.mxu0 0.0
  %2970 = vmatmul.mubr.f32.gmra.mrb[0].mxu0 %v1133
  %v2971 = vpop.f32.mrb[0].mxu0
  %v2972 = vadd.f32 0.0, %v2971
  %v2973 = vpop.f32.mrb[0].mxu0
  %2974 = vmatprep.mubr.f32.mxu0 0.0
  %2975 = vmatmul.mubr.f32.gmra.mrb[0].mxu0 %v1136
  %v2976 = vpop.f32.mrb[0].mxu0
  %v2977 = vadd.f32 0.0, %v2976
  %v2978 = vpop.f32.mrb[0].mxu0
  %2979 = vmatprep.mubr.f32.mxu0 0.0
  %2980 = vmatmul.mubr.f32.gmra.mrb[0].mxu0 %v1139
  %v2981 = vpop.f32.mrb[0].mxu0
  %v2982 = vadd.f32 0.0, %v2981
  %v2983 = vpop.f32.mrb[0].mxu0
  %2984 = vmatprep.mubr.f32.mxu0 0.0
  %2985 = vmatmul.mubr.f32.gmra.mrb[0].mxu0 %v1142
  %v2986 = vpop.f32.mrb[0].mxu0
  %v2987 = vadd.f32 0.0, %v2986
  %v2988 = vpop.f32.mrb[0].mxu0
  %2989 = vmatprep.mubr.f32.mxu0 0.0
  %2990 = vmatmul.mubr.f32.gmra.mrb[0].mxu0 %v1145
  %v2991 = vpop.f32.mrb[0].mxu0
  %v2992 = vadd.f32 0.0, %v2991
  %v2993 = vpop.f32.mrb[0].mxu0
  %2994 = vmatprep.mubr.f32.mxu0 0.0
  %2995 = vmatmul.mubr.f32.gmra.mrb[0].mxu0 %v1148
  %v2996 = vpop.f32.mrb[0].mxu0
  %v2997 = vadd.f32 0.0, %v2996
  %v2998 = vpop.f32.mrb[0].mxu0
  %2999 = vmatprep.mubr.f32.mxu0 0.0
  %3000 = vmatmul.mubr.f32.gmra.mrb[0].mxu0 %v1151
  %v3001 = vpop.f32.mrb[0].mxu0
  %v3002 = vadd.f32 0.0, %v3001
  %v3003 = vpop.f32.mrb[0].mxu0
  %3004 = vmatprep.mubr.f32.mxu0 0.0
  %3005 = vmatmul.mubr.f32.gmra.mrb[0].mxu0 %v1154
  %v3006 = vpop.f32.mrb[0].mxu0
  %v3007 = vadd.f32 0.0, %v3006
  %v3008 = vpop.f32.mrb[0].mxu0
  %3009 = vmatprep.mubr.f32.mxu0 0.0
  %3010 = vmatmul.mubr.f32.gmra.mrb[0].mxu0 %v1157
  %v3011 = vpop.f32.mrb[0].mxu0
  %v3012 = vadd.f32 0.0, %v3011
  %v3013 = vpop.f32.mrb[0].mxu0
  %3014 = vmatprep.mubr.f32.mxu0 0.0
  %3015 = vmatmul.mubr.f32.gmra.mrb[0].mxu0 %v1160
  %v3016 = vpop.f32.mrb[0].mxu0
  %v3017 = vadd.f32 0.0, %v3016
  %v3018 = vpop.f32.mrb[0].mxu0
  %3019 = vmatprep.mubr.f32.mxu0 0.0
  %3020 = vmatmul.mubr.f32.gmra.mrb[0].mxu0 %v1163
  %v3021 = vpop.f32.mrb[0].mxu0
  %v3022 = vadd.f32 0.0, %v3021
  %v3023 = vpop.f32.mrb[0].mxu0
  %3024 = vmatprep.mubr.f32.mxu0 0.0
  %3025 = vmatmul.mubr.f32.gmra.mrb[0].mxu0 %v1166
  %v3026 = vpop.f32.mrb[0].mxu0
  %v3027 = vadd.f32 0.0, %v3026
  %v3028 = vpop.f32.mrb[0].mxu0
  %3029 = vmatprep.mubr.f32.mxu0 0.0
  %3030 = vmatmul.mubr.f32.gmra.mrb[0].mxu0 %v1169
  %v3031 = vpop.f32.mrb[0].mxu0
  %v3032 = vadd.f32 0.0, %v3031
  %v3033 = vpop.f32.mrb[0].mxu0
  %3034 = vmatprep.mubr.f32.mxu0 0.0
  %3035 = vmatmul.mubr.f32.gmra.mrb[0].mxu0 %v1172
  %v3036 = vpop.f32.mrb[0].mxu0
  %v3037 = vadd.f32 0.0, %v3036
  %v3038 = vpop.f32.mrb[0].mxu0
  %3039 = vmatprep.mubr.f32.mxu0 0.0
  %3040 = vmatmul.mubr.f32.gmra.mrb[0].mxu0 %v1175
  %v3041 = vpop.f32.mrb[0].mxu0
  %v3042 = vadd.f32 0.0, %v3041
  %v3043 = vpop.f32.mrb[0].mxu0
  %3044 = vmatprep.mubr.f32.mxu0 0.0
  %3045 = vmatmul.mubr.f32.gmra.mrb[0].mxu0 %v1178
  %v3046 = vpop.f32.mrb[0].mxu0
  %v3047 = vadd.f32 0.0, %v3046
  %v3048 = vpop.f32.mrb[0].mxu0
  %3049 = vmatprep.mubr.f32.mxu0 0.0
  %3050 = vmatmul.mubr.f32.gmra.mrb[0].mxu0 %v1181
  %v3051 = vpop.f32.mrb[0].mxu0
  %v3052 = vadd.f32 0.0, %v3051
  %v3053 = vpop.f32.mrb[0].mxu0
  %3054 = vmatprep.mubr.f32.mxu0 0.0
  %3055 = vmatmul.mubr.f32.gmra.mrb[0].mxu0 %v1184
  %v3056 = vpop.f32.mrb[0].mxu0
  %v3057 = vadd.f32 0.0, %v3056
  %v3058 = vpop.f32.mrb[0].mxu0
  %3059 = vmatprep.mubr.f32.mxu0 0.0
  %3060 = vmatmul.mubr.f32.gmra.mrb[0].mxu0 %v1187
  %v3061 = vpop.f32.mrb[0].mxu0
  %v3062 = vadd.f32 0.0, %v3061
  %v3063 = vpop.f32.mrb[0].mxu0
  %3064 = vmatprep.mubr.f32.mxu0 0.0
  %3065 = vmatmul.mubr.f32.gmra.mrb[0].mxu0 %v1190
  %v3066 = vpop.f32.mrb[0].mxu0
  %v3067 = vadd.f32 0.0, %v3066
  %v3068 = vpop.f32.mrb[0].mxu0
  %3069 = vmatprep.mubr.f32.mxu0 0.0
  %3070 = vmatmul.mubr.f32.gmra.mrb[0].mxu0 %v1193
  %v3071 = vpop.f32.mrb[0].mxu0
  %v3072 = vadd.f32 0.0, %v3071
  %v3073 = vpop.f32.mrb[0].mxu0
  %3074 = vmatprep.mubr.f32.mxu0 0.0
  %3075 = vmatmul.mubr.f32.gmra.mrb[0].mxu0 %v1196
  %v3076 = vpop.f32.mrb[0].mxu0
  %v3077 = vadd.f32 0.0, %v3076
  %v3078 = vpop.f32.mrb[0].mxu0
  %3079 = vmatprep.mubr.f32.mxu0 0.0
  %3080 = vmatmul.mubr.f32.gmra.mrb[0].mxu0 %v1199
  %v3081 = vpop.f32.mrb[0].mxu0
  %v3082 = vadd.f32 0.0, %v3081
  %v3083 = vpop.f32.mrb[0].mxu0
  %3084 = vmatprep.mubr.f32.mxu0 0.0
  %3085 = vmatmul.mubr.f32.gmra.mrb[0].mxu0 %v1202
  %v3086 = vpop.f32.mrb[0].mxu0
  %v3087 = vadd.f32 0.0, %v3086
  %v3088 = vpop.f32.mrb[0].mxu0
  %3089 = vmatprep.mubr.f32.mxu0 0.0
  %3090 = vmatmul.mubr.f32.gmra.mrb[0].mxu0 %v1205
  %v3091 = vpop.f32.mrb[0].mxu0
  %v3092 = vadd.f32 0.0, %v3091
  %v3093 = vpop.f32.mrb[0].mxu0
  %3094 = vmatprep.mubr.f32.mxu0 0.0
  %3095 = vmatmul.mubr.f32.gmra.mrb[0].mxu0 %v1208
  %v3096 = vpop.f32.mrb[0].mxu0
  %v3097 = vadd.f32 0.0, %v3096
  %v3098 = vpop.f32.mrb[0].mxu0
  %3099 = vmatprep.mubr.f32.mxu0 0.0
  %3100 = vmatmul.mubr.f32.gmra.mrb[0].mxu0 %v1211
  %v3101 = vpop.f32.mrb[0].mxu0
  %v3102 = vadd.f32 0.0, %v3101
  %v3103 = vpop.f32.mrb[0].mxu0
  %3104 = vmatprep.mubr.f32.mxu0 0.0
  %3105 = vmatmul.mubr.f32.gmra.mrb[0].mxu0 %v1214
  %v3106 = vpop.f32.mrb[0].mxu0
  %v3107 = vadd.f32 0.0, %v3106
  %v3108 = vpop.f32.mrb[0].mxu0
  %3109 = vmatprep.mubr.f32.mxu0 0.0
  %3110 = vmatmul.mubr.f32.gmra.mrb[0].mxu0 %v1217
  %v3111 = vpop.f32.mrb[0].mxu0
  %v3112 = vadd.f32 0.0, %v3111
  %v3113 = vpop.f32.mrb[0].mxu0
  %3114 = vmatprep.mubr.f32.mxu0 0.0
  %3115 = vmatmul.mubr.f32.gmra.mrb[0].mxu0 %v1220
  %v3116 = vpop.f32.mrb[0].mxu0
  %v3117 = vadd.f32 0.0, %v3116
  %v3118 = vpop.f32.mrb[0].mxu0
  %3119 = vmatprep.mubr.f32.mxu0 0.0
  %3120 = vmatmul.mubr.f32.gmra.mrb[0].mxu0 %v1223
  %v3121 = vpop.f32.mrb[0].mxu0
  %v3122 = vadd.f32 0.0, %v3121
  %v3123 = vpop.f32.mrb[0].mxu0
  %3124 = vmatprep.mubr.f32.mxu0 0.0
  %3125 = vmatmul.mubr.f32.gmra.mrb[0].mxu0 %v1226
  %v3126 = vpop.f32.mrb[0].mxu0
  %v3127 = vadd.f32 0.0, %v3126
  %v3128 = vpop.f32.mrb[0].mxu0
  %3129 = vmatprep.mubr.f32.mxu0 0.0
  %3130 = vmatmul.mubr.f32.gmra.mrb[0].mxu0 %v1229
  %v3131 = vpop.f32.mrb[0].mxu0
  %v3132 = vadd.f32 0.0, %v3131
  %v3133 = vpop.f32.mrb[0].mxu0
  %3134 = vmatprep.mubr.f32.mxu0 0.0
  %3135 = vmatmul.mubr.f32.gmra.mrb[0].mxu0 %v1232
  %v3136 = vpop.f32.mrb[0].mxu0
  %v3137 = vadd.f32 0.0, %v3136
  %v3138 = vpop.f32.mrb[0].mxu0
  %3139 = vmatprep.mubr.f32.mxu0 0.0
  %3140 = vmatmul.mubr.f32.gmra.mrb[0].mxu0 %v1235
  %v3141 = vpop.f32.mrb[0].mxu0
  %v3142 = vadd.f32 0.0, %v3141
  %v3143 = vpop.f32.mrb[0].mxu0
  %3144 = vmatprep.mubr.f32.mxu0 0.0
  %3145 = vmatmul.mubr.f32.gmra.mrb[0].mxu0 %v1238
  %v3146 = vpop.f32.mrb[0].mxu0
  %v3147 = vadd.f32 0.0, %v3146
  %v3148 = vpop.f32.mrb[0].mxu0
  %3149 = vmatprep.mubr.f32.mxu0 0.0
  %3150 = vmatmul.mubr.f32.gmra.mrb[0].mxu0 %v1241
  %v3151 = vpop.f32.mrb[0].mxu0
  %v3152 = vadd.f32 0.0, %v3151
  %v3153 = vpop.f32.mrb[0].mxu0
  %3154 = vmatprep.mubr.f32.mxu0 0.0
  %3155 = vmatmul.mubr.f32.gmra.mrb[0].mxu0 %v1244
  %v3156 = vpop.f32.mrb[0].mxu0
  %v3157 = vadd.f32 0.0, %v3156
  %v3158 = vpop.f32.mrb[0].mxu0
  %3159 = vmatprep.mubr.f32.mxu0 0.0
  %3160 = vmatmul.mubr.f32.gmra.mrb[0].mxu0 %v1247
  %v3161 = vpop.f32.mrb[0].mxu0
  %v3162 = vadd.f32 0.0, %v3161
  %v3163 = vpop.f32.mrb[0].mxu0
  %3164 = vmatprep.mubr.f32.mxu0 0.0
  %3165 = vmatmul.mubr.f32.gmra.mrb[0].mxu0 %v1250
  %v3166 = vpop.f32.mrb[0].mxu0
  %v3167 = vadd.f32 0.0, %v3166
  %v3168 = vpop.f32.mrb[0].mxu0
  %3169 = vmatprep.mubr.f32.mxu0 0.0
  %3170 = vmatmul.mubr.f32.gmra.mrb[0].mxu0 %v1253
  %v3171 = vpop.f32.mrb[0].mxu0
  %v3172 = vadd.f32 0.0, %v3171
  %v3173 = vpop.f32.mrb[0].mxu0
  %3174 = vmatprep.mubr.f32.mxu0 0.0
  %3175 = vmatmul.mubr.f32.gmra.mrb[0].mxu0 %v1256
  %v3176 = vpop.f32.mrb[0].mxu0
  %v3177 = vadd.f32 0.0, %v3176
  %v3178 = vpop.f32.mrb[0].mxu0
  %3179 = vmatprep.mubr.f32.mxu0 0.0
  %3180 = vmatmul.mubr.f32.gmra.mrb[0].mxu0 %v1259
  %v3181 = vpop.f32.mrb[0].mxu0
  %v3182 = vadd.f32 0.0, %v3181
  %v3183 = vpop.f32.mrb[0].mxu0
  %3184 = vmatprep.mubr.f32.mxu0 0.0
  %3185 = vmatmul.mubr.f32.gmra.mrb[0].mxu0 %v1262
  %v3186 = vpop.f32.mrb[0].mxu0
  %v3187 = vadd.f32 0.0, %v3186
  %v3188 = vpop.f32.mrb[0].mxu0
  %3189 = vmatprep.mubr.f32.mxu0 0.0
  %3190 = vmatmul.mubr.f32.gmra.mrb[0].mxu0 %v1265
  %v3191 = vpop.f32.mrb[0].mxu0
  %v3192 = vadd.f32 0.0, %v3191
  %v3193 = vpop.f32.mrb[0].mxu0
  %3194 = vmatprep.mubr.f32.mxu0 0.0
  %3195 = vmatmul.mubr.f32.gmra.mrb[0].mxu0 %v1268
  %v3196 = vpop.f32.mrb[0].mxu0
  %v3197 = vadd.f32 0.0, %v3196
  %v3198 = vpop.f32.mrb[0].mxu0
  %3199 = vmatprep.mubr.f32.mxu0 0.0
  %3200 = vmatmul.mubr.f32.gmra.mrb[0].mxu0 %v1271
  %v3201 = vpop.f32.mrb[0].mxu0
  %v3202 = vadd.f32 0.0, %v3201
  %v3203 = vpop.f32.mrb[0].mxu0
  %3204 = vmatprep.mubr.f32.mxu0 0.0
  %3205 = vmatmul.mubr.f32.gmra.mrb[0].mxu0 %v1274
  %v3206 = vpop.f32.mrb[0].mxu0
  %v3207 = vadd.f32 0.0, %v3206
  %v3208 = vpop.f32.mrb[0].mxu0
  %3209 = vmatprep.mubr.f32.mxu0 0.0
  %3210 = vmatmul.mubr.f32.gmra.mrb[0].mxu0 %v1277
  %v3211 = vpop.f32.mrb[0].mxu0
  %v3212 = vadd.f32 0.0, %v3211
  %v3213 = vpop.f32.mrb[0].mxu0
  %3214 = vmatprep.mubr.f32.mxu0 0.0
  %3215 = vmatmul.mubr.f32.gmra.mrb[0].mxu0 %v1280
  %v3216 = vpop.f32.mrb[0].mxu0
  %v3217 = vadd.f32 0.0, %v3216
  %v3218 = vpop.f32.mrb[0].mxu0
  %3219 = vmatprep.mubr.f32.mxu0 0.0
  %3220 = vmatmul.mubr.f32.gmra.mrb[0].mxu0 %v1283
  %v3221 = vpop.f32.mrb[0].mxu0
  %v3222 = vadd.f32 0.0, %v3221
  %v3223 = vpop.f32.mrb[0].mxu0
  %3224 = vmatprep.mubr.f32.mxu0 0.0
  %3225 = vmatmul.mubr.f32.gmra.mrb[0].mxu0 %v1286
  %v3226 = vpop.f32.mrb[0].mxu0
  %v3227 = vadd.f32 0.0, %v3226
  %v3228 = vpop.f32.mrb[0].mxu0
  %3229 = vmatprep.mubr.f32.mxu0 0.0
  %3230 = vmatmul.mubr.f32.gmra.mrb[0].mxu0 %v1289
  %v3231 = vpop.f32.mrb[0].mxu0
  %v3232 = vadd.f32 0.0, %v3231
  %v3233 = vpop.f32.mrb[0].mxu0
  %3234 = vmatprep.mubr.f32.mxu0 0.0
  %3235 = vmatmul.mubr.f32.gmra.mrb[0].mxu0 %v1292
  %v3236 = vpop.f32.mrb[0].mxu0
  %v3237 = vadd.f32 0.0, %v3236
  %v3238 = vpop.f32.mrb[0].mxu0
  %3239 = vmatprep.mubr.f32.mxu0 0.0
  %3240 = vmatmul.mubr.f32.gmra.mrb[0].mxu0 %v1295
  %v3241 = vpop.f32.mrb[0].mxu0
  %v3242 = vadd.f32 0.0, %v3241
  %v3243 = vpop.f32.mrb[0].mxu0
  %3244 = vmatprep.mubr.f32.mxu0 0.0
  %3245 = vmatmul.mubr.f32.gmra.mrb[0].mxu0 %v1298
  %v3246 = vpop.f32.mrb[0].mxu0
  %v3247 = vadd.f32 0.0, %v3246
  %v3248 = vpop.f32.mrb[0].mxu0
  %3249 = vmatprep.mubr.f32.mxu0 0.0
  %3250 = vmatmul.mubr.f32.gmra.mrb[0].mxu0 %v1301
  %v3251 = vpop.f32.mrb[0].mxu0
  %v3252 = vadd.f32 0.0, %v3251
  %v3253 = vpop.f32.mrb[0].mxu0
  %3254 = vmatprep.mubr.f32.mxu0 0.0
  %3255 = vmatmul.mubr.f32.gmra.mrb[0].mxu0 %v1304
  %v3256 = vpop.f32.mrb[0].mxu0
  %v3257 = vadd.f32 0.0, %v3256
  %v3258 = vpop.f32.mrb[0].mxu0
  %3259 = vmatprep.mubr.f32.mxu0 0.0
  %3260 = vmatmul.mubr.f32.gmra.mrb[0].mxu0 %v1307
  %v3261 = vpop.f32.mrb[0].mxu0
  %v3262 = vadd.f32 0.0, %v3261
  %v3263 = vpop.f32.mrb[0].mxu0
  %3264 = vmatprep.mubr.f32.mxu0 0.0
  %3265 = vmatmul.mubr.f32.gmra.mrb[0].mxu0 %v1310
  %v3266 = vpop.f32.mrb[0].mxu0
  %v3267 = vadd.f32 0.0, %v3266
  %v3268 = vpop.f32.mrb[0].mxu0
  %3269 = vmatprep.mubr.f32.mxu0 0.0
  %3270 = vmatmul.mubr.f32.gmra.mrb[0].mxu0 %v1313
  %v3271 = vpop.f32.mrb[0].mxu0
  %v3272 = vadd.f32 0.0, %v3271
  %v3273 = vpop.f32.mrb[0].mxu0
  %3274 = vmatprep.mubr.f32.mxu0 0.0
  %3275 = vmatmul.mubr.f32.gmra.mrb[0].mxu0 %v1316
  %v3276 = vpop.f32.mrb[0].mxu0
  %v3277 = vadd.f32 0.0, %v3276
  %v3278 = vpop.f32.mrb[0].mxu0
  %3279 = vmatprep.mubr.f32.mxu0 0.0
  %3280 = vmatmul.mubr.f32.gmra.mrb[0].mxu0 %v1319
  %v3281 = vpop.f32.mrb[0].mxu0
  %v3282 = vadd.f32 0.0, %v3281
  %v3283 = vpop.f32.mrb[0].mxu0
  %3284 = vmatprep.mubr.f32.mxu0 0.0
  %3285 = vmatmul.mubr.f32.gmra.mrb[0].mxu0 %v1322
  %v3286 = vpop.f32.mrb[0].mxu0
  %v3287 = vadd.f32 0.0, %v3286
  %v3288 = vpop.f32.mrb[0].mxu0
  %3289 = vmatprep.mubr.f32.mxu0 0.0
  %3290 = vmatmul.mubr.f32.gmra.mrb[0].mxu0 %v1325
  %v3291 = vpop.f32.mrb[0].mxu0
  %v3292 = vadd.f32 0.0, %v3291
  %v3293 = vpop.f32.mrb[0].mxu0
  %3294 = vmatprep.mubr.f32.mxu0 0.0
  %3295 = vmatmul.mubr.f32.gmra.mrb[0].mxu0 %v1328
  %v3296 = vpop.f32.mrb[0].mxu0
  %v3297 = vadd.f32 0.0, %v3296
  %v3298 = vpop.f32.mrb[0].mxu0
  %3299 = vmatprep.mubr.f32.mxu0 0.0
  %3300 = vmatmul.mubr.f32.gmra.mrb[0].mxu0 %v1331
  %v3301 = vpop.f32.mrb[0].mxu0
  %v3302 = vadd.f32 0.0, %v3301
  %v3303 = vpop.f32.mrb[0].mxu0
  %3304 = vmatprep.mubr.f32.mxu0 0.0
  %3305 = vmatmul.mubr.f32.gmra.mrb[0].mxu0 %v1334
  %v3306 = vpop.f32.mrb[0].mxu0
  %v3307 = vadd.f32 0.0, %v3306
  %v3308 = vpop.f32.mrb[0].mxu0
  %3309 = vmatprep.mubr.f32.mxu0 0.0
  %3310 = vmatmul.mubr.f32.gmra.mrb[0].mxu0 %v1337
  %v3311 = vpop.f32.mrb[0].mxu0
  %v3312 = vadd.f32 0.0, %v3311
  %v3313 = vpop.f32.mrb[0].mxu0
  %3314 = vmatprep.mubr.f32.mxu0 0.0
  %3315 = vmatmul.mubr.f32.gmra.mrb[0].mxu0 %v1340
  %v3316 = vpop.f32.mrb[0].mxu0
  %v3317 = vadd.f32 0.0, %v3316
  %v3318 = vpop.f32.mrb[0].mxu0
  %3319 = vmatprep.mubr.f32.mxu0 0.0
  %3320 = vmatmul.mubr.f32.gmra.mrb[0].mxu0 %v1343
  %v3321 = vpop.f32.mrb[0].mxu0
  %v3322 = vadd.f32 0.0, %v3321
  %v3323 = vpop.f32.mrb[0].mxu0
  %3324 = vmatprep.mubr.f32.mxu0 0.0
  %3325 = vmatmul.mubr.f32.gmra.mrb[0].mxu0 %v1346
  %v3326 = vpop.f32.mrb[0].mxu0
  %v3327 = vadd.f32 0.0, %v3326
  %v3328 = vpop.f32.mrb[0].mxu0
  %3329 = vmatprep.mubr.f32.mxu0 0.0
  %3330 = vmatmul.mubr.f32.gmra.mrb[0].mxu0 %v1349
  %v3331 = vpop.f32.mrb[0].mxu0
  %v3332 = vadd.f32 0.0, %v3331
  %v3333 = vpop.f32.mrb[0].mxu0
  %3334 = vmatprep.mubr.f32.mxu0 0.0
  %3335 = vmatmul.mubr.f32.gmra.mrb[0].mxu0 %v1352
  %v3336 = vpop.f32.mrb[0].mxu0
  %v3337 = vadd.f32 0.0, %v3336
  %v3338 = vpop.f32.mrb[0].mxu0
  %3339 = vmatprep.mubr.f32.mxu0 0.0
  %3340 = vmatmul.mubr.f32.gmra.mrb[0].mxu0 %v1355
  %v3341 = vpop.f32.mrb[0].mxu0
  %v3342 = vadd.f32 0.0, %v3341
  %v3343 = vpop.f32.mrb[0].mxu0
  %3344 = vmatprep.mubr.f32.mxu0 0.0
  %3345 = vmatmul.mubr.f32.gmra.mrb[0].mxu0 %v1358
  %v3346 = vpop.f32.mrb[0].mxu0
  %v3347 = vadd.f32 0.0, %v3346
  %v3348 = vpop.f32.mrb[0].mxu0
  %3349 = vmatprep.mubr.f32.mxu0 0.0
  %3350 = vmatmul.mubr.f32.gmra.mrb[0].mxu0 %v1361
  %v3351 = vpop.f32.mrb[0].mxu0
  %v3352 = vadd.f32 0.0, %v3351
  %v3353 = vpop.f32.mrb[0].mxu0
  %3354 = vmatprep.mubr.f32.mxu0 0.0
  %3355 = vmatmul.mubr.f32.gmra.mrb[0].mxu0 %v1364
  %v3356 = vpop.f32.mrb[0].mxu0
  %v3357 = vadd.f32 0.0, %v3356
  %v3358 = vpop.f32.mrb[0].mxu0
  %3359 = vmatprep.mubr.f32.mxu0 0.0
  %3360 = vmatmul.mubr.f32.gmra.mrb[0].mxu0 %v1367
  %v3361 = vpop.f32.mrb[0].mxu0
  %v3362 = vadd.f32 0.0, %v3361
  %v3363 = vpop.f32.mrb[0].mxu0
  %3364 = vmatprep.mubr.f32.mxu0 0.0
  %3365 = vmatmul.mubr.f32.gmra.mrb[0].mxu0 %v1370
  %v3366 = vpop.f32.mrb[0].mxu0
  %v3367 = vadd.f32 0.0, %v3366
  %v3368 = vpop.f32.mrb[0].mxu0
  %3369 = vmatprep.mubr.f32.mxu0 0.0
  %3370 = vmatmul.mubr.f32.gmra.mrb[0].mxu0 %v1373
  %v3371 = vpop.f32.mrb[0].mxu0
  %v3372 = vadd.f32 0.0, %v3371
  %v3373 = vpop.f32.mrb[0].mxu0
  %3374 = vmatprep.mubr.f32.mxu0 0.0
  %3375 = vmatmul.mubr.f32.gmra.mrb[0].mxu0 %v1376
  %v3376 = vpop.f32.mrb[0].mxu0
  %v3377 = vadd.f32 0.0, %v3376
  %v3378 = vpop.f32.mrb[0].mxu0
  %3379 = vmatprep.mubr.f32.mxu0 0.0
  %3380 = vmatmul.mubr.f32.gmra.mrb[0].mxu0 %v1379
  %v3381 = vpop.f32.mrb[0].mxu0
  %v3382 = vadd.f32 0.0, %v3381
  %v3383 = vpop.f32.mrb[0].mxu0
  %3384 = vmatprep.mubr.f32.mxu0 0.0
  %3385 = vmatmul.mubr.f32.gmra.mrb[0].mxu0 %v1382
  %v3386 = vpop.f32.mrb[0].mxu0
  %v3387 = vadd.f32 0.0, %v3386
  %v3388 = vpop.f32.mrb[0].mxu0
  %3389 = vmatprep.mubr.f32.mxu0 0.0
  %3390 = vmatmul.mubr.f32.gmra.mrb[0].mxu0 %v1385
  %v3391 = vpop.f32.mrb[0].mxu0
  %v3392 = vadd.f32 0.0, %v3391
  %v3393 = vpop.f32.mrb[0].mxu0
  %3394 = vmatprep.mubr.f32.mxu0 0.0
  %3395 = vmatmul.mubr.f32.gmra.mrb[0].mxu0 %v1388
  %v3396 = vpop.f32.mrb[0].mxu0
  %v3397 = vadd.f32 0.0, %v3396
  %v3398 = vpop.f32.mrb[0].mxu0
  %3399 = vmatprep.mubr.f32.mxu0 0.0
  %3400 = vmatmul.mubr.f32.gmra.mrb[0].mxu0 %v1391
  %v3401 = vpop.f32.mrb[0].mxu0
  %v3402 = vadd.f32 0.0, %v3401
  %v3403 = vpop.f32.mrb[0].mxu0
  %3404 = vmatprep.mubr.f32.mxu0 0.0
  %3405 = vmatmul.mubr.f32.gmra.mrb[0].mxu0 %v1394
  %v3406 = vpop.f32.mrb[0].mxu0
  %v3407 = vadd.f32 0.0, %v3406
  %v3408 = vpop.f32.mrb[0].mxu0
  %3409 = vmatprep.mubr.f32.mxu0 0.0
  %3410 = vmatmul.mubr.f32.gmra.mrb[0].mxu0 %v1397
  %v3411 = vpop.f32.mrb[0].mxu0
  %v3412 = vadd.f32 0.0, %v3411
  %v3413 = vpop.f32.mrb[0].mxu0
  %3414 = vmatprep.mubr.f32.mxu0 0.0
  %3415 = vmatmul.mubr.f32.gmra.mrb[0].mxu0 %v1400
  %v3416 = vpop.f32.mrb[0].mxu0
  %v3417 = vadd.f32 0.0, %v3416
  %v3418 = vpop.f32.mrb[0].mxu0
  %3419 = vmatprep.mubr.f32.mxu0 0.0
  %3420 = vmatmul.mubr.f32.gmra.mrb[0].mxu0 %v1403
  %v3421 = vpop.f32.mrb[0].mxu0
  %v3422 = vadd.f32 0.0, %v3421
  %v3423 = vpop.f32.mrb[0].mxu0
  %3424 = vmatprep.mubr.f32.mxu0 0.0
  %3425 = vmatmul.mubr.f32.gmra.mrb[0].mxu0 %v1406
  %v3426 = vpop.f32.mrb[0].mxu0
  %v3427 = vadd.f32 0.0, %v3426
  %v3428 = vpop.f32.mrb[0].mxu0
  %3429 = vmatprep.mubr.f32.mxu0 0.0
  %3430 = vmatmul.mubr.f32.gmra.mrb[0].mxu0 %v1409
  %v3431 = vpop.f32.mrb[0].mxu0
  %v3432 = vadd.f32 0.0, %v3431
  %v3433 = vpop.f32.mrb[0].mxu0
  %3434 = vmatprep.mubr.f32.mxu0 0.0
  %3435 = vmatmul.mubr.f32.gmra.mrb[0].mxu0 %v1412
  %v3436 = vpop.f32.mrb[0].mxu0
  %v3437 = vadd.f32 0.0, %v3436
  %v3438 = vpop.f32.mrb[0].mxu0
  %3439 = vmatprep.mubr.f32.mxu0 0.0
  %3440 = vmatmul.mubr.f32.gmra.mrb[0].mxu0 %v1415
  %v3441 = vpop.f32.mrb[0].mxu0
  %v3442 = vadd.f32 0.0, %v3441
  %v3443 = vpop.f32.mrb[0].mxu0
  %3444 = vmatprep.mubr.f32.mxu0 0.0
  %3445 = vmatmul.mubr.f32.gmra.mrb[0].mxu0 %v1418
  %v3446 = vpop.f32.mrb[0].mxu0
  %v3447 = vadd.f32 0.0, %v3446
  %v3448 = vpop.f32.mrb[0].mxu0
  %3449 = vmatprep.mubr.f32.mxu0 0.0
  %3450 = vmatmul.mubr.f32.gmra.mrb[0].mxu0 %v1421
  %v3451 = vpop.f32.mrb[0].mxu0
  %v3452 = vadd.f32 0.0, %v3451
  %v3453 = vpop.f32.mrb[0].mxu0
  %3454 = vmatprep.mubr.f32.mxu0 0.0
  %3455 = vmatmul.mubr.f32.gmra.mrb[0].mxu0 %v1424
  %v3456 = vpop.f32.mrb[0].mxu0
  %v3457 = vadd.f32 0.0, %v3456
  %v3458 = vpop.f32.mrb[0].mxu0
  %3459 = vmatprep.mubr.f32.mxu0 0.0
  %3460 = vmatmul.mubr.f32.gmra.mrb[0].mxu0 %v1427
  %v3461 = vpop.f32.mrb[0].mxu0
  %v3462 = vadd.f32 0.0, %v3461
  %v3463 = vpop.f32.mrb[0].mxu0
  %3464 = vmatprep.mubr.f32.mxu0 0.0
  %3465 = vmatmul.mubr.f32.gmra.mrb[0].mxu0 %v1430
  %v3466 = vpop.f32.mrb[0].mxu0
  %v3467 = vadd.f32 0.0, %v3466
  %v3468 = vpop.f32.mrb[0].mxu0
  %3469 = vmatprep.mubr.f32.mxu0 0.0
  %3470 = vmatmul.mubr.f32.gmra.mrb[0].mxu0 %v1433
  %v3471 = vpop.f32.mrb[0].mxu0
  %v3472 = vadd.f32 0.0, %v3471
  %v3473 = vpop.f32.mrb[0].mxu0
  %3474 = vmatprep.mubr.f32.mxu0 0.0
  %3475 = vmatmul.mubr.f32.gmra.mrb[0].mxu0 %v1436
  %v3476 = vpop.f32.mrb[0].mxu0
  %v3477 = vadd.f32 0.0, %v3476
  %v3478 = vpop.f32.mrb[0].mxu0
  %3479 = vmatprep.mubr.f32.mxu0 0.0
  %3480 = vmatmul.mubr.f32.gmra.mrb[0].mxu0 %v1439
  %v3481 = vpop.f32.mrb[0].mxu0
  %v3482 = vadd.f32 0.0, %v3481
  %v3483 = vpop.f32.mrb[0].mxu0
  %3484 = vmatprep.mubr.f32.mxu0 0.0
  %3485 = vmatmul.mubr.f32.gmra.mrb[0].mxu0 %v1442
  %v3486 = vpop.f32.mrb[0].mxu0
  %v3487 = vadd.f32 0.0, %v3486
  %v3488 = vpop.f32.mrb[0].mxu0
  %3489 = vmatprep.mubr.f32.mxu0 0.0
  %3490 = vmatmul.mubr.f32.gmra.mrb[0].mxu0 %v1445
  %v3491 = vpop.f32.mrb[0].mxu0
  %v3492 = vadd.f32 0.0, %v3491
  %v3493 = vpop.f32.mrb[0].mxu0
  %3494 = vmatprep.mubr.f32.mxu0 0.0
  %3495 = vmatmul.mubr.f32.gmra.mrb[0].mxu0 %v1448
  %v3496 = vpop.f32.mrb[0].mxu0
  %v3497 = vadd.f32 0.0, %v3496
  %v3498 = vpop.f32.mrb[0].mxu0
  %3499 = vmatprep.mubr.f32.mxu0 0.0
  %3500 = vmatmul.mubr.f32.gmra.mrb[0].mxu0 %v1451
  %v3501 = vpop.f32.mrb[0].mxu0
  %v3502 = vadd.f32 0.0, %v3501
  %v3503 = vpop.f32.mrb[0].mxu0
  %3504 = vmatprep.mubr.f32.mxu0 0.0
  %3505 = vmatmul.mubr.f32.gmra.mrb[0].mxu0 %v1454
  %v3506 = vpop.f32.mrb[0].mxu0
  %v3507 = vadd.f32 0.0, %v3506
  %v3508 = vpop.f32.mrb[0].mxu0
  %3509 = vmatprep.mubr.f32.mxu0 0.0
  %3510 = vmatmul.mubr.f32.gmra.mrb[0].mxu0 %v1457
  %v3511 = vpop.f32.mrb[0].mxu0
  %v3512 = vadd.f32 0.0, %v3511
  %v3513 = vpop.f32.mrb[0].mxu0
  %3514 = vmatprep.mubr.f32.mxu0 0.0
  %3515 = vmatmul.mubr.f32.gmra.mrb[0].mxu0 %v1460
  %v3516 = vpop.f32.mrb[0].mxu0
  %v3517 = vadd.f32 0.0, %v3516
  %v3518 = vpop.f32.mrb[0].mxu0
  %3519 = vmatprep.mubr.f32.mxu0 0.0
  %3520 = vmatmul.mubr.f32.gmra.mrb[0].mxu0 %v1463
  %v3521 = vpop.f32.mrb[0].mxu0
  %v3522 = vadd.f32 0.0, %v3521
  %v3523 = vpop.f32.mrb[0].mxu0
  %3524 = vmatprep.mubr.f32.mxu0 0.0
  %3525 = vmatmul.mubr.f32.gmra.mrb[0].mxu0 %v1466
  %v3526 = vpop.f32.mrb[0].mxu0
  %v3527 = vadd.f32 0.0, %v3526
  %v3528 = vpop.f32.mrb[0].mxu0
  %3529 = vmatprep.mubr.f32.mxu0 0.0
  %3530 = vmatmul.mubr.f32.gmra.mrb[0].mxu0 %v1469
  %v3531 = vpop.f32.mrb[0].mxu0
  %v3532 = vadd.f32 0.0, %v3531
  %v3533 = vpop.f32.mrb[0].mxu0
  %3534 = vmatprep.mubr.f32.mxu0 0.0
  %3535 = vmatmul.mubr.f32.gmra.mrb[0].mxu0 %v1472
  %v3536 = vpop.f32.mrb[0].mxu0
  %v3537 = vadd.f32 0.0, %v3536
  %v3538 = vpop.f32.mrb[0].mxu0
  %3539 = vmatprep.mubr.f32.mxu0 0.0
  %3540 = vmatmul.mubr.f32.gmra.mrb[0].mxu0 %v1475
  %v3541 = vpop.f32.mrb[0].mxu0
  %v3542 = vadd.f32 0.0, %v3541
  %v3543 = vpop.f32.mrb[0].mxu0
  %3544 = vmatprep.mubr.f32.mxu0 0.0
  %3545 = vmatmul.mubr.f32.gmra.mrb[0].mxu0 %v1478
  %v3546 = vpop.f32.mrb[0].mxu0
  %v3547 = vadd.f32 0.0, %v3546
  %v3548 = vpop.f32.mrb[0].mxu0
  %3549 = vmatprep.mubr.f32.mxu0 0.0
  %3550 = vmatmul.mubr.f32.gmra.mrb[0].mxu0 %v1481
  %v3551 = vpop.f32.mrb[0].mxu0
  %v3552 = vadd.f32 0.0, %v3551
  %v3553 = vpop.f32.mrb[0].mxu0
  %3554 = vmatprep.mubr.f32.mxu0 0.0
  %3555 = vmatmul.mubr.f32.gmra.mrb[0].mxu0 %v1484
  %v3556 = vpop.f32.mrb[0].mxu0
  %v3557 = vadd.f32 0.0, %v3556
  %v3558 = vpop.f32.mrb[0].mxu0
  %3559 = vmatprep.mubr.f32.mxu0 0.0
  %3560 = vmatmul.mubr.f32.gmra.mrb[0].mxu0 %v1487
  %v3561 = vpop.f32.mrb[0].mxu0
  %v3562 = vadd.f32 0.0, %v3561
  %v3563 = vpop.f32.mrb[0].mxu0
  %3564 = vmatprep.mubr.f32.mxu0 0.0
  %3565 = vmatmul.mubr.f32.gmra.mrb[0].mxu0 %v1490
  %v3566 = vpop.f32.mrb[0].mxu0
  %v3567 = vadd.f32 0.0, %v3566
  %v3568 = vpop.f32.mrb[0].mxu0
  %3569 = vmatprep.mubr.f32.mxu0 0.0
  %3570 = vmatmul.mubr.f32.gmra.mrb[0].mxu0 %v1493
  %v3571 = vpop.f32.mrb[0].mxu0
  %v3572 = vadd.f32 0.0, %v3571
  %v3573 = vpop.f32.mrb[0].mxu0
  %3574 = vmatprep.mubr.f32.mxu0 0.0
  %3575 = vmatmul.mubr.f32.gmra.mrb[0].mxu0 %v1496
  %v3576 = vpop.f32.mrb[0].mxu0
  %v3577 = vadd.f32 0.0, %v3576
  %v3578 = vpop.f32.mrb[0].mxu0
  %3579 = vmatprep.mubr.f32.mxu0 0.0
  %3580 = vmatmul.mubr.f32.gmra.mrb[0].mxu0 %v1499
  %v3581 = vpop.f32.mrb[0].mxu0
  %v3582 = vadd.f32 0.0, %v3581
  %v3583 = vpop.f32.mrb[0].mxu0
  %3584 = vmatprep.mubr.f32.mxu0 0.0
  %3585 = vmatmul.mubr.f32.gmra.mrb[0].mxu0 %v1502
  %v3586 = vpop.f32.mrb[0].mxu0
  %v3587 = vadd.f32 0.0, %v3586
  %v3588 = vpop.f32.mrb[0].mxu0
  %3589 = vmatprep.mubr.f32.mxu0 0.0
  %3590 = vmatmul.mubr.f32.gmra.mrb[0].mxu0 %v1505
  %v3591 = vpop.f32.mrb[0].mxu0
  %v3592 = vadd.f32 0.0, %v3591
  %v3593 = vpop.f32.mrb[0].mxu0
  %3594 = vmatprep.mubr.f32.mxu0 0.0
  %3595 = vmatmul.mubr.f32.gmra.mrb[0].mxu0 %v1508
  %v3596 = vpop.f32.mrb[0].mxu0
  %v3597 = vadd.f32 0.0, %v3596
  %v3598 = vpop.f32.mrb[0].mxu0
  %3599 = vmatprep.mubr.f32.mxu0 0.0
  %3600 = vmatmul.mubr.f32.gmra.mrb[0].mxu0 %v1511
  %v3601 = vpop.f32.mrb[0].mxu0
  %v3602 = vadd.f32 0.0, %v3601
  %v3603 = vpop.f32.mrb[0].mxu0
  %3604 = vmatprep.mubr.f32.mxu0 0.0
  %3605 = vmatmul.mubr.f32.gmra.mrb[0].mxu0 %v1514
  %v3606 = vpop.f32.mrb[0].mxu0
  %v3607 = vadd.f32 0.0, %v3606
  %v3608 = vpop.f32.mrb[0].mxu0
  %3609 = vmatprep.mubr.f32.mxu0 0.0
  %3610 = vmatmul.mubr.f32.gmra.mrb[0].mxu0 %v1517
  %v3611 = vpop.f32.mrb[0].mxu0
  %v3612 = vadd.f32 0.0, %v3611
  %v3613 = vpop.f32.mrb[0].mxu0
  %3614 = vmatprep.mubr.f32.mxu0 0.0
  %3615 = vmatmul.mubr.f32.gmra.mrb[0].mxu0 %v1520
  %v3616 = vpop.f32.mrb[0].mxu0
  %v3617 = vadd.f32 0.0, %v3616
  %v3618 = vpop.f32.mrb[0].mxu0
  %3619 = vmatprep.mubr.f32.mxu0 0.0
  %3620 = vmatmul.mubr.f32.gmra.mrb[0].mxu0 %v1523
  %v3621 = vpop.f32.mrb[0].mxu0
  %v3622 = vadd.f32 0.0, %v3621
  %v3623 = vpop.f32.mrb[0].mxu0
  %3624 = vmatprep.mubr.f32.mxu0 0.0
  %3625 = vmatmul.mubr.f32.gmra.mrb[0].mxu0 %v1526
  %v3626 = vpop.f32.mrb[0].mxu0
  %v3627 = vadd.f32 0.0, %v3626
  %v3628 = vpop.f32.mrb[0].mxu0
  %3629 = vmatprep.mubr.f32.mxu0 0.0
  %3630 = vmatmul.mubr.f32.gmra.mrb[0].mxu0 %v1529
  %v3631 = vpop.f32.mrb[0].mxu0
  %v3632 = vadd.f32 0.0, %v3631
  %v3633 = vpop.f32.mrb[0].mxu0
  %3634 = vmatprep.mubr.f32.mxu0 0.0
  %3635 = vmatmul.mubr.f32.gmra.mrb[0].mxu0 %v1532
  %v3636 = vpop.f32.mrb[0].mxu0
  %v3637 = vadd.f32 0.0, %v3636
  %v3638 = vpop.f32.mrb[0].mxu0
  %3639 = vmatprep.mubr.f32.mxu0 0.0
  %3640 = vmatmul.mubr.f32.gmra.mrb[0].mxu0 %v1535
  %v3641 = vpop.f32.mrb[0].mxu0
  %v3642 = vadd.f32 0.0, %v3641
  %v3643 = vpop.f32.mrb[0].mxu0
  %3644 = vmatprep.mubr.f32.mxu0 0.0
  %3645 = vmatmul.mubr.f32.gmra.mrb[0].mxu0 %v1538
  %v3646 = vpop.f32.mrb[0].mxu0
  %v3647 = vadd.f32 0.0, %v3646
  %v3648 = vpop.f32.mrb[0].mxu0
  %3649 = vmatprep.mubr.f32.mxu0 0.0
  %3650 = vmatmul.mubr.f32.gmra.mrb[0].mxu0 %v1541
  %v3651 = vpop.f32.mrb[0].mxu0
  %v3652 = vadd.f32 0.0, %v3651
  %v3653 = vpop.f32.mrb[0].mxu0
  %3654 = vmatprep.mubr.f32.mxu0 0.0
  %3655 = vmatmul.mubr.f32.gmra.mrb[0].mxu0 %v1544
  %v3656 = vpop.f32.mrb[0].mxu0
  %v3657 = vadd.f32 0.0, %v3656
  %v3658 = vpop.f32.mrb[0].mxu0
  %3659 = vmatprep.mubr.f32.mxu0 0.0
  %3660 = vmatmul.mubr.f32.gmra.mrb[0].mxu0 %v1547
  %v3661 = vpop.f32.mrb[0].mxu0
  %v3662 = vadd.f32 0.0, %v3661
  %v3663 = vpop.f32.mrb[0].mxu0
  %3664 = vmatprep.mubr.f32.mxu0 0.0
  %3665 = vmatmul.mubr.f32.gmra.mrb[0].mxu0 %v1550
  %v3666 = vpop.f32.mrb[0].mxu0
  %v3667 = vadd.f32 0.0, %v3666
  %v3668 = vpop.f32.mrb[0].mxu0
  %3669 = vmatprep.mubr.f32.mxu0 0.0
  %3670 = vmatmul.mubr.f32.gmra.mrb[0].mxu0 %v1553
  %v3671 = vpop.f32.mrb[0].mxu0
  %v3672 = vadd.f32 0.0, %v3671
  %v3673 = vpop.f32.mrb[0].mxu0
  %3674 = vmatprep.mubr.f32.mxu0 0.0
  %3675 = vmatmul.mubr.f32.gmra.mrb[0].mxu0 %v1556
  %v3676 = vpop.f32.mrb[0].mxu0
  %v3677 = vadd.f32 0.0, %v3676
  %v3678 = vpop.f32.mrb[0].mxu0
  %3679 = vmatprep.mubr.f32.mxu0 0.0
  %3680 = vmatmul.mubr.f32.gmra.mrb[0].mxu0 %v1559
  %v3681 = vpop.f32.mrb[0].mxu0
  %v3682 = vadd.f32 0.0, %v3681
  %v3683 = vpop.f32.mrb[0].mxu0
  %3684 = vmatprep.mubr.f32.mxu0 0.0
  %3685 = vmatmul.mubr.f32.gmra.mrb[0].mxu0 %v1562
  %v3686 = vpop.f32.mrb[0].mxu0
  %v3687 = vadd.f32 0.0, %v3686
  %v3688 = vpop.f32.mrb[0].mxu0
  %3689 = vmatprep.mubr.f32.mxu0 0.0
  %3690 = vmatmul.mubr.f32.gmra.mrb[0].mxu0 %v1565
  %v3691 = vpop.f32.mrb[0].mxu0
  %v3692 = vadd.f32 0.0, %v3691
  %v3693 = vpop.f32.mrb[0].mxu0
  %3694 = vmatprep.mubr.f32.mxu0 0.0
  %3695 = vmatmul.mubr.f32.gmra.mrb[0].mxu0 %v1568
  %v3696 = vpop.f32.mrb[0].mxu0
  %v3697 = vadd.f32 0.0, %v3696
  %v3698 = vpop.f32.mrb[0].mxu0
  %3699 = vmatprep.mubr.f32.mxu0 0.0
  %3700 = vmatmul.mubr.f32.gmra.mrb[0].mxu0 %v1571
  %v3701 = vpop.f32.mrb[0].mxu0
  %v3702 = vadd.f32 0.0, %v3701
  %v3703 = vpop.f32.mrb[0].mxu0
  %3704 = vmatprep.mubr.f32.mxu0 0.0
  %3705 = vmatmul.mubr.f32.gmra.mrb[0].mxu0 %v1574
  %v3706 = vpop.f32.mrb[0].mxu0
  %v3707 = vadd.f32 0.0, %v3706
  %v3708 = vpop.f32.mrb[0].mxu0
  %3709 = vmatprep.mubr.f32.mxu0 0.0
  %3710 = vmatmul.mubr.f32.gmra.mrb[0].mxu0 %v1577
  %v3711 = vpop.f32.mrb[0].mxu0
  %v3712 = vadd.f32 0.0, %v3711
  %v3713 = vpop.f32.mrb[0].mxu0
  %3714 = vmatprep.mubr.f32.mxu0 0.0
  %3715 = vmatmul.mubr.f32.gmra.mrb[0].mxu0 %v1580
  %v3716 = vpop.f32.mrb[0].mxu0
  %v3717 = vadd.f32 0.0, %v3716
  %v3718 = vpop.f32.mrb[0].mxu0
  %3719 = vmatprep.mubr.f32.mxu0 0.0
  %3720 = vmatmul.mubr.f32.gmra.mrb[0].mxu0 %v1583
  %v3721 = vpop.f32.mrb[0].mxu0
  %v3722 = vadd.f32 0.0, %v3721
  %v3723 = vpop.f32.mrb[0].mxu0
  %3724 = vmatprep.mubr.f32.mxu0 0.0
  %3725 = vmatmul.mubr.f32.gmra.mrb[0].mxu0 %v1586
  %v3726 = vpop.f32.mrb[0].mxu0
  %v3727 = vadd.f32 0.0, %v3726
  %v3728 = vpop.f32.mrb[0].mxu0
  %3729 = vmatprep.mubr.f32.mxu0 0.0
  %3730 = vmatmul.mubr.f32.gmra.mrb[0].mxu0 %v1589
  %v3731 = vpop.f32.mrb[0].mxu0
  %v3732 = vadd.f32 0.0, %v3731
  %v3733 = vpop.f32.mrb[0].mxu0
  %3734 = vmatprep.mubr.f32.mxu0 0.0
  %3735 = vmatmul.mubr.f32.gmra.mrb[0].mxu0 %v1592
  %v3736 = vpop.f32.mrb[0].mxu0
  %v3737 = vadd.f32 0.0, %v3736
  %v3738 = vpop.f32.mrb[0].mxu0
  %3739 = vmatprep.mubr.f32.mxu0 0.0
  %3740 = vmatmul.mubr.f32.gmra.mrb[0].mxu0 %v1595
  %v3741 = vpop.f32.mrb[0].mxu0
  %v3742 = vadd.f32 0.0, %v3741
  %v3743 = vpop.f32.mrb[0].mxu0
  %3744 = vmatprep.mubr.f32.mxu0 0.0
  %3745 = vmatmul.mubr.f32.gmra.mrb[0].mxu0 %v1598
  %v3746 = vpop.f32.mrb[0].mxu0
  %v3747 = vadd.f32 0.0, %v3746
  %v3748 = vpop.f32.mrb[0].mxu0
  %3749 = vmatprep.mubr.f32.mxu0 0.0
  %3750 = vmatmul.mubr.f32.gmra.mrb[0].mxu0 %v1601
  %v3751 = vpop.f32.mrb[0].mxu0
  %v3752 = vadd.f32 0.0, %v3751
  %v3753 = vpop.f32.mrb[0].mxu0
  %3754 = vmatprep.mubr.f32.mxu0 0.0
  %3755 = vmatmul.mubr.f32.gmra.mrb[0].mxu0 %v1604
  %v3756 = vpop.f32.mrb[0].mxu0
  %v3757 = vadd.f32 0.0, %v3756
  %v3758 = vpop.f32.mrb[0].mxu0
  %3759 = vmatprep.mubr.f32.mxu0 0.0
  %3760 = vmatmul.mubr.f32.gmra.mrb[0].mxu0 %v1607
  %v3761 = vpop.f32.mrb[0].mxu0
  %v3762 = vadd.f32 0.0, %v3761
  %v3763 = vpop.f32.mrb[0].mxu0
  %3764 = vmatprep.mubr.f32.mxu0 0.0
  %3765 = vmatmul.mubr.f32.gmra.mrb[0].mxu0 %v1610
  %v3766 = vpop.f32.mrb[0].mxu0
  %v3767 = vadd.f32 0.0, %v3766
  %v3768 = vpop.f32.mrb[0].mxu0
  %3769 = vmatprep.mubr.f32.mxu0 0.0
  %3770 = vmatmul.mubr.f32.gmra.mrb[0].mxu0 %v1613
  %v3771 = vpop.f32.mrb[0].mxu0
  %v3772 = vadd.f32 0.0, %v3771
  %v3773 = vpop.f32.mrb[0].mxu0
  %3774 = vmatprep.mubr.f32.mxu0 0.0
  %3775 = vmatmul.mubr.f32.gmra.mrb[0].mxu0 %v1616
  %v3776 = vpop.f32.mrb[0].mxu0
  %v3777 = vadd.f32 0.0, %v3776
  %v3778 = vpop.f32.mrb[0].mxu0
  %3779 = vmatprep.mubr.f32.mxu0 0.0
  %3780 = vmatmul.mubr.f32.gmra.mrb[0].mxu0 %v1619
  %v3781 = vpop.f32.mrb[0].mxu0
  %v3782 = vadd.f32 0.0, %v3781
  %v3783 = vpop.f32.mrb[0].mxu0
  %3784 = vmatprep.mubr.f32.mxu0 0.0
  %3785 = vmatmul.mubr.f32.gmra.mrb[0].mxu0 %v1622
  %v3786 = vpop.f32.mrb[0].mxu0
  %v3787 = vadd.f32 0.0, %v3786
  %v3788 = vpop.f32.mrb[0].mxu0
  %3789 = vmatprep.mubr.f32.mxu0 0.0
  %3790 = vmatmul.mubr.f32.gmra.mrb[0].mxu0 %v1625
  %v3791 = vpop.f32.mrb[0].mxu0
  %v3792 = vadd.f32 0.0, %v3791
  %v3793 = vpop.f32.mrb[0].mxu0
  %3794 = vmatprep.mubr.f32.mxu0 0.0
  %3795 = vmatmul.mubr.f32.gmra.mrb[0].mxu0 %v1628
  %v3796 = vpop.f32.mrb[0].mxu0
  %v3797 = vadd.f32 0.0, %v3796
  %v3798 = vpop.f32.mrb[0].mxu0
  %3799 = vmatprep.mubr.f32.mxu0 0.0
  %3800 = vmatmul.mubr.f32.gmra.mrb[0].mxu0 %v1631
  %v3801 = vpop.f32.mrb[0].mxu0
  %v3802 = vadd.f32 0.0, %v3801
  %v3803 = vpop.f32.mrb[0].mxu0
  %3804 = vmatprep.mubr.f32.mxu0 0.0
  %3805 = vmatmul.mubr.f32.gmra.mrb[0].mxu0 %v1634
  %v3806 = vpop.f32.mrb[0].mxu0
  %v3807 = vadd.f32 0.0, %v3806
  %v3808 = vpop.f32.mrb[0].mxu0
  %3809 = vmatprep.mubr.f32.mxu0 0.0
  %3810 = vmatmul.mubr.f32.gmra.mrb[0].mxu0 %v1637
  %v3811 = vpop.f32.mrb[0].mxu0
  %v3812 = vadd.f32 0.0, %v3811
  %v3813 = vpop.f32.mrb[0].mxu0
  %3814 = vmatprep.mubr.f32.mxu0 0.0
  %3815 = vmatmul.mubr.f32.gmra.mrb[0].mxu0 %v1640
  %v3816 = vpop.f32.mrb[0].mxu0
  %v3817 = vadd.f32 0.0, %v3816
  %v3818 = vpop.f32.mrb[0].mxu0
  %3819 = vmatprep.mubr.f32.mxu0 0.0
  %3820 = vmatmul.mubr.f32.gmra.mrb[0].mxu0 %v1643
  %v3821 = vpop.f32.mrb[0].mxu0
  %v3822 = vadd.f32 0.0, %v3821
  %v3823 = vpop.f32.mrb[0].mxu0
  %3824 = vmatprep.mubr.f32.mxu0 0.0
  %3825 = vmatmul.mubr.f32.gmra.mrb[0].mxu0 %v1646
  %v3826 = vpop.f32.mrb[0].mxu0
  %v3827 = vadd.f32 0.0, %v3826
  %v3828 = vpop.f32.mrb[0].mxu0
  %3829 = vmatprep.mubr.f32.mxu0 0.0
  %3830 = vmatmul.mubr.f32.gmra.mrb[0].mxu0 %v1649
  %v3831 = vpop.f32.mrb[0].mxu0
  %v3832 = vadd.f32 0.0, %v3831
  %v3833 = vpop.f32.mrb[0].mxu0
  %3834 = vmatprep.mubr.f32.mxu0 0.0
  %3835 = vmatmul.mubr.f32.gmra.mrb[0].mxu0 %v1652
  %v3836 = vpop.f32.mrb[0].mxu0
  %v3837 = vadd.f32 0.0, %v3836
  %v3838 = vpop.f32.mrb[0].mxu0
  %3839 = vmatprep.mubr.f32.mxu0 0.0
  %3840 = vmatmul.mubr.f32.gmra.mrb[0].mxu0 %v1655
  %v3841 = vpop.f32.mrb[0].mxu0
  %v3842 = vadd.f32 0.0, %v3841
  %v3843 = vpop.f32.mrb[0].mxu0
  %3844 = vmatprep.mubr.f32.mxu0 0.0
  %3845 = vmatmul.mubr.f32.gmra.mrb[0].mxu0 %v1658
  %v3846 = vpop.f32.mrb[0].mxu0
  %v3847 = vadd.f32 0.0, %v3846
  %v3848 = vpop.f32.mrb[0].mxu0
  %3849 = vmatprep.mubr.f32.mxu0 0.0
  %3850 = vmatmul.mubr.f32.gmra.mrb[0].mxu0 %v1661
  %v3851 = vpop.f32.mrb[0].mxu0
  %v3852 = vadd.f32 0.0, %v3851
  %v3853 = vpop.f32.mrb[0].mxu0
  %3854 = vmatprep.mubr.f32.mxu0 0.0
  %3855 = vmatmul.mubr.f32.gmra.mrb[0].mxu0 %v1664
  %v3856 = vpop.f32.mrb[0].mxu0
  %v3857 = vadd.f32 0.0, %v3856
  %v3858 = vpop.f32.mrb[0].mxu0
  %3859 = vmatprep.mubr.f32.mxu0 0.0
  %3860 = vmatmul.mubr.f32.gmra.mrb[0].mxu0 %v1667
  %v3861 = vpop.f32.mrb[0].mxu0
  %v3862 = vadd.f32 0.0, %v3861
  %v3863 = vpop.f32.mrb[0].mxu0
  %3864 = vmatprep.mubr.f32.mxu0 0.0
  %3865 = vmatmul.mubr.f32.gmra.mrb[0].mxu0 %v1670
  %v3866 = vpop.f32.mrb[0].mxu0
  %v3867 = vadd.f32 0.0, %v3866
  %v3868 = vpop.f32.mrb[0].mxu0
  %3869 = vmatprep.mubr.f32.mxu0 0.0
  %3870 = vmatmul.mubr.f32.gmra.mrb[0].mxu0 %v1673
  %v3871 = vpop.f32.mrb[0].mxu0
  %v3872 = vadd.f32 0.0, %v3871
  %v3873 = vpop.f32.mrb[0].mxu0
  %3874 = vmatprep.mubr.f32.mxu0 0.0
  %3875 = vmatmul.mubr.f32.gmra.mrb[0].mxu0 %v1676
  %v3876 = vpop.f32.mrb[0].mxu0
  %v3877 = vadd.f32 0.0, %v3876
  %v3878 = vpop.f32.mrb[0].mxu0
  %3879 = vmatprep.mubr.f32.mxu0 0.0
  %3880 = vmatmul.mubr.f32.gmra.mrb[0].mxu0 %v1679
  %v3881 = vpop.f32.mrb[0].mxu0
  %v3882 = vadd.f32 0.0, %v3881
  %v3883 = vpop.f32.mrb[0].mxu0
  %3884 = vmatprep.mubr.f32.mxu0 0.0
  %3885 = vmatmul.mubr.f32.gmra.mrb[0].mxu0 %v1682
  %v3886 = vpop.f32.mrb[0].mxu0
  %v3887 = vadd.f32 0.0, %v3886
  %v3888 = vpop.f32.mrb[0].mxu0
  %3889 = vmatprep.mubr.f32.mxu0 0.0
  %3890 = vmatmul.mubr.f32.gmra.mrb[0].mxu0 %v1685
  %v3891 = vpop.f32.mrb[0].mxu0
  %v3892 = vadd.f32 0.0, %v3891
  %v3893 = vpop.f32.mrb[0].mxu0
  %3894 = vmatprep.mubr.f32.mxu0 0.0
  %3895 = vmatmul.mubr.f32.gmra.mrb[0].mxu0 %v1688
  %v3896 = vpop.f32.mrb[0].mxu0
  %v3897 = vadd.f32 0.0, %v3896
  %v3898 = vpop.f32.mrb[0].mxu0
  %3899 = vmatprep.mubr.f32.mxu0 0.0
  %3900 = vmatmul.mubr.f32.gmra.mrb[0].mxu0 %v1691
  %v3901 = vpop.f32.mrb[0].mxu0
  %v3902 = vadd.f32 0.0, %v3901
  %v3903 = vpop.f32.mrb[0].mxu0
  %3904 = vmatprep.mubr.f32.mxu0 0.0
  %3905 = vmatmul.mubr.f32.gmra.mrb[0].mxu0 %v1694
  %v3906 = vpop.f32.mrb[0].mxu0
  %v3907 = vadd.f32 0.0, %v3906
  %v3908 = vpop.f32.mrb[0].mxu0
  %3909 = vmatprep.mubr.f32.mxu0 0.0
  %3910 = vmatmul.mubr.f32.gmra.mrb[0].mxu0 %v1697
  %v3911 = vpop.f32.mrb[0].mxu0
  %v3912 = vadd.f32 0.0, %v3911
  %v3913 = vpop.f32.mrb[0].mxu0
  %3914 = vmatprep.mubr.f32.mxu0 0.0
  %3915 = vmatmul.mubr.f32.gmra.mrb[0].mxu0 %v1700
  %v3916 = vpop.f32.mrb[0].mxu0
  %v3917 = vadd.f32 0.0, %v3916
  %v3918 = vpop.f32.mrb[0].mxu0
  %3919 = vmatprep.mubr.f32.mxu0 0.0
  %3920 = vmatmul.mubr.f32.gmra.mrb[0].mxu0 %v1703
  %v3921 = vpop.f32.mrb[0].mxu0
  %v3922 = vadd.f32 0.0, %v3921
  %v3923 = vpop.f32.mrb[0].mxu0
  %3924 = vmatprep.mubr.f32.mxu0 0.0
  %3925 = vmatmul.mubr.f32.gmra.mrb[0].mxu0 %v1706
  %v3926 = vpop.f32.mrb[0].mxu0
  %v3927 = vadd.f32 0.0, %v3926
  %v3928 = vpop.f32.mrb[0].mxu0
  %3929 = vmatprep.mubr.f32.mxu0 0.0
  %3930 = vmatmul.mubr.f32.gmra.mrb[0].mxu0 %v1709
  %v3931 = vpop.f32.mrb[0].mxu0
  %v3932 = vadd.f32 0.0, %v3931
  %v3933 = vpop.f32.mrb[0].mxu0
  %3934 = vmatprep.mubr.f32.mxu0 0.0
  %3935 = vmatmul.mubr.f32.gmra.mrb[0].mxu0 %v1712
  %v3936 = vpop.f32.mrb[0].mxu0
  %v3937 = vadd.f32 0.0, %v3936
  %v3938 = vpop.f32.mrb[0].mxu0
  %3939 = vmatprep.mubr.f32.mxu0 0.0
  %3940 = vmatmul.mubr.f32.gmra.mrb[0].mxu0 %v1715
  %v3941 = vpop.f32.mrb[0].mxu0
  %v3942 = vadd.f32 0.0, %v3941
  %v3943 = vpop.f32.mrb[0].mxu0
  %3944 = vmatprep.mubr.f32.mxu0 0.0
  %3945 = vmatmul.mubr.f32.gmra.mrb[0].mxu0 %v1718
  %v3946 = vpop.f32.mrb[0].mxu0
  %v3947 = vadd.f32 0.0, %v3946
  %v3948 = vpop.f32.mrb[0].mxu0
  %3949 = vmatprep.mubr.f32.mxu0 0.0
  %3950 = vmatmul.mubr.f32.gmra.mrb[0].mxu0 %v1721
  %v3951 = vpop.f32.mrb[0].mxu0
  %v3952 = vadd.f32 0.0, %v3951
  %v3953 = vpop.f32.mrb[0].mxu0
  %3954 = vmatprep.mubr.f32.mxu0 0.0
  %3955 = vmatmul.mubr.f32.gmra.mrb[0].mxu0 %v1724
  %v3956 = vpop.f32.mrb[0].mxu0
  %v3957 = vadd.f32 0.0, %v3956
  %v3958 = vpop.f32.mrb[0].mxu0
  %3959 = vmatprep.mubr.f32.mxu0 0.0
  %3960 = vmatmul.mubr.f32.gmra.mrb[0].mxu0 %v1727
  %v3961 = vpop.f32.mrb[0].mxu0
  %v3962 = vadd.f32 0.0, %v3961
  %v3963 = vpop.f32.mrb[0].mxu0
  %3964 = vmatprep.mubr.f32.mxu0 0.0
  %3965 = vmatmul.mubr.f32.gmra.mrb[0].mxu0 %v1730
  %v3966 = vpop.f32.mrb[0].mxu0
  %v3967 = vadd.f32 0.0, %v3966
  %v3968 = vpop.f32.mrb[0].mxu0
  %3969 = vmatprep.mubr.f32.mxu0 0.0
  %3970 = vmatmul.mubr.f32.gmra.mrb[0].mxu0 %v1733
  %v3971 = vpop.f32.mrb[0].mxu0
  %v3972 = vadd.f32 0.0, %v3971
  %v3973 = vpop.f32.mrb[0].mxu0
  %3974 = vmatprep.mubr.f32.mxu0 0.0
  %3975 = vmatmul.mubr.f32.gmra.mrb[0].mxu0 %v1736
  %v3976 = vpop.f32.mrb[0].mxu0
  %v3977 = vadd.f32 0.0, %v3976
  %v3978 = vpop.f32.mrb[0].mxu0
  %3979 = vmatprep.mubr.f32.mxu0 0.0
  %3980 = vmatmul.mubr.f32.gmra.mrb[0].mxu0 %v1739
  %v3981 = vpop.f32.mrb[0].mxu0
  %v3982 = vadd.f32 0.0, %v3981
  %v3983 = vpop.f32.mrb[0].mxu0
  %3984 = vmatprep.mubr.f32.mxu0 0.0
  %3985 = vmatmul.mubr.f32.gmra.mrb[0].mxu0 %v1742
  %v3986 = vpop.f32.mrb[0].mxu0
  %v3987 = vadd.f32 0.0, %v3986
  %v3988 = vpop.f32.mrb[0].mxu0
  %3989 = vmatprep.mubr.f32.mxu0 0.0
  %3990 = vmatmul.mubr.f32.gmra.mrb[0].mxu0 %v1745
  %v3991 = vpop.f32.mrb[0].mxu0
  %v3992 = vadd.f32 0.0, %v3991
  %v3993 = vpop.f32.mrb[0].mxu0
  %3994 = vmatprep.mubr.f32.mxu0 0.0
  %3995 = vmatmul.mubr.f32.gmra.mrb[0].mxu0 %v1748
  %v3996 = vpop.f32.mrb[0].mxu0
  %v3997 = vadd.f32 0.0, %v3996
  %v3998 = vpop.f32.mrb[0].mxu0
  %3999 = vmatprep.mubr.f32.mxu0 0.0
  %4000 = vmatmul.mubr.f32.gmra.mrb[0].mxu0 %v1751
  %v4001 = vpop.f32.mrb[0].mxu0
  %v4002 = vadd.f32 0.0, %v4001
  %v4003 = vpop.f32.mrb[0].mxu0
  %4004 = vmatprep.mubr.f32.mxu0 0.0
  %4005 = vmatmul.mubr.f32.gmra.mrb[0].mxu0 %v1754
  %v4006 = vpop.f32.mrb[0].mxu0
  %v4007 = vadd.f32 0.0, %v4006
  %v4008 = vpop.f32.mrb[0].mxu0
  %4009 = vmatprep.mubr.f32.mxu0 0.0
  %4010 = vmatmul.mubr.f32.gmra.mrb[0].mxu0 %v1757
  %v4011 = vpop.f32.mrb[0].mxu0
  %v4012 = vadd.f32 0.0, %v4011
  %v4013 = vpop.f32.mrb[0].mxu0
  %4014 = vmatprep.mubr.f32.mxu0 0.0
  %4015 = vmatmul.mubr.f32.gmra.mrb[0].mxu0 %v1760
  %v4016 = vpop.f32.mrb[0].mxu0
  %v4017 = vadd.f32 0.0, %v4016
  %v4018 = vpop.f32.mrb[0].mxu0
  %4019 = vmatprep.mubr.f32.mxu0 0.0
  %4020 = vmatmul.mubr.f32.gmra.mrb[0].mxu0 %v1763
  %v4021 = vpop.f32.mrb[0].mxu0
  %v4022 = vadd.f32 0.0, %v4021
  %v4023 = vpop.f32.mrb[0].mxu0
  %4024 = vmatprep.mubr.f32.mxu0 0.0
  %4025 = vmatmul.mubr.f32.gmra.mrb[0].mxu0 %v1766
  %v4026 = vpop.f32.mrb[0].mxu0
  %v4027 = vadd.f32 0.0, %v4026
  %v4028 = vpop.f32.mrb[0].mxu0
  %4029 = vmatprep.mubr.f32.mxu0 0.0
  %4030 = vmatmul.mubr.f32.gmra.mrb[0].mxu0 %v1769
  %v4031 = vpop.f32.mrb[0].mxu0
  %v4032 = vadd.f32 0.0, %v4031
  %v4033 = vpop.f32.mrb[0].mxu0
  %4034 = vmatprep.mubr.f32.mxu0 0.0
  %4035 = vmatmul.mubr.f32.gmra.mrb[0].mxu0 %v1772
  %v4036 = vpop.f32.mrb[0].mxu0
  %v4037 = vadd.f32 0.0, %v4036
  %v4038 = vpop.f32.mrb[0].mxu0
  %4039 = vmatprep.mubr.f32.mxu0 0.0
  %4040 = vmatmul.mubr.f32.gmra.mrb[0].mxu0 %v1775
  %v4041 = vpop.f32.mrb[0].mxu0
  %v4042 = vadd.f32 0.0, %v4041
  %v4043 = vpop.f32.mrb[0].mxu0
  %4044 = vmatprep.mubr.f32.mxu0 0.0
  %4045 = vmatmul.mubr.f32.gmra.mrb[0].mxu0 %v1778
  %v4046 = vpop.f32.mrb[0].mxu0
  %v4047 = vadd.f32 0.0, %v4046
  %v4048 = vpop.f32.mrb[0].mxu0
  %4049 = vdwg.mxu0
  %4050 = vst [vmem:[%s2] sm:$0xff] %v1847
  %4051 = vst [vmem:[%s2 + $0x8] sm:$0xff] %v1852
  %4052 = vst [vmem:[%s2 + $0x10] sm:$0xff] %v1857
  %4053 = vst [vmem:[%s2 + $0x18] sm:$0xff] %v1862
  %4054 = vst [vmem:[%s2 + $0x20] sm:$0xff] %v1867
  %4055 = vst [vmem:[%s2 + $0x28] sm:$0xff] %v1872
  %4056 = vst [vmem:[%s2 + $0x30] sm:$0xff] %v1877
  %4057 = vst [vmem:[%s2 + $0x38] sm:$0xff] %v1882
  %4058 = vst [vmem:[%s2 + $0x40] sm:$0xff] %v1887
  %4059 = vst [vmem:[%s2 + $0x48] sm:$0xff] %v1892
  %4060 = vst [vmem:[%s2 + $0x50] sm:$0xff] %v1897
  %4061 = vst [vmem:[%s2 + $0x58] sm:$0xff] %v1902
  %4062 = vst [vmem:[%s2 + $0x60] sm:$0xff] %v1907
  %4063 = vst [vmem:[%s2 + $0x68] sm:$0xff] %v1912
  %4064 = vst [vmem:[%s2 + $0x70] sm:$0xff] %v1917
  %4065 = vst [vmem:[%s2 + $0x78] sm:$0xff] %v1922
  %4066 = vst [vmem:[%s2 + $0x80] sm:$0xff] %v1927
  %4067 = vst [vmem:[%s2 + $0x88] sm:$0xff] %v1932
  %4068 = vst [vmem:[%s2 + $0x90] sm:$0xff] %v1937
  %4069 = vst [vmem:[%s2 + $0x98] sm:$0xff] %v1942
  %4070 = vst [vmem:[%s2 + $0xa0] sm:$0xff] %v1947
  %4071 = vst [vmem:[%s2 + $0xa8] sm:$0xff] %v1952
  %4072 = vst [vmem:[%s2 + $0xb0] sm:$0xff] %v1957
  %4073 = vst [vmem:[%s2 + $0xb8] sm:$0xff] %v1962
  %4074 = vst [vmem:[%s2 + $0xc0] sm:$0xff] %v1967
  %4075 = vst [vmem:[%s2 + $0xc8] sm:$0xff] %v1972
  %4076 = vst [vmem:[%s2 + $0xd0] sm:$0xff] %v1977
  %4077 = vst [vmem:[%s2 + $0xd8] sm:$0xff] %v1982
  %4078 = vst [vmem:[%s2 + $0xe0] sm:$0xff] %v1987
  %4079 = vst [vmem:[%s2 + $0xe8] sm:$0xff] %v1992
  %4080 = vst [vmem:[%s2 + $0xf0] sm:$0xff] %v1997
  %4081 = vst [vmem:[%s2 + $0xf8] sm:$0xff] %v2002
  %4082 = vst [vmem:[%s2 + $0x100] sm:$0xff] %v2007
  %4083 = vst [vmem:[%s2 + $0x108] sm:$0xff] %v2012
  %4084 = vst [vmem:[%s2 + $0x110] sm:$0xff] %v2017
  %4085 = vst [vmem:[%s2 + $0x118] sm:$0xff] %v2022
  %4086 = vst [vmem:[%s2 + $0x120] sm:$0xff] %v2027
  %4087 = vst [vmem:[%s2 + $0x128] sm:$0xff] %v2032
  %4088 = vst [vmem:[%s2 + $0x130] sm:$0xff] %v2037
  %4089 = vst [vmem:[%s2 + $0x138] sm:$0xff] %v2042
  %4090 = vst [vmem:[%s2 + $0x140] sm:$0xff] %v2047
  %4091 = vst [vmem:[%s2 + $0x148] sm:$0xff] %v2052
  %4092 = vst [vmem:[%s2 + $0x150] sm:$0xff] %v2057
  %4093 = vst [vmem:[%s2 + $0x158] sm:$0xff] %v2062
  %4094 = vst [vmem:[%s2 + $0x160] sm:$0xff] %v2067
  %4095 = vst [vmem:[%s2 + $0x168] sm:$0xff] %v2072
  %4096 = vst [vmem:[%s2 + $0x170] sm:$0xff] %v2077
  %4097 = vst [vmem:[%s2 + $0x178] sm:$0xff] %v2082
  %4098 = vst [vmem:[%s2 + $0x180] sm:$0xff] %v2087
  %4099 = vst [vmem:[%s2 + $0x188] sm:$0xff] %v2092
  %4100 = vst [vmem:[%s2 + $0x190] sm:$0xff] %v2097
  %4101 = vst [vmem:[%s2 + $0x198] sm:$0xff] %v2102
  %4102 = vst [vmem:[%s2 + $0x1a0] sm:$0xff] %v2107
  %4103 = vst [vmem:[%s2 + $0x1a8] sm:$0xff] %v2112
  %4104 = vst [vmem:[%s2 + $0x1b0] sm:$0xff] %v2117
  %4105 = vst [vmem:[%s2 + $0x1b8] sm:$0xff] %v2122
  %4106 = vst [vmem:[%s2 + $0x1c0] sm:$0xff] %v2127
  %4107 = vst [vmem:[%s2 + $0x1c8] sm:$0xff] %v2132
  %4108 = vst [vmem:[%s2 + $0x1d0] sm:$0xff] %v2137
  %4109 = vst [vmem:[%s2 + $0x1d8] sm:$0xff] %v2142
  %4110 = vst [vmem:[%s2 + $0x1e0] sm:$0xff] %v2147
  %4111 = vst [vmem:[%s2 + $0x1e8] sm:$0xff] %v2152
  %4112 = vst [vmem:[%s2 + $0x1f0] sm:$0xff] %v2157
  %4113 = vst [vmem:[%s2 + $0x1f8] sm:$0xff] %v2162
  %4114 = vst [vmem:[%s2 + $0x200] sm:$0xff] %v2167
  %4115 = vst [vmem:[%s2 + $0x208] sm:$0xff] %v2172
  %4116 = vst [vmem:[%s2 + $0x210] sm:$0xff] %v2177
  %4117 = vst [vmem:[%s2 + $0x218] sm:$0xff] %v2182
  %4118 = vst [vmem:[%s2 + $0x220] sm:$0xff] %v2187
  %4119 = vst [vmem:[%s2 + $0x228] sm:$0xff] %v2192
  %4120 = vst [vmem:[%s2 + $0x230] sm:$0xff] %v2197
  %4121 = vst [vmem:[%s2 + $0x238] sm:$0xff] %v2202
  %4122 = vst [vmem:[%s2 + $0x240] sm:$0xff] %v2207
  %4123 = vst [vmem:[%s2 + $0x248] sm:$0xff] %v2212
  %4124 = vst [vmem:[%s2 + $0x250] sm:$0xff] %v2217
  %4125 = vst [vmem:[%s2 + $0x258] sm:$0xff] %v2222
  %4126 = vst [vmem:[%s2 + $0x260] sm:$0xff] %v2227
  %4127 = vst [vmem:[%s2 + $0x268] sm:$0xff] %v2232
  %4128 = vst [vmem:[%s2 + $0x270] sm:$0xff] %v2237
  %4129 = vst [vmem:[%s2 + $0x278] sm:$0xff] %v2242
  %4130 = vst [vmem:[%s2 + $0x280] sm:$0xff] %v2247
  %4131 = vst [vmem:[%s2 + $0x288] sm:$0xff] %v2252
  %4132 = vst [vmem:[%s2 + $0x290] sm:$0xff] %v2257
  %4133 = vst [vmem:[%s2 + $0x298] sm:$0xff] %v2262
  %4134 = vst [vmem:[%s2 + $0x2a0] sm:$0xff] %v2267
  %4135 = vst [vmem:[%s2 + $0x2a8] sm:$0xff] %v2272
  %4136 = vst [vmem:[%s2 + $0x2b0] sm:$0xff] %v2277
  %4137 = vst [vmem:[%s2 + $0x2b8] sm:$0xff] %v2282
  %4138 = vst [vmem:[%s2 + $0x2c0] sm:$0xff] %v2287
  %4139 = vst [vmem:[%s2 + $0x2c8] sm:$0xff] %v2292
  %4140 = vst [vmem:[%s2 + $0x2d0] sm:$0xff] %v2297
  %4141 = vst [vmem:[%s2 + $0x2d8] sm:$0xff] %v2302
  %4142 = vst [vmem:[%s2 + $0x2e0] sm:$0xff] %v2307
  %4143 = vst [vmem:[%s2 + $0x2e8] sm:$0xff] %v2312
  %4144 = vst [vmem:[%s2 + $0x2f0] sm:$0xff] %v2317
  %4145 = vst [vmem:[%s2 + $0x2f8] sm:$0xff] %v2322
  %4146 = vst [vmem:[%s2 + $0x300] sm:$0xff] %v2327
  %4147 = vst [vmem:[%s2 + $0x308] sm:$0xff] %v2332
  %4148 = vst [vmem:[%s2 + $0x310] sm:$0xff] %v2337
  %4149 = vst [vmem:[%s2 + $0x318] sm:$0xff] %v2342
  %4150 = vst [vmem:[%s2 + $0x320] sm:$0xff] %v2347
  %4151 = vst [vmem:[%s2 + $0x328] sm:$0xff] %v2352
  %4152 = vst [vmem:[%s2 + $0x330] sm:$0xff] %v2357
  %4153 = vst [vmem:[%s2 + $0x338] sm:$0xff] %v2362
  %4154 = vst [vmem:[%s2 + $0x340] sm:$0xff] %v2367
  %4155 = vst [vmem:[%s2 + $0x348] sm:$0xff] %v2372
  %4156 = vst [vmem:[%s2 + $0x350] sm:$0xff] %v2377
  %4157 = vst [vmem:[%s2 + $0x358] sm:$0xff] %v2382
  %4158 = vst [vmem:[%s2 + $0x360] sm:$0xff] %v2387
  %4159 = vst [vmem:[%s2 + $0x368] sm:$0xff] %v2392
  %4160 = vst [vmem:[%s2 + $0x370] sm:$0xff] %v2397
  %4161 = vst [vmem:[%s2 + $0x378] sm:$0xff] %v2402
  %4162 = vst [vmem:[%s2 + $0x380] sm:$0xff] %v2407
  %4163 = vst [vmem:[%s2 + $0x388] sm:$0xff] %v2412
  %4164 = vst [vmem:[%s2 + $0x390] sm:$0xff] %v2417
  %4165 = vst [vmem:[%s2 + $0x398] sm:$0xff] %v2422
  %4166 = vst [vmem:[%s2 + $0x3a0] sm:$0xff] %v2427
  %4167 = vst [vmem:[%s2 + $0x3a8] sm:$0xff] %v2432
  %4168 = vst [vmem:[%s2 + $0x3b0] sm:$0xff] %v2437
  %4169 = vst [vmem:[%s2 + $0x3b8] sm:$0xff] %v2442
  %4170 = vst [vmem:[%s2 + $0x3c0] sm:$0xff] %v2447
  %4171 = vst [vmem:[%s2 + $0x3c8] sm:$0xff] %v2452
  %4172 = vst [vmem:[%s2 + $0x3d0] sm:$0xff] %v2457
  %4173 = vst [vmem:[%s2 + $0x3d8] sm:$0xff] %v2462
  %4174 = vst [vmem:[%s2 + $0x3e0] sm:$0xff] %v2467
  %4175 = vst [vmem:[%s2 + $0x3e8] sm:$0xff] %v2472
  %4176 = vst [vmem:[%s2 + $0x3f0] sm:$0xff] %v2477
  %4177 = vst [vmem:[%s2 + $0x3f8] sm:$0xff] %v2482
  %4178 = vst [vmem:[%s2 + $0x400] sm:$0xff] %v2487
  %4179 = vst [vmem:[%s2 + $0x408] sm:$0xff] %v2492
  %4180 = vst [vmem:[%s2 + $0x410] sm:$0xff] %v2497
  %4181 = vst [vmem:[%s2 + $0x418] sm:$0xff] %v2502
  %4182 = vst [vmem:[%s2 + $0x420] sm:$0xff] %v2507
  %4183 = vst [vmem:[%s2 + $0x428] sm:$0xff] %v2512
  %4184 = vst [vmem:[%s2 + $0x430] sm:$0xff] %v2517
  %4185 = vst [vmem:[%s2 + $0x438] sm:$0xff] %v2522
  %4186 = vst [vmem:[%s2 + $0x440] sm:$0xff] %v2527
  %4187 = vst [vmem:[%s2 + $0x448] sm:$0xff] %v2532
  %4188 = vst [vmem:[%s2 + $0x450] sm:$0xff] %v2537
  %4189 = vst [vmem:[%s2 + $0x458] sm:$0xff] %v2542
  %4190 = vst [vmem:[%s2 + $0x460] sm:$0xff] %v2547
  %4191 = vst [vmem:[%s2 + $0x468] sm:$0xff] %v2552
  %4192 = vst [vmem:[%s2 + $0x470] sm:$0xff] %v2557
  %4193 = vst [vmem:[%s2 + $0x478] sm:$0xff] %v2562
  %4194 = vst [vmem:[%s2 + $0x480] sm:$0xff] %v2567
  %4195 = vst [vmem:[%s2 + $0x488] sm:$0xff] %v2572
  %4196 = vst [vmem:[%s2 + $0x490] sm:$0xff] %v2577
  %4197 = vst [vmem:[%s2 + $0x498] sm:$0xff] %v2582
  %4198 = vst [vmem:[%s2 + $0x4a0] sm:$0xff] %v2587
  %4199 = vst [vmem:[%s2 + $0x4a8] sm:$0xff] %v2592
  %4200 = vst [vmem:[%s2 + $0x4b0] sm:$0xff] %v2597
  %4201 = vst [vmem:[%s2 + $0x4b8] sm:$0xff] %v2602
  %4202 = vst [vmem:[%s2 + $0x4c0] sm:$0xff] %v2607
  %4203 = vst [vmem:[%s2 + $0x4c8] sm:$0xff] %v2612
  %4204 = vst [vmem:[%s2 + $0x4d0] sm:$0xff] %v2617
  %4205 = vst [vmem:[%s2 + $0x4d8] sm:$0xff] %v2622
  %4206 = vst [vmem:[%s2 + $0x4e0] sm:$0xff] %v2627
  %4207 = vst [vmem:[%s2 + $0x4e8] sm:$0xff] %v2632
  %4208 = vst [vmem:[%s2 + $0x4f0] sm:$0xff] %v2637
  %4209 = vst [vmem:[%s2 + $0x4f8] sm:$0xff] %v2642
  %4210 = vst [vmem:[%s2 + $0x500] sm:$0xff] %v2647
  %4211 = vst [vmem:[%s2 + $0x508] sm:$0xff] %v2652
  %4212 = vst [vmem:[%s2 + $0x510] sm:$0xff] %v2657
  %4213 = vst [vmem:[%s2 + $0x518] sm:$0xff] %v2662
  %4214 = vst [vmem:[%s2 + $0x520] sm:$0xff] %v2667
  %4215 = vst [vmem:[%s2 + $0x528] sm:$0xff] %v2672
  %4216 = vst [vmem:[%s2 + $0x530] sm:$0xff] %v2677
  %4217 = vst [vmem:[%s2 + $0x538] sm:$0xff] %v2682
  %4218 = vst [vmem:[%s2 + $0x540] sm:$0xff] %v2687
  %4219 = vst [vmem:[%s2 + $0x548] sm:$0xff] %v2692
  %4220 = vst [vmem:[%s2 + $0x550] sm:$0xff] %v2697
  %4221 = vst [vmem:[%s2 + $0x558] sm:$0xff] %v2702
  %4222 = vst [vmem:[%s2 + $0x560] sm:$0xff] %v2707
  %4223 = vst [vmem:[%s2 + $0x568] sm:$0xff] %v2712
  %4224 = vst [vmem:[%s2 + $0x570] sm:$0xff] %v2717
  %4225 = vst [vmem:[%s2 + $0x578] sm:$0xff] %v2722
  %4226 = vst [vmem:[%s2 + $0x580] sm:$0xff] %v2727
  %4227 = vst [vmem:[%s2 + $0x588] sm:$0xff] %v2732
  %4228 = vst [vmem:[%s2 + $0x590] sm:$0xff] %v2737
  %4229 = vst [vmem:[%s2 + $0x598] sm:$0xff] %v2742
  %4230 = vst [vmem:[%s2 + $0x5a0] sm:$0xff] %v2747
  %4231 = vst [vmem:[%s2 + $0x5a8] sm:$0xff] %v2752
  %4232 = vst [vmem:[%s2 + $0x5b0] sm:$0xff] %v2757
  %4233 = vst [vmem:[%s2 + $0x5b8] sm:$0xff] %v2762
  %4234 = vst [vmem:[%s2 + $0x5c0] sm:$0xff] %v2767
  %4235 = vst [vmem:[%s2 + $0x5c8] sm:$0xff] %v2772
  %4236 = vst [vmem:[%s2 + $0x5d0] sm:$0xff] %v2777
  %4237 = vst [vmem:[%s2 + $0x5d8] sm:$0xff] %v2782
  %4238 = vst [vmem:[%s2 + $0x5e0] sm:$0xff] %v2787
  %4239 = vst [vmem:[%s2 + $0x5e8] sm:$0xff] %v2792
  %4240 = vst [vmem:[%s2 + $0x5f0] sm:$0xff] %v2797
  %4241 = vst [vmem:[%s2 + $0x5f8] sm:$0xff] %v2802
  %4242 = vst [vmem:[%s2 + $0x600] sm:$0xff] %v2807
  %4243 = vst [vmem:[%s2 + $0x608] sm:$0xff] %v2812
  %4244 = vst [vmem:[%s2 + $0x610] sm:$0xff] %v2817
  %4245 = vst [vmem:[%s2 + $0x618] sm:$0xff] %v2822
  %4246 = vst [vmem:[%s2 + $0x620] sm:$0xff] %v2827
  %4247 = vst [vmem:[%s2 + $0x628] sm:$0xff] %v2832
  %4248 = vst [vmem:[%s2 + $0x630] sm:$0xff] %v2837
  %4249 = vst [vmem:[%s2 + $0x638] sm:$0xff] %v2842
  %4250 = vst [vmem:[%s2 + $0x640] sm:$0xff] %v2847
  %4251 = vst [vmem:[%s2 + $0x648] sm:$0xff] %v2852
  %4252 = vst [vmem:[%s2 + $0x650] sm:$0xff] %v2857
  %4253 = vst [vmem:[%s2 + $0x658] sm:$0xff] %v2862
  %4254 = vst [vmem:[%s2 + $0x660] sm:$0xff] %v2867
  %4255 = vst [vmem:[%s2 + $0x668] sm:$0xff] %v2872
  %4256 = vst [vmem:[%s2 + $0x670] sm:$0xff] %v2877
  %4257 = vst [vmem:[%s2 + $0x678] sm:$0xff] %v2882
  %4258 = vst [vmem:[%s2 + $0x680] sm:$0xff] %v2887
  %4259 = vst [vmem:[%s2 + $0x688] sm:$0xff] %v2892
  %4260 = vst [vmem:[%s2 + $0x690] sm:$0xff] %v2897
  %4261 = vst [vmem:[%s2 + $0x698] sm:$0xff] %v2902
  %4262 = vst [vmem:[%s2 + $0x6a0] sm:$0xff] %v2907
  %4263 = vst [vmem:[%s2 + $0x6a8] sm:$0xff] %v2912
  %4264 = vst [vmem:[%s2 + $0x6b0] sm:$0xff] %v2917
  %4265 = vst [vmem:[%s2 + $0x6b8] sm:$0xff] %v2922
  %4266 = vst [vmem:[%s2 + $0x6c0] sm:$0xff] %v2927
  %4267 = vst [vmem:[%s2 + $0x6c8] sm:$0xff] %v2932
  %4268 = vst [vmem:[%s2 + $0x6d0] sm:$0xff] %v2937
  %4269 = vst [vmem:[%s2 + $0x6d8] sm:$0xff] %v2942
  %4270 = vst [vmem:[%s2 + $0x6e0] sm:$0xff] %v2947
  %4271 = vst [vmem:[%s2 + $0x6e8] sm:$0xff] %v2952
  %4272 = vst [vmem:[%s2 + $0x6f0] sm:$0xff] %v2957
  %4273 = vst [vmem:[%s2 + $0x6f8] sm:$0xff] %v2962
  %4274 = vst [vmem:[%s2 + $0x700] sm:$0xff] %v2967
  %4275 = vst [vmem:[%s2 + $0x708] sm:$0xff] %v2972
  %4276 = vst [vmem:[%s2 + $0x710] sm:$0xff] %v2977
  %4277 = vst [vmem:[%s2 + $0x718] sm:$0xff] %v2982
  %4278 = vst [vmem:[%s2 + $0x720] sm:$0xff] %v2987
  %4279 = vst [vmem:[%s2 + $0x728] sm:$0xff] %v2992
  %4280 = vst [vmem:[%s2 + $0x730] sm:$0xff] %v2997
  %4281 = vst [vmem:[%s2 + $0x738] sm:$0xff] %v3002
  %4282 = vst [vmem:[%s2 + $0x740] sm:$0xff] %v3007
  %4283 = vst [vmem:[%s2 + $0x748] sm:$0xff] %v3012
  %4284 = vst [vmem:[%s2 + $0x750] sm:$0xff] %v3017
  %4285 = vst [vmem:[%s2 + $0x758] sm:$0xff] %v3022
  %4286 = vst [vmem:[%s2 + $0x760] sm:$0xff] %v3027
  %4287 = vst [vmem:[%s2 + $0x768] sm:$0xff] %v3032
  %4288 = vst [vmem:[%s2 + $0x770] sm:$0xff] %v3037
  %4289 = vst [vmem:[%s2 + $0x778] sm:$0xff] %v3042
  %4290 = vst [vmem:[%s2 + $0x780] sm:$0xff] %v3047
  %4291 = vst [vmem:[%s2 + $0x788] sm:$0xff] %v3052
  %4292 = vst [vmem:[%s2 + $0x790] sm:$0xff] %v3057
  %4293 = vst [vmem:[%s2 + $0x798] sm:$0xff] %v3062
  %4294 = vst [vmem:[%s2 + $0x7a0] sm:$0xff] %v3067
  %4295 = vst [vmem:[%s2 + $0x7a8] sm:$0xff] %v3072
  %4296 = vst [vmem:[%s2 + $0x7b0] sm:$0xff] %v3077
  %4297 = vst [vmem:[%s2 + $0x7b8] sm:$0xff] %v3082
  %4298 = vst [vmem:[%s2 + $0x7c0] sm:$0xff] %v3087
  %4299 = vst [vmem:[%s2 + $0x7c8] sm:$0xff] %v3092
  %4300 = vst [vmem:[%s2 + $0x7d0] sm:$0xff] %v3097
  %4301 = vst [vmem:[%s2 + $0x7d8] sm:$0xff] %v3102
  %4302 = vst [vmem:[%s2 + $0x7e0] sm:$0xff] %v3107
  %4303 = vst [vmem:[%s2 + $0x7e8] sm:$0xff] %v3112
  %4304 = vst [vmem:[%s2 + $0x7f0] sm:$0xff] %v3117
  %4305 = vst [vmem:[%s2 + $0x7f8] sm:$0xff] %v3122
  %4306 = vst [vmem:[%s2 + $0x800] sm:$0xff] %v3127
  %4307 = vst [vmem:[%s2 + $0x808] sm:$0xff] %v3132
  %4308 = vst [vmem:[%s2 + $0x810] sm:$0xff] %v3137
  %4309 = vst [vmem:[%s2 + $0x818] sm:$0xff] %v3142
  %4310 = vst [vmem:[%s2 + $0x820] sm:$0xff] %v3147
  %4311 = vst [vmem:[%s2 + $0x828] sm:$0xff] %v3152
  %4312 = vst [vmem:[%s2 + $0x830] sm:$0xff] %v3157
  %4313 = vst [vmem:[%s2 + $0x838] sm:$0xff] %v3162
  %4314 = vst [vmem:[%s2 + $0x840] sm:$0xff] %v3167
  %4315 = vst [vmem:[%s2 + $0x848] sm:$0xff] %v3172
  %4316 = vst [vmem:[%s2 + $0x850] sm:$0xff] %v3177
  %4317 = vst [vmem:[%s2 + $0x858] sm:$0xff] %v3182
  %4318 = vst [vmem:[%s2 + $0x860] sm:$0xff] %v3187
  %4319 = vst [vmem:[%s2 + $0x868] sm:$0xff] %v3192
  %4320 = vst [vmem:[%s2 + $0x870] sm:$0xff] %v3197
  %4321 = vst [vmem:[%s2 + $0x878] sm:$0xff] %v3202
  %4322 = vst [vmem:[%s2 + $0x880] sm:$0xff] %v3207
  %4323 = vst [vmem:[%s2 + $0x888] sm:$0xff] %v3212
  %4324 = vst [vmem:[%s2 + $0x890] sm:$0xff] %v3217
  %4325 = vst [vmem:[%s2 + $0x898] sm:$0xff] %v3222
  %4326 = vst [vmem:[%s2 + $0x8a0] sm:$0xff] %v3227
  %4327 = vst [vmem:[%s2 + $0x8a8] sm:$0xff] %v3232
  %4328 = vst [vmem:[%s2 + $0x8b0] sm:$0xff] %v3237
  %4329 = vst [vmem:[%s2 + $0x8b8] sm:$0xff] %v3242
  %4330 = vst [vmem:[%s2 + $0x8c0] sm:$0xff] %v3247
  %4331 = vst [vmem:[%s2 + $0x8c8] sm:$0xff] %v3252
  %4332 = vst [vmem:[%s2 + $0x8d0] sm:$0xff] %v3257
  %4333 = vst [vmem:[%s2 + $0x8d8] sm:$0xff] %v3262
  %4334 = vst [vmem:[%s2 + $0x8e0] sm:$0xff] %v3267
  %4335 = vst [vmem:[%s2 + $0x8e8] sm:$0xff] %v3272
  %4336 = vst [vmem:[%s2 + $0x8f0] sm:$0xff] %v3277
  %4337 = vst [vmem:[%s2 + $0x8f8] sm:$0xff] %v3282
  %4338 = vst [vmem:[%s2 + $0x900] sm:$0xff] %v3287
  %4339 = vst [vmem:[%s2 + $0x908] sm:$0xff] %v3292
  %4340 = vst [vmem:[%s2 + $0x910] sm:$0xff] %v3297
  %4341 = vst [vmem:[%s2 + $0x918] sm:$0xff] %v3302
  %4342 = vst [vmem:[%s2 + $0x920] sm:$0xff] %v3307
  %4343 = vst [vmem:[%s2 + $0x928] sm:$0xff] %v3312
  %4344 = vst [vmem:[%s2 + $0x930] sm:$0xff] %v3317
  %4345 = vst [vmem:[%s2 + $0x938] sm:$0xff] %v3322
  %4346 = vst [vmem:[%s2 + $0x940] sm:$0xff] %v3327
  %4347 = vst [vmem:[%s2 + $0x948] sm:$0xff] %v3332
  %4348 = vst [vmem:[%s2 + $0x950] sm:$0xff] %v3337
  %4349 = vst [vmem:[%s2 + $0x958] sm:$0xff] %v3342
  %4350 = vst [vmem:[%s2 + $0x960] sm:$0xff] %v3347
  %4351 = vst [vmem:[%s2 + $0x968] sm:$0xff] %v3352
  %4352 = vst [vmem:[%s2 + $0x970] sm:$0xff] %v3357
  %4353 = vst [vmem:[%s2 + $0x978] sm:$0xff] %v3362
  %4354 = vst [vmem:[%s2 + $0x980] sm:$0xff] %v3367
  %4355 = vst [vmem:[%s2 + $0x988] sm:$0xff] %v3372
  %4356 = vst [vmem:[%s2 + $0x990] sm:$0xff] %v3377
  %4357 = vst [vmem:[%s2 + $0x998] sm:$0xff] %v3382
  %4358 = vst [vmem:[%s2 + $0x9a0] sm:$0xff] %v3387
  %4359 = vst [vmem:[%s2 + $0x9a8] sm:$0xff] %v3392
  %4360 = vst [vmem:[%s2 + $0x9b0] sm:$0xff] %v3397
  %4361 = vst [vmem:[%s2 + $0x9b8] sm:$0xff] %v3402
  %4362 = vst [vmem:[%s2 + $0x9c0] sm:$0xff] %v3407
  %4363 = vst [vmem:[%s2 + $0x9c8] sm:$0xff] %v3412
  %4364 = vst [vmem:[%s2 + $0x9d0] sm:$0xff] %v3417
  %4365 = vst [vmem:[%s2 + $0x9d8] sm:$0xff] %v3422
  %4366 = vst [vmem:[%s2 + $0x9e0] sm:$0xff] %v3427
  %4367 = vst [vmem:[%s2 + $0x9e8] sm:$0xff] %v3432
  %4368 = vst [vmem:[%s2 + $0x9f0] sm:$0xff] %v3437
  %4369 = vst [vmem:[%s2 + $0x9f8] sm:$0xff] %v3442
  %4370 = vst [vmem:[%s2 + $0xa00] sm:$0xff] %v3447
  %4371 = vst [vmem:[%s2 + $0xa08] sm:$0xff] %v3452
  %4372 = vst [vmem:[%s2 + $0xa10] sm:$0xff] %v3457
  %4373 = vst [vmem:[%s2 + $0xa18] sm:$0xff] %v3462
  %4374 = vst [vmem:[%s2 + $0xa20] sm:$0xff] %v3467
  %4375 = vst [vmem:[%s2 + $0xa28] sm:$0xff] %v3472
  %4376 = vst [vmem:[%s2 + $0xa30] sm:$0xff] %v3477
  %4377 = vst [vmem:[%s2 + $0xa38] sm:$0xff] %v3482
  %4378 = vst [vmem:[%s2 + $0xa40] sm:$0xff] %v3487
  %4379 = vst [vmem:[%s2 + $0xa48] sm:$0xff] %v3492
  %4380 = vst [vmem:[%s2 + $0xa50] sm:$0xff] %v3497
  %4381 = vst [vmem:[%s2 + $0xa58] sm:$0xff] %v3502
  %4382 = vst [vmem:[%s2 + $0xa60] sm:$0xff] %v3507
  %4383 = vst [vmem:[%s2 + $0xa68] sm:$0xff] %v3512
  %4384 = vst [vmem:[%s2 + $0xa70] sm:$0xff] %v3517
  %4385 = vst [vmem:[%s2 + $0xa78] sm:$0xff] %v3522
  %4386 = vst [vmem:[%s2 + $0xa80] sm:$0xff] %v3527
  %4387 = vst [vmem:[%s2 + $0xa88] sm:$0xff] %v3532
  %4388 = vst [vmem:[%s2 + $0xa90] sm:$0xff] %v3537
  %4389 = vst [vmem:[%s2 + $0xa98] sm:$0xff] %v3542
  %4390 = vst [vmem:[%s2 + $0xaa0] sm:$0xff] %v3547
  %4391 = vst [vmem:[%s2 + $0xaa8] sm:$0xff] %v3552
  %4392 = vst [vmem:[%s2 + $0xab0] sm:$0xff] %v3557
  %4393 = vst [vmem:[%s2 + $0xab8] sm:$0xff] %v3562
  %4394 = vst [vmem:[%s2 + $0xac0] sm:$0xff] %v3567
  %4395 = vst [vmem:[%s2 + $0xac8] sm:$0xff] %v3572
  %4396 = vst [vmem:[%s2 + $0xad0] sm:$0xff] %v3577
  %4397 = vst [vmem:[%s2 + $0xad8] sm:$0xff] %v3582
  %4398 = vst [vmem:[%s2 + $0xae0] sm:$0xff] %v3587
  %4399 = vst [vmem:[%s2 + $0xae8] sm:$0xff] %v3592
  %4400 = vst [vmem:[%s2 + $0xaf0] sm:$0xff] %v3597
  %4401 = vst [vmem:[%s2 + $0xaf8] sm:$0xff] %v3602
  %4402 = vst [vmem:[%s2 + $0xb00] sm:$0xff] %v3607
  %4403 = vst [vmem:[%s2 + $0xb08] sm:$0xff] %v3612
  %4404 = vst [vmem:[%s2 + $0xb10] sm:$0xff] %v3617
  %4405 = vst [vmem:[%s2 + $0xb18] sm:$0xff] %v3622
  %4406 = vst [vmem:[%s2 + $0xb20] sm:$0xff] %v3627
  %4407 = vst [vmem:[%s2 + $0xb28] sm:$0xff] %v3632
  %4408 = vst [vmem:[%s2 + $0xb30] sm:$0xff] %v3637
  %4409 = vst [vmem:[%s2 + $0xb38] sm:$0xff] %v3642
  %4410 = vst [vmem:[%s2 + $0xb40] sm:$0xff] %v3647
  %4411 = vst [vmem:[%s2 + $0xb48] sm:$0xff] %v3652
  %4412 = vst [vmem:[%s2 + $0xb50] sm:$0xff] %v3657
  %4413 = vst [vmem:[%s2 + $0xb58] sm:$0xff] %v3662
  %4414 = vst [vmem:[%s2 + $0xb60] sm:$0xff] %v3667
  %4415 = vst [vmem:[%s2 + $0xb68] sm:$0xff] %v3672
  %4416 = vst [vmem:[%s2 + $0xb70] sm:$0xff] %v3677
  %4417 = vst [vmem:[%s2 + $0xb78] sm:$0xff] %v3682
  %4418 = vst [vmem:[%s2 + $0xb80] sm:$0xff] %v3687
  %4419 = vst [vmem:[%s2 + $0xb88] sm:$0xff] %v3692
  %4420 = vst [vmem:[%s2 + $0xb90] sm:$0xff] %v3697
  %4421 = vst [vmem:[%s2 + $0xb98] sm:$0xff] %v3702
  %4422 = vst [vmem:[%s2 + $0xba0] sm:$0xff] %v3707
  %4423 = vst [vmem:[%s2 + $0xba8] sm:$0xff] %v3712
  %4424 = vst [vmem:[%s2 + $0xbb0] sm:$0xff] %v3717
  %4425 = vst [vmem:[%s2 + $0xbb8] sm:$0xff] %v3722
  %4426 = vst [vmem:[%s2 + $0xbc0] sm:$0xff] %v3727
  %4427 = vst [vmem:[%s2 + $0xbc8] sm:$0xff] %v3732
  %4428 = vst [vmem:[%s2 + $0xbd0] sm:$0xff] %v3737
  %4429 = vst [vmem:[%s2 + $0xbd8] sm:$0xff] %v3742
  %4430 = vst [vmem:[%s2 + $0xbe0] sm:$0xff] %v3747
  %4431 = vst [vmem:[%s2 + $0xbe8] sm:$0xff] %v3752
  %4432 = vst [vmem:[%s2 + $0xbf0] sm:$0xff] %v3757
  %4433 = vst [vmem:[%s2 + $0xbf8] sm:$0xff] %v3762
  %4434 = vst [vmem:[%s2 + $0xc00] sm:$0xff] %v3767
  %4435 = vst [vmem:[%s2 + $0xc08] sm:$0xff] %v3772
  %4436 = vst [vmem:[%s2 + $0xc10] sm:$0xff] %v3777
  %4437 = vst [vmem:[%s2 + $0xc18] sm:$0xff] %v3782
  %4438 = vst [vmem:[%s2 + $0xc20] sm:$0xff] %v3787
  %4439 = vst [vmem:[%s2 + $0xc28] sm:$0xff] %v3792
  %4440 = vst [vmem:[%s2 + $0xc30] sm:$0xff] %v3797
  %4441 = vst [vmem:[%s2 + $0xc38] sm:$0xff] %v3802
  %4442 = vst [vmem:[%s2 + $0xc40] sm:$0xff] %v3807
  %4443 = vst [vmem:[%s2 + $0xc48] sm:$0xff] %v3812
  %4444 = vst [vmem:[%s2 + $0xc50] sm:$0xff] %v3817
  %4445 = vst [vmem:[%s2 + $0xc58] sm:$0xff] %v3822
  %4446 = vst [vmem:[%s2 + $0xc60] sm:$0xff] %v3827
  %4447 = vst [vmem:[%s2 + $0xc68] sm:$0xff] %v3832
  %4448 = vst [vmem:[%s2 + $0xc70] sm:$0xff] %v3837
  %4449 = vst [vmem:[%s2 + $0xc78] sm:$0xff] %v3842
  %4450 = vst [vmem:[%s2 + $0xc80] sm:$0xff] %v3847
  %4451 = vst [vmem:[%s2 + $0xc88] sm:$0xff] %v3852
  %4452 = vst [vmem:[%s2 + $0xc90] sm:$0xff] %v3857
  %4453 = vst [vmem:[%s2 + $0xc98] sm:$0xff] %v3862
  %4454 = vst [vmem:[%s2 + $0xca0] sm:$0xff] %v3867
  %4455 = vst [vmem:[%s2 + $0xca8] sm:$0xff] %v3872
  %4456 = vst [vmem:[%s2 + $0xcb0] sm:$0xff] %v3877
  %4457 = vst [vmem:[%s2 + $0xcb8] sm:$0xff] %v3882
  %4458 = vst [vmem:[%s2 + $0xcc0] sm:$0xff] %v3887
  %4459 = vst [vmem:[%s2 + $0xcc8] sm:$0xff] %v3892
  %4460 = vst [vmem:[%s2 + $0xcd0] sm:$0xff] %v3897
  %4461 = vst [vmem:[%s2 + $0xcd8] sm:$0xff] %v3902
  %4462 = vst [vmem:[%s2 + $0xce0] sm:$0xff] %v3907
  %4463 = vst [vmem:[%s2 + $0xce8] sm:$0xff] %v3912
  %4464 = vst [vmem:[%s2 + $0xcf0] sm:$0xff] %v3917
  %4465 = vst [vmem:[%s2 + $0xcf8] sm:$0xff] %v3922
  %4466 = vst [vmem:[%s2 + $0xd00] sm:$0xff] %v3927
  %4467 = vst [vmem:[%s2 + $0xd08] sm:$0xff] %v3932
  %4468 = vst [vmem:[%s2 + $0xd10] sm:$0xff] %v3937
  %4469 = vst [vmem:[%s2 + $0xd18] sm:$0xff] %v3942
  %4470 = vst [vmem:[%s2 + $0xd20] sm:$0xff] %v3947
  %4471 = vst [vmem:[%s2 + $0xd28] sm:$0xff] %v3952
  %4472 = vst [vmem:[%s2 + $0xd30] sm:$0xff] %v3957
  %4473 = vst [vmem:[%s2 + $0xd38] sm:$0xff] %v3962
  %4474 = vst [vmem:[%s2 + $0xd40] sm:$0xff] %v3967
  %4475 = vst [vmem:[%s2 + $0xd48] sm:$0xff] %v3972
  %4476 = vst [vmem:[%s2 + $0xd50] sm:$0xff] %v3977
  %4477 = vst [vmem:[%s2 + $0xd58] sm:$0xff] %v3982
  %4478 = vst [vmem:[%s2 + $0xd60] sm:$0xff] %v3987
  %4479 = vst [vmem:[%s2 + $0xd68] sm:$0xff] %v3992
  %4480 = vst [vmem:[%s2 + $0xd70] sm:$0xff] %v3997
  %4481 = vst [vmem:[%s2 + $0xd78] sm:$0xff] %v4002
  %4482 = vst [vmem:[%s2 + $0xd80] sm:$0xff] %v4007
  %4483 = vst [vmem:[%s2 + $0xd88] sm:$0xff] %v4012
  %4484 = vst [vmem:[%s2 + $0xd90] sm:$0xff] %v4017
  %4485 = vst [vmem:[%s2 + $0xd98] sm:$0xff] %v4022
  %4486 = vst [vmem:[%s2 + $0xda0] sm:$0xff] %v4027
  %4487 = vst [vmem:[%s2 + $0xda8] sm:$0xff] %v4032
  %4488 = vst [vmem:[%s2 + $0xdb0] sm:$0xff] %v4037
  %4489 = vst [vmem:[%s2 + $0xdb8] sm:$0xff] %v4042
  %4490 = vst [vmem:[%s2 + $0xdc0] sm:$0xff] %v4047
  // Predicated region
  $region10: #{decoder_forward.9} parent=0 // pred_check
    _
  $region11: #{decoder_forward.9} parent=0 // pred_check_branch
    %4492 = sbr.rel (0) target = $region13
  $region12: #{decoder_forward.9} parent=0 // pred_region
    _
  $region13: #{decoder_forward.9} parent=0 // pred_fallthru
    _
  // Predicated region
  $region14: #{decoder_forward.9} parent=0 // pred_check
    _
  $region15: #{decoder_forward.9} parent=0 // pred_check_branch
    %4494 = sbr.rel (0) target = $region17
  $region16: #{decoder_forward.9} parent=0 // pred_region
    _
  $region17: #{decoder_forward.9} parent=0 // pred_fallthru
    _

</llo_original>
